<compile_context>
chip_gen: v7x
topology: tpu7x:2x2x1
jax: 0.10.0
libtpu: 0.0.40
codegen_flags: <defaults>
</compile_context>

<pallas_src>
import jax
import jax.numpy as jnp
import numpy as np
from jax import lax
from jax.experimental import pallas as pl
from jax.experimental.pallas import tpu as pltpu

# ----------------------------- configuration -------------------------------
N = 2              # batch
H, W = 15, 20      # feature-map size implied by image_shape [240,320]/16
C_IN = 64          # module uses 512; scaled down for a small example
C_MID = 64         # RPN_Conv output channels (module: 512)
NC_SCORE = 2 * 12          # 24
NC_BBOX = 4 * 12           # 48
NC_ACTION = 22 * 12        # 264
C_HEAD = NC_SCORE + NC_BBOX + NC_ACTION   # 336
C_HEAD_PAD = 384           # lane-aligned (multiple of 128) output slab width
HW = H * W                 # 300
PAD = W + 1                # flat-row zero pad so every 3x3 shift is a static slice
BN_EPS = 1e-5


# ------------------------------- Pallas kernel -----------------------------
def cpn_head_kernel(x_ref, w1_ref, s1_ref, t1_ref, w2_ref, s2_ref, t2_ref,
                    out_ref):
    # x_ref: (HW + 2*PAD, C_IN) bf16 -- flattened NHWC rows of one image,
    #        zero-padded by PAD rows on each end.
    # W-boundary masks (the H boundary is handled by the zero-pad rows).
    col = lax.broadcasted_iota(jnp.int32, (HW, 1), 0) % W
    not_first = col != 0          # rows valid when kx == 0  (dx = -1)
    not_last = col != (W - 1)     # rows valid when kx == 2  (dx = +1)

    # 3x3 conv as 9 shifted matmuls, accumulated in f32.
    acc = None
    for ky in range(3):
        for kx in range(3):
            start = PAD + (ky - 1) * W + (kx - 1)
            slab = x_ref[start:start + HW, :]                # (HW, C_IN) bf16
            if kx == 0:
                slab = jnp.where(not_first, slab, jnp.zeros_like(slab))
            elif kx == 2:
                slab = jnp.where(not_last, slab, jnp.zeros_like(slab))
            part = jnp.dot(slab, w1_ref[ky * 3 + kx],
                           preferred_element_type=jnp.float32)
            acc = part if acc is None else acc + part

    # folded BN1 + ReLU (f32 elementwise)
    y1 = jnp.maximum(acc * s1_ref[...] + t1_ref[...], 0.0)

    # RPN_cls_bbox_action (1x1 conv == matmul, padded to 384 lanes) + BN2
    y2 = jnp.dot(y1.astype(jnp.bfloat16), w2_ref[...],
                 preferred_element_type=jnp.float32)
    y2 = y2 * s2_ref[...] + t2_ref[...]
    out_ref[...] = y2                                        # unmasked 384-wide store

    # rpn_cls_prob: softmax over paired channels (c, c+12) of the first 24
    # channels (== reshape(x,2) -> softmax(dim=1) -> reshape(x,24) in the
    # PyTorch module).  Written in place of the raw cls scores, which are not
    # needed downstream.
    s_a = y2[:, :12]
    s_b = y2[:, 12:24]
    m = jnp.maximum(s_a, s_b)
    e_a = jnp.exp(s_a - m)
    e_b = jnp.exp(s_b - m)
    inv = pl.reciprocal(e_a + e_b, approx=True)
    out_ref[:, 0:12] = e_a * inv
    out_ref[:, 12:24] = e_b * inv


def cpn_head_pallas(x_fp, w1k, s1, t1, w2p, s2p, t2p):
    n, rows, _ = x_fp.shape
    const2 = lambda i: (0, 0)
    return pl.pallas_call(
        cpn_head_kernel,
        grid=(n,),
        in_specs=[
            pl.BlockSpec((None, rows, C_IN), lambda i: (i, 0, 0)),
            pl.BlockSpec((9, C_IN, C_MID), lambda i: (0, 0, 0)),
            pl.BlockSpec((1, C_MID), const2),
            pl.BlockSpec((1, C_MID), const2),
            pl.BlockSpec((C_MID, C_HEAD_PAD), const2),
            pl.BlockSpec((1, C_HEAD_PAD), const2),
            pl.BlockSpec((1, C_HEAD_PAD), const2),
        ],
        out_specs=pl.BlockSpec((None, HW, C_HEAD_PAD), lambda i: (i, 0, 0)),
        out_shape=jax.ShapeDtypeStruct((n, HW, C_HEAD_PAD), jnp.float32),
        compiler_params=pltpu.CompilerParams(
            dimension_semantics=("parallel",)),
    )(x_fp, w1k, s1, t1, w2p, s2p, t2p)


# ------------------------------- glue (JAX) ---------------------------------
def fold_bn(bias, gamma, beta, mean, var):
    scale = gamma / jnp.sqrt(var + BN_EPS)
    shift = (bias - mean) * scale + beta
    return scale.reshape(1, -1), shift.reshape(1, -1)


@jax.jit
def cpn_forward(x_nchw, params):
    """Eval-mode CPN forward (up to proposal generation).

    Returns (rpn_cls_prob, rpn_bbox_pred, rpn_action_score) in NCHW, matching
    the PyTorch tensors of the same names.
    """
    (w1, b1, g1, be1, m1, v1, w2, b2, g2, be2, m2, v2) = params

    # NCHW -> flattened NHWC rows, zero-padded in the flat-HW axis so the
    # kernel's 9 shifted slices are static and always in-bounds.
    x_flat = jnp.transpose(x_nchw, (0, 2, 3, 1)).reshape(N, HW, C_IN)
    x_fp = jnp.pad(x_flat, ((0, 0), (PAD, PAD), (0, 0))).astype(jnp.bfloat16)

    w1k = w1.reshape(9, C_IN, C_MID).astype(jnp.bfloat16)   # (ky*3+kx, cin, cmid)
    s1, t1 = fold_bn(b1, g1, be1, m1, v1)
    s2, t2 = fold_bn(b2, g2, be2, m2, v2)

    # zero-pad the 1x1 head to a lane-aligned 384-wide slab.
    pad_c = C_HEAD_PAD - C_HEAD
    w2p = jnp.pad(w2, ((0, 0), (0, pad_c))).astype(jnp.bfloat16)
    s2p = jnp.pad(s2, ((0, 0), (0, pad_c)))
    t2p = jnp.pad(t2, ((0, 0), (0, pad_c)))

    out = cpn_head_pallas(x_fp, w1k, s1, t1, w2p, s2p, t2p)   # (N, HW, 384)
    out = out.reshape(N, H, W, C_HEAD_PAD)

    # Slice in NHWC first (smaller transposes), then convert to NCHW to match
    # the PyTorch module's layout.
    rpn_cls_prob = out[..., :NC_SCORE].transpose(0, 3, 1, 2)
    rpn_bbox_pred = out[..., NC_SCORE:NC_SCORE + NC_BBOX].transpose(0, 3, 1, 2)
    rpn_action_score = out[..., NC_SCORE + NC_BBOX:C_HEAD].transpose(0, 3, 1, 2)
    return rpn_cls_prob, rpn_bbox_pred, rpn_action_score


# ------------------------------ pure-JAX reference ---------------------------
def cpn_forward_ref(x_nchw, params):
    (w1, b1, g1, be1, m1, v1, w2, b2, g2, be2, m2, v2) = params
    x = jnp.transpose(x_nchw, (0, 2, 3, 1))
    y = lax.conv_general_dilated(
        x, w1, (1, 1), "SAME",
        dimension_numbers=("NHWC", "HWIO", "NHWC")) + b1
    y = (y - m1) / jnp.sqrt(v1 + BN_EPS) * g1 + be1
    y = jnp.maximum(y, 0.0)
    z = jnp.einsum("nhwc,cd->nhwd", y, w2) + b2
    z = (z - m2) / jnp.sqrt(v2 + BN_EPS) * g2 + be2
    cls = z[..., :NC_SCORE]
    s_a, s_b = cls[..., :12], cls[..., 12:]
    m = jnp.maximum(s_a, s_b)
    e_a, e_b = jnp.exp(s_a - m), jnp.exp(s_b - m)
    prob = jnp.concatenate([e_a / (e_a + e_b), e_b / (e_a + e_b)], axis=-1)
    z_nchw = z.transpose(0, 3, 1, 2)
    return (prob.transpose(0, 3, 1, 2),
            z_nchw[:, NC_SCORE:NC_SCORE + NC_BBOX],
            z_nchw[:, NC_SCORE + NC_BBOX:])


# ----------------------------------- main ------------------------------------
if __name__ == "__main__":
    key = jax.random.PRNGKey(0)
    ks = jax.random.split(key, 13)

    x = jax.random.normal(ks[0], (N, C_IN, H, W), jnp.float32)   # NCHW input

    # RPN_Conv (3x3) weights in HWIO layout + bias, BN1 params
    w1 = 0.05 * jax.random.normal(ks[1], (3, 3, C_IN, C_MID), jnp.float32)
    b1 = 0.05 * jax.random.normal(ks[2], (C_MID,), jnp.float32)
    g1 = 1.0 + 0.1 * jax.random.normal(ks[3], (C_MID,), jnp.float32)
    be1 = 0.1 * jax.random.normal(ks[4], (C_MID,), jnp.float32)
    m1 = 0.1 * jax.random.normal(ks[5], (C_MID,), jnp.float32)
    v1 = jax.random.uniform(ks[6], (C_MID,), jnp.float32, 0.5, 1.5)

    # RPN_cls_bbox_action (1x1) weights + bias, BN2 params
    w2 = 0.05 * jax.random.normal(ks[7], (C_MID, C_HEAD), jnp.float32)
    b2 = 0.05 * jax.random.normal(ks[8], (C_HEAD,), jnp.float32)
    g2 = 1.0 + 0.1 * jax.random.normal(ks[9], (C_HEAD,), jnp.float32)
    be2 = 0.1 * jax.random.normal(ks[10], (C_HEAD,), jnp.float32)
    m2 = 0.1 * jax.random.normal(ks[11], (C_HEAD,), jnp.float32)
    v2 = jax.random.uniform(ks[12], (C_HEAD,), jnp.float32, 0.5, 1.5)

    params = (w1, b1, g1, be1, m1, v1, w2, b2, g2, be2, m2, v2)

    outs = cpn_forward(x, params)
    outs = jax.block_until_ready(outs)

    refs = cpn_forward_ref(x, params)
    for got, want in zip(outs, refs):
        np.testing.assert_allclose(np.asarray(got), np.asarray(want),
                                   atol=1e-2, rtol=1e-2)

    print("KERNEL_OK")
</pallas_src>

<mosaic_0001>
module attributes {stable_mosaic.version = 11 : i64} {
  func.func @cpn_head_kernel(%arg0: i32, %arg1: memref<1x342x64xbf16, #tpu.memory_space<vmem>>, %arg2: memref<9x64x64xbf16, #tpu.memory_space<vmem>>, %arg3: memref<1x64xf32, #tpu.memory_space<vmem>>, %arg4: memref<1x64xf32, #tpu.memory_space<vmem>>, %arg5: memref<64x384xbf16, #tpu.memory_space<vmem>>, %arg6: memref<1x384xf32, #tpu.memory_space<vmem>>, %arg7: memref<1x384xf32, #tpu.memory_space<vmem>>, %arg8: memref<1x300x384xf32, #tpu.memory_space<vmem>>) attributes {dimension_semantics = [#tpu.dimension_semantics<parallel>], iteration_bounds = array<i64: 2>, scalar_prefetch = 0 : i64, scratch_operands = 0 : i64, tpu.core_type = #tpu.core_type<tc>, window_params = [{transform_indices = @transform_0, window_bounds = array<i64: 1, 342, 64>}, {pipeline_mode = #tpu.pipeline_mode<synchronous>, transform_indices = @transform_1, window_bounds = array<i64: 9, 64, 64>}, {pipeline_mode = #tpu.pipeline_mode<synchronous>, transform_indices = @transform_2, window_bounds = array<i64: 1, 64>}, {pipeline_mode = #tpu.pipeline_mode<synchronous>, transform_indices = @transform_3, window_bounds = array<i64: 1, 64>}, {pipeline_mode = #tpu.pipeline_mode<synchronous>, transform_indices = @transform_4, window_bounds = array<i64: 64, 384>}, {pipeline_mode = #tpu.pipeline_mode<synchronous>, transform_indices = @transform_5, window_bounds = array<i64: 1, 384>}, {pipeline_mode = #tpu.pipeline_mode<synchronous>, transform_indices = @transform_6, window_bounds = array<i64: 1, 384>}, {transform_indices = @transform_7, window_bounds = array<i64: 1, 300, 384>}]} {
    %0 = tpu.iota {dimensions = array<i32: 0>} : vector<300x1xi32>
    %c20_i32 = arith.constant 20 : i32
    %c0_i32 = arith.constant 0 : i32
    %1 = arith.cmpi eq, %c20_i32, %c0_i32 : i32
    %c1_i32 = arith.constant 1 : i32
    %2 = arith.select %1, %c1_i32, %c20_i32 : i32
    %3 = vector.broadcast %2 : i32 to vector<300x1xi32>
    %4 = arith.remsi %0, %3 : vector<300x1xi32>
    %c0_i32_0 = arith.constant 0 : i32
    %5 = vector.broadcast %c0_i32_0 : i32 to vector<300x1xi32>
    %6 = arith.cmpi ne, %4, %5 : vector<300x1xi32>
    %c0_i32_1 = arith.constant 0 : i32
    %7 = vector.broadcast %c0_i32_1 : i32 to vector<300x1xi32>
    %8 = arith.cmpi slt, %4, %7 : vector<300x1xi32>
    %c0_i32_2 = arith.constant 0 : i32
    %9 = arith.cmpi slt, %2, %c0_i32_2 : i32
    %10 = vector.broadcast %9 : i1 to vector<300x1xi1>
    %11 = vector.broadcast %10 : vector<300x1xi1> to vector<300x1xi1>
    %12 = arith.xori %8, %11 : vector<300x1xi1>
    %13 = arith.andi %12, %6 : vector<300x1xi1>
    %14 = vector.broadcast %2 : i32 to vector<300x1xi32>
    %15 = arith.addi %4, %14 : vector<300x1xi32>
    %16 = arith.select %13, %15, %4 : vector<300x1xi1>, vector<300x1xi32>
    %c0_i32_3 = arith.constant 0 : i32
    %17 = vector.broadcast %c0_i32_3 : i32 to vector<300x1xi32>
    %18 = arith.cmpi ne, %16, %17 : vector<300x1xi32>
    %c19_i32 = arith.constant 19 : i32
    %19 = vector.broadcast %c19_i32 : i32 to vector<300x1xi32>
    %20 = arith.cmpi ne, %16, %19 : vector<300x1xi32>
    %c0 = arith.constant 0 : index
    %c0_4 = arith.constant 0 : index
    %c0_5 = arith.constant 0 : index
    %21 = vector.load %arg1[%c0, %c0_4, %c0_5] : memref<1x342x64xbf16, #tpu.memory_space<vmem>>, vector<1x300x64xbf16>
    %22 = vector.shape_cast %21 : vector<1x300x64xbf16> to vector<300x64xbf16>
    %cst = arith.constant 0.000000e+00 : bf16
    %23 = vector.broadcast %cst : bf16 to vector<300x64xbf16>
    %24 = vector.shape_cast %18 : vector<300x1xi1> to vector<300x1xi1>
    %25 = vector.broadcast %24 : vector<300x1xi1> to vector<300x64xi1>
    %26 = arith.select %25, %22, %23 : vector<300x64xi1>, vector<300x64xbf16>
    %c0_6 = arith.constant 0 : index
    %c0_7 = arith.constant 0 : index
    %c0_8 = arith.constant 0 : index
    %27 = vector.load %arg2[%c0_6, %c0_7, %c0_8] : memref<9x64x64xbf16, #tpu.memory_space<vmem>>, vector<1x64x64xbf16>
    %28 = vector.shape_cast %27 : vector<1x64x64xbf16> to vector<64x64xbf16>
    %cst_9 = arith.constant dense<0.000000e+00> : vector<300x64xf32>
    %29 = tpu.matmul %26, %28, %cst_9 {dimension_numbers = #tpu.dot_dimension_numbers<[1], [0], [0], [1], [0, 0, 1, 1], [], []>} : vector<300x64xbf16>, vector<64x64xbf16>, vector<300x64xf32> -> vector<300x64xf32>
    %c0_10 = arith.constant 0 : index
    %c1 = arith.constant 1 : index
    %c0_11 = arith.constant 0 : index
    %30 = vector.load %arg1[%c0_10, %c1, %c0_11] : memref<1x342x64xbf16, #tpu.memory_space<vmem>>, vector<1x300x64xbf16>
    %31 = vector.shape_cast %30 : vector<1x300x64xbf16> to vector<300x64xbf16>
    %c1_12 = arith.constant 1 : index
    %c0_13 = arith.constant 0 : index
    %c0_14 = arith.constant 0 : index
    %32 = vector.load %arg2[%c1_12, %c0_13, %c0_14] : memref<9x64x64xbf16, #tpu.memory_space<vmem>>, vector<1x64x64xbf16>
    %33 = vector.shape_cast %32 : vector<1x64x64xbf16> to vector<64x64xbf16>
    %cst_15 = arith.constant dense<0.000000e+00> : vector<300x64xf32>
    %34 = tpu.matmul %31, %33, %cst_15 {dimension_numbers = #tpu.dot_dimension_numbers<[1], [0], [0], [1], [0, 0, 1, 1], [], []>} : vector<300x64xbf16>, vector<64x64xbf16>, vector<300x64xf32> -> vector<300x64xf32>
    %35 = arith.addf %29, %34 : vector<300x64xf32>
    %c0_16 = arith.constant 0 : index
    %c2 = arith.constant 2 : index
    %c0_17 = arith.constant 0 : index
    %36 = vector.load %arg1[%c0_16, %c2, %c0_17] : memref<1x342x64xbf16, #tpu.memory_space<vmem>>, vector<1x300x64xbf16>
    %37 = vector.shape_cast %36 : vector<1x300x64xbf16> to vector<300x64xbf16>
    %cst_18 = arith.constant 0.000000e+00 : bf16
    %38 = vector.broadcast %cst_18 : bf16 to vector<300x64xbf16>
    %39 = vector.shape_cast %20 : vector<300x1xi1> to vector<300x1xi1>
    %40 = vector.broadcast %39 : vector<300x1xi1> to vector<300x64xi1>
    %41 = arith.select %40, %37, %38 : vector<300x64xi1>, vector<300x64xbf16>
    %c2_19 = arith.constant 2 : index
    %c0_20 = arith.constant 0 : index
    %c0_21 = arith.constant 0 : index
    %42 = vector.load %arg2[%c2_19, %c0_20, %c0_21] : memref<9x64x64xbf16, #tpu.memory_space<vmem>>, vector<1x64x64xbf16>
    %43 = vector.shape_cast %42 : vector<1x64x64xbf16> to vector<64x64xbf16>
    %cst_22 = arith.constant dense<0.000000e+00> : vector<300x64xf32>
    %44 = tpu.matmul %41, %43, %cst_22 {dimension_numbers = #tpu.dot_dimension_numbers<[1], [0], [0], [1], [0, 0, 1, 1], [], []>} : vector<300x64xbf16>, vector<64x64xbf16>, vector<300x64xf32> -> vector<300x64xf32>
    %45 = arith.addf %35, %44 : vector<300x64xf32>
    %c0_23 = arith.constant 0 : index
    %c20 = arith.constant 20 : index
    %c0_24 = arith.constant 0 : index
    %46 = vector.load %arg1[%c0_23, %c20, %c0_24] : memref<1x342x64xbf16, #tpu.memory_space<vmem>>, vector<1x300x64xbf16>
    %47 = vector.shape_cast %46 : vector<1x300x64xbf16> to vector<300x64xbf16>
    %cst_25 = arith.constant 0.000000e+00 : bf16
    %48 = vector.broadcast %cst_25 : bf16 to vector<300x64xbf16>
    %49 = vector.shape_cast %18 : vector<300x1xi1> to vector<300x1xi1>
    %50 = vector.broadcast %49 : vector<300x1xi1> to vector<300x64xi1>
    %51 = arith.select %50, %47, %48 : vector<300x64xi1>, vector<300x64xbf16>
    %c3 = arith.constant 3 : index
    %c0_26 = arith.constant 0 : index
    %c0_27 = arith.constant 0 : index
    %52 = vector.load %arg2[%c3, %c0_26, %c0_27] : memref<9x64x64xbf16, #tpu.memory_space<vmem>>, vector<1x64x64xbf16>
    %53 = vector.shape_cast %52 : vector<1x64x64xbf16> to vector<64x64xbf16>
    %cst_28 = arith.constant dense<0.000000e+00> : vector<300x64xf32>
    %54 = tpu.matmul %51, %53, %cst_28 {dimension_numbers = #tpu.dot_dimension_numbers<[1], [0], [0], [1], [0, 0, 1, 1], [], []>} : vector<300x64xbf16>, vector<64x64xbf16>, vector<300x64xf32> -> vector<300x64xf32>
    %55 = arith.addf %45, %54 : vector<300x64xf32>
    %c0_29 = arith.constant 0 : index
    %c21 = arith.constant 21 : index
    %c0_30 = arith.constant 0 : index
    %56 = vector.load %arg1[%c0_29, %c21, %c0_30] : memref<1x342x64xbf16, #tpu.memory_space<vmem>>, vector<1x300x64xbf16>
    %57 = vector.shape_cast %56 : vector<1x300x64xbf16> to vector<300x64xbf16>
    %c4 = arith.constant 4 : index
    %c0_31 = arith.constant 0 : index
    %c0_32 = arith.constant 0 : index
    %58 = vector.load %arg2[%c4, %c0_31, %c0_32] : memref<9x64x64xbf16, #tpu.memory_space<vmem>>, vector<1x64x64xbf16>
    %59 = vector.shape_cast %58 : vector<1x64x64xbf16> to vector<64x64xbf16>
    %cst_33 = arith.constant dense<0.000000e+00> : vector<300x64xf32>
    %60 = tpu.matmul %57, %59, %cst_33 {dimension_numbers = #tpu.dot_dimension_numbers<[1], [0], [0], [1], [0, 0, 1, 1], [], []>} : vector<300x64xbf16>, vector<64x64xbf16>, vector<300x64xf32> -> vector<300x64xf32>
    %61 = arith.addf %55, %60 : vector<300x64xf32>
    %c0_34 = arith.constant 0 : index
    %c22 = arith.constant 22 : index
    %c0_35 = arith.constant 0 : index
    %62 = vector.load %arg1[%c0_34, %c22, %c0_35] : memref<1x342x64xbf16, #tpu.memory_space<vmem>>, vector<1x300x64xbf16>
    %63 = vector.shape_cast %62 : vector<1x300x64xbf16> to vector<300x64xbf16>
    %cst_36 = arith.constant 0.000000e+00 : bf16
    %64 = vector.broadcast %cst_36 : bf16 to vector<300x64xbf16>
    %65 = vector.shape_cast %20 : vector<300x1xi1> to vector<300x1xi1>
    %66 = vector.broadcast %65 : vector<300x1xi1> to vector<300x64xi1>
    %67 = arith.select %66, %63, %64 : vector<300x64xi1>, vector<300x64xbf16>
    %c5 = arith.constant 5 : index
    %c0_37 = arith.constant 0 : index
    %c0_38 = arith.constant 0 : index
    %68 = vector.load %arg2[%c5, %c0_37, %c0_38] : memref<9x64x64xbf16, #tpu.memory_space<vmem>>, vector<1x64x64xbf16>
    %69 = vector.shape_cast %68 : vector<1x64x64xbf16> to vector<64x64xbf16>
    %cst_39 = arith.constant dense<0.000000e+00> : vector<300x64xf32>
    %70 = tpu.matmul %67, %69, %cst_39 {dimension_numbers = #tpu.dot_dimension_numbers<[1], [0], [0], [1], [0, 0, 1, 1], [], []>} : vector<300x64xbf16>, vector<64x64xbf16>, vector<300x64xf32> -> vector<300x64xf32>
    %71 = arith.addf %61, %70 : vector<300x64xf32>
    %c0_40 = arith.constant 0 : index
    %c40 = arith.constant 40 : index
    %c0_41 = arith.constant 0 : index
    %72 = vector.load %arg1[%c0_40, %c40, %c0_41] : memref<1x342x64xbf16, #tpu.memory_space<vmem>>, vector<1x300x64xbf16>
    %73 = vector.shape_cast %72 : vector<1x300x64xbf16> to vector<300x64xbf16>
    %cst_42 = arith.constant 0.000000e+00 : bf16
    %74 = vector.broadcast %cst_42 : bf16 to vector<300x64xbf16>
    %75 = vector.shape_cast %18 : vector<300x1xi1> to vector<300x1xi1>
    %76 = vector.broadcast %75 : vector<300x1xi1> to vector<300x64xi1>
    %77 = arith.select %76, %73, %74 : vector<300x64xi1>, vector<300x64xbf16>
    %c6 = arith.constant 6 : index
    %c0_43 = arith.constant 0 : index
    %c0_44 = arith.constant 0 : index
    %78 = vector.load %arg2[%c6, %c0_43, %c0_44] : memref<9x64x64xbf16, #tpu.memory_space<vmem>>, vector<1x64x64xbf16>
    %79 = vector.shape_cast %78 : vector<1x64x64xbf16> to vector<64x64xbf16>
    %cst_45 = arith.constant dense<0.000000e+00> : vector<300x64xf32>
    %80 = tpu.matmul %77, %79, %cst_45 {dimension_numbers = #tpu.dot_dimension_numbers<[1], [0], [0], [1], [0, 0, 1, 1], [], []>} : vector<300x64xbf16>, vector<64x64xbf16>, vector<300x64xf32> -> vector<300x64xf32>
    %81 = arith.addf %71, %80 : vector<300x64xf32>
    %c0_46 = arith.constant 0 : index
    %c41 = arith.constant 41 : index
    %c0_47 = arith.constant 0 : index
    %82 = vector.load %arg1[%c0_46, %c41, %c0_47] : memref<1x342x64xbf16, #tpu.memory_space<vmem>>, vector<1x300x64xbf16>
    %83 = vector.shape_cast %82 : vector<1x300x64xbf16> to vector<300x64xbf16>
    %c7 = arith.constant 7 : index
    %c0_48 = arith.constant 0 : index
    %c0_49 = arith.constant 0 : index
    %84 = vector.load %arg2[%c7, %c0_48, %c0_49] : memref<9x64x64xbf16, #tpu.memory_space<vmem>>, vector<1x64x64xbf16>
    %85 = vector.shape_cast %84 : vector<1x64x64xbf16> to vector<64x64xbf16>
    %cst_50 = arith.constant dense<0.000000e+00> : vector<300x64xf32>
    %86 = tpu.matmul %83, %85, %cst_50 {dimension_numbers = #tpu.dot_dimension_numbers<[1], [0], [0], [1], [0, 0, 1, 1], [], []>} : vector<300x64xbf16>, vector<64x64xbf16>, vector<300x64xf32> -> vector<300x64xf32>
    %87 = arith.addf %81, %86 : vector<300x64xf32>
    %c0_51 = arith.constant 0 : index
    %c42 = arith.constant 42 : index
    %c0_52 = arith.constant 0 : index
    %88 = vector.load %arg1[%c0_51, %c42, %c0_52] : memref<1x342x64xbf16, #tpu.memory_space<vmem>>, vector<1x300x64xbf16>
    %89 = vector.shape_cast %88 : vector<1x300x64xbf16> to vector<300x64xbf16>
    %cst_53 = arith.constant 0.000000e+00 : bf16
    %90 = vector.broadcast %cst_53 : bf16 to vector<300x64xbf16>
    %91 = vector.shape_cast %20 : vector<300x1xi1> to vector<300x1xi1>
    %92 = vector.broadcast %91 : vector<300x1xi1> to vector<300x64xi1>
    %93 = arith.select %92, %89, %90 : vector<300x64xi1>, vector<300x64xbf16>
    %c8 = arith.constant 8 : index
    %c0_54 = arith.constant 0 : index
    %c0_55 = arith.constant 0 : index
    %94 = vector.load %arg2[%c8, %c0_54, %c0_55] : memref<9x64x64xbf16, #tpu.memory_space<vmem>>, vector<1x64x64xbf16>
    %95 = vector.shape_cast %94 : vector<1x64x64xbf16> to vector<64x64xbf16>
    %cst_56 = arith.constant dense<0.000000e+00> : vector<300x64xf32>
    %96 = tpu.matmul %93, %95, %cst_56 {dimension_numbers = #tpu.dot_dimension_numbers<[1], [0], [0], [1], [0, 0, 1, 1], [], []>} : vector<300x64xbf16>, vector<64x64xbf16>, vector<300x64xf32> -> vector<300x64xf32>
    %97 = arith.addf %87, %96 : vector<300x64xf32>
    %c0_57 = arith.constant 0 : index
    %c0_58 = arith.constant 0 : index
    %98 = vector.load %arg3[%c0_57, %c0_58] : memref<1x64xf32, #tpu.memory_space<vmem>>, vector<1x64xf32>
    %99 = vector.broadcast %98 : vector<1x64xf32> to vector<300x64xf32>
    %100 = arith.mulf %97, %99 : vector<300x64xf32>
    %c0_59 = arith.constant 0 : index
    %c0_60 = arith.constant 0 : index
    %101 = vector.load %arg4[%c0_59, %c0_60] : memref<1x64xf32, #tpu.memory_space<vmem>>, vector<1x64xf32>
    %102 = vector.broadcast %101 : vector<1x64xf32> to vector<300x64xf32>
    %103 = arith.addf %100, %102 : vector<300x64xf32>
    %cst_61 = arith.constant 0.000000e+00 : f32
    %104 = vector.broadcast %cst_61 : f32 to vector<300x64xf32>
    %105 = arith.maximumf %103, %104 : vector<300x64xf32>
    %106 = arith.truncf %105 : vector<300x64xf32> to vector<300x64xbf16>
    %c0_62 = arith.constant 0 : index
    %c0_63 = arith.constant 0 : index
    %107 = vector.load %arg5[%c0_62, %c0_63] : memref<64x384xbf16, #tpu.memory_space<vmem>>, vector<64x384xbf16>
    %cst_64 = arith.constant dense<0.000000e+00> : vector<300x384xf32>
    %108 = tpu.matmul %106, %107, %cst_64 {dimension_numbers = #tpu.dot_dimension_numbers<[1], [0], [0], [1], [0, 0, 1, 1], [], []>} : vector<300x64xbf16>, vector<64x384xbf16>, vector<300x384xf32> -> vector<300x384xf32>
    %c0_65 = arith.constant 0 : index
    %c0_66 = arith.constant 0 : index
    %109 = vector.load %arg6[%c0_65, %c0_66] : memref<1x384xf32, #tpu.memory_space<vmem>>, vector<1x384xf32>
    %110 = vector.broadcast %109 : vector<1x384xf32> to vector<300x384xf32>
    %111 = arith.mulf %108, %110 : vector<300x384xf32>
    %c0_67 = arith.constant 0 : index
    %c0_68 = arith.constant 0 : index
    %112 = vector.load %arg7[%c0_67, %c0_68] : memref<1x384xf32, #tpu.memory_space<vmem>>, vector<1x384xf32>
    %113 = vector.broadcast %112 : vector<1x384xf32> to vector<300x384xf32>
    %114 = arith.addf %111, %113 : vector<300x384xf32>
    %c0_69 = arith.constant 0 : index
    %c0_70 = arith.constant 0 : index
    %c0_71 = arith.constant 0 : index
    %115 = vector.load %arg8[%c0_69, %c0_70, %c0_71] : memref<1x300x384xf32, #tpu.memory_space<vmem>>, vector<1x300x384xf32>
    %116 = vector.shape_cast %115 : vector<1x300x384xf32> to vector<300x384xf32>
    %117 = vector.shape_cast %114 : vector<300x384xf32> to vector<1x300x384xf32>
    tpu.vector_store %arg8[%c0_69, %c0_70, %c0_71], %117 {strides = array<i32>} : memref<1x300x384xf32, #tpu.memory_space<vmem>>, vector<1x300x384xf32>,
    %118 = vector.extract_strided_slice %114 {offsets = [0, 0], sizes = [300, 12], strides = [1, 1]} : vector<300x384xf32> to vector<300x12xf32>
    %119 = vector.extract_strided_slice %114 {offsets = [0, 12], sizes = [300, 12], strides = [1, 1]} : vector<300x384xf32> to vector<300x12xf32>
    %120 = arith.maximumf %118, %119 : vector<300x12xf32>
    %121 = arith.subf %118, %120 : vector<300x12xf32>
    %122 = math.exp %121 : vector<300x12xf32>
    %123 = arith.subf %119, %120 : vector<300x12xf32>
    %124 = math.exp %123 : vector<300x12xf32>
    %125 = arith.addf %122, %124 : vector<300x12xf32>
    %126 = tpu.reciprocal %125 {approx = true} : vector<300x12xf32> -> vector<300x12xf32>
    %127 = arith.mulf %122, %126 : vector<300x12xf32>
    %c0_72 = arith.constant 0 : index
    %c0_73 = arith.constant 0 : index
    %c0_74 = arith.constant 0 : index
    %128 = vector.load %arg8[%c0_72, %c0_73, %c0_74] : memref<1x300x384xf32, #tpu.memory_space<vmem>>, vector<1x300x12xf32>
    %129 = vector.shape_cast %128 : vector<1x300x12xf32> to vector<300x12xf32>
    %130 = vector.shape_cast %127 : vector<300x12xf32> to vector<1x300x12xf32>
    tpu.vector_store %arg8[%c0_72, %c0_73, %c0_74], %130 {strides = array<i32>} : memref<1x300x384xf32, #tpu.memory_space<vmem>>, vector<1x300x12xf32>,
    %131 = arith.mulf %124, %126 : vector<300x12xf32>
    %c0_75 = arith.constant 0 : index
    %c0_76 = arith.constant 0 : index
    %c12 = arith.constant 12 : index
    %132 = vector.load %arg8[%c0_75, %c0_76, %c12] : memref<1x300x384xf32, #tpu.memory_space<vmem>>, vector<1x300x12xf32>
    %133 = vector.shape_cast %132 : vector<1x300x12xf32> to vector<300x12xf32>
    %134 = vector.shape_cast %131 : vector<300x12xf32> to vector<1x300x12xf32>
    tpu.vector_store %arg8[%c0_75, %c0_76, %c12], %134 {strides = array<i32>} : memref<1x300x384xf32, #tpu.memory_space<vmem>>, vector<1x300x12xf32>,
    return
  }
  func.func @transform_0(%arg0: i32) -> (i32, i32, i32) {
    %c0_i32 = arith.constant 0 : i32
    %c0_i32_0 = arith.constant 0 : i32
    %c0_i32_1 = arith.constant 0 : i32
    return %arg0, %c0_i32, %c0_i32_0 : i32, i32, i32
  }
  func.func @transform_1(%arg0: i32) -> (i32, i32, i32) {
    %c0_i32 = arith.constant 0 : i32
    %c0_i32_0 = arith.constant 0 : i32
    %c0_i32_1 = arith.constant 0 : i32
    %c0_i32_2 = arith.constant 0 : i32
    return %c0_i32, %c0_i32_0, %c0_i32_1 : i32, i32, i32
  }
  func.func @transform_2(%arg0: i32) -> (i32, i32) {
    %c0_i32 = arith.constant 0 : i32
    %c0_i32_0 = arith.constant 0 : i32
    %c0_i32_1 = arith.constant 0 : i32
    return %c0_i32, %c0_i32_0 : i32, i32
  }
  func.func @transform_3(%arg0: i32) -> (i32, i32) {
    %c0_i32 = arith.constant 0 : i32
    %c0_i32_0 = arith.constant 0 : i32
    %c0_i32_1 = arith.constant 0 : i32
    return %c0_i32, %c0_i32_0 : i32, i32
  }
  func.func @transform_4(%arg0: i32) -> (i32, i32) {
    %c0_i32 = arith.constant 0 : i32
    %c0_i32_0 = arith.constant 0 : i32
    %c0_i32_1 = arith.constant 0 : i32
    return %c0_i32, %c0_i32_0 : i32, i32
  }
  func.func @transform_5(%arg0: i32) -> (i32, i32) {
    %c0_i32 = arith.constant 0 : i32
    %c0_i32_0 = arith.constant 0 : i32
    %c0_i32_1 = arith.constant 0 : i32
    return %c0_i32, %c0_i32_0 : i32, i32
  }
  func.func @transform_6(%arg0: i32) -> (i32, i32) {
    %c0_i32 = arith.constant 0 : i32
    %c0_i32_0 = arith.constant 0 : i32
    %c0_i32_1 = arith.constant 0 : i32
    return %c0_i32, %c0_i32_0 : i32, i32
  }
  func.func @transform_7(%arg0: i32) -> (i32, i32, i32) {
    %c0_i32 = arith.constant 0 : i32
    %c0_i32_0 = arith.constant 0 : i32
    %c0_i32_1 = arith.constant 0 : i32
    return %arg0, %c0_i32, %c0_i32_0 : i32, i32, i32
  }
}

</mosaic_0001>

<llo_original>
// kernel: cpn_forward.1
$region0: #{cpn_forward.1}
  #allocation0 [shape = 'u32[]', space=smem, size = 0x4, offset = 0x4, fixed_abs, tag = 'smem constant byte address 0x4 - core index']
  #allocation1 [shape = 'u32[144,128]{1,0:T(1,128)}', space=vmem, size = 0x12000, scoped, tag = 'internal scratch']
  %s0 = inlined_call_operand.vmem [shape: bf16[2,342,64], index: 0, kind: input, shape index: {}]
  %s1 = inlined_call_operand.vmem [shape: bf16[9,64,64], index: 1, kind: input, shape index: {}]
  %s2 = inlined_call_operand.vmem [shape: f32[1,64], index: 2, kind: input, shape index: {}]
  %s3 = inlined_call_operand.vmem [shape: f32[1,64], index: 3, kind: input, shape index: {}]
  %s4 = inlined_call_operand.vmem [shape: bf16[64,384], index: 4, kind: input, shape index: {}]
  %s5 = inlined_call_operand.vmem [shape: f32[1,384], index: 5, kind: input, shape index: {}]
  %s6 = inlined_call_operand.vmem [shape: f32[1,384], index: 6, kind: input, shape index: {}]
  %s7 = inlined_call_operand.vmem [shape: f32[2,300,384], index: 7, kind: output, shape index: {}]
  %s8 = sld [smem:[#allocation0]]
  $region61: #{cpn_forward.1} parent=0
    _
  %s10 = ssub.s32 1, %s8
  %s11 = scalar_select 0, %s10, %s8
  loop: start=0, step=1, limit=4
  $region2: #{cpn_forward.1} parent=0 // loop_pre_header
    _
  $region3: #{cpn_forward.1} parent=0 // loop_header
    %s13 = sphi 0, %s17
    %p14 = scmp.ge.s32.totalorder %s13, 4
    %s23 = sphi 0, %s25
    %s26 = sphi 0, %s23
    %s27 = sphi 0, %s26
    %s43 = sphi 0, %s27
    %s47 = sphi 0, %s47
    %s49 = sphi 0, %s47
    %s50 = sphi 0, %s49
    %s64 = sphi 0, %s50
    %s68 = sphi 0, %s68
    %s70 = sphi 0, %s68
    %s71 = sphi 0, %s70
    %s85 = sphi 0, %s71
    %s89 = sphi 0, %s89
    %s91 = sphi 0, %s89
    %s92 = sphi 0, %s91
    %s106 = sphi 0, %s92
    %s110 = sphi 0, %s110
    %s112 = sphi 0, %s110
    %s113 = sphi 0, %s112
    %s127 = sphi 0, %s113
    %s131 = sphi 0, %s131
    %s133 = sphi 0, %s131
    %s134 = sphi 0, %s133
    %s148 = sphi 0, %s134
    %s152 = sphi 0, %s152
    %s154 = sphi 0, %s152
    %s155 = sphi 0, %s154
    %s169 = sphi 0, %s155
    %s175 = sphi 0, %s177
    %s178 = sphi 0, %s175
    %s179 = sphi 0, %s178
    %s195 = sphi 0, %s179
  $region4: #{cpn_forward.1} parent=0 // loop_header_branch
    %16 = sbr.rel (%p14) target = $region8
  $region5: #{cpn_forward.1} parent=0 // loop_body
    %s18 = ssub.s32 %s13, 1
    %s19 = ssub.s32 %s13, 2
    %s20 = sadd.s32 %s13, 1
    %s21 = ssub.s32 %s13, %s20
    %p22 = scmp.eq.s32.totalorder %s21, 0
    %s24 = sadd.s32 %s23, 1
    %s25 = scalar_select %p22, %s23, %s24
    %p28 = pneg %p22
    %p29 = scmp.eq.s32.totalorder %s13, 1
    %p30 = por %p28, %p29
    %p31 = scmp.ne.s32.totalorder %s23, %s26
    %p32 = scmp.eq.s32.totalorder %s13, 0
    %p33 = por %p31, %p32
    %p34 = scmp.ne.s32.totalorder %s23, %s26
    %p35 = scmp.eq.s32.totalorder %s18, 1
    %p36 = por %p34, %p35
    %p37 = scmp.ne.s32.totalorder %s26, %s27
    %p38 = scmp.eq.s32.totalorder %s18, 0
    %p39 = por %p37, %p38
    %p40 = scmp.ne.s32.totalorder %s26, %s27
    %p41 = scmp.eq.s32.totalorder %s19, 1
    %p42 = por %p40, %p41
    %p44 = scmp.ne.s32.totalorder %s27, %s43
    %p45 = scmp.eq.s32.totalorder %s19, 0
    %p46 = por %p44, %p45
    %s48 = sadd.s32 %s47, 1
    %p51 = scmp.eq.s32.totalorder %s13, 1
    %p52 = scmp.ne.s32.totalorder %s47, %s49
    %p53 = scmp.eq.s32.totalorder %s13, 0
    %p54 = por %p52, %p53
    %p55 = scmp.ne.s32.totalorder %s47, %s49
    %p56 = scmp.eq.s32.totalorder %s18, 1
    %p57 = por %p55, %p56
    %p58 = scmp.ne.s32.totalorder %s49, %s50
    %p59 = scmp.eq.s32.totalorder %s18, 0
    %p60 = por %p58, %p59
    %p61 = scmp.ne.s32.totalorder %s49, %s50
    %p62 = scmp.eq.s32.totalorder %s19, 1
    %p63 = por %p61, %p62
    %p65 = scmp.ne.s32.totalorder %s50, %s64
    %p66 = scmp.eq.s32.totalorder %s19, 0
    %p67 = por %p65, %p66
    %s69 = sadd.s32 %s68, 1
    %p72 = scmp.eq.s32.totalorder %s13, 1
    %p73 = scmp.ne.s32.totalorder %s68, %s70
    %p74 = scmp.eq.s32.totalorder %s13, 0
    %p75 = por %p73, %p74
    %p76 = scmp.ne.s32.totalorder %s68, %s70
    %p77 = scmp.eq.s32.totalorder %s18, 1
    %p78 = por %p76, %p77
    %p79 = scmp.ne.s32.totalorder %s70, %s71
    %p80 = scmp.eq.s32.totalorder %s18, 0
    %p81 = por %p79, %p80
    %p82 = scmp.ne.s32.totalorder %s70, %s71
    %p83 = scmp.eq.s32.totalorder %s19, 1
    %p84 = por %p82, %p83
    %p86 = scmp.ne.s32.totalorder %s71, %s85
    %p87 = scmp.eq.s32.totalorder %s19, 0
    %p88 = por %p86, %p87
    %s90 = sadd.s32 %s89, 1
    %p93 = scmp.eq.s32.totalorder %s13, 1
    %p94 = scmp.ne.s32.totalorder %s89, %s91
    %p95 = scmp.eq.s32.totalorder %s13, 0
    %p96 = por %p94, %p95
    %p97 = scmp.ne.s32.totalorder %s89, %s91
    %p98 = scmp.eq.s32.totalorder %s18, 1
    %p99 = por %p97, %p98
    %p100 = scmp.ne.s32.totalorder %s91, %s92
    %p101 = scmp.eq.s32.totalorder %s18, 0
    %p102 = por %p100, %p101
    %p103 = scmp.ne.s32.totalorder %s91, %s92
    %p104 = scmp.eq.s32.totalorder %s19, 1
    %p105 = por %p103, %p104
    %p107 = scmp.ne.s32.totalorder %s92, %s106
    %p108 = scmp.eq.s32.totalorder %s19, 0
    %p109 = por %p107, %p108
    %s111 = sadd.s32 %s110, 1
    %p114 = scmp.eq.s32.totalorder %s13, 1
    %p115 = scmp.ne.s32.totalorder %s110, %s112
    %p116 = scmp.eq.s32.totalorder %s13, 0
    %p117 = por %p115, %p116
    %p118 = scmp.ne.s32.totalorder %s110, %s112
    %p119 = scmp.eq.s32.totalorder %s18, 1
    %p120 = por %p118, %p119
    %p121 = scmp.ne.s32.totalorder %s112, %s113
    %p122 = scmp.eq.s32.totalorder %s18, 0
    %p123 = por %p121, %p122
    %p124 = scmp.ne.s32.totalorder %s112, %s113
    %p125 = scmp.eq.s32.totalorder %s19, 1
    %p126 = por %p124, %p125
    %p128 = scmp.ne.s32.totalorder %s113, %s127
    %p129 = scmp.eq.s32.totalorder %s19, 0
    %p130 = por %p128, %p129
    %s132 = sadd.s32 %s131, 1
    %p135 = scmp.eq.s32.totalorder %s13, 1
    %p136 = scmp.ne.s32.totalorder %s131, %s133
    %p137 = scmp.eq.s32.totalorder %s13, 0
    %p138 = por %p136, %p137
    %p139 = scmp.ne.s32.totalorder %s131, %s133
    %p140 = scmp.eq.s32.totalorder %s18, 1
    %p141 = por %p139, %p140
    %p142 = scmp.ne.s32.totalorder %s133, %s134
    %p143 = scmp.eq.s32.totalorder %s18, 0
    %p144 = por %p142, %p143
    %p145 = scmp.ne.s32.totalorder %s133, %s134
    %p146 = scmp.eq.s32.totalorder %s19, 1
    %p147 = por %p145, %p146
    %p149 = scmp.ne.s32.totalorder %s134, %s148
    %p150 = scmp.eq.s32.totalorder %s19, 0
    %p151 = por %p149, %p150
    %s153 = sadd.s32 %s152, 1
    %p156 = scmp.eq.s32.totalorder %s13, 1
    %p157 = scmp.ne.s32.totalorder %s152, %s154
    %p158 = scmp.eq.s32.totalorder %s13, 0
    %p159 = por %p157, %p158
    %p160 = scmp.ne.s32.totalorder %s152, %s154
    %p161 = scmp.eq.s32.totalorder %s18, 1
    %p162 = por %p160, %p161
    %p163 = scmp.ne.s32.totalorder %s154, %s155
    %p164 = scmp.eq.s32.totalorder %s18, 0
    %p165 = por %p163, %p164
    %p166 = scmp.ne.s32.totalorder %s154, %s155
    %p167 = scmp.eq.s32.totalorder %s19, 1
    %p168 = por %p166, %p167
    %p170 = scmp.ne.s32.totalorder %s155, %s169
    %p171 = scmp.eq.s32.totalorder %s19, 0
    %p172 = por %p170, %p171
    %s173 = ssub.s32 %s13, %s20
    %p174 = scmp.eq.s32.totalorder %s173, 0
    %s176 = sadd.s32 %s175, 1
    %s177 = scalar_select %p174, %s175, %s176
    %p180 = pneg %p174
    %p181 = scmp.eq.s32.totalorder %s13, 1
    %p182 = por %p180, %p181
    %p183 = scmp.ne.s32.totalorder %s175, %s178
    %p184 = scmp.eq.s32.totalorder %s13, 0
    %p185 = por %p183, %p184
    %p186 = scmp.ne.s32.totalorder %s175, %s178
    %p187 = scmp.eq.s32.totalorder %s18, 1
    %p188 = por %p186, %p187
    %p189 = scmp.ne.s32.totalorder %s178, %s179
    %p190 = scmp.eq.s32.totalorder %s18, 0
    %p191 = por %p189, %p190
    %p192 = scmp.ne.s32.totalorder %s178, %s179
    %p193 = scmp.eq.s32.totalorder %s19, 1
    %p194 = por %p192, %p193
    %p196 = scmp.ne.s32.totalorder %s179, %s195
    %p197 = scmp.eq.s32.totalorder %s19, 0
    %p198 = por %p196, %p197
    %p199 = scmp.le.s32.totalorder 1, %s13
    %p200 = scmp.lt.s32.totalorder %s13, 3
    %p201 = pnand %p199, %p200
    %p202 = pneg %p201
    // Predicated region
    $region9: #{cpn_forward.1} parent=5 // pred_check
      _
    $region10: #{cpn_forward.1} parent=5 // pred_check_branch
      %204 = sbr.rel (%p201) target = $region12
    $region11: #{cpn_forward.1} parent=5 // pred_region
      %s205 = ssub.s32 %s13, 1
      // Predicated region
      $region13: #{cpn_forward.1} parent=11 // pred_check
        %p206 = pneg %p60
      $region14: #{cpn_forward.1} parent=11 // pred_check_branch
        %208 = sbr.rel (%p206) target = $region16
      $region15: #{cpn_forward.1} parent=11 // pred_region
        _
      $region16: #{cpn_forward.1} parent=11 // pred_fallthru
        _
      // Predicated region
      $region17: #{cpn_forward.1} parent=11 // pred_check
        %p209 = pneg %p81
      $region18: #{cpn_forward.1} parent=11 // pred_check_branch
        %211 = sbr.rel (%p209) target = $region20
      $region19: #{cpn_forward.1} parent=11 // pred_region
        _
      $region20: #{cpn_forward.1} parent=11 // pred_fallthru
        _
      // Predicated region
      $region21: #{cpn_forward.1} parent=11 // pred_check
        %p212 = pneg %p102
      $region22: #{cpn_forward.1} parent=11 // pred_check_branch
        %214 = sbr.rel (%p212) target = $region24
      $region23: #{cpn_forward.1} parent=11 // pred_region
        _
      $region24: #{cpn_forward.1} parent=11 // pred_fallthru
        _
      // Predicated region
      $region25: #{cpn_forward.1} parent=11 // pred_check
        %p215 = pneg %p123
      $region26: #{cpn_forward.1} parent=11 // pred_check_branch
        %217 = sbr.rel (%p215) target = $region28
      $region27: #{cpn_forward.1} parent=11 // pred_region
        _
      $region28: #{cpn_forward.1} parent=11 // pred_fallthru
        _
      // Predicated region
      $region29: #{cpn_forward.1} parent=11 // pred_check
        %p218 = pneg %p144
      $region30: #{cpn_forward.1} parent=11 // pred_check_branch
        %220 = sbr.rel (%p218) target = $region32
      $region31: #{cpn_forward.1} parent=11 // pred_region
        _
      $region32: #{cpn_forward.1} parent=11 // pred_fallthru
        _
      // Predicated region
      $region33: #{cpn_forward.1} parent=11 // pred_check
        %p221 = pneg %p165
      $region34: #{cpn_forward.1} parent=11 // pred_check_branch
        %223 = sbr.rel (%p221) target = $region36
      $region35: #{cpn_forward.1} parent=11 // pred_region
        _
      $region36: #{cpn_forward.1} parent=11 // pred_fallthru
        _
    $region12: #{cpn_forward.1} parent=5 // pred_fallthru
      _
    %p224 = scmp.lt.s32.totalorder %s13, 2
    // Predicated region
    $region37: #{cpn_forward.1} parent=5 // pred_check
      %p225 = pneg %p224
    $region38: #{cpn_forward.1} parent=5 // pred_check_branch
      %227 = sbr.rel (%p225) target = $region40
    $region39: #{cpn_forward.1} parent=5 // pred_region
      // Predicated region
      $region41: #{cpn_forward.1} parent=39 // pred_check
        %p228 = pneg %p33
      $region42: #{cpn_forward.1} parent=39 // pred_check_branch
        %230 = sbr.rel (%p228) target = $region44
      $region43: #{cpn_forward.1} parent=39 // pred_region
        %p231 = scmp.lt.s32.totalorder %s13, 1
        %s232 = scalar_select %p231, %s13, 1
        %s233 = smul.addr %s232, 43
        %s234 = smul.addr %s233, 4
        %s235 = scalar_lea.vmem %s0, %s234
      $region44: #{cpn_forward.1} parent=39 // pred_fallthru
        _
    $region40: #{cpn_forward.1} parent=5 // pred_fallthru
      _
    %p236 = scmp.le.s32.totalorder 1, %s13
    %p237 = scmp.lt.s32.totalorder %s13, 3
    %p238 = pnand %p236, %p237
    %p239 = pneg %p238
    // Predicated region
    $region45: #{cpn_forward.1} parent=5 // pred_check
      _
    $region46: #{cpn_forward.1} parent=5 // pred_check_branch
      %241 = sbr.rel (%p238) target = $region48
    $region47: #{cpn_forward.1} parent=5 // pred_region
      %s242 = ssub.s32 %s13, 1
      %p243 = scmp.lt.s32.totalorder %s18, 1
      %s244 = scalar_select %p243, %s18, 1
      %s245 = smul.addr %s244, 43
      %s246 = smul.addr %s245, 4
      %s247 = scalar_lea.vmem %s0, %s246
      %p248 = pneg %p39
      %p249 = pneg %p36
      %p250 = pneg %p60
      %p251 = pneg %p57
      %p252 = pneg %p81
      %p253 = pneg %p78
      %p254 = pneg %p102
      %p255 = pneg %p99
      %p256 = pneg %p123
      %p257 = pneg %p120
      %p258 = pneg %p144
      %p259 = pneg %p141
      %p260 = pneg %p165
      %p261 = pneg %p162
      %p262 = pneg %p191
      %p263 = pneg %p188
      %p264 = scmp.lt.s32.totalorder %s18, 1
      %s265 = scalar_select %p264, %s18, 1
      %s266 = smul.addr %s265, 114
      %s267 = smul.addr %s266, 8
      %s268 = scalar_lea.vmem %s7, %s267
      %p269 = scmp.lt.s32.totalorder %s18, 1
      %s270 = scalar_select %p269, %s18, 1
      %s271 = smul.addr %s270, 43
      %s272 = smul.addr %s271, 4
      %s273 = scalar_lea.vmem %s0, %s272
      %p274 = scmp.lt.s32.totalorder %s18, 1
      %s275 = scalar_select %p274, %s18, 1
      %s276 = smul.addr %s275, 114
      %s277 = smul.addr %s276, 8
      %s278 = scalar_lea.vmem %s7, %s277
      %v282 = vlaneseq
      %v283 = vshrl.u32 %v282, 7
      %v284 = vadd.s32 %v283, 8
      %v285 = vadd.s32 %v283, 16
      %v286 = vadd.s32 %v283, 24
      %v287 = vadd.s32 %v283, 32
      %v288 = vadd.s32 %v283, 40
      %v289 = vadd.s32 %v283, 48
      %v290 = vadd.s32 %v283, 56
      %v291 = vadd.s32 %v283, 64
      %v292 = vadd.s32 %v283, 72
      %v293 = vadd.s32 %v283, 80
      %v294 = vadd.s32 %v283, 88
      %v295 = vadd.s32 %v283, 96
      %v296 = vadd.s32 %v283, 104
      %v297 = vadd.s32 %v283, 112
      %v298 = vadd.s32 %v283, 120
      %v299 = vadd.s32 %v283, 128
      %v300 = vadd.s32 %v283, 136
      %v301 = vadd.s32 %v283, 144
      %v302 = vadd.s32 %v283, 152
      %v303 = vadd.s32 %v283, 160
      %v304 = vadd.s32 %v283, 168
      %v305 = vadd.s32 %v283, 176
      %v306 = vadd.s32 %v283, 184
      %v307 = vadd.s32 %v283, 192
      %v308 = vadd.s32 %v283, 200
      %v309 = vadd.s32 %v283, 208
      %v310 = vadd.s32 %v283, 216
      %v311 = vadd.s32 %v283, 224
      %v312 = vadd.s32 %v283, 232
      %v313 = vadd.s32 %v283, 240
      %v314 = vadd.s32 %v283, 248
      %v315 = vadd.s32 %v283, 256
      %v316 = vadd.s32 %v283, 264
      %v317 = vadd.s32 %v283, 272
      %v318 = vadd.s32 %v283, 280
      %v319 = vadd.s32 %v283, 288
      %v320 = vadd.s32 %v283, 296
      %vm321 = vcmp.lt.s32.totalorder %v283, 0
      %v322 = vsub.s32 0, %v283
      %v323 = vsel %vm321, %v322, %v283
      %v324 = vmul.u32.u64.compose %v323, 3435973837
      %v325 = vextract.low.u32 %v324
      %v326 = vextract.high.u32 %v324
      %v327 = vshrl.u32 %v326, 4
      %v328 = vmul.u32 %v327, 20
      %v329 = vsub.s32 %v323, %v328
      %v330 = vsub.s32 0, %v329
      %v331 = vsel %vm321, %v330, %v329
      %vm332 = vcmp.lt.s32.totalorder %v284, 0
      %v333 = vsub.s32 0, %v284
      %v334 = vsel %vm332, %v333, %v284
      %v335 = vmul.u32.u64.compose %v334, 3435973837
      %v336 = vextract.low.u32 %v335
      %v337 = vextract.high.u32 %v335
      %v338 = vshrl.u32 %v337, 4
      %v339 = vmul.u32 %v338, 20
      %v340 = vsub.s32 %v334, %v339
      %v341 = vsub.s32 0, %v340
      %v342 = vsel %vm332, %v341, %v340
      %vm343 = vcmp.lt.s32.totalorder %v285, 0
      %v344 = vsub.s32 0, %v285
      %v345 = vsel %vm343, %v344, %v285
      %v346 = vmul.u32.u64.compose %v345, 3435973837
      %v347 = vextract.low.u32 %v346
      %v348 = vextract.high.u32 %v346
      %v349 = vshrl.u32 %v348, 4
      %v350 = vmul.u32 %v349, 20
      %v351 = vsub.s32 %v345, %v350
      %v352 = vsub.s32 0, %v351
      %v353 = vsel %vm343, %v352, %v351
      %vm354 = vcmp.lt.s32.totalorder %v286, 0
      %v355 = vsub.s32 0, %v286
      %v356 = vsel %vm354, %v355, %v286
      %v357 = vmul.u32.u64.compose %v356, 3435973837
      %v358 = vextract.low.u32 %v357
      %v359 = vextract.high.u32 %v357
      %v360 = vshrl.u32 %v359, 4
      %v361 = vmul.u32 %v360, 20
      %v362 = vsub.s32 %v356, %v361
      %v363 = vsub.s32 0, %v362
      %v364 = vsel %vm354, %v363, %v362
      %vm365 = vcmp.lt.s32.totalorder %v287, 0
      %v366 = vsub.s32 0, %v287
      %v367 = vsel %vm365, %v366, %v287
      %v368 = vmul.u32.u64.compose %v367, 3435973837
      %v369 = vextract.low.u32 %v368
      %v370 = vextract.high.u32 %v368
      %v371 = vshrl.u32 %v370, 4
      %v372 = vmul.u32 %v371, 20
      %v373 = vsub.s32 %v367, %v372
      %v374 = vsub.s32 0, %v373
      %v375 = vsel %vm365, %v374, %v373
      %vm376 = vcmp.lt.s32.totalorder %v288, 0
      %v377 = vsub.s32 0, %v288
      %v378 = vsel %vm376, %v377, %v288
      %v379 = vmul.u32.u64.compose %v378, 3435973837
      %v380 = vextract.low.u32 %v379
      %v381 = vextract.high.u32 %v379
      %v382 = vshrl.u32 %v381, 4
      %v383 = vmul.u32 %v382, 20
      %v384 = vsub.s32 %v378, %v383
      %v385 = vsub.s32 0, %v384
      %v386 = vsel %vm376, %v385, %v384
      %vm387 = vcmp.lt.s32.totalorder %v289, 0
      %v388 = vsub.s32 0, %v289
      %v389 = vsel %vm387, %v388, %v289
      %v390 = vmul.u32.u64.compose %v389, 3435973837
      %v391 = vextract.low.u32 %v390
      %v392 = vextract.high.u32 %v390
      %v393 = vshrl.u32 %v392, 4
      %v394 = vmul.u32 %v393, 20
      %v395 = vsub.s32 %v389, %v394
      %v396 = vsub.s32 0, %v395
      %v397 = vsel %vm387, %v396, %v395
      %vm398 = vcmp.lt.s32.totalorder %v290, 0
      %v399 = vsub.s32 0, %v290
      %v400 = vsel %vm398, %v399, %v290
      %v401 = vmul.u32.u64.compose %v400, 3435973837
      %v402 = vextract.low.u32 %v401
      %v403 = vextract.high.u32 %v401
      %v404 = vshrl.u32 %v403, 4
      %v405 = vmul.u32 %v404, 20
      %v406 = vsub.s32 %v400, %v405
      %v407 = vsub.s32 0, %v406
      %v408 = vsel %vm398, %v407, %v406
      %vm409 = vcmp.lt.s32.totalorder %v291, 0
      %v410 = vsub.s32 0, %v291
      %v411 = vsel %vm409, %v410, %v291
      %v412 = vmul.u32.u64.compose %v411, 3435973837
      %v413 = vextract.low.u32 %v412
      %v414 = vextract.high.u32 %v412
      %v415 = vshrl.u32 %v414, 4
      %v416 = vmul.u32 %v415, 20
      %v417 = vsub.s32 %v411, %v416
      %v418 = vsub.s32 0, %v417
      %v419 = vsel %vm409, %v418, %v417
      %vm420 = vcmp.lt.s32.totalorder %v292, 0
      %v421 = vsub.s32 0, %v292
      %v422 = vsel %vm420, %v421, %v292
      %v423 = vmul.u32.u64.compose %v422, 3435973837
      %v424 = vextract.low.u32 %v423
      %v425 = vextract.high.u32 %v423
      %v426 = vshrl.u32 %v425, 4
      %v427 = vmul.u32 %v426, 20
      %v428 = vsub.s32 %v422, %v427
      %v429 = vsub.s32 0, %v428
      %v430 = vsel %vm420, %v429, %v428
      %vm431 = vcmp.lt.s32.totalorder %v293, 0
      %v432 = vsub.s32 0, %v293
      %v433 = vsel %vm431, %v432, %v293
      %v434 = vmul.u32.u64.compose %v433, 3435973837
      %v435 = vextract.low.u32 %v434
      %v436 = vextract.high.u32 %v434
      %v437 = vshrl.u32 %v436, 4
      %v438 = vmul.u32 %v437, 20
      %v439 = vsub.s32 %v433, %v438
      %v440 = vsub.s32 0, %v439
      %v441 = vsel %vm431, %v440, %v439
      %vm442 = vcmp.lt.s32.totalorder %v294, 0
      %v443 = vsub.s32 0, %v294
      %v444 = vsel %vm442, %v443, %v294
      %v445 = vmul.u32.u64.compose %v444, 3435973837
      %v446 = vextract.low.u32 %v445
      %v447 = vextract.high.u32 %v445
      %v448 = vshrl.u32 %v447, 4
      %v449 = vmul.u32 %v448, 20
      %v450 = vsub.s32 %v444, %v449
      %v451 = vsub.s32 0, %v450
      %v452 = vsel %vm442, %v451, %v450
      %vm453 = vcmp.lt.s32.totalorder %v295, 0
      %v454 = vsub.s32 0, %v295
      %v455 = vsel %vm453, %v454, %v295
      %v456 = vmul.u32.u64.compose %v455, 3435973837
      %v457 = vextract.low.u32 %v456
      %v458 = vextract.high.u32 %v456
      %v459 = vshrl.u32 %v458, 4
      %v460 = vmul.u32 %v459, 20
      %v461 = vsub.s32 %v455, %v460
      %v462 = vsub.s32 0, %v461
      %v463 = vsel %vm453, %v462, %v461
      %vm464 = vcmp.lt.s32.totalorder %v296, 0
      %v465 = vsub.s32 0, %v296
      %v466 = vsel %vm464, %v465, %v296
      %v467 = vmul.u32.u64.compose %v466, 3435973837
      %v468 = vextract.low.u32 %v467
      %v469 = vextract.high.u32 %v467
      %v470 = vshrl.u32 %v469, 4
      %v471 = vmul.u32 %v470, 20
      %v472 = vsub.s32 %v466, %v471
      %v473 = vsub.s32 0, %v472
      %v474 = vsel %vm464, %v473, %v472
      %vm475 = vcmp.lt.s32.totalorder %v297, 0
      %v476 = vsub.s32 0, %v297
      %v477 = vsel %vm475, %v476, %v297
      %v478 = vmul.u32.u64.compose %v477, 3435973837
      %v479 = vextract.low.u32 %v478
      %v480 = vextract.high.u32 %v478
      %v481 = vshrl.u32 %v480, 4
      %v482 = vmul.u32 %v481, 20
      %v483 = vsub.s32 %v477, %v482
      %v484 = vsub.s32 0, %v483
      %v485 = vsel %vm475, %v484, %v483
      %vm486 = vcmp.lt.s32.totalorder %v298, 0
      %v487 = vsub.s32 0, %v298
      %v488 = vsel %vm486, %v487, %v298
      %v489 = vmul.u32.u64.compose %v488, 3435973837
      %v490 = vextract.low.u32 %v489
      %v491 = vextract.high.u32 %v489
      %v492 = vshrl.u32 %v491, 4
      %v493 = vmul.u32 %v492, 20
      %v494 = vsub.s32 %v488, %v493
      %v495 = vsub.s32 0, %v494
      %v496 = vsel %vm486, %v495, %v494
      %vm497 = vcmp.lt.s32.totalorder %v299, 0
      %v498 = vsub.s32 0, %v299
      %v499 = vsel %vm497, %v498, %v299
      %v500 = vmul.u32.u64.compose %v499, 3435973837
      %v501 = vextract.low.u32 %v500
      %v502 = vextract.high.u32 %v500
      %v503 = vshrl.u32 %v502, 4
      %v504 = vmul.u32 %v503, 20
      %v505 = vsub.s32 %v499, %v504
      %v506 = vsub.s32 0, %v505
      %v507 = vsel %vm497, %v506, %v505
      %vm508 = vcmp.lt.s32.totalorder %v300, 0
      %v509 = vsub.s32 0, %v300
      %v510 = vsel %vm508, %v509, %v300
      %v511 = vmul.u32.u64.compose %v510, 3435973837
      %v512 = vextract.low.u32 %v511
      %v513 = vextract.high.u32 %v511
      %v514 = vshrl.u32 %v513, 4
      %v515 = vmul.u32 %v514, 20
      %v516 = vsub.s32 %v510, %v515
      %v517 = vsub.s32 0, %v516
      %v518 = vsel %vm508, %v517, %v516
      %vm519 = vcmp.lt.s32.totalorder %v301, 0
      %v520 = vsub.s32 0, %v301
      %v521 = vsel %vm519, %v520, %v301
      %v522 = vmul.u32.u64.compose %v521, 3435973837
      %v523 = vextract.low.u32 %v522
      %v524 = vextract.high.u32 %v522
      %v525 = vshrl.u32 %v524, 4
      %v526 = vmul.u32 %v525, 20
      %v527 = vsub.s32 %v521, %v526
      %v528 = vsub.s32 0, %v527
      %v529 = vsel %vm519, %v528, %v527
      %vm530 = vcmp.lt.s32.totalorder %v302, 0
      %v531 = vsub.s32 0, %v302
      %v532 = vsel %vm530, %v531, %v302
      %v533 = vmul.u32.u64.compose %v532, 3435973837
      %v534 = vextract.low.u32 %v533
      %v535 = vextract.high.u32 %v533
      %v536 = vshrl.u32 %v535, 4
      %v537 = vmul.u32 %v536, 20
      %v538 = vsub.s32 %v532, %v537
      %v539 = vsub.s32 0, %v538
      %v540 = vsel %vm530, %v539, %v538
      %vm541 = vcmp.lt.s32.totalorder %v303, 0
      %v542 = vsub.s32 0, %v303
      %v543 = vsel %vm541, %v542, %v303
      %v544 = vmul.u32.u64.compose %v543, 3435973837
      %v545 = vextract.low.u32 %v544
      %v546 = vextract.high.u32 %v544
      %v547 = vshrl.u32 %v546, 4
      %v548 = vmul.u32 %v547, 20
      %v549 = vsub.s32 %v543, %v548
      %v550 = vsub.s32 0, %v549
      %v551 = vsel %vm541, %v550, %v549
      %vm552 = vcmp.lt.s32.totalorder %v304, 0
      %v553 = vsub.s32 0, %v304
      %v554 = vsel %vm552, %v553, %v304
      %v555 = vmul.u32.u64.compose %v554, 3435973837
      %v556 = vextract.low.u32 %v555
      %v557 = vextract.high.u32 %v555
      %v558 = vshrl.u32 %v557, 4
      %v559 = vmul.u32 %v558, 20
      %v560 = vsub.s32 %v554, %v559
      %v561 = vsub.s32 0, %v560
      %v562 = vsel %vm552, %v561, %v560
      %vm563 = vcmp.lt.s32.totalorder %v305, 0
      %v564 = vsub.s32 0, %v305
      %v565 = vsel %vm563, %v564, %v305
      %v566 = vmul.u32.u64.compose %v565, 3435973837
      %v567 = vextract.low.u32 %v566
      %v568 = vextract.high.u32 %v566
      %v569 = vshrl.u32 %v568, 4
      %v570 = vmul.u32 %v569, 20
      %v571 = vsub.s32 %v565, %v570
      %v572 = vsub.s32 0, %v571
      %v573 = vsel %vm563, %v572, %v571
      %vm574 = vcmp.lt.s32.totalorder %v306, 0
      %v575 = vsub.s32 0, %v306
      %v576 = vsel %vm574, %v575, %v306
      %v577 = vmul.u32.u64.compose %v576, 3435973837
      %v578 = vextract.low.u32 %v577
      %v579 = vextract.high.u32 %v577
      %v580 = vshrl.u32 %v579, 4
      %v581 = vmul.u32 %v580, 20
      %v582 = vsub.s32 %v576, %v581
      %v583 = vsub.s32 0, %v582
      %v584 = vsel %vm574, %v583, %v582
      %vm585 = vcmp.lt.s32.totalorder %v307, 0
      %v586 = vsub.s32 0, %v307
      %v587 = vsel %vm585, %v586, %v307
      %v588 = vmul.u32.u64.compose %v587, 3435973837
      %v589 = vextract.low.u32 %v588
      %v590 = vextract.high.u32 %v588
      %v591 = vshrl.u32 %v590, 4
      %v592 = vmul.u32 %v591, 20
      %v593 = vsub.s32 %v587, %v592
      %v594 = vsub.s32 0, %v593
      %v595 = vsel %vm585, %v594, %v593
      %vm596 = vcmp.lt.s32.totalorder %v308, 0
      %v597 = vsub.s32 0, %v308
      %v598 = vsel %vm596, %v597, %v308
      %v599 = vmul.u32.u64.compose %v598, 3435973837
      %v600 = vextract.low.u32 %v599
      %v601 = vextract.high.u32 %v599
      %v602 = vshrl.u32 %v601, 4
      %v603 = vmul.u32 %v602, 20
      %v604 = vsub.s32 %v598, %v603
      %v605 = vsub.s32 0, %v604
      %v606 = vsel %vm596, %v605, %v604
      %vm607 = vcmp.lt.s32.totalorder %v309, 0
      %v608 = vsub.s32 0, %v309
      %v609 = vsel %vm607, %v608, %v309
      %v610 = vmul.u32.u64.compose %v609, 3435973837
      %v611 = vextract.low.u32 %v610
      %v612 = vextract.high.u32 %v610
      %v613 = vshrl.u32 %v612, 4
      %v614 = vmul.u32 %v613, 20
      %v615 = vsub.s32 %v609, %v614
      %v616 = vsub.s32 0, %v615
      %v617 = vsel %vm607, %v616, %v615
      %vm618 = vcmp.lt.s32.totalorder %v310, 0
      %v619 = vsub.s32 0, %v310
      %v620 = vsel %vm618, %v619, %v310
      %v621 = vmul.u32.u64.compose %v620, 3435973837
      %v622 = vextract.low.u32 %v621
      %v623 = vextract.high.u32 %v621
      %v624 = vshrl.u32 %v623, 4
      %v625 = vmul.u32 %v624, 20
      %v626 = vsub.s32 %v620, %v625
      %v627 = vsub.s32 0, %v626
      %v628 = vsel %vm618, %v627, %v626
      %vm629 = vcmp.lt.s32.totalorder %v311, 0
      %v630 = vsub.s32 0, %v311
      %v631 = vsel %vm629, %v630, %v311
      %v632 = vmul.u32.u64.compose %v631, 3435973837
      %v633 = vextract.low.u32 %v632
      %v634 = vextract.high.u32 %v632
      %v635 = vshrl.u32 %v634, 4
      %v636 = vmul.u32 %v635, 20
      %v637 = vsub.s32 %v631, %v636
      %v638 = vsub.s32 0, %v637
      %v639 = vsel %vm629, %v638, %v637
      %vm640 = vcmp.lt.s32.totalorder %v312, 0
      %v641 = vsub.s32 0, %v312
      %v642 = vsel %vm640, %v641, %v312
      %v643 = vmul.u32.u64.compose %v642, 3435973837
      %v644 = vextract.low.u32 %v643
      %v645 = vextract.high.u32 %v643
      %v646 = vshrl.u32 %v645, 4
      %v647 = vmul.u32 %v646, 20
      %v648 = vsub.s32 %v642, %v647
      %v649 = vsub.s32 0, %v648
      %v650 = vsel %vm640, %v649, %v648
      %vm651 = vcmp.lt.s32.totalorder %v313, 0
      %v652 = vsub.s32 0, %v313
      %v653 = vsel %vm651, %v652, %v313
      %v654 = vmul.u32.u64.compose %v653, 3435973837
      %v655 = vextract.low.u32 %v654
      %v656 = vextract.high.u32 %v654
      %v657 = vshrl.u32 %v656, 4
      %v658 = vmul.u32 %v657, 20
      %v659 = vsub.s32 %v653, %v658
      %v660 = vsub.s32 0, %v659
      %v661 = vsel %vm651, %v660, %v659
      %vm662 = vcmp.lt.s32.totalorder %v314, 0
      %v663 = vsub.s32 0, %v314
      %v664 = vsel %vm662, %v663, %v314
      %v665 = vmul.u32.u64.compose %v664, 3435973837
      %v666 = vextract.low.u32 %v665
      %v667 = vextract.high.u32 %v665
      %v668 = vshrl.u32 %v667, 4
      %v669 = vmul.u32 %v668, 20
      %v670 = vsub.s32 %v664, %v669
      %v671 = vsub.s32 0, %v670
      %v672 = vsel %vm662, %v671, %v670
      %vm673 = vcmp.lt.s32.totalorder %v315, 0
      %v674 = vsub.s32 0, %v315
      %v675 = vsel %vm673, %v674, %v315
      %v676 = vmul.u32.u64.compose %v675, 3435973837
      %v677 = vextract.low.u32 %v676
      %v678 = vextract.high.u32 %v676
      %v679 = vshrl.u32 %v678, 4
      %v680 = vmul.u32 %v679, 20
      %v681 = vsub.s32 %v675, %v680
      %v682 = vsub.s32 0, %v681
      %v683 = vsel %vm673, %v682, %v681
      %vm684 = vcmp.lt.s32.totalorder %v316, 0
      %v685 = vsub.s32 0, %v316
      %v686 = vsel %vm684, %v685, %v316
      %v687 = vmul.u32.u64.compose %v686, 3435973837
      %v688 = vextract.low.u32 %v687
      %v689 = vextract.high.u32 %v687
      %v690 = vshrl.u32 %v689, 4
      %v691 = vmul.u32 %v690, 20
      %v692 = vsub.s32 %v686, %v691
      %v693 = vsub.s32 0, %v692
      %v694 = vsel %vm684, %v693, %v692
      %vm695 = vcmp.lt.s32.totalorder %v317, 0
      %v696 = vsub.s32 0, %v317
      %v697 = vsel %vm695, %v696, %v317
      %v698 = vmul.u32.u64.compose %v697, 3435973837
      %v699 = vextract.low.u32 %v698
      %v700 = vextract.high.u32 %v698
      %v701 = vshrl.u32 %v700, 4
      %v702 = vmul.u32 %v701, 20
      %v703 = vsub.s32 %v697, %v702
      %v704 = vsub.s32 0, %v703
      %v705 = vsel %vm695, %v704, %v703
      %vm706 = vcmp.lt.s32.totalorder %v318, 0
      %v707 = vsub.s32 0, %v318
      %v708 = vsel %vm706, %v707, %v318
      %v709 = vmul.u32.u64.compose %v708, 3435973837
      %v710 = vextract.low.u32 %v709
      %v711 = vextract.high.u32 %v709
      %v712 = vshrl.u32 %v711, 4
      %v713 = vmul.u32 %v712, 20
      %v714 = vsub.s32 %v708, %v713
      %v715 = vsub.s32 0, %v714
      %v716 = vsel %vm706, %v715, %v714
      %vm717 = vcmp.lt.s32.totalorder %v319, 0
      %v718 = vsub.s32 0, %v319
      %v719 = vsel %vm717, %v718, %v319
      %v720 = vmul.u32.u64.compose %v719, 3435973837
      %v721 = vextract.low.u32 %v720
      %v722 = vextract.high.u32 %v720
      %v723 = vshrl.u32 %v722, 4
      %v724 = vmul.u32 %v723, 20
      %v725 = vsub.s32 %v719, %v724
      %v726 = vsub.s32 0, %v725
      %v727 = vsel %vm717, %v726, %v725
      %vm728 = vcmp.lt.s32.totalorder %v320, 0
      %v729 = vsub.s32 0, %v320
      %v730 = vsel %vm728, %v729, %v320
      %v731 = vmul.u32.u64.compose %v730, 3435973837
      %v732 = vextract.low.u32 %v731
      %v733 = vextract.high.u32 %v731
      %v734 = vshrl.u32 %v733, 4
      %v735 = vmul.u32 %v734, 20
      %v736 = vsub.s32 %v730, %v735
      %v737 = vsub.s32 0, %v736
      %v738 = vsel %vm728, %v737, %v736
      %vm739 = vcmp.ne.s32.totalorder %v331, 0
      %vm740 = vcmp.ne.s32.totalorder %v342, 0
      %vm741 = vcmp.ne.s32.totalorder %v353, 0
      %vm742 = vcmp.ne.s32.totalorder %v364, 0
      %vm743 = vcmp.ne.s32.totalorder %v375, 0
      %vm744 = vcmp.ne.s32.totalorder %v386, 0
      %vm745 = vcmp.ne.s32.totalorder %v397, 0
      %vm746 = vcmp.ne.s32.totalorder %v408, 0
      %vm747 = vcmp.ne.s32.totalorder %v419, 0
      %vm748 = vcmp.ne.s32.totalorder %v430, 0
      %vm749 = vcmp.ne.s32.totalorder %v441, 0
      %vm750 = vcmp.ne.s32.totalorder %v452, 0
      %vm751 = vcmp.ne.s32.totalorder %v463, 0
      %vm752 = vcmp.ne.s32.totalorder %v474, 0
      %vm753 = vcmp.ne.s32.totalorder %v485, 0
      %vm754 = vcmp.ne.s32.totalorder %v496, 0
      %vm755 = vcmp.ne.s32.totalorder %v507, 0
      %vm756 = vcmp.ne.s32.totalorder %v518, 0
      %vm757 = vcmp.ne.s32.totalorder %v529, 0
      %vm758 = vcmp.ne.s32.totalorder %v540, 0
      %vm759 = vcmp.ne.s32.totalorder %v551, 0
      %vm760 = vcmp.ne.s32.totalorder %v562, 0
      %vm761 = vcmp.ne.s32.totalorder %v573, 0
      %vm762 = vcmp.ne.s32.totalorder %v584, 0
      %vm763 = vcmp.ne.s32.totalorder %v595, 0
      %vm764 = vcmp.ne.s32.totalorder %v606, 0
      %vm765 = vcmp.ne.s32.totalorder %v617, 0
      %vm766 = vcmp.ne.s32.totalorder %v628, 0
      %vm767 = vcmp.ne.s32.totalorder %v639, 0
      %vm768 = vcmp.ne.s32.totalorder %v650, 0
      %vm769 = vcmp.ne.s32.totalorder %v661, 0
      %vm770 = vcmp.ne.s32.totalorder %v672, 0
      %vm771 = vcmp.ne.s32.totalorder %v683, 0
      %vm772 = vcmp.ne.s32.totalorder %v694, 0
      %vm773 = vcmp.ne.s32.totalorder %v705, 0
      %vm774 = vcmp.ne.s32.totalorder %v716, 0
      %vm775 = vcmp.ne.s32.totalorder %v727, 0
      %vm776 = vcmp.ne.s32.totalorder %v738, 0
      %vm777 = vcmp.lt.s32.totalorder %v331, 0
      %vm778 = vcmp.lt.s32.totalorder %v342, 0
      %vm779 = vcmp.lt.s32.totalorder %v353, 0
      %vm780 = vcmp.lt.s32.totalorder %v364, 0
      %vm781 = vcmp.lt.s32.totalorder %v375, 0
      %vm782 = vcmp.lt.s32.totalorder %v386, 0
      %vm783 = vcmp.lt.s32.totalorder %v397, 0
      %vm784 = vcmp.lt.s32.totalorder %v408, 0
      %vm785 = vcmp.lt.s32.totalorder %v419, 0
      %vm786 = vcmp.lt.s32.totalorder %v430, 0
      %vm787 = vcmp.lt.s32.totalorder %v441, 0
      %vm788 = vcmp.lt.s32.totalorder %v452, 0
      %vm789 = vcmp.lt.s32.totalorder %v463, 0
      %vm790 = vcmp.lt.s32.totalorder %v474, 0
      %vm791 = vcmp.lt.s32.totalorder %v485, 0
      %vm792 = vcmp.lt.s32.totalorder %v496, 0
      %vm793 = vcmp.lt.s32.totalorder %v507, 0
      %vm794 = vcmp.lt.s32.totalorder %v518, 0
      %vm795 = vcmp.lt.s32.totalorder %v529, 0
      %vm796 = vcmp.lt.s32.totalorder %v540, 0
      %vm797 = vcmp.lt.s32.totalorder %v551, 0
      %vm798 = vcmp.lt.s32.totalorder %v562, 0
      %vm799 = vcmp.lt.s32.totalorder %v573, 0
      %vm800 = vcmp.lt.s32.totalorder %v584, 0
      %vm801 = vcmp.lt.s32.totalorder %v595, 0
      %vm802 = vcmp.lt.s32.totalorder %v606, 0
      %vm803 = vcmp.lt.s32.totalorder %v617, 0
      %vm804 = vcmp.lt.s32.totalorder %v628, 0
      %vm805 = vcmp.lt.s32.totalorder %v639, 0
      %vm806 = vcmp.lt.s32.totalorder %v650, 0
      %vm807 = vcmp.lt.s32.totalorder %v661, 0
      %vm808 = vcmp.lt.s32.totalorder %v672, 0
      %vm809 = vcmp.lt.s32.totalorder %v683, 0
      %vm810 = vcmp.lt.s32.totalorder %v694, 0
      %vm811 = vcmp.lt.s32.totalorder %v705, 0
      %vm812 = vcmp.lt.s32.totalorder %v716, 0
      %vm813 = vcmp.lt.s32.totalorder %v727, 0
      %vm814 = vcmp.lt.s32.totalorder %v738, 0
      %vm815 = vmand %vm777, %vm739
      %vm816 = vmand %vm778, %vm740
      %vm817 = vmand %vm779, %vm741
      %vm818 = vmand %vm780, %vm742
      %vm819 = vmand %vm781, %vm743
      %vm820 = vmand %vm782, %vm744
      %vm821 = vmand %vm783, %vm745
      %vm822 = vmand %vm784, %vm746
      %vm823 = vmand %vm785, %vm747
      %vm824 = vmand %vm786, %vm748
      %vm825 = vmand %vm787, %vm749
      %vm826 = vmand %vm788, %vm750
      %vm827 = vmand %vm789, %vm751
      %vm828 = vmand %vm790, %vm752
      %vm829 = vmand %vm791, %vm753
      %vm830 = vmand %vm792, %vm754
      %vm831 = vmand %vm793, %vm755
      %vm832 = vmand %vm794, %vm756
      %vm833 = vmand %vm795, %vm757
      %vm834 = vmand %vm796, %vm758
      %vm835 = vmand %vm797, %vm759
      %vm836 = vmand %vm798, %vm760
      %vm837 = vmand %vm799, %vm761
      %vm838 = vmand %vm800, %vm762
      %vm839 = vmand %vm801, %vm763
      %vm840 = vmand %vm802, %vm764
      %vm841 = vmand %vm803, %vm765
      %vm842 = vmand %vm804, %vm766
      %vm843 = vmand %vm805, %vm767
      %vm844 = vmand %vm806, %vm768
      %vm845 = vmand %vm807, %vm769
      %vm846 = vmand %vm808, %vm770
      %vm847 = vmand %vm809, %vm771
      %vm848 = vmand %vm810, %vm772
      %vm849 = vmand %vm811, %vm773
      %vm850 = vmand %vm812, %vm774
      %vm851 = vmand %vm813, %vm775
      %vm852 = vmand %vm814, %vm776
      %v853 = vadd.s32 %v331, 20
      %v854 = vadd.s32 %v342, 20
      %v855 = vadd.s32 %v353, 20
      %v856 = vadd.s32 %v364, 20
      %v857 = vadd.s32 %v375, 20
      %v858 = vadd.s32 %v386, 20
      %v859 = vadd.s32 %v397, 20
      %v860 = vadd.s32 %v408, 20
      %v861 = vadd.s32 %v419, 20
      %v862 = vadd.s32 %v430, 20
      %v863 = vadd.s32 %v441, 20
      %v864 = vadd.s32 %v452, 20
      %v865 = vadd.s32 %v463, 20
      %v866 = vadd.s32 %v474, 20
      %v867 = vadd.s32 %v485, 20
      %v868 = vadd.s32 %v496, 20
      %v869 = vadd.s32 %v507, 20
      %v870 = vadd.s32 %v518, 20
      %v871 = vadd.s32 %v529, 20
      %v872 = vadd.s32 %v540, 20
      %v873 = vadd.s32 %v551, 20
      %v874 = vadd.s32 %v562, 20
      %v875 = vadd.s32 %v573, 20
      %v876 = vadd.s32 %v584, 20
      %v877 = vadd.s32 %v595, 20
      %v878 = vadd.s32 %v606, 20
      %v879 = vadd.s32 %v617, 20
      %v880 = vadd.s32 %v628, 20
      %v881 = vadd.s32 %v639, 20
      %v882 = vadd.s32 %v650, 20
      %v883 = vadd.s32 %v661, 20
      %v884 = vadd.s32 %v672, 20
      %v885 = vadd.s32 %v683, 20
      %v886 = vadd.s32 %v694, 20
      %v887 = vadd.s32 %v705, 20
      %v888 = vadd.s32 %v716, 20
      %v889 = vadd.s32 %v727, 20
      %v890 = vadd.s32 %v738, 20
      %v891 = vsel %vm815, %v853, %v331
      %v892 = vsel %vm816, %v854, %v342
      %v893 = vsel %vm817, %v855, %v353
      %v894 = vsel %vm818, %v856, %v364
      %v895 = vsel %vm819, %v857, %v375
      %v896 = vsel %vm820, %v858, %v386
      %v897 = vsel %vm821, %v859, %v397
      %v898 = vsel %vm822, %v860, %v408
      %v899 = vsel %vm823, %v861, %v419
      %v900 = vsel %vm824, %v862, %v430
      %v901 = vsel %vm825, %v863, %v441
      %v902 = vsel %vm826, %v864, %v452
      %v903 = vsel %vm827, %v865, %v463
      %v904 = vsel %vm828, %v866, %v474
      %v905 = vsel %vm829, %v867, %v485
      %v906 = vsel %vm830, %v868, %v496
      %v907 = vsel %vm831, %v869, %v507
      %v908 = vsel %vm832, %v870, %v518
      %v909 = vsel %vm833, %v871, %v529
      %v910 = vsel %vm834, %v872, %v540
      %v911 = vsel %vm835, %v873, %v551
      %v912 = vsel %vm836, %v874, %v562
      %v913 = vsel %vm837, %v875, %v573
      %v914 = vsel %vm838, %v876, %v584
      %v915 = vsel %vm839, %v877, %v595
      %v916 = vsel %vm840, %v878, %v606
      %v917 = vsel %vm841, %v879, %v617
      %v918 = vsel %vm842, %v880, %v628
      %v919 = vsel %vm843, %v881, %v639
      %v920 = vsel %vm844, %v882, %v650
      %v921 = vsel %vm845, %v883, %v661
      %v922 = vsel %vm846, %v884, %v672
      %v923 = vsel %vm847, %v885, %v683
      %v924 = vsel %vm848, %v886, %v694
      %v925 = vsel %vm849, %v887, %v705
      %v926 = vsel %vm850, %v888, %v716
      %v927 = vsel %vm851, %v889, %v727
      %v928 = vsel %vm852, %v890, %v738
      %vm929 = vcmp.ne.s32.totalorder %v891, 0
      %vm930 = vcmp.ne.s32.totalorder %v892, 0
      %vm931 = vcmp.ne.s32.totalorder %v893, 0
      %vm932 = vcmp.ne.s32.totalorder %v894, 0
      %vm933 = vcmp.ne.s32.totalorder %v895, 0
      %vm934 = vcmp.ne.s32.totalorder %v896, 0
      %vm935 = vcmp.ne.s32.totalorder %v897, 0
      %vm936 = vcmp.ne.s32.totalorder %v898, 0
      %vm937 = vcmp.ne.s32.totalorder %v899, 0
      %vm938 = vcmp.ne.s32.totalorder %v900, 0
      %vm939 = vcmp.ne.s32.totalorder %v901, 0
      %vm940 = vcmp.ne.s32.totalorder %v902, 0
      %vm941 = vcmp.ne.s32.totalorder %v903, 0
      %vm942 = vcmp.ne.s32.totalorder %v904, 0
      %vm943 = vcmp.ne.s32.totalorder %v905, 0
      %vm944 = vcmp.ne.s32.totalorder %v906, 0
      %vm945 = vcmp.ne.s32.totalorder %v907, 0
      %vm946 = vcmp.ne.s32.totalorder %v908, 0
      %vm947 = vcmp.ne.s32.totalorder %v909, 0
      %vm948 = vcmp.ne.s32.totalorder %v910, 0
      %vm949 = vcmp.ne.s32.totalorder %v911, 0
      %vm950 = vcmp.ne.s32.totalorder %v912, 0
      %vm951 = vcmp.ne.s32.totalorder %v913, 0
      %vm952 = vcmp.ne.s32.totalorder %v914, 0
      %vm953 = vcmp.ne.s32.totalorder %v915, 0
      %vm954 = vcmp.ne.s32.totalorder %v916, 0
      %vm955 = vcmp.ne.s32.totalorder %v917, 0
      %vm956 = vcmp.ne.s32.totalorder %v918, 0
      %vm957 = vcmp.ne.s32.totalorder %v919, 0
      %vm958 = vcmp.ne.s32.totalorder %v920, 0
      %vm959 = vcmp.ne.s32.totalorder %v921, 0
      %vm960 = vcmp.ne.s32.totalorder %v922, 0
      %vm961 = vcmp.ne.s32.totalorder %v923, 0
      %vm962 = vcmp.ne.s32.totalorder %v924, 0
      %vm963 = vcmp.ne.s32.totalorder %v925, 0
      %vm964 = vcmp.ne.s32.totalorder %v926, 0
      %vm965 = vcmp.ne.s32.totalorder %v927, 0
      %vm966 = vcmp.ne.s32.totalorder %v928, 0
      %vm967 = vcmp.ne.s32.totalorder %v891, 19
      %vm968 = vcmp.ne.s32.totalorder %v892, 19
      %vm969 = vcmp.ne.s32.totalorder %v893, 19
      %vm970 = vcmp.ne.s32.totalorder %v894, 19
      %vm971 = vcmp.ne.s32.totalorder %v895, 19
      %vm972 = vcmp.ne.s32.totalorder %v896, 19
      %vm973 = vcmp.ne.s32.totalorder %v897, 19
      %vm974 = vcmp.ne.s32.totalorder %v898, 19
      %vm975 = vcmp.ne.s32.totalorder %v899, 19
      %vm976 = vcmp.ne.s32.totalorder %v900, 19
      %vm977 = vcmp.ne.s32.totalorder %v901, 19
      %vm978 = vcmp.ne.s32.totalorder %v902, 19
      %vm979 = vcmp.ne.s32.totalorder %v903, 19
      %vm980 = vcmp.ne.s32.totalorder %v904, 19
      %vm981 = vcmp.ne.s32.totalorder %v905, 19
      %vm982 = vcmp.ne.s32.totalorder %v906, 19
      %vm983 = vcmp.ne.s32.totalorder %v907, 19
      %vm984 = vcmp.ne.s32.totalorder %v908, 19
      %vm985 = vcmp.ne.s32.totalorder %v909, 19
      %vm986 = vcmp.ne.s32.totalorder %v910, 19
      %vm987 = vcmp.ne.s32.totalorder %v911, 19
      %vm988 = vcmp.ne.s32.totalorder %v912, 19
      %vm989 = vcmp.ne.s32.totalorder %v913, 19
      %vm990 = vcmp.ne.s32.totalorder %v914, 19
      %vm991 = vcmp.ne.s32.totalorder %v915, 19
      %vm992 = vcmp.ne.s32.totalorder %v916, 19
      %vm993 = vcmp.ne.s32.totalorder %v917, 19
      %vm994 = vcmp.ne.s32.totalorder %v918, 19
      %vm995 = vcmp.ne.s32.totalorder %v919, 19
      %vm996 = vcmp.ne.s32.totalorder %v920, 19
      %vm997 = vcmp.ne.s32.totalorder %v921, 19
      %vm998 = vcmp.ne.s32.totalorder %v922, 19
      %vm999 = vcmp.ne.s32.totalorder %v923, 19
      %vm1000 = vcmp.ne.s32.totalorder %v924, 19
      %vm1001 = vcmp.ne.s32.totalorder %v925, 19
      %vm1002 = vcmp.ne.s32.totalorder %v926, 19
      %vm1003 = vcmp.ne.s32.totalorder %v927, 19
      %vm1004 = vcmp.ne.s32.totalorder %v928, 19
      %v1005 = vld [vmem:[%s273] sm:$0xf]
      %v1006 = vld [vmem:[%s273 + $0x4] sm:$0xf]
      %v1007 = vld [vmem:[%s273 + $0x8] sm:$0xf]
      %v1008 = vld [vmem:[%s273 + $0xc] sm:$0xf]
      %v1009 = vld [vmem:[%s273 + $0x10] sm:$0xf]
      %v1010 = vld [vmem:[%s273 + $0x14] sm:$0xf]
      %v1011 = vld [vmem:[%s273 + $0x18] sm:$0xf]
      %v1012 = vld [vmem:[%s273 + $0x1c] sm:$0xf]
      %v1013 = vld [vmem:[%s273 + $0x20] sm:$0xf]
      %v1014 = vld [vmem:[%s273 + $0x24] sm:$0xf]
      %v1015 = vld [vmem:[%s273 + $0x28] sm:$0xf]
      %v1016 = vld [vmem:[%s273 + $0x2c] sm:$0xf]
      %v1017 = vld [vmem:[%s273 + $0x30] sm:$0xf]
      %v1018 = vld [vmem:[%s273 + $0x34] sm:$0xf]
      %v1019 = vld [vmem:[%s273 + $0x38] sm:$0xf]
      %v1020 = vld [vmem:[%s273 + $0x3c] sm:$0xf]
      %v1021 = vld [vmem:[%s273 + $0x40] sm:$0xf]
      %v1022 = vld [vmem:[%s273 + $0x44] sm:$0xf]
      %v1023 = vld [vmem:[%s273 + $0x48] sm:$0xf]
      %v1024 = vld [vmem:[%s273 + $0x4c] sm:$0xf]
      %v1025 = vld [vmem:[%s273 + $0x50] sm:$0xf]
      %v1026 = vld [vmem:[%s273 + $0x54] sm:$0xf]
      %v1027 = vld [vmem:[%s273 + $0x58] sm:$0xf]
      %v1028 = vld [vmem:[%s273 + $0x5c] sm:$0xf]
      %v1029 = vld [vmem:[%s273 + $0x60] sm:$0xf]
      %v1030 = vld [vmem:[%s273 + $0x64] sm:$0xf]
      %v1031 = vld [vmem:[%s273 + $0x68] sm:$0xf]
      %v1032 = vld [vmem:[%s273 + $0x6c] sm:$0xf]
      %v1033 = vld [vmem:[%s273 + $0x70] sm:$0xf]
      %v1034 = vld [vmem:[%s273 + $0x74] sm:$0xf]
      %v1035 = vld [vmem:[%s273 + $0x78] sm:$0xf]
      %v1036 = vld [vmem:[%s273 + $0x7c] sm:$0xf]
      %v1037 = vld [vmem:[%s273 + $0x80] sm:$0xf]
      %v1038 = vld [vmem:[%s273 + $0x84] sm:$0xf]
      %v1039 = vld [vmem:[%s273 + $0x88] sm:$0xf]
      %v1040 = vld [vmem:[%s273 + $0x8c] sm:$0xf]
      %v1041 = vld [vmem:[%s273 + $0x90] sm:$0xf]
      %v1042 = vld [vmem:[%s273 + $0x94] sm:$0x3]
      %v1043 = vsel %vm929, 1, 0
      %v1044 = vsel %vm930, 1, 0
      %v1045 = vsel %vm931, 1, 0
      %v1046 = vsel %vm932, 1, 0
      %v1047 = vsel %vm933, 1, 0
      %v1048 = vsel %vm934, 1, 0
      %v1049 = vsel %vm935, 1, 0
      %v1050 = vsel %vm936, 1, 0
      %v1051 = vsel %vm937, 1, 0
      %v1052 = vsel %vm938, 1, 0
      %v1053 = vsel %vm939, 1, 0
      %v1054 = vsel %vm940, 1, 0
      %v1055 = vsel %vm941, 1, 0
      %v1056 = vsel %vm942, 1, 0
      %v1057 = vsel %vm943, 1, 0
      %v1058 = vsel %vm944, 1, 0
      %v1059 = vsel %vm945, 1, 0
      %v1060 = vsel %vm946, 1, 0
      %v1061 = vsel %vm947, 1, 0
      %v1062 = vsel %vm948, 1, 0
      %v1063 = vsel %vm949, 1, 0
      %v1064 = vsel %vm950, 1, 0
      %v1065 = vsel %vm951, 1, 0
      %v1066 = vsel %vm952, 1, 0
      %v1067 = vsel %vm953, 1, 0
      %v1068 = vsel %vm954, 1, 0
      %v1069 = vsel %vm955, 1, 0
      %v1070 = vsel %vm956, 1, 0
      %v1071 = vsel %vm957, 1, 0
      %v1072 = vsel %vm958, 1, 0
      %v1073 = vsel %vm959, 1, 0
      %v1074 = vsel %vm960, 1, 0
      %v1075 = vsel %vm961, 1, 0
      %v1076 = vsel %vm962, 1, 0
      %v1077 = vsel %vm963, 1, 0
      %v1078 = vsel %vm964, 1, 0
      %v1079 = vsel %vm965, 1, 0
      %v1080 = vsel %vm966, 1, 0
      %vm1081 = vcmp.eq.s32.totalorder %v1043, 1
      %vm1082 = vcmp.eq.s32.totalorder %v1044, 1
      %vm1083 = vcmp.eq.s32.totalorder %v1045, 1
      %vm1084 = vcmp.eq.s32.totalorder %v1046, 1
      %vm1085 = vcmp.eq.s32.totalorder %v1047, 1
      %vm1086 = vcmp.eq.s32.totalorder %v1048, 1
      %vm1087 = vcmp.eq.s32.totalorder %v1049, 1
      %vm1088 = vcmp.eq.s32.totalorder %v1050, 1
      %vm1089 = vcmp.eq.s32.totalorder %v1051, 1
      %vm1090 = vcmp.eq.s32.totalorder %v1052, 1
      %vm1091 = vcmp.eq.s32.totalorder %v1053, 1
      %vm1092 = vcmp.eq.s32.totalorder %v1054, 1
      %vm1093 = vcmp.eq.s32.totalorder %v1055, 1
      %vm1094 = vcmp.eq.s32.totalorder %v1056, 1
      %vm1095 = vcmp.eq.s32.totalorder %v1057, 1
      %vm1096 = vcmp.eq.s32.totalorder %v1058, 1
      %vm1097 = vcmp.eq.s32.totalorder %v1059, 1
      %vm1098 = vcmp.eq.s32.totalorder %v1060, 1
      %vm1099 = vcmp.eq.s32.totalorder %v1061, 1
      %vm1100 = vcmp.eq.s32.totalorder %v1062, 1
      %vm1101 = vcmp.eq.s32.totalorder %v1063, 1
      %vm1102 = vcmp.eq.s32.totalorder %v1064, 1
      %vm1103 = vcmp.eq.s32.totalorder %v1065, 1
      %vm1104 = vcmp.eq.s32.totalorder %v1066, 1
      %vm1105 = vcmp.eq.s32.totalorder %v1067, 1
      %vm1106 = vcmp.eq.s32.totalorder %v1068, 1
      %vm1107 = vcmp.eq.s32.totalorder %v1069, 1
      %vm1108 = vcmp.eq.s32.totalorder %v1070, 1
      %vm1109 = vcmp.eq.s32.totalorder %v1071, 1
      %vm1110 = vcmp.eq.s32.totalorder %v1072, 1
      %vm1111 = vcmp.eq.s32.totalorder %v1073, 1
      %vm1112 = vcmp.eq.s32.totalorder %v1074, 1
      %vm1113 = vcmp.eq.s32.totalorder %v1075, 1
      %vm1114 = vcmp.eq.s32.totalorder %v1076, 1
      %vm1115 = vcmp.eq.s32.totalorder %v1077, 1
      %vm1116 = vcmp.eq.s32.totalorder %v1078, 1
      %vm1117 = vcmp.eq.s32.totalorder %v1079, 1
      %vm1118 = vcmp.eq.s32.totalorder %v1080, 1
      %vm1119 = vmpackc.low %vm1081, %vm1081
      %vm1120 = vmpackc.low %vm1082, %vm1082
      %vm1121 = vmpackc.low %vm1083, %vm1083
      %vm1122 = vmpackc.low %vm1084, %vm1084
      %vm1123 = vmpackc.low %vm1085, %vm1085
      %vm1124 = vmpackc.low %vm1086, %vm1086
      %vm1125 = vmpackc.low %vm1087, %vm1087
      %vm1126 = vmpackc.low %vm1088, %vm1088
      %vm1127 = vmpackc.low %vm1089, %vm1089
      %vm1128 = vmpackc.low %vm1090, %vm1090
      %vm1129 = vmpackc.low %vm1091, %vm1091
      %vm1130 = vmpackc.low %vm1092, %vm1092
      %vm1131 = vmpackc.low %vm1093, %vm1093
      %vm1132 = vmpackc.low %vm1094, %vm1094
      %vm1133 = vmpackc.low %vm1095, %vm1095
      %vm1134 = vmpackc.low %vm1096, %vm1096
      %vm1135 = vmpackc.low %vm1097, %vm1097
      %vm1136 = vmpackc.low %vm1098, %vm1098
      %vm1137 = vmpackc.low %vm1099, %vm1099
      %vm1138 = vmpackc.low %vm1100, %vm1100
      %vm1139 = vmpackc.low %vm1101, %vm1101
      %vm1140 = vmpackc.low %vm1102, %vm1102
      %vm1141 = vmpackc.low %vm1103, %vm1103
      %vm1142 = vmpackc.low %vm1104, %vm1104
      %vm1143 = vmpackc.low %vm1105, %vm1105
      %vm1144 = vmpackc.low %vm1106, %vm1106
      %vm1145 = vmpackc.low %vm1107, %vm1107
      %vm1146 = vmpackc.low %vm1108, %vm1108
      %vm1147 = vmpackc.low %vm1109, %vm1109
      %vm1148 = vmpackc.low %vm1110, %vm1110
      %vm1149 = vmpackc.low %vm1111, %vm1111
      %vm1150 = vmpackc.low %vm1112, %vm1112
      %vm1151 = vmpackc.low %vm1113, %vm1113
      %vm1152 = vmpackc.low %vm1114, %vm1114
      %vm1153 = vmpackc.low %vm1115, %vm1115
      %vm1154 = vmpackc.low %vm1116, %vm1116
      %vm1155 = vmpackc.low %vm1117, %vm1117
      %vm1156 = vmpackc.low %vm1118, %vm1118
      %v1157 = vsel %vm1119, %v1005, 0
      %v1158 = vsel %vm1120, %v1006, 0
      %v1159 = vsel %vm1121, %v1007, 0
      %v1160 = vsel %vm1122, %v1008, 0
      %v1161 = vsel %vm1123, %v1009, 0
      %v1162 = vsel %vm1124, %v1010, 0
      %v1163 = vsel %vm1125, %v1011, 0
      %v1164 = vsel %vm1126, %v1012, 0
      %v1165 = vsel %vm1127, %v1013, 0
      %v1166 = vsel %vm1128, %v1014, 0
      %v1167 = vsel %vm1129, %v1015, 0
      %v1168 = vsel %vm1130, %v1016, 0
      %v1169 = vsel %vm1131, %v1017, 0
      %v1170 = vsel %vm1132, %v1018, 0
      %v1171 = vsel %vm1133, %v1019, 0
      %v1172 = vsel %vm1134, %v1020, 0
      %v1173 = vsel %vm1135, %v1021, 0
      %v1174 = vsel %vm1136, %v1022, 0
      %v1175 = vsel %vm1137, %v1023, 0
      %v1176 = vsel %vm1138, %v1024, 0
      %v1177 = vsel %vm1139, %v1025, 0
      %v1178 = vsel %vm1140, %v1026, 0
      %v1179 = vsel %vm1141, %v1027, 0
      %v1180 = vsel %vm1142, %v1028, 0
      %v1181 = vsel %vm1143, %v1029, 0
      %v1182 = vsel %vm1144, %v1030, 0
      %v1183 = vsel %vm1145, %v1031, 0
      %v1184 = vsel %vm1146, %v1032, 0
      %v1185 = vsel %vm1147, %v1033, 0
      %v1186 = vsel %vm1148, %v1034, 0
      %v1187 = vsel %vm1149, %v1035, 0
      %v1188 = vsel %vm1150, %v1036, 0
      %v1189 = vsel %vm1151, %v1037, 0
      %v1190 = vsel %vm1152, %v1038, 0
      %v1191 = vsel %vm1153, %v1039, 0
      %v1192 = vsel %vm1154, %v1040, 0
      %v1193 = vsel %vm1155, %v1041, 0
      %v1194 = vsel %vm1156, %v1042, 0
      %v1195 = vld [vmem:[%s1] sm:$0xf]
      %v1196 = vld [vmem:[%s1 + $0x4] sm:$0xf]
      %v1197 = vld [vmem:[%s1 + $0x8] sm:$0xf]
      %v1198 = vld [vmem:[%s1 + $0xc] sm:$0xf]
      %v1199 = vld [vmem:[%s1 + $0x10] sm:$0xf]
      %v1200 = vld [vmem:[%s1 + $0x14] sm:$0xf]
      %v1201 = vld [vmem:[%s1 + $0x18] sm:$0xf]
      %v1202 = vld [vmem:[%s1 + $0x1c] sm:$0xf]
      %v1203 = vld [vmem:[%s273 + $0x94] sm:$0x7]
      %s1204 = scalar_lea.vmem %s1, 32
      %v1205 = vld [vmem:[%s1204] sm:$0xf]
      %v1206 = vld [vmem:[%s1204 + $0x4] sm:$0xf]
      %v1207 = vld [vmem:[%s1204 + $0x8] sm:$0xf]
      %v1208 = vld [vmem:[%s1204 + $0xc] sm:$0xf]
      %v1209 = vld [vmem:[%s1204 + $0x10] sm:$0xf]
      %v1210 = vld [vmem:[%s1204 + $0x14] sm:$0xf]
      %v1211 = vld [vmem:[%s1204 + $0x18] sm:$0xf]
      %v1212 = vld [vmem:[%s1204 + $0x1c] sm:$0xf]
      %v1251 = vunpack.c.l.b16 %v1005
      %v1252 = vunpack.c.l.b16 %v1006
      %v1253 = vunpack.c.l.b16 %v1007
      %v1254 = vunpack.c.l.b16 %v1008
      %v1255 = vunpack.c.l.b16 %v1009
      %v1256 = vunpack.c.l.b16 %v1010
      %v1257 = vunpack.c.l.b16 %v1011
      %v1258 = vunpack.c.l.b16 %v1012
      %v1259 = vunpack.c.l.b16 %v1013
      %v1260 = vunpack.c.l.b16 %v1014
      %v1261 = vunpack.c.l.b16 %v1015
      %v1262 = vunpack.c.l.b16 %v1016
      %v1263 = vunpack.c.l.b16 %v1017
      %v1264 = vunpack.c.l.b16 %v1018
      %v1265 = vunpack.c.l.b16 %v1019
      %v1266 = vunpack.c.l.b16 %v1020
      %v1267 = vunpack.c.l.b16 %v1021
      %v1268 = vunpack.c.l.b16 %v1022
      %v1269 = vunpack.c.l.b16 %v1023
      %v1270 = vunpack.c.l.b16 %v1024
      %v1271 = vunpack.c.l.b16 %v1025
      %v1272 = vunpack.c.l.b16 %v1026
      %v1273 = vunpack.c.l.b16 %v1027
      %v1274 = vunpack.c.l.b16 %v1028
      %v1275 = vunpack.c.l.b16 %v1029
      %v1276 = vunpack.c.l.b16 %v1030
      %v1277 = vunpack.c.l.b16 %v1031
      %v1278 = vunpack.c.l.b16 %v1032
      %v1279 = vunpack.c.l.b16 %v1033
      %v1280 = vunpack.c.l.b16 %v1034
      %v1281 = vunpack.c.l.b16 %v1035
      %v1282 = vunpack.c.l.b16 %v1036
      %v1283 = vunpack.c.l.b16 %v1037
      %v1284 = vunpack.c.l.b16 %v1038
      %v1285 = vunpack.c.l.b16 %v1039
      %v1286 = vunpack.c.l.b16 %v1040
      %v1287 = vunpack.c.l.b16 %v1041
      %v1288 = vunpack.c.l.b16 %v1203
      %v1289 = vpack.c.b16 %v1252, %v1251
      %v1290 = vpack.c.b16 %v1254, %v1253
      %v1291 = vpack.c.b16 %v1256, %v1255
      %v1292 = vpack.c.b16 %v1258, %v1257
      %v1293 = vpack.c.b16 %v1260, %v1259
      %v1294 = vpack.c.b16 %v1262, %v1261
      %v1295 = vpack.c.b16 %v1264, %v1263
      %v1296 = vpack.c.b16 %v1266, %v1265
      %v1297 = vpack.c.b16 %v1268, %v1267
      %v1298 = vpack.c.b16 %v1270, %v1269
      %v1299 = vpack.c.b16 %v1272, %v1271
      %v1300 = vpack.c.b16 %v1274, %v1273
      %v1301 = vpack.c.b16 %v1276, %v1275
      %v1302 = vpack.c.b16 %v1278, %v1277
      %v1303 = vpack.c.b16 %v1280, %v1279
      %v1304 = vpack.c.b16 %v1282, %v1281
      %v1305 = vpack.c.b16 %v1284, %v1283
      %v1306 = vpack.c.b16 %v1286, %v1285
      %v1307 = vpack.c.b16 %v1288, %v1287
      %vm1308 = vsmask.f32 7424
      %v1310 = vshrl.u32 %v1289, 16
      %v1312 = vshll.u32 %v1289, 16
      %v1314 = vrot.slane %v1312, 1
      %v1315 = vor.u32 %v1310, %v1314
      %v1317 = vshll.u32 %v1290, 16
      %v1319 = vrot.slane %v1317, 1
      %v1320 = vsel %vm1308, %v1315, %v1319
      %v1321 = vshrl.u32 %v1290, 16
      %v1323 = vor.u32 %v1321, %v1319
      %v1325 = vshll.u32 %v1291, 16
      %v1327 = vrot.slane %v1325, 1
      %v1328 = vsel %vm1308, %v1323, %v1327
      %v1329 = vshrl.u32 %v1291, 16
      %v1331 = vor.u32 %v1329, %v1327
      %v1333 = vshll.u32 %v1292, 16
      %v1335 = vrot.slane %v1333, 1
      %v1336 = vsel %vm1308, %v1331, %v1335
      %v1337 = vshrl.u32 %v1292, 16
      %v1339 = vor.u32 %v1337, %v1335
      %v1341 = vshll.u32 %v1293, 16
      %v1343 = vrot.slane %v1341, 1
      %v1344 = vsel %vm1308, %v1339, %v1343
      %v1345 = vshrl.u32 %v1293, 16
      %v1347 = vor.u32 %v1345, %v1343
      %v1349 = vshll.u32 %v1294, 16
      %v1351 = vrot.slane %v1349, 1
      %v1352 = vsel %vm1308, %v1347, %v1351
      %v1353 = vshrl.u32 %v1294, 16
      %v1355 = vor.u32 %v1353, %v1351
      %v1357 = vshll.u32 %v1295, 16
      %v1359 = vrot.slane %v1357, 1
      %v1360 = vsel %vm1308, %v1355, %v1359
      %v1361 = vshrl.u32 %v1295, 16
      %v1363 = vor.u32 %v1361, %v1359
      %v1365 = vshll.u32 %v1296, 16
      %v1367 = vrot.slane %v1365, 1
      %v1368 = vsel %vm1308, %v1363, %v1367
      %v1369 = vshrl.u32 %v1296, 16
      %v1371 = vor.u32 %v1369, %v1367
      %v1373 = vshll.u32 %v1297, 16
      %v1375 = vrot.slane %v1373, 1
      %v1376 = vsel %vm1308, %v1371, %v1375
      %v1377 = vshrl.u32 %v1297, 16
      %v1379 = vor.u32 %v1377, %v1375
      %v1381 = vshll.u32 %v1298, 16
      %v1383 = vrot.slane %v1381, 1
      %v1384 = vsel %vm1308, %v1379, %v1383
      %v1385 = vshrl.u32 %v1298, 16
      %v1387 = vor.u32 %v1385, %v1383
      %v1389 = vshll.u32 %v1299, 16
      %v1391 = vrot.slane %v1389, 1
      %v1392 = vsel %vm1308, %v1387, %v1391
      %v1393 = vshrl.u32 %v1299, 16
      %v1395 = vor.u32 %v1393, %v1391
      %v1397 = vshll.u32 %v1300, 16
      %v1399 = vrot.slane %v1397, 1
      %v1400 = vsel %vm1308, %v1395, %v1399
      %v1401 = vshrl.u32 %v1300, 16
      %v1403 = vor.u32 %v1401, %v1399
      %v1405 = vshll.u32 %v1301, 16
      %v1407 = vrot.slane %v1405, 1
      %v1408 = vsel %vm1308, %v1403, %v1407
      %v1409 = vshrl.u32 %v1301, 16
      %v1411 = vor.u32 %v1409, %v1407
      %v1413 = vshll.u32 %v1302, 16
      %v1415 = vrot.slane %v1413, 1
      %v1416 = vsel %vm1308, %v1411, %v1415
      %v1417 = vshrl.u32 %v1302, 16
      %v1419 = vor.u32 %v1417, %v1415
      %v1421 = vshll.u32 %v1303, 16
      %v1423 = vrot.slane %v1421, 1
      %v1424 = vsel %vm1308, %v1419, %v1423
      %v1425 = vshrl.u32 %v1303, 16
      %v1427 = vor.u32 %v1425, %v1423
      %v1429 = vshll.u32 %v1304, 16
      %v1431 = vrot.slane %v1429, 1
      %v1432 = vsel %vm1308, %v1427, %v1431
      %v1433 = vshrl.u32 %v1304, 16
      %v1435 = vor.u32 %v1433, %v1431
      %v1437 = vshll.u32 %v1305, 16
      %v1439 = vrot.slane %v1437, 1
      %v1440 = vsel %vm1308, %v1435, %v1439
      %v1441 = vshrl.u32 %v1305, 16
      %v1443 = vor.u32 %v1441, %v1439
      %v1445 = vshll.u32 %v1306, 16
      %v1447 = vrot.slane %v1445, 1
      %v1448 = vsel %vm1308, %v1443, %v1447
      %v1449 = vshrl.u32 %v1306, 16
      %v1451 = vor.u32 %v1449, %v1447
      %v1453 = vshll.u32 %v1307, 16
      %v1455 = vrot.slane %v1453, 1
      %v1456 = vsel %vm1308, %v1451, %v1455
      %v1457 = vshrl.u32 %v1307, 16
      %v1459 = vor.u32 %v1457, %v1455
      %v1468 = vunpack.c.l.b16 %v1205
      %v1469 = vunpack.c.l.b16 %v1206
      %v1470 = vunpack.c.l.b16 %v1207
      %v1471 = vunpack.c.l.b16 %v1208
      %v1472 = vunpack.c.l.b16 %v1209
      %v1473 = vunpack.c.l.b16 %v1210
      %v1474 = vunpack.c.l.b16 %v1211
      %v1475 = vunpack.c.l.b16 %v1212
      %v1476 = vpack.c.b16 %v1469, %v1468
      %v1477 = vpack.c.b16 %v1471, %v1470
      %v1478 = vpack.c.b16 %v1473, %v1472
      %v1479 = vpack.c.b16 %v1475, %v1474
      %vm1484 = vcmask 523264
      %v1486 = vsel %vm1484, %v1320, 0
      %v1489 = vsel %vm1484, %v1328, 0
      %v1492 = vsel %vm1484, %v1336, 0
      %v1495 = vsel %vm1484, %v1344, 0
      %v1498 = vsel %vm1484, %v1352, 0
      %v1501 = vsel %vm1484, %v1360, 0
      %v1504 = vsel %vm1484, %v1368, 0
      %v1507 = vsel %vm1484, %v1376, 0
      %v1510 = vsel %vm1484, %v1384, 0
      %v1513 = vsel %vm1484, %v1392, 0
      %v1516 = vsel %vm1484, %v1400, 0
      %v1519 = vsel %vm1484, %v1408, 0
      %v1522 = vsel %vm1484, %v1416, 0
      %v1525 = vsel %vm1484, %v1424, 0
      %v1528 = vsel %vm1484, %v1432, 0
      %v1531 = vsel %vm1484, %v1440, 0
      %v1534 = vsel %vm1484, %v1448, 0
      %v1537 = vsel %vm1484, %v1456, 0
      %v1540 = vsel %vm1484, %v1459, 0
      %1542 = vmatprep.subr.bf16.mxu0 0
      %1543 = vmatpush1.bf16.msra.mxu0 %v1476
      %1544 = vmatprep.subr.bf16.mxu0 0
      %1545 = vmatpush1.bf16.msra.mxu0 %v1477
      %1546 = vmatprep.subr.bf16.mxu0 0
      %1547 = vmatpush1.bf16.msra.mxu0 %v1478
      %1548 = vmatprep.subr.bf16.mxu0 0
      %1549 = vmatpush1.bf16.msra.mxu0 %v1479
      %1550 = vmatprep.subr.bf16.mxu0 0
      %1551 = vmatpush1.bf16.msra.mxu0 0
      %1552 = vmatprep.subr.bf16.mxu0 0
      %1553 = vmatpush1.bf16.msra.mxu0 0
      %1554 = vmatprep.subr.bf16.mxu0 0
      %1555 = vmatpush1.bf16.msra.mxu0 0
      %1556 = vmatprep.subr.bf16.mxu0 0
      %1557 = vmatpush1.bf16.msra.mxu0 0
      %1558 = vmatprep.subr.bf16.mxu0 0
      %1559 = vmatpush1.bf16.msra.mxu0 0
      %1560 = vmatprep.subr.bf16.mxu0 0
      %1561 = vmatpush1.bf16.msra.mxu0 0
      %1562 = vmatprep.subr.bf16.mxu0 0
      %1563 = vmatpush1.bf16.msra.mxu0 0
      %1564 = vmatprep.subr.bf16.mxu0 0
      %1565 = vmatpush1.bf16.msra.mxu0 0
      %1566 = vmatprep.subr.bf16.mxu0 0
      %1567 = vmatpush1.bf16.msra.mxu0 0
      %1568 = vmatprep.subr.bf16.mxu0 0
      %1569 = vmatpush1.bf16.msra.mxu0 0
      %1570 = vmatprep.subr.bf16.mxu0 0
      %1571 = vmatpush1.bf16.msra.mxu0 0
      %1572 = vmatprep.subr.bf16.mxu0 0
      %1573 = vmatpush1.bf16.msra.mxu0 0
      %1574 = vmatprep.mubr.bf16.mxu0 0
      %1575 = vmatmul.mubr.bf16.gmra.mrb[0].mxu0 %v1486
      %v1576 = vpop.f32.mrb[0].mxu0
      %v1577 = vadd.f32 0.0, %v1576
      %v1578 = vpop.f32.mrb[0].mxu0
      %v1579 = vpop.f32.mrb[0].mxu0
      %v1580 = vadd.f32 0.0, %v1579
      %v1581 = vpop.f32.mrb[0].mxu0
      %1582 = vmatprep.mubr.bf16.mxu0 0
      %1583 = vmatmul.mubr.bf16.gmra.mrb[0].mxu0 %v1489
      %v1584 = vpop.f32.mrb[0].mxu0
      %v1585 = vadd.f32 0.0, %v1584
      %v1586 = vpop.f32.mrb[0].mxu0
      %v1587 = vpop.f32.mrb[0].mxu0
      %v1588 = vadd.f32 0.0, %v1587
      %v1589 = vpop.f32.mrb[0].mxu0
      %1590 = vmatprep.mubr.bf16.mxu0 0
      %1591 = vmatmul.mubr.bf16.gmra.mrb[0].mxu0 %v1492
      %v1592 = vpop.f32.mrb[0].mxu0
      %v1593 = vadd.f32 0.0, %v1592
      %v1594 = vpop.f32.mrb[0].mxu0
      %v1595 = vpop.f32.mrb[0].mxu0
      %v1596 = vadd.f32 0.0, %v1595
      %v1597 = vpop.f32.mrb[0].mxu0
      %1598 = vmatprep.mubr.bf16.mxu0 0
      %1599 = vmatmul.mubr.bf16.gmra.mrb[0].mxu0 %v1495
      %v1600 = vpop.f32.mrb[0].mxu0
      %v1601 = vadd.f32 0.0, %v1600
      %v1602 = vpop.f32.mrb[0].mxu0
      %v1603 = vpop.f32.mrb[0].mxu0
      %v1604 = vadd.f32 0.0, %v1603
      %v1605 = vpop.f32.mrb[0].mxu0
      %1606 = vmatprep.mubr.bf16.mxu0 0
      %1607 = vmatmul.mubr.bf16.gmra.mrb[0].mxu0 %v1498
      %v1608 = vpop.f32.mrb[0].mxu0
      %v1609 = vadd.f32 0.0, %v1608
      %v1610 = vpop.f32.mrb[0].mxu0
      %v1611 = vpop.f32.mrb[0].mxu0
      %v1612 = vadd.f32 0.0, %v1611
      %v1613 = vpop.f32.mrb[0].mxu0
      %1614 = vmatprep.mubr.bf16.mxu0 0
      %1615 = vmatmul.mubr.bf16.gmra.mrb[0].mxu0 %v1501
      %v1616 = vpop.f32.mrb[0].mxu0
      %v1617 = vadd.f32 0.0, %v1616
      %v1618 = vpop.f32.mrb[0].mxu0
      %v1619 = vpop.f32.mrb[0].mxu0
      %v1620 = vadd.f32 0.0, %v1619
      %v1621 = vpop.f32.mrb[0].mxu0
      %1622 = vmatprep.mubr.bf16.mxu0 0
      %1623 = vmatmul.mubr.bf16.gmra.mrb[0].mxu0 %v1504
      %v1624 = vpop.f32.mrb[0].mxu0
      %v1625 = vadd.f32 0.0, %v1624
      %v1626 = vpop.f32.mrb[0].mxu0
      %v1627 = vpop.f32.mrb[0].mxu0
      %v1628 = vadd.f32 0.0, %v1627
      %v1629 = vpop.f32.mrb[0].mxu0
      %1630 = vmatprep.mubr.bf16.mxu0 0
      %1631 = vmatmul.mubr.bf16.gmra.mrb[0].mxu0 %v1507
      %v1632 = vpop.f32.mrb[0].mxu0
      %v1633 = vadd.f32 0.0, %v1632
      %v1634 = vpop.f32.mrb[0].mxu0
      %v1635 = vpop.f32.mrb[0].mxu0
      %v1636 = vadd.f32 0.0, %v1635
      %v1637 = vpop.f32.mrb[0].mxu0
      %1638 = vmatprep.mubr.bf16.mxu0 0
      %1639 = vmatmul.mubr.bf16.gmra.mrb[0].mxu0 %v1510
      %v1640 = vpop.f32.mrb[0].mxu0
      %v1641 = vadd.f32 0.0, %v1640
      %v1642 = vpop.f32.mrb[0].mxu0
      %v1643 = vpop.f32.mrb[0].mxu0
      %v1644 = vadd.f32 0.0, %v1643
      %v1645 = vpop.f32.mrb[0].mxu0
      %1646 = vmatprep.mubr.bf16.mxu0 0
      %1647 = vmatmul.mubr.bf16.gmra.mrb[0].mxu0 %v1513
      %v1648 = vpop.f32.mrb[0].mxu0
      %v1649 = vadd.f32 0.0, %v1648
      %v1650 = vpop.f32.mrb[0].mxu0
      %v1651 = vpop.f32.mrb[0].mxu0
      %v1652 = vadd.f32 0.0, %v1651
      %v1653 = vpop.f32.mrb[0].mxu0
      %1654 = vmatprep.mubr.bf16.mxu0 0
      %1655 = vmatmul.mubr.bf16.gmra.mrb[0].mxu0 %v1516
      %v1656 = vpop.f32.mrb[0].mxu0
      %v1657 = vadd.f32 0.0, %v1656
      %v1658 = vpop.f32.mrb[0].mxu0
      %v1659 = vpop.f32.mrb[0].mxu0
      %v1660 = vadd.f32 0.0, %v1659
      %v1661 = vpop.f32.mrb[0].mxu0
      %1662 = vmatprep.mubr.bf16.mxu0 0
      %1663 = vmatmul.mubr.bf16.gmra.mrb[0].mxu0 %v1519
      %v1664 = vpop.f32.mrb[0].mxu0
      %v1665 = vadd.f32 0.0, %v1664
      %v1666 = vpop.f32.mrb[0].mxu0
      %v1667 = vpop.f32.mrb[0].mxu0
      %v1668 = vadd.f32 0.0, %v1667
      %v1669 = vpop.f32.mrb[0].mxu0
      %1670 = vmatprep.mubr.bf16.mxu0 0
      %1671 = vmatmul.mubr.bf16.gmra.mrb[0].mxu0 %v1522
      %v1672 = vpop.f32.mrb[0].mxu0
      %v1673 = vadd.f32 0.0, %v1672
      %v1674 = vpop.f32.mrb[0].mxu0
      %v1675 = vpop.f32.mrb[0].mxu0
      %v1676 = vadd.f32 0.0, %v1675
      %v1677 = vpop.f32.mrb[0].mxu0
      %1678 = vmatprep.mubr.bf16.mxu0 0
      %1679 = vmatmul.mubr.bf16.gmra.mrb[0].mxu0 %v1525
      %v1680 = vpop.f32.mrb[0].mxu0
      %v1681 = vadd.f32 0.0, %v1680
      %v1682 = vpop.f32.mrb[0].mxu0
      %v1683 = vpop.f32.mrb[0].mxu0
      %v1684 = vadd.f32 0.0, %v1683
      %v1685 = vpop.f32.mrb[0].mxu0
      %1686 = vmatprep.mubr.bf16.mxu0 0
      %1687 = vmatmul.mubr.bf16.gmra.mrb[0].mxu0 %v1528
      %v1688 = vpop.f32.mrb[0].mxu0
      %v1689 = vadd.f32 0.0, %v1688
      %v1690 = vpop.f32.mrb[0].mxu0
      %v1691 = vpop.f32.mrb[0].mxu0
      %v1692 = vadd.f32 0.0, %v1691
      %v1693 = vpop.f32.mrb[0].mxu0
      %1694 = vmatprep.mubr.bf16.mxu0 0
      %1695 = vmatmul.mubr.bf16.gmra.mrb[0].mxu0 %v1531
      %v1696 = vpop.f32.mrb[0].mxu0
      %v1697 = vadd.f32 0.0, %v1696
      %v1698 = vpop.f32.mrb[0].mxu0
      %v1699 = vpop.f32.mrb[0].mxu0
      %v1700 = vadd.f32 0.0, %v1699
      %v1701 = vpop.f32.mrb[0].mxu0
      %1702 = vmatprep.mubr.bf16.mxu0 0
      %1703 = vmatmul.mubr.bf16.gmra.mrb[0].mxu0 %v1534
      %v1704 = vpop.f32.mrb[0].mxu0
      %v1705 = vadd.f32 0.0, %v1704
      %v1706 = vpop.f32.mrb[0].mxu0
      %v1707 = vpop.f32.mrb[0].mxu0
      %v1708 = vadd.f32 0.0, %v1707
      %v1709 = vpop.f32.mrb[0].mxu0
      %1710 = vmatprep.mubr.bf16.mxu0 0
      %1711 = vmatmul.mubr.bf16.gmra.mrb[0].mxu0 %v1537
      %v1712 = vpop.f32.mrb[0].mxu0
      %v1713 = vadd.f32 0.0, %v1712
      %v1714 = vpop.f32.mrb[0].mxu0
      %v1715 = vpop.f32.mrb[0].mxu0
      %v1716 = vadd.f32 0.0, %v1715
      %v1717 = vpop.f32.mrb[0].mxu0
      %1718 = vmatprep.mubr.bf16.mxu0 0
      %1719 = vmatmul.mubr.bf16.gmra.mrb[0].mxu0 %v1540
      %v1720 = vpop.f32.mrb[0].mxu0
      %v1721 = vadd.f32 0.0, %v1720
      %v1722 = vpop.f32.mrb[0].mxu0
      %v1723 = vpop.f32.mrb[0].mxu0
      %v1724 = vadd.f32 0.0, %v1723
      %v1725 = vpop.f32.mrb[0].mxu0
      %1726 = vdwg.mxu0
      %v1765 = vunpack.c.l.b16 %v1157
      %v1766 = vunpack.c.l.b16 %v1158
      %v1767 = vunpack.c.l.b16 %v1159
      %v1768 = vunpack.c.l.b16 %v1160
      %v1769 = vunpack.c.l.b16 %v1161
      %v1770 = vunpack.c.l.b16 %v1162
      %v1771 = vunpack.c.l.b16 %v1163
      %v1772 = vunpack.c.l.b16 %v1164
      %v1773 = vunpack.c.l.b16 %v1165
      %v1774 = vunpack.c.l.b16 %v1166
      %v1775 = vunpack.c.l.b16 %v1167
      %v1776 = vunpack.c.l.b16 %v1168
      %v1777 = vunpack.c.l.b16 %v1169
      %v1778 = vunpack.c.l.b16 %v1170
      %v1779 = vunpack.c.l.b16 %v1171
      %v1780 = vunpack.c.l.b16 %v1172
      %v1781 = vunpack.c.l.b16 %v1173
      %v1782 = vunpack.c.l.b16 %v1174
      %v1783 = vunpack.c.l.b16 %v1175
      %v1784 = vunpack.c.l.b16 %v1176
      %v1785 = vunpack.c.l.b16 %v1177
      %v1786 = vunpack.c.l.b16 %v1178
      %v1787 = vunpack.c.l.b16 %v1179
      %v1788 = vunpack.c.l.b16 %v1180
      %v1789 = vunpack.c.l.b16 %v1181
      %v1790 = vunpack.c.l.b16 %v1182
      %v1791 = vunpack.c.l.b16 %v1183
      %v1792 = vunpack.c.l.b16 %v1184
      %v1793 = vunpack.c.l.b16 %v1185
      %v1794 = vunpack.c.l.b16 %v1186
      %v1795 = vunpack.c.l.b16 %v1187
      %v1796 = vunpack.c.l.b16 %v1188
      %v1797 = vunpack.c.l.b16 %v1189
      %v1798 = vunpack.c.l.b16 %v1190
      %v1799 = vunpack.c.l.b16 %v1191
      %v1800 = vunpack.c.l.b16 %v1192
      %v1801 = vunpack.c.l.b16 %v1193
      %v1802 = vunpack.c.l.b16 %v1194
      %v1803 = vpack.c.b16 %v1766, %v1765
      %v1804 = vpack.c.b16 %v1768, %v1767
      %v1805 = vpack.c.b16 %v1770, %v1769
      %v1806 = vpack.c.b16 %v1772, %v1771
      %v1807 = vpack.c.b16 %v1774, %v1773
      %v1808 = vpack.c.b16 %v1776, %v1775
      %v1809 = vpack.c.b16 %v1778, %v1777
      %v1810 = vpack.c.b16 %v1780, %v1779
      %v1811 = vpack.c.b16 %v1782, %v1781
      %v1812 = vpack.c.b16 %v1784, %v1783
      %v1813 = vpack.c.b16 %v1786, %v1785
      %v1814 = vpack.c.b16 %v1788, %v1787
      %v1815 = vpack.c.b16 %v1790, %v1789
      %v1816 = vpack.c.b16 %v1792, %v1791
      %v1817 = vpack.c.b16 %v1794, %v1793
      %v1818 = vpack.c.b16 %v1796, %v1795
      %v1819 = vpack.c.b16 %v1798, %v1797
      %v1820 = vpack.c.b16 %v1800, %v1799
      %v1821 = vpack.c.b16 %v1802, %v1801
      %v1830 = vunpack.c.l.b16 %v1195
      %v1831 = vunpack.c.l.b16 %v1196
      %v1832 = vunpack.c.l.b16 %v1197
      %v1833 = vunpack.c.l.b16 %v1198
      %v1834 = vunpack.c.l.b16 %v1199
      %v1835 = vunpack.c.l.b16 %v1200
      %v1836 = vunpack.c.l.b16 %v1201
      %v1837 = vunpack.c.l.b16 %v1202
      %v1838 = vpack.c.b16 %v1831, %v1830
      %v1839 = vpack.c.b16 %v1833, %v1832
      %v1840 = vpack.c.b16 %v1835, %v1834
      %v1841 = vpack.c.b16 %v1837, %v1836
      %v1847 = vsel %vm1484, %v1803, 0
      %v1850 = vsel %vm1484, %v1804, 0
      %v1853 = vsel %vm1484, %v1805, 0
      %v1856 = vsel %vm1484, %v1806, 0
      %v1859 = vsel %vm1484, %v1807, 0
      %v1862 = vsel %vm1484, %v1808, 0
      %v1865 = vsel %vm1484, %v1809, 0
      %v1868 = vsel %vm1484, %v1810, 0
      %v1871 = vsel %vm1484, %v1811, 0
      %v1874 = vsel %vm1484, %v1812, 0
      %v1877 = vsel %vm1484, %v1813, 0
      %v1880 = vsel %vm1484, %v1814, 0
      %v1883 = vsel %vm1484, %v1815, 0
      %v1886 = vsel %vm1484, %v1816, 0
      %v1889 = vsel %vm1484, %v1817, 0
      %v1892 = vsel %vm1484, %v1818, 0
      %v1895 = vsel %vm1484, %v1819, 0
      %v1898 = vsel %vm1484, %v1820, 0
      %v1901 = vsel %vm1484, %v1821, 0
      %1903 = vmatprep.subr.bf16.mxu0 0
      %1904 = vmatpush1.bf16.msra.mxu0 %v1838
      %1905 = vmatprep.subr.bf16.mxu0 0
      %1906 = vmatpush1.bf16.msra.mxu0 %v1839
      %1907 = vmatprep.subr.bf16.mxu0 0
      %1908 = vmatpush1.bf16.msra.mxu0 %v1840
      %1909 = vmatprep.subr.bf16.mxu0 0
      %1910 = vmatpush1.bf16.msra.mxu0 %v1841
      %1911 = vmatprep.subr.bf16.mxu0 0
      %1912 = vmatpush1.bf16.msra.mxu0 0
      %1913 = vmatprep.subr.bf16.mxu0 0
      %1914 = vmatpush1.bf16.msra.mxu0 0
      %1915 = vmatprep.subr.bf16.mxu0 0
      %1916 = vmatpush1.bf16.msra.mxu0 0
      %1917 = vmatprep.subr.bf16.mxu0 0
      %1918 = vmatpush1.bf16.msra.mxu0 0
      %1919 = vmatprep.subr.bf16.mxu0 0
      %1920 = vmatpush1.bf16.msra.mxu0 0
      %1921 = vmatprep.subr.bf16.mxu0 0
      %1922 = vmatpush1.bf16.msra.mxu0 0
      %1923 = vmatprep.subr.bf16.mxu0 0
      %1924 = vmatpush1.bf16.msra.mxu0 0
      %1925 = vmatprep.subr.bf16.mxu0 0
      %1926 = vmatpush1.bf16.msra.mxu0 0
      %1927 = vmatprep.subr.bf16.mxu0 0
      %1928 = vmatpush1.bf16.msra.mxu0 0
      %1929 = vmatprep.subr.bf16.mxu0 0
      %1930 = vmatpush1.bf16.msra.mxu0 0
      %1931 = vmatprep.subr.bf16.mxu0 0
      %1932 = vmatpush1.bf16.msra.mxu0 0
      %1933 = vmatprep.subr.bf16.mxu0 0
      %1934 = vmatpush1.bf16.msra.mxu0 0
      %1935 = vmatprep.mubr.bf16.mxu0 0
      %1936 = vmatmul.mubr.bf16.gmra.mrb[0].mxu0 %v1847
      %v1937 = vpop.f32.mrb[0].mxu0
      %v1938 = vadd.f32 %v1577, %v1937
      %v1939 = vpop.f32.mrb[0].mxu0
      %v1940 = vpop.f32.mrb[0].mxu0
      %v1941 = vadd.f32 %v1580, %v1940
      %v1942 = vpop.f32.mrb[0].mxu0
      %1943 = vmatprep.mubr.bf16.mxu0 0
      %1944 = vmatmul.mubr.bf16.gmra.mrb[0].mxu0 %v1850
      %v1945 = vpop.f32.mrb[0].mxu0
      %v1946 = vadd.f32 %v1585, %v1945
      %v1947 = vpop.f32.mrb[0].mxu0
      %v1948 = vpop.f32.mrb[0].mxu0
      %v1949 = vadd.f32 %v1588, %v1948
      %v1950 = vpop.f32.mrb[0].mxu0
      %1951 = vmatprep.mubr.bf16.mxu0 0
      %1952 = vmatmul.mubr.bf16.gmra.mrb[0].mxu0 %v1853
      %v1953 = vpop.f32.mrb[0].mxu0
      %v1954 = vadd.f32 %v1593, %v1953
      %v1955 = vpop.f32.mrb[0].mxu0
      %v1956 = vpop.f32.mrb[0].mxu0
      %v1957 = vadd.f32 %v1596, %v1956
      %v1958 = vpop.f32.mrb[0].mxu0
      %1959 = vmatprep.mubr.bf16.mxu0 0
      %1960 = vmatmul.mubr.bf16.gmra.mrb[0].mxu0 %v1856
      %v1961 = vpop.f32.mrb[0].mxu0
      %v1962 = vadd.f32 %v1601, %v1961
      %v1963 = vpop.f32.mrb[0].mxu0
      %v1964 = vpop.f32.mrb[0].mxu0
      %v1965 = vadd.f32 %v1604, %v1964
      %v1966 = vpop.f32.mrb[0].mxu0
      %1967 = vmatprep.mubr.bf16.mxu0 0
      %1968 = vmatmul.mubr.bf16.gmra.mrb[0].mxu0 %v1859
      %v1969 = vpop.f32.mrb[0].mxu0
      %v1970 = vadd.f32 %v1609, %v1969
      %v1971 = vpop.f32.mrb[0].mxu0
      %v1972 = vpop.f32.mrb[0].mxu0
      %v1973 = vadd.f32 %v1612, %v1972
      %v1974 = vpop.f32.mrb[0].mxu0
      %1975 = vmatprep.mubr.bf16.mxu0 0
      %1976 = vmatmul.mubr.bf16.gmra.mrb[0].mxu0 %v1862
      %v1977 = vpop.f32.mrb[0].mxu0
      %v1978 = vadd.f32 %v1617, %v1977
      %v1979 = vpop.f32.mrb[0].mxu0
      %v1980 = vpop.f32.mrb[0].mxu0
      %v1981 = vadd.f32 %v1620, %v1980
      %v1982 = vpop.f32.mrb[0].mxu0
      %1983 = vmatprep.mubr.bf16.mxu0 0
      %1984 = vmatmul.mubr.bf16.gmra.mrb[0].mxu0 %v1865
      %v1985 = vpop.f32.mrb[0].mxu0
      %v1986 = vadd.f32 %v1625, %v1985
      %v1987 = vpop.f32.mrb[0].mxu0
      %v1988 = vpop.f32.mrb[0].mxu0
      %v1989 = vadd.f32 %v1628, %v1988
      %v1990 = vpop.f32.mrb[0].mxu0
      %1991 = vmatprep.mubr.bf16.mxu0 0
      %1992 = vmatmul.mubr.bf16.gmra.mrb[0].mxu0 %v1868
      %v1993 = vpop.f32.mrb[0].mxu0
      %v1994 = vadd.f32 %v1633, %v1993
      %v1995 = vpop.f32.mrb[0].mxu0
      %v1996 = vpop.f32.mrb[0].mxu0
      %v1997 = vadd.f32 %v1636, %v1996
      %v1998 = vpop.f32.mrb[0].mxu0
      %1999 = vmatprep.mubr.bf16.mxu0 0
      %2000 = vmatmul.mubr.bf16.gmra.mrb[0].mxu0 %v1871
      %v2001 = vpop.f32.mrb[0].mxu0
      %v2002 = vadd.f32 %v1641, %v2001
      %v2003 = vpop.f32.mrb[0].mxu0
      %v2004 = vpop.f32.mrb[0].mxu0
      %v2005 = vadd.f32 %v1644, %v2004
      %v2006 = vpop.f32.mrb[0].mxu0
      %2007 = vmatprep.mubr.bf16.mxu0 0
      %2008 = vmatmul.mubr.bf16.gmra.mrb[0].mxu0 %v1874
      %v2009 = vpop.f32.mrb[0].mxu0
      %v2010 = vadd.f32 %v1649, %v2009
      %v2011 = vpop.f32.mrb[0].mxu0
      %v2012 = vpop.f32.mrb[0].mxu0
      %v2013 = vadd.f32 %v1652, %v2012
      %v2014 = vpop.f32.mrb[0].mxu0
      %2015 = vmatprep.mubr.bf16.mxu0 0
      %2016 = vmatmul.mubr.bf16.gmra.mrb[0].mxu0 %v1877
      %v2017 = vpop.f32.mrb[0].mxu0
      %v2018 = vadd.f32 %v1657, %v2017
      %v2019 = vpop.f32.mrb[0].mxu0
      %v2020 = vpop.f32.mrb[0].mxu0
      %v2021 = vadd.f32 %v1660, %v2020
      %v2022 = vpop.f32.mrb[0].mxu0
      %2023 = vmatprep.mubr.bf16.mxu0 0
      %2024 = vmatmul.mubr.bf16.gmra.mrb[0].mxu0 %v1880
      %v2025 = vpop.f32.mrb[0].mxu0
      %v2026 = vadd.f32 %v1665, %v2025
      %v2027 = vpop.f32.mrb[0].mxu0
      %v2028 = vpop.f32.mrb[0].mxu0
      %v2029 = vadd.f32 %v1668, %v2028
      %v2030 = vpop.f32.mrb[0].mxu0
      %2031 = vmatprep.mubr.bf16.mxu0 0
      %2032 = vmatmul.mubr.bf16.gmra.mrb[0].mxu0 %v1883
      %v2033 = vpop.f32.mrb[0].mxu0
      %v2034 = vadd.f32 %v1673, %v2033
      %v2035 = vpop.f32.mrb[0].mxu0
      %v2036 = vpop.f32.mrb[0].mxu0
      %v2037 = vadd.f32 %v1676, %v2036
      %v2038 = vpop.f32.mrb[0].mxu0
      %2039 = vmatprep.mubr.bf16.mxu0 0
      %2040 = vmatmul.mubr.bf16.gmra.mrb[0].mxu0 %v1886
      %v2041 = vpop.f32.mrb[0].mxu0
      %v2042 = vadd.f32 %v1681, %v2041
      %v2043 = vpop.f32.mrb[0].mxu0
      %v2044 = vpop.f32.mrb[0].mxu0
      %v2045 = vadd.f32 %v1684, %v2044
      %v2046 = vpop.f32.mrb[0].mxu0
      %2047 = vmatprep.mubr.bf16.mxu0 0
      %2048 = vmatmul.mubr.bf16.gmra.mrb[0].mxu0 %v1889
      %v2049 = vpop.f32.mrb[0].mxu0
      %v2050 = vadd.f32 %v1689, %v2049
      %v2051 = vpop.f32.mrb[0].mxu0
      %v2052 = vpop.f32.mrb[0].mxu0
      %v2053 = vadd.f32 %v1692, %v2052
      %v2054 = vpop.f32.mrb[0].mxu0
      %2055 = vmatprep.mubr.bf16.mxu0 0
      %2056 = vmatmul.mubr.bf16.gmra.mrb[0].mxu0 %v1892
      %v2057 = vpop.f32.mrb[0].mxu0
      %v2058 = vadd.f32 %v1697, %v2057
      %v2059 = vpop.f32.mrb[0].mxu0
      %v2060 = vpop.f32.mrb[0].mxu0
      %v2061 = vadd.f32 %v1700, %v2060
      %v2062 = vpop.f32.mrb[0].mxu0
      %2063 = vmatprep.mubr.bf16.mxu0 0
      %2064 = vmatmul.mubr.bf16.gmra.mrb[0].mxu0 %v1895
      %v2065 = vpop.f32.mrb[0].mxu0
      %v2066 = vadd.f32 %v1705, %v2065
      %v2067 = vpop.f32.mrb[0].mxu0
      %v2068 = vpop.f32.mrb[0].mxu0
      %v2069 = vadd.f32 %v1708, %v2068
      %v2070 = vpop.f32.mrb[0].mxu0
      %2071 = vmatprep.mubr.bf16.mxu0 0
      %2072 = vmatmul.mubr.bf16.gmra.mrb[0].mxu0 %v1898
      %v2073 = vpop.f32.mrb[0].mxu0
      %v2074 = vadd.f32 %v1713, %v2073
      %v2075 = vpop.f32.mrb[0].mxu0
      %v2076 = vpop.f32.mrb[0].mxu0
      %v2077 = vadd.f32 %v1716, %v2076
      %v2078 = vpop.f32.mrb[0].mxu0
      %2079 = vmatprep.mubr.bf16.mxu0 0
      %2080 = vmatmul.mubr.bf16.gmra.mrb[0].mxu0 %v1901
      %v2081 = vpop.f32.mrb[0].mxu0
      %v2082 = vadd.f32 %v1721, %v2081
      %v2083 = vpop.f32.mrb[0].mxu0
      %v2084 = vpop.f32.mrb[0].mxu0
      %v2085 = vadd.f32 %v1724, %v2084
      %v2086 = vpop.f32.mrb[0].mxu0
      %2087 = vdwg.mxu0
      %v2088 = vld [vmem:[%s273] sm:$0xe]
      %v2089 = vsel %vm967, 1, 0
      %v2090 = vsel %vm968, 1, 0
      %v2091 = vsel %vm969, 1, 0
      %v2092 = vsel %vm970, 1, 0
      %v2093 = vsel %vm971, 1, 0
      %v2094 = vsel %vm972, 1, 0
      %v2095 = vsel %vm973, 1, 0
      %v2096 = vsel %vm974, 1, 0
      %v2097 = vsel %vm975, 1, 0
      %v2098 = vsel %vm976, 1, 0
      %v2099 = vsel %vm977, 1, 0
      %v2100 = vsel %vm978, 1, 0
      %v2101 = vsel %vm979, 1, 0
      %v2102 = vsel %vm980, 1, 0
      %v2103 = vsel %vm981, 1, 0
      %v2104 = vsel %vm982, 1, 0
      %v2105 = vsel %vm983, 1, 0
      %v2106 = vsel %vm984, 1, 0
      %v2107 = vsel %vm985, 1, 0
      %v2108 = vsel %vm986, 1, 0
      %v2109 = vsel %vm987, 1, 0
      %v2110 = vsel %vm988, 1, 0
      %v2111 = vsel %vm989, 1, 0
      %v2112 = vsel %vm990, 1, 0
      %v2113 = vsel %vm991, 1, 0
      %v2114 = vsel %vm992, 1, 0
      %v2115 = vsel %vm993, 1, 0
      %v2116 = vsel %vm994, 1, 0
      %v2117 = vsel %vm995, 1, 0
      %v2118 = vsel %vm996, 1, 0
      %v2119 = vsel %vm997, 1, 0
      %v2120 = vsel %vm998, 1, 0
      %v2121 = vsel %vm999, 1, 0
      %v2122 = vsel %vm1000, 1, 0
      %v2123 = vsel %vm1001, 1, 0
      %v2124 = vsel %vm1002, 1, 0
      %v2125 = vsel %vm1003, 1, 0
      %v2126 = vsel %vm1004, 1, 0
      %vm2127 = vcmp.eq.s32.totalorder %v2089, 1
      %vm2128 = vcmp.eq.s32.totalorder %v2090, 1
      %vm2129 = vcmp.eq.s32.totalorder %v2091, 1
      %vm2130 = vcmp.eq.s32.totalorder %v2092, 1
      %vm2131 = vcmp.eq.s32.totalorder %v2093, 1
      %vm2132 = vcmp.eq.s32.totalorder %v2094, 1
      %vm2133 = vcmp.eq.s32.totalorder %v2095, 1
      %vm2134 = vcmp.eq.s32.totalorder %v2096, 1
      %vm2135 = vcmp.eq.s32.totalorder %v2097, 1
      %vm2136 = vcmp.eq.s32.totalorder %v2098, 1
      %vm2137 = vcmp.eq.s32.totalorder %v2099, 1
      %vm2138 = vcmp.eq.s32.totalorder %v2100, 1
      %vm2139 = vcmp.eq.s32.totalorder %v2101, 1
      %vm2140 = vcmp.eq.s32.totalorder %v2102, 1
      %vm2141 = vcmp.eq.s32.totalorder %v2103, 1
      %vm2142 = vcmp.eq.s32.totalorder %v2104, 1
      %vm2143 = vcmp.eq.s32.totalorder %v2105, 1
      %vm2144 = vcmp.eq.s32.totalorder %v2106, 1
      %vm2145 = vcmp.eq.s32.totalorder %v2107, 1
      %vm2146 = vcmp.eq.s32.totalorder %v2108, 1
      %vm2147 = vcmp.eq.s32.totalorder %v2109, 1
      %vm2148 = vcmp.eq.s32.totalorder %v2110, 1
      %vm2149 = vcmp.eq.s32.totalorder %v2111, 1
      %vm2150 = vcmp.eq.s32.totalorder %v2112, 1
      %vm2151 = vcmp.eq.s32.totalorder %v2113, 1
      %vm2152 = vcmp.eq.s32.totalorder %v2114, 1
      %vm2153 = vcmp.eq.s32.totalorder %v2115, 1
      %vm2154 = vcmp.eq.s32.totalorder %v2116, 1
      %vm2155 = vcmp.eq.s32.totalorder %v2117, 1
      %vm2156 = vcmp.eq.s32.totalorder %v2118, 1
      %vm2157 = vcmp.eq.s32.totalorder %v2119, 1
      %vm2158 = vcmp.eq.s32.totalorder %v2120, 1
      %vm2159 = vcmp.eq.s32.totalorder %v2121, 1
      %vm2160 = vcmp.eq.s32.totalorder %v2122, 1
      %vm2161 = vcmp.eq.s32.totalorder %v2123, 1
      %vm2162 = vcmp.eq.s32.totalorder %v2124, 1
      %vm2163 = vcmp.eq.s32.totalorder %v2125, 1
      %vm2164 = vcmp.eq.s32.totalorder %v2126, 1
      %vm2165 = vmpackc.low %vm2127, %vm2127
      %vm2166 = vmpackc.low %vm2128, %vm2128
      %vm2167 = vmpackc.low %vm2129, %vm2129
      %vm2168 = vmpackc.low %vm2130, %vm2130
      %vm2169 = vmpackc.low %vm2131, %vm2131
      %vm2170 = vmpackc.low %vm2132, %vm2132
      %vm2171 = vmpackc.low %vm2133, %vm2133
      %vm2172 = vmpackc.low %vm2134, %vm2134
      %vm2173 = vmpackc.low %vm2135, %vm2135
      %vm2174 = vmpackc.low %vm2136, %vm2136
      %vm2175 = vmpackc.low %vm2137, %vm2137
      %vm2176 = vmpackc.low %vm2138, %vm2138
      %vm2177 = vmpackc.low %vm2139, %vm2139
      %vm2178 = vmpackc.low %vm2140, %vm2140
      %vm2179 = vmpackc.low %vm2141, %vm2141
      %vm2180 = vmpackc.low %vm2142, %vm2142
      %vm2181 = vmpackc.low %vm2143, %vm2143
      %vm2182 = vmpackc.low %vm2144, %vm2144
      %vm2183 = vmpackc.low %vm2145, %vm2145
      %vm2184 = vmpackc.low %vm2146, %vm2146
      %vm2185 = vmpackc.low %vm2147, %vm2147
      %vm2186 = vmpackc.low %vm2148, %vm2148
      %vm2187 = vmpackc.low %vm2149, %vm2149
      %vm2188 = vmpackc.low %vm2150, %vm2150
      %vm2189 = vmpackc.low %vm2151, %vm2151
      %vm2190 = vmpackc.low %vm2152, %vm2152
      %vm2191 = vmpackc.low %vm2153, %vm2153
      %vm2192 = vmpackc.low %vm2154, %vm2154
      %vm2193 = vmpackc.low %vm2155, %vm2155
      %vm2194 = vmpackc.low %vm2156, %vm2156
      %vm2195 = vmpackc.low %vm2157, %vm2157
      %vm2196 = vmpackc.low %vm2158, %vm2158
      %vm2197 = vmpackc.low %vm2159, %vm2159
      %vm2198 = vmpackc.low %vm2160, %vm2160
      %vm2199 = vmpackc.low %vm2161, %vm2161
      %vm2200 = vmpackc.low %vm2162, %vm2162
      %vm2201 = vmpackc.low %vm2163, %vm2163
      %vm2202 = vmpackc.low %vm2164, %vm2164
      %v2203 = vsel %vm2165, 65537, 0
      %v2204 = vsel %vm2166, 65537, 0
      %v2205 = vsel %vm2167, 65537, 0
      %v2206 = vsel %vm2168, 65537, 0
      %v2207 = vsel %vm2169, 65537, 0
      %v2208 = vsel %vm2170, 65537, 0
      %v2209 = vsel %vm2171, 65537, 0
      %v2210 = vsel %vm2172, 65537, 0
      %v2211 = vsel %vm2173, 65537, 0
      %v2212 = vsel %vm2174, 65537, 0
      %v2213 = vsel %vm2175, 65537, 0
      %v2214 = vsel %vm2176, 65537, 0
      %v2215 = vsel %vm2177, 65537, 0
      %v2216 = vsel %vm2178, 65537, 0
      %v2217 = vsel %vm2179, 65537, 0
      %v2218 = vsel %vm2180, 65537, 0
      %v2219 = vsel %vm2181, 65537, 0
      %v2220 = vsel %vm2182, 65537, 0
      %v2221 = vsel %vm2183, 65537, 0
      %v2222 = vsel %vm2184, 65537, 0
      %v2223 = vsel %vm2185, 65537, 0
      %v2224 = vsel %vm2186, 65537, 0
      %v2225 = vsel %vm2187, 65537, 0
      %v2226 = vsel %vm2188, 65537, 0
      %v2227 = vsel %vm2189, 65537, 0
      %v2228 = vsel %vm2190, 65537, 0
      %v2229 = vsel %vm2191, 65537, 0
      %v2230 = vsel %vm2192, 65537, 0
      %v2231 = vsel %vm2193, 65537, 0
      %v2232 = vsel %vm2194, 65537, 0
      %v2233 = vsel %vm2195, 65537, 0
      %v2234 = vsel %vm2196, 65537, 0
      %v2235 = vsel %vm2197, 65537, 0
      %v2236 = vsel %vm2198, 65537, 0
      %v2237 = vsel %vm2199, 65537, 0
      %v2238 = vsel %vm2200, 65537, 0
      %v2239 = vsel %vm2201, 65537, 0
      %v2240 = vsel %vm2202, 65537, 0
      %vm2241 = vcmask 1040384
      %vm2242 = vcmask 1044484
      %vm2243 = vmor %vm2241, %vm2242
      %v2244 = vrot.slane %v2203, 7
      %v2245 = vrot.slane %v2244, 4
      %v2246 = vrot.slane %v2204, 7
      %v2247 = vsel %vm2243, %v2245, %v2246
      %v2248 = vrot.slane %v2246, 4
      %v2249 = vrot.slane %v2205, 7
      %v2250 = vsel %vm2243, %v2248, %v2249
      %v2251 = vrot.slane %v2249, 4
      %v2252 = vrot.slane %v2206, 7
      %v2253 = vsel %vm2243, %v2251, %v2252
      %v2254 = vrot.slane %v2252, 4
      %v2255 = vrot.slane %v2207, 7
      %v2256 = vsel %vm2243, %v2254, %v2255
      %v2257 = vrot.slane %v2255, 4
      %v2258 = vrot.slane %v2208, 7
      %v2259 = vsel %vm2243, %v2257, %v2258
      %v2260 = vrot.slane %v2258, 4
      %v2261 = vrot.slane %v2209, 7
      %v2262 = vsel %vm2243, %v2260, %v2261
      %v2263 = vrot.slane %v2261, 4
      %v2264 = vrot.slane %v2210, 7
      %v2265 = vsel %vm2243, %v2263, %v2264
      %v2266 = vrot.slane %v2264, 4
      %v2267 = vrot.slane %v2211, 7
      %v2268 = vsel %vm2243, %v2266, %v2267
      %v2269 = vrot.slane %v2267, 4
      %v2270 = vrot.slane %v2212, 7
      %v2271 = vsel %vm2243, %v2269, %v2270
      %v2272 = vrot.slane %v2270, 4
      %v2273 = vrot.slane %v2213, 7
      %v2274 = vsel %vm2243, %v2272, %v2273
      %v2275 = vrot.slane %v2273, 4
      %v2276 = vrot.slane %v2214, 7
      %v2277 = vsel %vm2243, %v2275, %v2276
      %v2278 = vrot.slane %v2276, 4
      %v2279 = vrot.slane %v2215, 7
      %v2280 = vsel %vm2243, %v2278, %v2279
      %v2281 = vrot.slane %v2279, 4
      %v2282 = vrot.slane %v2216, 7
      %v2283 = vsel %vm2243, %v2281, %v2282
      %v2284 = vrot.slane %v2282, 4
      %v2285 = vrot.slane %v2217, 7
      %v2286 = vsel %vm2243, %v2284, %v2285
      %v2287 = vrot.slane %v2285, 4
      %v2288 = vrot.slane %v2218, 7
      %v2289 = vsel %vm2243, %v2287, %v2288
      %v2290 = vrot.slane %v2288, 4
      %v2291 = vrot.slane %v2219, 7
      %v2292 = vsel %vm2243, %v2290, %v2291
      %v2293 = vrot.slane %v2291, 4
      %v2294 = vrot.slane %v2220, 7
      %v2295 = vsel %vm2243, %v2293, %v2294
      %v2296 = vrot.slane %v2294, 4
      %v2297 = vrot.slane %v2221, 7
      %v2298 = vsel %vm2243, %v2296, %v2297
      %v2299 = vrot.slane %v2297, 4
      %v2300 = vrot.slane %v2222, 7
      %v2301 = vsel %vm2243, %v2299, %v2300
      %v2302 = vrot.slane %v2300, 4
      %v2303 = vrot.slane %v2223, 7
      %v2304 = vsel %vm2243, %v2302, %v2303
      %v2305 = vrot.slane %v2303, 4
      %v2306 = vrot.slane %v2224, 7
      %v2307 = vsel %vm2243, %v2305, %v2306
      %v2308 = vrot.slane %v2306, 4
      %v2309 = vrot.slane %v2225, 7
      %v2310 = vsel %vm2243, %v2308, %v2309
      %v2311 = vrot.slane %v2309, 4
      %v2312 = vrot.slane %v2226, 7
      %v2313 = vsel %vm2243, %v2311, %v2312
      %v2314 = vrot.slane %v2312, 4
      %v2315 = vrot.slane %v2227, 7
      %v2316 = vsel %vm2243, %v2314, %v2315
      %v2317 = vrot.slane %v2315, 4
      %v2318 = vrot.slane %v2228, 7
      %v2319 = vsel %vm2243, %v2317, %v2318
      %v2320 = vrot.slane %v2318, 4
      %v2321 = vrot.slane %v2229, 7
      %v2322 = vsel %vm2243, %v2320, %v2321
      %v2323 = vrot.slane %v2321, 4
      %v2324 = vrot.slane %v2230, 7
      %v2325 = vsel %vm2243, %v2323, %v2324
      %v2326 = vrot.slane %v2324, 4
      %v2327 = vrot.slane %v2231, 7
      %v2328 = vsel %vm2243, %v2326, %v2327
      %v2329 = vrot.slane %v2327, 4
      %v2330 = vrot.slane %v2232, 7
      %v2331 = vsel %vm2243, %v2329, %v2330
      %v2332 = vrot.slane %v2330, 4
      %v2333 = vrot.slane %v2233, 7
      %v2334 = vsel %vm2243, %v2332, %v2333
      %v2335 = vrot.slane %v2333, 4
      %v2336 = vrot.slane %v2234, 7
      %v2337 = vsel %vm2243, %v2335, %v2336
      %v2338 = vrot.slane %v2336, 4
      %v2339 = vrot.slane %v2235, 7
      %v2340 = vsel %vm2243, %v2338, %v2339
      %v2341 = vrot.slane %v2339, 4
      %v2342 = vrot.slane %v2236, 7
      %v2343 = vsel %vm2243, %v2341, %v2342
      %v2344 = vrot.slane %v2342, 4
      %v2345 = vrot.slane %v2237, 7
      %v2346 = vsel %vm2243, %v2344, %v2345
      %v2347 = vrot.slane %v2345, 4
      %v2348 = vrot.slane %v2238, 7
      %v2349 = vsel %vm2243, %v2347, %v2348
      %v2350 = vrot.slane %v2348, 4
      %v2351 = vrot.slane %v2239, 7
      %v2352 = vsel %vm2243, %v2350, %v2351
      %v2353 = vrot.slane %v2351, 4
      %v2354 = vrot.slane %v2240, 7
      %v2355 = vsel %vm2243, %v2353, %v2354
      %vm2356 = vcmp.ne.s16.totalorder %v2244, 0
      %vm2357 = vcmp.ne.s16.totalorder %v2247, 0
      %vm2358 = vcmp.ne.s16.totalorder %v2250, 0
      %vm2359 = vcmp.ne.s16.totalorder %v2253, 0
      %vm2360 = vcmp.ne.s16.totalorder %v2256, 0
      %vm2361 = vcmp.ne.s16.totalorder %v2259, 0
      %vm2362 = vcmp.ne.s16.totalorder %v2262, 0
      %vm2363 = vcmp.ne.s16.totalorder %v2265, 0
      %vm2364 = vcmp.ne.s16.totalorder %v2268, 0
      %vm2365 = vcmp.ne.s16.totalorder %v2271, 0
      %vm2366 = vcmp.ne.s16.totalorder %v2274, 0
      %vm2367 = vcmp.ne.s16.totalorder %v2277, 0
      %vm2368 = vcmp.ne.s16.totalorder %v2280, 0
      %vm2369 = vcmp.ne.s16.totalorder %v2283, 0
      %vm2370 = vcmp.ne.s16.totalorder %v2286, 0
      %vm2371 = vcmp.ne.s16.totalorder %v2289, 0
      %vm2372 = vcmp.ne.s16.totalorder %v2292, 0
      %vm2373 = vcmp.ne.s16.totalorder %v2295, 0
      %vm2374 = vcmp.ne.s16.totalorder %v2298, 0
      %vm2375 = vcmp.ne.s16.totalorder %v2301, 0
      %vm2376 = vcmp.ne.s16.totalorder %v2304, 0
      %vm2377 = vcmp.ne.s16.totalorder %v2307, 0
      %vm2378 = vcmp.ne.s16.totalorder %v2310, 0
      %vm2379 = vcmp.ne.s16.totalorder %v2313, 0
      %vm2380 = vcmp.ne.s16.totalorder %v2316, 0
      %vm2381 = vcmp.ne.s16.totalorder %v2319, 0
      %vm2382 = vcmp.ne.s16.totalorder %v2322, 0
      %vm2383 = vcmp.ne.s16.totalorder %v2325, 0
      %vm2384 = vcmp.ne.s16.totalorder %v2328, 0
      %vm2385 = vcmp.ne.s16.totalorder %v2331, 0
      %vm2386 = vcmp.ne.s16.totalorder %v2334, 0
      %vm2387 = vcmp.ne.s16.totalorder %v2337, 0
      %vm2388 = vcmp.ne.s16.totalorder %v2340, 0
      %vm2389 = vcmp.ne.s16.totalorder %v2343, 0
      %vm2390 = vcmp.ne.s16.totalorder %v2346, 0
      %vm2391 = vcmp.ne.s16.totalorder %v2349, 0
      %vm2392 = vcmp.ne.s16.totalorder %v2352, 0
      %vm2393 = vcmp.ne.s16.totalorder %v2355, 0
      %v2394 = vsel %vm2356, %v2088, 0
      %v2395 = vsel %vm2357, %v1006, 0
      %v2396 = vsel %vm2358, %v1007, 0
      %v2397 = vsel %vm2359, %v1008, 0
      %v2398 = vsel %vm2360, %v1009, 0
      %v2399 = vsel %vm2361, %v1010, 0
      %v2400 = vsel %vm2362, %v1011, 0
      %v2401 = vsel %vm2363, %v1012, 0
      %v2402 = vsel %vm2364, %v1013, 0
      %v2403 = vsel %vm2365, %v1014, 0
      %v2404 = vsel %vm2366, %v1015, 0
      %v2405 = vsel %vm2367, %v1016, 0
      %v2406 = vsel %vm2368, %v1017, 0
      %v2407 = vsel %vm2369, %v1018, 0
      %v2408 = vsel %vm2370, %v1019, 0
      %v2409 = vsel %vm2371, %v1020, 0
      %v2410 = vsel %vm2372, %v1021, 0
      %v2411 = vsel %vm2373, %v1022, 0
      %v2412 = vsel %vm2374, %v1023, 0
      %v2413 = vsel %vm2375, %v1024, 0
      %v2414 = vsel %vm2376, %v1025, 0
      %v2415 = vsel %vm2377, %v1026, 0
      %v2416 = vsel %vm2378, %v1027, 0
      %v2417 = vsel %vm2379, %v1028, 0
      %v2418 = vsel %vm2380, %v1029, 0
      %v2419 = vsel %vm2381, %v1030, 0
      %v2420 = vsel %vm2382, %v1031, 0
      %v2421 = vsel %vm2383, %v1032, 0
      %v2422 = vsel %vm2384, %v1033, 0
      %v2423 = vsel %vm2385, %v1034, 0
      %v2424 = vsel %vm2386, %v1035, 0
      %v2425 = vsel %vm2387, %v1036, 0
      %v2426 = vsel %vm2388, %v1037, 0
      %v2427 = vsel %vm2389, %v1038, 0
      %v2428 = vsel %vm2390, %v1039, 0
      %v2429 = vsel %vm2391, %v1040, 0
      %v2430 = vsel %vm2392, %v1041, 0
      %v2431 = vsel %vm2393, %v1203, 0
      %s2432 = scalar_lea.vmem %s1, 64
      %v2433 = vld [vmem:[%s2432] sm:$0xf]
      %v2434 = vld [vmem:[%s2432 + $0x4] sm:$0xf]
      %v2435 = vld [vmem:[%s2432 + $0x8] sm:$0xf]
      %v2436 = vld [vmem:[%s2432 + $0xc] sm:$0xf]
      %v2437 = vld [vmem:[%s2432 + $0x10] sm:$0xf]
      %v2438 = vld [vmem:[%s2432 + $0x14] sm:$0xf]
      %v2439 = vld [vmem:[%s2432 + $0x18] sm:$0xf]
      %v2440 = vld [vmem:[%s2432 + $0x1c] sm:$0xf]
      %v2479 = vunpack.c.l.b16 %v2394
      %v2480 = vunpack.c.l.b16 %v2395
      %v2481 = vunpack.c.l.b16 %v2396
      %v2482 = vunpack.c.l.b16 %v2397
      %v2483 = vunpack.c.l.b16 %v2398
      %v2484 = vunpack.c.l.b16 %v2399
      %v2485 = vunpack.c.l.b16 %v2400
      %v2486 = vunpack.c.l.b16 %v2401
      %v2487 = vunpack.c.l.b16 %v2402
      %v2488 = vunpack.c.l.b16 %v2403
      %v2489 = vunpack.c.l.b16 %v2404
      %v2490 = vunpack.c.l.b16 %v2405
      %v2491 = vunpack.c.l.b16 %v2406
      %v2492 = vunpack.c.l.b16 %v2407
      %v2493 = vunpack.c.l.b16 %v2408
      %v2494 = vunpack.c.l.b16 %v2409
      %v2495 = vunpack.c.l.b16 %v2410
      %v2496 = vunpack.c.l.b16 %v2411
      %v2497 = vunpack.c.l.b16 %v2412
      %v2498 = vunpack.c.l.b16 %v2413
      %v2499 = vunpack.c.l.b16 %v2414
      %v2500 = vunpack.c.l.b16 %v2415
      %v2501 = vunpack.c.l.b16 %v2416
      %v2502 = vunpack.c.l.b16 %v2417
      %v2503 = vunpack.c.l.b16 %v2418
      %v2504 = vunpack.c.l.b16 %v2419
      %v2505 = vunpack.c.l.b16 %v2420
      %v2506 = vunpack.c.l.b16 %v2421
      %v2507 = vunpack.c.l.b16 %v2422
      %v2508 = vunpack.c.l.b16 %v2423
      %v2509 = vunpack.c.l.b16 %v2424
      %v2510 = vunpack.c.l.b16 %v2425
      %v2511 = vunpack.c.l.b16 %v2426
      %v2512 = vunpack.c.l.b16 %v2427
      %v2513 = vunpack.c.l.b16 %v2428
      %v2514 = vunpack.c.l.b16 %v2429
      %v2515 = vunpack.c.l.b16 %v2430
      %v2516 = vunpack.c.l.b16 %v2431
      %v2517 = vpack.c.b16 %v2480, %v2479
      %v2518 = vpack.c.b16 %v2482, %v2481
      %v2519 = vpack.c.b16 %v2484, %v2483
      %v2520 = vpack.c.b16 %v2486, %v2485
      %v2521 = vpack.c.b16 %v2488, %v2487
      %v2522 = vpack.c.b16 %v2490, %v2489
      %v2523 = vpack.c.b16 %v2492, %v2491
      %v2524 = vpack.c.b16 %v2494, %v2493
      %v2525 = vpack.c.b16 %v2496, %v2495
      %v2526 = vpack.c.b16 %v2498, %v2497
      %v2527 = vpack.c.b16 %v2500, %v2499
      %v2528 = vpack.c.b16 %v2502, %v2501
      %v2529 = vpack.c.b16 %v2504, %v2503
      %v2530 = vpack.c.b16 %v2506, %v2505
      %v2531 = vpack.c.b16 %v2508, %v2507
      %v2532 = vpack.c.b16 %v2510, %v2509
      %v2533 = vpack.c.b16 %v2512, %v2511
      %v2534 = vpack.c.b16 %v2514, %v2513
      %v2535 = vpack.c.b16 %v2516, %v2515
      %vm2536 = vcmask 1046528
      %v2537 = vrot.slane %v2517, 1
      %v2538 = vrot.slane %v2518, 1
      %v2539 = vsel %vm2536, %v2537, %v2538
      %v2540 = vrot.slane %v2519, 1
      %v2541 = vsel %vm2536, %v2538, %v2540
      %v2542 = vrot.slane %v2520, 1
      %v2543 = vsel %vm2536, %v2540, %v2542
      %v2544 = vrot.slane %v2521, 1
      %v2545 = vsel %vm2536, %v2542, %v2544
      %v2546 = vrot.slane %v2522, 1
      %v2547 = vsel %vm2536, %v2544, %v2546
      %v2548 = vrot.slane %v2523, 1
      %v2549 = vsel %vm2536, %v2546, %v2548
      %v2550 = vrot.slane %v2524, 1
      %v2551 = vsel %vm2536, %v2548, %v2550
      %v2552 = vrot.slane %v2525, 1
      %v2553 = vsel %vm2536, %v2550, %v2552
      %v2554 = vrot.slane %v2526, 1
      %v2555 = vsel %vm2536, %v2552, %v2554
      %v2556 = vrot.slane %v2527, 1
      %v2557 = vsel %vm2536, %v2554, %v2556
      %v2558 = vrot.slane %v2528, 1
      %v2559 = vsel %vm2536, %v2556, %v2558
      %v2560 = vrot.slane %v2529, 1
      %v2561 = vsel %vm2536, %v2558, %v2560
      %v2562 = vrot.slane %v2530, 1
      %v2563 = vsel %vm2536, %v2560, %v2562
      %v2564 = vrot.slane %v2531, 1
      %v2565 = vsel %vm2536, %v2562, %v2564
      %v2566 = vrot.slane %v2532, 1
      %v2567 = vsel %vm2536, %v2564, %v2566
      %v2568 = vrot.slane %v2533, 1
      %v2569 = vsel %vm2536, %v2566, %v2568
      %v2570 = vrot.slane %v2534, 1
      %v2571 = vsel %vm2536, %v2568, %v2570
      %v2572 = vrot.slane %v2535, 1
      %v2573 = vsel %vm2536, %v2570, %v2572
      %v2582 = vunpack.c.l.b16 %v2433
      %v2583 = vunpack.c.l.b16 %v2434
      %v2584 = vunpack.c.l.b16 %v2435
      %v2585 = vunpack.c.l.b16 %v2436
      %v2586 = vunpack.c.l.b16 %v2437
      %v2587 = vunpack.c.l.b16 %v2438
      %v2588 = vunpack.c.l.b16 %v2439
      %v2589 = vunpack.c.l.b16 %v2440
      %v2590 = vpack.c.b16 %v2583, %v2582
      %v2591 = vpack.c.b16 %v2585, %v2584
      %v2592 = vpack.c.b16 %v2587, %v2586
      %v2593 = vpack.c.b16 %v2589, %v2588
      %v2599 = vsel %vm1484, %v2539, 0
      %v2602 = vsel %vm1484, %v2541, 0
      %v2605 = vsel %vm1484, %v2543, 0
      %v2608 = vsel %vm1484, %v2545, 0
      %v2611 = vsel %vm1484, %v2547, 0
      %v2614 = vsel %vm1484, %v2549, 0
      %v2617 = vsel %vm1484, %v2551, 0
      %v2620 = vsel %vm1484, %v2553, 0
      %v2623 = vsel %vm1484, %v2555, 0
      %v2626 = vsel %vm1484, %v2557, 0
      %v2629 = vsel %vm1484, %v2559, 0
      %v2632 = vsel %vm1484, %v2561, 0
      %v2635 = vsel %vm1484, %v2563, 0
      %v2638 = vsel %vm1484, %v2565, 0
      %v2641 = vsel %vm1484, %v2567, 0
      %v2644 = vsel %vm1484, %v2569, 0
      %v2647 = vsel %vm1484, %v2571, 0
      %v2650 = vsel %vm1484, %v2573, 0
      %v2653 = vsel %vm1484, %v2572, 0
      %2655 = vmatprep.subr.bf16.mxu0 0
      %2656 = vmatpush1.bf16.msra.mxu0 %v2590
      %2657 = vmatprep.subr.bf16.mxu0 0
      %2658 = vmatpush1.bf16.msra.mxu0 %v2591
      %2659 = vmatprep.subr.bf16.mxu0 0
      %2660 = vmatpush1.bf16.msra.mxu0 %v2592
      %2661 = vmatprep.subr.bf16.mxu0 0
      %2662 = vmatpush1.bf16.msra.mxu0 %v2593
      %2663 = vmatprep.subr.bf16.mxu0 0
      %2664 = vmatpush1.bf16.msra.mxu0 0
      %2665 = vmatprep.subr.bf16.mxu0 0
      %2666 = vmatpush1.bf16.msra.mxu0 0
      %2667 = vmatprep.subr.bf16.mxu0 0
      %2668 = vmatpush1.bf16.msra.mxu0 0
      %2669 = vmatprep.subr.bf16.mxu0 0
      %2670 = vmatpush1.bf16.msra.mxu0 0
      %2671 = vmatprep.subr.bf16.mxu0 0
      %2672 = vmatpush1.bf16.msra.mxu0 0
      %2673 = vmatprep.subr.bf16.mxu0 0
      %2674 = vmatpush1.bf16.msra.mxu0 0
      %2675 = vmatprep.subr.bf16.mxu0 0
      %2676 = vmatpush1.bf16.msra.mxu0 0
      %2677 = vmatprep.subr.bf16.mxu0 0
      %2678 = vmatpush1.bf16.msra.mxu0 0
      %2679 = vmatprep.subr.bf16.mxu0 0
      %2680 = vmatpush1.bf16.msra.mxu0 0
      %2681 = vmatprep.subr.bf16.mxu0 0
      %2682 = vmatpush1.bf16.msra.mxu0 0
      %2683 = vmatprep.subr.bf16.mxu0 0
      %2684 = vmatpush1.bf16.msra.mxu0 0
      %2685 = vmatprep.subr.bf16.mxu0 0
      %2686 = vmatpush1.bf16.msra.mxu0 0
      %2687 = vmatprep.mubr.bf16.mxu0 0
      %2688 = vmatmul.mubr.bf16.gmra.mrb[0].mxu0 %v2599
      %v2689 = vpop.f32.mrb[0].mxu0
      %v2690 = vadd.f32 0.0, %v2689
      %v2691 = vpop.f32.mrb[0].mxu0
      %v2692 = vpop.f32.mrb[0].mxu0
      %v2693 = vadd.f32 0.0, %v2692
      %v2694 = vpop.f32.mrb[0].mxu0
      %2695 = vmatprep.mubr.bf16.mxu0 0
      %2696 = vmatmul.mubr.bf16.gmra.mrb[0].mxu0 %v2602
      %v2697 = vpop.f32.mrb[0].mxu0
      %v2698 = vadd.f32 0.0, %v2697
      %v2699 = vpop.f32.mrb[0].mxu0
      %v2700 = vpop.f32.mrb[0].mxu0
      %v2701 = vadd.f32 0.0, %v2700
      %v2702 = vpop.f32.mrb[0].mxu0
      %2703 = vmatprep.mubr.bf16.mxu0 0
      %2704 = vmatmul.mubr.bf16.gmra.mrb[0].mxu0 %v2605
      %v2705 = vpop.f32.mrb[0].mxu0
      %v2706 = vadd.f32 0.0, %v2705
      %v2707 = vpop.f32.mrb[0].mxu0
      %v2708 = vpop.f32.mrb[0].mxu0
      %v2709 = vadd.f32 0.0, %v2708
      %v2710 = vpop.f32.mrb[0].mxu0
      %2711 = vmatprep.mubr.bf16.mxu0 0
      %2712 = vmatmul.mubr.bf16.gmra.mrb[0].mxu0 %v2608
      %v2713 = vpop.f32.mrb[0].mxu0
      %v2714 = vadd.f32 0.0, %v2713
      %v2715 = vpop.f32.mrb[0].mxu0
      %v2716 = vpop.f32.mrb[0].mxu0
      %v2717 = vadd.f32 0.0, %v2716
      %v2718 = vpop.f32.mrb[0].mxu0
      %2719 = vmatprep.mubr.bf16.mxu0 0
      %2720 = vmatmul.mubr.bf16.gmra.mrb[0].mxu0 %v2611
      %v2721 = vpop.f32.mrb[0].mxu0
      %v2722 = vadd.f32 0.0, %v2721
      %v2723 = vpop.f32.mrb[0].mxu0
      %v2724 = vpop.f32.mrb[0].mxu0
      %v2725 = vadd.f32 0.0, %v2724
      %v2726 = vpop.f32.mrb[0].mxu0
      %2727 = vmatprep.mubr.bf16.mxu0 0
      %2728 = vmatmul.mubr.bf16.gmra.mrb[0].mxu0 %v2614
      %v2729 = vpop.f32.mrb[0].mxu0
      %v2730 = vadd.f32 0.0, %v2729
      %v2731 = vpop.f32.mrb[0].mxu0
      %v2732 = vpop.f32.mrb[0].mxu0
      %v2733 = vadd.f32 0.0, %v2732
      %v2734 = vpop.f32.mrb[0].mxu0
      %2735 = vmatprep.mubr.bf16.mxu0 0
      %2736 = vmatmul.mubr.bf16.gmra.mrb[0].mxu0 %v2617
      %v2737 = vpop.f32.mrb[0].mxu0
      %v2738 = vadd.f32 0.0, %v2737
      %v2739 = vpop.f32.mrb[0].mxu0
      %v2740 = vpop.f32.mrb[0].mxu0
      %v2741 = vadd.f32 0.0, %v2740
      %v2742 = vpop.f32.mrb[0].mxu0
      %2743 = vmatprep.mubr.bf16.mxu0 0
      %2744 = vmatmul.mubr.bf16.gmra.mrb[0].mxu0 %v2620
      %v2745 = vpop.f32.mrb[0].mxu0
      %v2746 = vadd.f32 0.0, %v2745
      %v2747 = vpop.f32.mrb[0].mxu0
      %v2748 = vpop.f32.mrb[0].mxu0
      %v2749 = vadd.f32 0.0, %v2748
      %v2750 = vpop.f32.mrb[0].mxu0
      %2751 = vmatprep.mubr.bf16.mxu0 0
      %2752 = vmatmul.mubr.bf16.gmra.mrb[0].mxu0 %v2623
      %v2753 = vpop.f32.mrb[0].mxu0
      %v2754 = vadd.f32 0.0, %v2753
      %v2755 = vpop.f32.mrb[0].mxu0
      %v2756 = vpop.f32.mrb[0].mxu0
      %v2757 = vadd.f32 0.0, %v2756
      %v2758 = vpop.f32.mrb[0].mxu0
      %2759 = vmatprep.mubr.bf16.mxu0 0
      %2760 = vmatmul.mubr.bf16.gmra.mrb[0].mxu0 %v2626
      %v2761 = vpop.f32.mrb[0].mxu0
      %v2762 = vadd.f32 0.0, %v2761
      %v2763 = vpop.f32.mrb[0].mxu0
      %v2764 = vpop.f32.mrb[0].mxu0
      %v2765 = vadd.f32 0.0, %v2764
      %v2766 = vpop.f32.mrb[0].mxu0
      %2767 = vmatprep.mubr.bf16.mxu0 0
      %2768 = vmatmul.mubr.bf16.gmra.mrb[0].mxu0 %v2629
      %v2769 = vpop.f32.mrb[0].mxu0
      %v2770 = vadd.f32 0.0, %v2769
      %v2771 = vpop.f32.mrb[0].mxu0
      %v2772 = vpop.f32.mrb[0].mxu0
      %v2773 = vadd.f32 0.0, %v2772
      %v2774 = vpop.f32.mrb[0].mxu0
      %2775 = vmatprep.mubr.bf16.mxu0 0
      %2776 = vmatmul.mubr.bf16.gmra.mrb[0].mxu0 %v2632
      %v2777 = vpop.f32.mrb[0].mxu0
      %v2778 = vadd.f32 0.0, %v2777
      %v2779 = vpop.f32.mrb[0].mxu0
      %v2780 = vpop.f32.mrb[0].mxu0
      %v2781 = vadd.f32 0.0, %v2780
      %v2782 = vpop.f32.mrb[0].mxu0
      %2783 = vmatprep.mubr.bf16.mxu0 0
      %2784 = vmatmul.mubr.bf16.gmra.mrb[0].mxu0 %v2635
      %v2785 = vpop.f32.mrb[0].mxu0
      %v2786 = vadd.f32 0.0, %v2785
      %v2787 = vpop.f32.mrb[0].mxu0
      %v2788 = vpop.f32.mrb[0].mxu0
      %v2789 = vadd.f32 0.0, %v2788
      %v2790 = vpop.f32.mrb[0].mxu0
      %2791 = vmatprep.mubr.bf16.mxu0 0
      %2792 = vmatmul.mubr.bf16.gmra.mrb[0].mxu0 %v2638
      %v2793 = vpop.f32.mrb[0].mxu0
      %v2794 = vadd.f32 0.0, %v2793
      %v2795 = vpop.f32.mrb[0].mxu0
      %v2796 = vpop.f32.mrb[0].mxu0
      %v2797 = vadd.f32 0.0, %v2796
      %v2798 = vpop.f32.mrb[0].mxu0
      %2799 = vmatprep.mubr.bf16.mxu0 0
      %2800 = vmatmul.mubr.bf16.gmra.mrb[0].mxu0 %v2641
      %v2801 = vpop.f32.mrb[0].mxu0
      %v2802 = vadd.f32 0.0, %v2801
      %v2803 = vpop.f32.mrb[0].mxu0
      %v2804 = vpop.f32.mrb[0].mxu0
      %v2805 = vadd.f32 0.0, %v2804
      %v2806 = vpop.f32.mrb[0].mxu0
      %2807 = vmatprep.mubr.bf16.mxu0 0
      %2808 = vmatmul.mubr.bf16.gmra.mrb[0].mxu0 %v2644
      %v2809 = vpop.f32.mrb[0].mxu0
      %v2810 = vadd.f32 0.0, %v2809
      %v2811 = vpop.f32.mrb[0].mxu0
      %v2812 = vpop.f32.mrb[0].mxu0
      %v2813 = vadd.f32 0.0, %v2812
      %v2814 = vpop.f32.mrb[0].mxu0
      %2815 = vmatprep.mubr.bf16.mxu0 0
      %2816 = vmatmul.mubr.bf16.gmra.mrb[0].mxu0 %v2647
      %v2817 = vpop.f32.mrb[0].mxu0
      %v2818 = vadd.f32 0.0, %v2817
      %v2819 = vpop.f32.mrb[0].mxu0
      %v2820 = vpop.f32.mrb[0].mxu0
      %v2821 = vadd.f32 0.0, %v2820
      %v2822 = vpop.f32.mrb[0].mxu0
      %2823 = vmatprep.mubr.bf16.mxu0 0
      %2824 = vmatmul.mubr.bf16.gmra.mrb[0].mxu0 %v2650
      %v2825 = vpop.f32.mrb[0].mxu0
      %v2826 = vadd.f32 0.0, %v2825
      %v2827 = vpop.f32.mrb[0].mxu0
      %v2828 = vpop.f32.mrb[0].mxu0
      %v2829 = vadd.f32 0.0, %v2828
      %v2830 = vpop.f32.mrb[0].mxu0
      %2831 = vmatprep.mubr.bf16.mxu0 0
      %2832 = vmatmul.mubr.bf16.gmra.mrb[0].mxu0 %v2653
      %v2833 = vpop.f32.mrb[0].mxu0
      %v2834 = vadd.f32 0.0, %v2833
      %v2835 = vpop.f32.mrb[0].mxu0
      %v2836 = vpop.f32.mrb[0].mxu0
      %v2837 = vadd.f32 0.0, %v2836
      %v2838 = vpop.f32.mrb[0].mxu0
      %2839 = vdwg.mxu0
      %v2840 = vadd.f32 %v1938, %v2690
      %v2841 = vadd.f32 %v1941, %v2693
      %v2842 = vadd.f32 %v1946, %v2698
      %v2843 = vadd.f32 %v1949, %v2701
      %v2844 = vadd.f32 %v1954, %v2706
      %v2845 = vadd.f32 %v1957, %v2709
      %v2846 = vadd.f32 %v1962, %v2714
      %v2847 = vadd.f32 %v1965, %v2717
      %v2848 = vadd.f32 %v1970, %v2722
      %v2849 = vadd.f32 %v1973, %v2725
      %v2850 = vadd.f32 %v1978, %v2730
      %v2851 = vadd.f32 %v1981, %v2733
      %v2852 = vadd.f32 %v1986, %v2738
      %v2853 = vadd.f32 %v1989, %v2741
      %v2854 = vadd.f32 %v1994, %v2746
      %v2855 = vadd.f32 %v1997, %v2749
      %v2856 = vadd.f32 %v2002, %v2754
      %v2857 = vadd.f32 %v2005, %v2757
      %v2858 = vadd.f32 %v2010, %v2762
      %v2859 = vadd.f32 %v2013, %v2765
      %v2860 = vadd.f32 %v2018, %v2770
      %v2861 = vadd.f32 %v2021, %v2773
      %v2862 = vadd.f32 %v2026, %v2778
      %v2863 = vadd.f32 %v2029, %v2781
      %v2864 = vadd.f32 %v2034, %v2786
      %v2865 = vadd.f32 %v2037, %v2789
      %v2866 = vadd.f32 %v2042, %v2794
      %v2867 = vadd.f32 %v2045, %v2797
      %v2868 = vadd.f32 %v2050, %v2802
      %v2869 = vadd.f32 %v2053, %v2805
      %v2870 = vadd.f32 %v2058, %v2810
      %v2871 = vadd.f32 %v2061, %v2813
      %v2872 = vadd.f32 %v2066, %v2818
      %v2873 = vadd.f32 %v2069, %v2821
      %v2874 = vadd.f32 %v2074, %v2826
      %v2875 = vadd.f32 %v2077, %v2829
      %v2876 = vadd.f32 %v2082, %v2834
      %v2877 = vadd.f32 %v2085, %v2837
      %v2878 = vld [vmem:[%s273 + $0x8] sm:$0xc]
      %v2879 = vld [vmem:[%s273 + $0xc] sm:$0xf]
      %v2880 = vld [vmem:[%s273 + $0x10] sm:$0xf]
      %v2881 = vld [vmem:[%s273 + $0x14] sm:$0xf]
      %v2882 = vld [vmem:[%s273 + $0x18] sm:$0xf]
      %v2883 = vld [vmem:[%s273 + $0x1c] sm:$0xf]
      %v2884 = vld [vmem:[%s273 + $0x20] sm:$0xf]
      %v2885 = vld [vmem:[%s273 + $0x24] sm:$0xf]
      %v2886 = vld [vmem:[%s273 + $0x28] sm:$0xf]
      %v2887 = vld [vmem:[%s273 + $0x2c] sm:$0xf]
      %v2888 = vld [vmem:[%s273 + $0x30] sm:$0xf]
      %v2889 = vld [vmem:[%s273 + $0x34] sm:$0xf]
      %v2890 = vld [vmem:[%s273 + $0x38] sm:$0xf]
      %v2891 = vld [vmem:[%s273 + $0x3c] sm:$0xf]
      %v2892 = vld [vmem:[%s273 + $0x40] sm:$0xf]
      %v2893 = vld [vmem:[%s273 + $0x44] sm:$0xf]
      %v2894 = vld [vmem:[%s273 + $0x48] sm:$0xf]
      %v2895 = vld [vmem:[%s273 + $0x4c] sm:$0xf]
      %v2896 = vld [vmem:[%s273 + $0x50] sm:$0xf]
      %v2897 = vld [vmem:[%s273 + $0x54] sm:$0xf]
      %v2898 = vld [vmem:[%s273 + $0x58] sm:$0xf]
      %v2899 = vld [vmem:[%s273 + $0x5c] sm:$0xf]
      %v2900 = vld [vmem:[%s273 + $0x60] sm:$0xf]
      %v2901 = vld [vmem:[%s273 + $0x64] sm:$0xf]
      %v2902 = vld [vmem:[%s273 + $0x68] sm:$0xf]
      %v2903 = vld [vmem:[%s273 + $0x6c] sm:$0xf]
      %v2904 = vld [vmem:[%s273 + $0x70] sm:$0xf]
      %v2905 = vld [vmem:[%s273 + $0x74] sm:$0xf]
      %v2906 = vld [vmem:[%s273 + $0x78] sm:$0xf]
      %v2907 = vld [vmem:[%s273 + $0x7c] sm:$0xf]
      %v2908 = vld [vmem:[%s273 + $0x80] sm:$0xf]
      %v2909 = vld [vmem:[%s273 + $0x84] sm:$0xf]
      %v2910 = vld [vmem:[%s273 + $0x88] sm:$0xf]
      %v2911 = vld [vmem:[%s273 + $0x8c] sm:$0xf]
      %v2912 = vld [vmem:[%s273 + $0x90] sm:$0xf]
      %v2913 = vld [vmem:[%s273 + $0x94] sm:$0xf]
      %v2914 = vld [vmem:[%s273 + $0x98] sm:$0xf]
      %v2915 = vld [vmem:[%s273 + $0x9c] sm:$0xf]
      %v2916 = vsel %vm1119, 65537, 0
      %v2917 = vsel %vm1120, 65537, 0
      %v2918 = vsel %vm1121, 65537, 0
      %v2919 = vsel %vm1122, 65537, 0
      %v2920 = vsel %vm1123, 65537, 0
      %v2921 = vsel %vm1124, 65537, 0
      %v2922 = vsel %vm1125, 65537, 0
      %v2923 = vsel %vm1126, 65537, 0
      %v2924 = vsel %vm1127, 65537, 0
      %v2925 = vsel %vm1128, 65537, 0
      %v2926 = vsel %vm1129, 65537, 0
      %v2927 = vsel %vm1130, 65537, 0
      %v2928 = vsel %vm1131, 65537, 0
      %v2929 = vsel %vm1132, 65537, 0
      %v2930 = vsel %vm1133, 65537, 0
      %v2931 = vsel %vm1134, 65537, 0
      %v2932 = vsel %vm1135, 65537, 0
      %v2933 = vsel %vm1136, 65537, 0
      %v2934 = vsel %vm1137, 65537, 0
      %v2935 = vsel %vm1138, 65537, 0
      %v2936 = vsel %vm1139, 65537, 0
      %v2937 = vsel %vm1140, 65537, 0
      %v2938 = vsel %vm1141, 65537, 0
      %v2939 = vsel %vm1142, 65537, 0
      %v2940 = vsel %vm1143, 65537, 0
      %v2941 = vsel %vm1144, 65537, 0
      %v2942 = vsel %vm1145, 65537, 0
      %v2943 = vsel %vm1146, 65537, 0
      %v2944 = vsel %vm1147, 65537, 0
      %v2945 = vsel %vm1148, 65537, 0
      %v2946 = vsel %vm1149, 65537, 0
      %v2947 = vsel %vm1150, 65537, 0
      %v2948 = vsel %vm1151, 65537, 0
      %v2949 = vsel %vm1152, 65537, 0
      %v2950 = vsel %vm1153, 65537, 0
      %v2951 = vsel %vm1154, 65537, 0
      %v2952 = vsel %vm1155, 65537, 0
      %v2953 = vsel %vm1156, 65537, 0
      %vm2954 = vcmask 1041408
      %vm2955 = vcmask 1045508
      %vm2956 = vmor %vm2954, %vm2955
      %v2957 = vrot.slane %v2916, 6
      %v2958 = vrot.slane %v2957, 4
      %v2959 = vrot.slane %v2917, 6
      %v2960 = vsel %vm2956, %v2958, %v2959
      %v2961 = vrot.slane %v2959, 4
      %v2962 = vrot.slane %v2918, 6
      %v2963 = vsel %vm2956, %v2961, %v2962
      %v2964 = vrot.slane %v2962, 4
      %v2965 = vrot.slane %v2919, 6
      %v2966 = vsel %vm2956, %v2964, %v2965
      %v2967 = vrot.slane %v2965, 4
      %v2968 = vrot.slane %v2920, 6
      %v2969 = vsel %vm2956, %v2967, %v2968
      %v2970 = vrot.slane %v2968, 4
      %v2971 = vrot.slane %v2921, 6
      %v2972 = vsel %vm2956, %v2970, %v2971
      %v2973 = vrot.slane %v2971, 4
      %v2974 = vrot.slane %v2922, 6
      %v2975 = vsel %vm2956, %v2973, %v2974
      %v2976 = vrot.slane %v2974, 4
      %v2977 = vrot.slane %v2923, 6
      %v2978 = vsel %vm2956, %v2976, %v2977
      %v2979 = vrot.slane %v2977, 4
      %v2980 = vrot.slane %v2924, 6
      %v2981 = vsel %vm2956, %v2979, %v2980
      %v2982 = vrot.slane %v2980, 4
      %v2983 = vrot.slane %v2925, 6
      %v2984 = vsel %vm2956, %v2982, %v2983
      %v2985 = vrot.slane %v2983, 4
      %v2986 = vrot.slane %v2926, 6
      %v2987 = vsel %vm2956, %v2985, %v2986
      %v2988 = vrot.slane %v2986, 4
      %v2989 = vrot.slane %v2927, 6
      %v2990 = vsel %vm2956, %v2988, %v2989
      %v2991 = vrot.slane %v2989, 4
      %v2992 = vrot.slane %v2928, 6
      %v2993 = vsel %vm2956, %v2991, %v2992
      %v2994 = vrot.slane %v2992, 4
      %v2995 = vrot.slane %v2929, 6
      %v2996 = vsel %vm2956, %v2994, %v2995
      %v2997 = vrot.slane %v2995, 4
      %v2998 = vrot.slane %v2930, 6
      %v2999 = vsel %vm2956, %v2997, %v2998
      %v3000 = vrot.slane %v2998, 4
      %v3001 = vrot.slane %v2931, 6
      %v3002 = vsel %vm2956, %v3000, %v3001
      %v3003 = vrot.slane %v3001, 4
      %v3004 = vrot.slane %v2932, 6
      %v3005 = vsel %vm2956, %v3003, %v3004
      %v3006 = vrot.slane %v3004, 4
      %v3007 = vrot.slane %v2933, 6
      %v3008 = vsel %vm2956, %v3006, %v3007
      %v3009 = vrot.slane %v3007, 4
      %v3010 = vrot.slane %v2934, 6
      %v3011 = vsel %vm2956, %v3009, %v3010
      %v3012 = vrot.slane %v3010, 4
      %v3013 = vrot.slane %v2935, 6
      %v3014 = vsel %vm2956, %v3012, %v3013
      %v3015 = vrot.slane %v3013, 4
      %v3016 = vrot.slane %v2936, 6
      %v3017 = vsel %vm2956, %v3015, %v3016
      %v3018 = vrot.slane %v3016, 4
      %v3019 = vrot.slane %v2937, 6
      %v3020 = vsel %vm2956, %v3018, %v3019
      %v3021 = vrot.slane %v3019, 4
      %v3022 = vrot.slane %v2938, 6
      %v3023 = vsel %vm2956, %v3021, %v3022
      %v3024 = vrot.slane %v3022, 4
      %v3025 = vrot.slane %v2939, 6
      %v3026 = vsel %vm2956, %v3024, %v3025
      %v3027 = vrot.slane %v3025, 4
      %v3028 = vrot.slane %v2940, 6
      %v3029 = vsel %vm2956, %v3027, %v3028
      %v3030 = vrot.slane %v3028, 4
      %v3031 = vrot.slane %v2941, 6
      %v3032 = vsel %vm2956, %v3030, %v3031
      %v3033 = vrot.slane %v3031, 4
      %v3034 = vrot.slane %v2942, 6
      %v3035 = vsel %vm2956, %v3033, %v3034
      %v3036 = vrot.slane %v3034, 4
      %v3037 = vrot.slane %v2943, 6
      %v3038 = vsel %vm2956, %v3036, %v3037
      %v3039 = vrot.slane %v3037, 4
      %v3040 = vrot.slane %v2944, 6
      %v3041 = vsel %vm2956, %v3039, %v3040
      %v3042 = vrot.slane %v3040, 4
      %v3043 = vrot.slane %v2945, 6
      %v3044 = vsel %vm2956, %v3042, %v3043
      %v3045 = vrot.slane %v3043, 4
      %v3046 = vrot.slane %v2946, 6
      %v3047 = vsel %vm2956, %v3045, %v3046
      %v3048 = vrot.slane %v3046, 4
      %v3049 = vrot.slane %v2947, 6
      %v3050 = vsel %vm2956, %v3048, %v3049
      %v3051 = vrot.slane %v3049, 4
      %v3052 = vrot.slane %v2948, 6
      %v3053 = vsel %vm2956, %v3051, %v3052
      %v3054 = vrot.slane %v3052, 4
      %v3055 = vrot.slane %v2949, 6
      %v3056 = vsel %vm2956, %v3054, %v3055
      %v3057 = vrot.slane %v3055, 4
      %v3058 = vrot.slane %v2950, 6
      %v3059 = vsel %vm2956, %v3057, %v3058
      %v3060 = vrot.slane %v3058, 4
      %v3061 = vrot.slane %v2951, 6
      %v3062 = vsel %vm2956, %v3060, %v3061
      %v3063 = vrot.slane %v3061, 4
      %v3064 = vrot.slane %v2952, 6
      %v3065 = vsel %vm2956, %v3063, %v3064
      %v3066 = vrot.slane %v3064, 4
      %v3067 = vrot.slane %v2953, 6
      %v3068 = vsel %vm2956, %v3066, %v3067
      %vm3069 = vcmp.ne.s16.totalorder %v2957, 0
      %vm3070 = vcmp.ne.s16.totalorder %v2960, 0
      %vm3071 = vcmp.ne.s16.totalorder %v2963, 0
      %vm3072 = vcmp.ne.s16.totalorder %v2966, 0
      %vm3073 = vcmp.ne.s16.totalorder %v2969, 0
      %vm3074 = vcmp.ne.s16.totalorder %v2972, 0
      %vm3075 = vcmp.ne.s16.totalorder %v2975, 0
      %vm3076 = vcmp.ne.s16.totalorder %v2978, 0
      %vm3077 = vcmp.ne.s16.totalorder %v2981, 0
      %vm3078 = vcmp.ne.s16.totalorder %v2984, 0
      %vm3079 = vcmp.ne.s16.totalorder %v2987, 0
      %vm3080 = vcmp.ne.s16.totalorder %v2990, 0
      %vm3081 = vcmp.ne.s16.totalorder %v2993, 0
      %vm3082 = vcmp.ne.s16.totalorder %v2996, 0
      %vm3083 = vcmp.ne.s16.totalorder %v2999, 0
      %vm3084 = vcmp.ne.s16.totalorder %v3002, 0
      %vm3085 = vcmp.ne.s16.totalorder %v3005, 0
      %vm3086 = vcmp.ne.s16.totalorder %v3008, 0
      %vm3087 = vcmp.ne.s16.totalorder %v3011, 0
      %vm3088 = vcmp.ne.s16.totalorder %v3014, 0
      %vm3089 = vcmp.ne.s16.totalorder %v3017, 0
      %vm3090 = vcmp.ne.s16.totalorder %v3020, 0
      %vm3091 = vcmp.ne.s16.totalorder %v3023, 0
      %vm3092 = vcmp.ne.s16.totalorder %v3026, 0
      %vm3093 = vcmp.ne.s16.totalorder %v3029, 0
      %vm3094 = vcmp.ne.s16.totalorder %v3032, 0
      %vm3095 = vcmp.ne.s16.totalorder %v3035, 0
      %vm3096 = vcmp.ne.s16.totalorder %v3038, 0
      %vm3097 = vcmp.ne.s16.totalorder %v3041, 0
      %vm3098 = vcmp.ne.s16.totalorder %v3044, 0
      %vm3099 = vcmp.ne.s16.totalorder %v3047, 0
      %vm3100 = vcmp.ne.s16.totalorder %v3050, 0
      %vm3101 = vcmp.ne.s16.totalorder %v3053, 0
      %vm3102 = vcmp.ne.s16.totalorder %v3056, 0
      %vm3103 = vcmp.ne.s16.totalorder %v3059, 0
      %vm3104 = vcmp.ne.s16.totalorder %v3062, 0
      %vm3105 = vcmp.ne.s16.totalorder %v3065, 0
      %vm3106 = vcmp.ne.s16.totalorder %v3068, 0
      %v3107 = vsel %vm3069, %v2878, 0
      %v3108 = vsel %vm3070, %v2879, 0
      %v3109 = vsel %vm3071, %v2880, 0
      %v3110 = vsel %vm3072, %v2881, 0
      %v3111 = vsel %vm3073, %v2882, 0
      %v3112 = vsel %vm3074, %v2883, 0
      %v3113 = vsel %vm3075, %v2884, 0
      %v3114 = vsel %vm3076, %v2885, 0
      %v3115 = vsel %vm3077, %v2886, 0
      %v3116 = vsel %vm3078, %v2887, 0
      %v3117 = vsel %vm3079, %v2888, 0
      %v3118 = vsel %vm3080, %v2889, 0
      %v3119 = vsel %vm3081, %v2890, 0
      %v3120 = vsel %vm3082, %v2891, 0
      %v3121 = vsel %vm3083, %v2892, 0
      %v3122 = vsel %vm3084, %v2893, 0
      %v3123 = vsel %vm3085, %v2894, 0
      %v3124 = vsel %vm3086, %v2895, 0
      %v3125 = vsel %vm3087, %v2896, 0
      %v3126 = vsel %vm3088, %v2897, 0
      %v3127 = vsel %vm3089, %v2898, 0
      %v3128 = vsel %vm3090, %v2899, 0
      %v3129 = vsel %vm3091, %v2900, 0
      %v3130 = vsel %vm3092, %v2901, 0
      %v3131 = vsel %vm3093, %v2902, 0
      %v3132 = vsel %vm3094, %v2903, 0
      %v3133 = vsel %vm3095, %v2904, 0
      %v3134 = vsel %vm3096, %v2905, 0
      %v3135 = vsel %vm3097, %v2906, 0
      %v3136 = vsel %vm3098, %v2907, 0
      %v3137 = vsel %vm3099, %v2908, 0
      %v3138 = vsel %vm3100, %v2909, 0
      %v3139 = vsel %vm3101, %v2910, 0
      %v3140 = vsel %vm3102, %v2911, 0
      %v3141 = vsel %vm3103, %v2912, 0
      %v3142 = vsel %vm3104, %v2913, 0
      %v3143 = vsel %vm3105, %v2914, 0
      %v3144 = vsel %vm3106, %v2915, 0
      %s3145 = scalar_lea.vmem %s1, 96
      %v3146 = vld [vmem:[%s3145] sm:$0xf]
      %v3147 = vld [vmem:[%s3145 + $0x4] sm:$0xf]
      %v3148 = vld [vmem:[%s3145 + $0x8] sm:$0xf]
      %v3149 = vld [vmem:[%s3145 + $0xc] sm:$0xf]
      %v3150 = vld [vmem:[%s3145 + $0x10] sm:$0xf]
      %v3151 = vld [vmem:[%s3145 + $0x14] sm:$0xf]
      %v3152 = vld [vmem:[%s3145 + $0x18] sm:$0xf]
      %v3153 = vld [vmem:[%s3145 + $0x1c] sm:$0xf]
      %v3192 = vunpack.c.l.b16 %v3107
      %v3193 = vunpack.c.l.b16 %v3108
      %v3194 = vunpack.c.l.b16 %v3109
      %v3195 = vunpack.c.l.b16 %v3110
      %v3196 = vunpack.c.l.b16 %v3111
      %v3197 = vunpack.c.l.b16 %v3112
      %v3198 = vunpack.c.l.b16 %v3113
      %v3199 = vunpack.c.l.b16 %v3114
      %v3200 = vunpack.c.l.b16 %v3115
      %v3201 = vunpack.c.l.b16 %v3116
      %v3202 = vunpack.c.l.b16 %v3117
      %v3203 = vunpack.c.l.b16 %v3118
      %v3204 = vunpack.c.l.b16 %v3119
      %v3205 = vunpack.c.l.b16 %v3120
      %v3206 = vunpack.c.l.b16 %v3121
      %v3207 = vunpack.c.l.b16 %v3122
      %v3208 = vunpack.c.l.b16 %v3123
      %v3209 = vunpack.c.l.b16 %v3124
      %v3210 = vunpack.c.l.b16 %v3125
      %v3211 = vunpack.c.l.b16 %v3126
      %v3212 = vunpack.c.l.b16 %v3127
      %v3213 = vunpack.c.l.b16 %v3128
      %v3214 = vunpack.c.l.b16 %v3129
      %v3215 = vunpack.c.l.b16 %v3130
      %v3216 = vunpack.c.l.b16 %v3131
      %v3217 = vunpack.c.l.b16 %v3132
      %v3218 = vunpack.c.l.b16 %v3133
      %v3219 = vunpack.c.l.b16 %v3134
      %v3220 = vunpack.c.l.b16 %v3135
      %v3221 = vunpack.c.l.b16 %v3136
      %v3222 = vunpack.c.l.b16 %v3137
      %v3223 = vunpack.c.l.b16 %v3138
      %v3224 = vunpack.c.l.b16 %v3139
      %v3225 = vunpack.c.l.b16 %v3140
      %v3226 = vunpack.c.l.b16 %v3141
      %v3227 = vunpack.c.l.b16 %v3142
      %v3228 = vunpack.c.l.b16 %v3143
      %v3229 = vunpack.c.l.b16 %v3144
      %v3230 = vpack.c.b16 %v3193, %v3192
      %v3231 = vpack.c.b16 %v3195, %v3194
      %v3232 = vpack.c.b16 %v3197, %v3196
      %v3233 = vpack.c.b16 %v3199, %v3198
      %v3234 = vpack.c.b16 %v3201, %v3200
      %v3235 = vpack.c.b16 %v3203, %v3202
      %v3236 = vpack.c.b16 %v3205, %v3204
      %v3237 = vpack.c.b16 %v3207, %v3206
      %v3238 = vpack.c.b16 %v3209, %v3208
      %v3239 = vpack.c.b16 %v3211, %v3210
      %v3240 = vpack.c.b16 %v3213, %v3212
      %v3241 = vpack.c.b16 %v3215, %v3214
      %v3242 = vpack.c.b16 %v3217, %v3216
      %v3243 = vpack.c.b16 %v3219, %v3218
      %v3244 = vpack.c.b16 %v3221, %v3220
      %v3245 = vpack.c.b16 %v3223, %v3222
      %v3246 = vpack.c.b16 %v3225, %v3224
      %v3247 = vpack.c.b16 %v3227, %v3226
      %v3248 = vpack.c.b16 %v3229, %v3228
      %vm3249 = vcmask 1045504
      %v3250 = vrot.slane %v3230, 2
      %v3251 = vrot.slane %v3231, 2
      %v3252 = vsel %vm3249, %v3250, %v3251
      %v3253 = vrot.slane %v3232, 2
      %v3254 = vsel %vm3249, %v3251, %v3253
      %v3255 = vrot.slane %v3233, 2
      %v3256 = vsel %vm3249, %v3253, %v3255
      %v3257 = vrot.slane %v3234, 2
      %v3258 = vsel %vm3249, %v3255, %v3257
      %v3259 = vrot.slane %v3235, 2
      %v3260 = vsel %vm3249, %v3257, %v3259
      %v3261 = vrot.slane %v3236, 2
      %v3262 = vsel %vm3249, %v3259, %v3261
      %v3263 = vrot.slane %v3237, 2
      %v3264 = vsel %vm3249, %v3261, %v3263
      %v3265 = vrot.slane %v3238, 2
      %v3266 = vsel %vm3249, %v3263, %v3265
      %v3267 = vrot.slane %v3239, 2
      %v3268 = vsel %vm3249, %v3265, %v3267
      %v3269 = vrot.slane %v3240, 2
      %v3270 = vsel %vm3249, %v3267, %v3269
      %v3271 = vrot.slane %v3241, 2
      %v3272 = vsel %vm3249, %v3269, %v3271
      %v3273 = vrot.slane %v3242, 2
      %v3274 = vsel %vm3249, %v3271, %v3273
      %v3275 = vrot.slane %v3243, 2
      %v3276 = vsel %vm3249, %v3273, %v3275
      %v3277 = vrot.slane %v3244, 2
      %v3278 = vsel %vm3249, %v3275, %v3277
      %v3279 = vrot.slane %v3245, 2
      %v3280 = vsel %vm3249, %v3277, %v3279
      %v3281 = vrot.slane %v3246, 2
      %v3282 = vsel %vm3249, %v3279, %v3281
      %v3283 = vrot.slane %v3247, 2
      %v3284 = vsel %vm3249, %v3281, %v3283
      %v3285 = vrot.slane %v3248, 2
      %v3286 = vsel %vm3249, %v3283, %v3285
      %v3295 = vunpack.c.l.b16 %v3146
      %v3296 = vunpack.c.l.b16 %v3147
      %v3297 = vunpack.c.l.b16 %v3148
      %v3298 = vunpack.c.l.b16 %v3149
      %v3299 = vunpack.c.l.b16 %v3150
      %v3300 = vunpack.c.l.b16 %v3151
      %v3301 = vunpack.c.l.b16 %v3152
      %v3302 = vunpack.c.l.b16 %v3153
      %v3303 = vpack.c.b16 %v3296, %v3295
      %v3304 = vpack.c.b16 %v3298, %v3297
      %v3305 = vpack.c.b16 %v3300, %v3299
      %v3306 = vpack.c.b16 %v3302, %v3301
      %v3312 = vsel %vm1484, %v3252, 0
      %v3315 = vsel %vm1484, %v3254, 0
      %v3318 = vsel %vm1484, %v3256, 0
      %v3321 = vsel %vm1484, %v3258, 0
      %v3324 = vsel %vm1484, %v3260, 0
      %v3327 = vsel %vm1484, %v3262, 0
      %v3330 = vsel %vm1484, %v3264, 0
      %v3333 = vsel %vm1484, %v3266, 0
      %v3336 = vsel %vm1484, %v3268, 0
      %v3339 = vsel %vm1484, %v3270, 0
      %v3342 = vsel %vm1484, %v3272, 0
      %v3345 = vsel %vm1484, %v3274, 0
      %v3348 = vsel %vm1484, %v3276, 0
      %v3351 = vsel %vm1484, %v3278, 0
      %v3354 = vsel %vm1484, %v3280, 0
      %v3357 = vsel %vm1484, %v3282, 0
      %v3360 = vsel %vm1484, %v3284, 0
      %v3363 = vsel %vm1484, %v3286, 0
      %v3366 = vsel %vm1484, %v3285, 0
      %3368 = vmatprep.subr.bf16.mxu0 0
      %3369 = vmatpush1.bf16.msra.mxu0 %v3303
      %3370 = vmatprep.subr.bf16.mxu0 0
      %3371 = vmatpush1.bf16.msra.mxu0 %v3304
      %3372 = vmatprep.subr.bf16.mxu0 0
      %3373 = vmatpush1.bf16.msra.mxu0 %v3305
      %3374 = vmatprep.subr.bf16.mxu0 0
      %3375 = vmatpush1.bf16.msra.mxu0 %v3306
      %3376 = vmatprep.subr.bf16.mxu0 0
      %3377 = vmatpush1.bf16.msra.mxu0 0
      %3378 = vmatprep.subr.bf16.mxu0 0
      %3379 = vmatpush1.bf16.msra.mxu0 0
      %3380 = vmatprep.subr.bf16.mxu0 0
      %3381 = vmatpush1.bf16.msra.mxu0 0
      %3382 = vmatprep.subr.bf16.mxu0 0
      %3383 = vmatpush1.bf16.msra.mxu0 0
      %3384 = vmatprep.subr.bf16.mxu0 0
      %3385 = vmatpush1.bf16.msra.mxu0 0
      %3386 = vmatprep.subr.bf16.mxu0 0
      %3387 = vmatpush1.bf16.msra.mxu0 0
      %3388 = vmatprep.subr.bf16.mxu0 0
      %3389 = vmatpush1.bf16.msra.mxu0 0
      %3390 = vmatprep.subr.bf16.mxu0 0
      %3391 = vmatpush1.bf16.msra.mxu0 0
      %3392 = vmatprep.subr.bf16.mxu0 0
      %3393 = vmatpush1.bf16.msra.mxu0 0
      %3394 = vmatprep.subr.bf16.mxu0 0
      %3395 = vmatpush1.bf16.msra.mxu0 0
      %3396 = vmatprep.subr.bf16.mxu0 0
      %3397 = vmatpush1.bf16.msra.mxu0 0
      %3398 = vmatprep.subr.bf16.mxu0 0
      %3399 = vmatpush1.bf16.msra.mxu0 0
      %3400 = vmatprep.mubr.bf16.mxu0 0
      %3401 = vmatmul.mubr.bf16.gmra.mrb[0].mxu0 %v3312
      %v3402 = vpop.f32.mrb[0].mxu0
      %v3403 = vadd.f32 0.0, %v3402
      %v3404 = vpop.f32.mrb[0].mxu0
      %v3405 = vpop.f32.mrb[0].mxu0
      %v3406 = vadd.f32 0.0, %v3405
      %v3407 = vpop.f32.mrb[0].mxu0
      %3408 = vmatprep.mubr.bf16.mxu0 0
      %3409 = vmatmul.mubr.bf16.gmra.mrb[0].mxu0 %v3315
      %v3410 = vpop.f32.mrb[0].mxu0
      %v3411 = vadd.f32 0.0, %v3410
      %v3412 = vpop.f32.mrb[0].mxu0
      %v3413 = vpop.f32.mrb[0].mxu0
      %v3414 = vadd.f32 0.0, %v3413
      %v3415 = vpop.f32.mrb[0].mxu0
      %3416 = vmatprep.mubr.bf16.mxu0 0
      %3417 = vmatmul.mubr.bf16.gmra.mrb[0].mxu0 %v3318
      %v3418 = vpop.f32.mrb[0].mxu0
      %v3419 = vadd.f32 0.0, %v3418
      %v3420 = vpop.f32.mrb[0].mxu0
      %v3421 = vpop.f32.mrb[0].mxu0
      %v3422 = vadd.f32 0.0, %v3421
      %v3423 = vpop.f32.mrb[0].mxu0
      %3424 = vmatprep.mubr.bf16.mxu0 0
      %3425 = vmatmul.mubr.bf16.gmra.mrb[0].mxu0 %v3321
      %v3426 = vpop.f32.mrb[0].mxu0
      %v3427 = vadd.f32 0.0, %v3426
      %v3428 = vpop.f32.mrb[0].mxu0
      %v3429 = vpop.f32.mrb[0].mxu0
      %v3430 = vadd.f32 0.0, %v3429
      %v3431 = vpop.f32.mrb[0].mxu0
      %3432 = vmatprep.mubr.bf16.mxu0 0
      %3433 = vmatmul.mubr.bf16.gmra.mrb[0].mxu0 %v3324
      %v3434 = vpop.f32.mrb[0].mxu0
      %v3435 = vadd.f32 0.0, %v3434
      %v3436 = vpop.f32.mrb[0].mxu0
      %v3437 = vpop.f32.mrb[0].mxu0
      %v3438 = vadd.f32 0.0, %v3437
      %v3439 = vpop.f32.mrb[0].mxu0
      %3440 = vmatprep.mubr.bf16.mxu0 0
      %3441 = vmatmul.mubr.bf16.gmra.mrb[0].mxu0 %v3327
      %v3442 = vpop.f32.mrb[0].mxu0
      %v3443 = vadd.f32 0.0, %v3442
      %v3444 = vpop.f32.mrb[0].mxu0
      %v3445 = vpop.f32.mrb[0].mxu0
      %v3446 = vadd.f32 0.0, %v3445
      %v3447 = vpop.f32.mrb[0].mxu0
      %3448 = vmatprep.mubr.bf16.mxu0 0
      %3449 = vmatmul.mubr.bf16.gmra.mrb[0].mxu0 %v3330
      %v3450 = vpop.f32.mrb[0].mxu0
      %v3451 = vadd.f32 0.0, %v3450
      %v3452 = vpop.f32.mrb[0].mxu0
      %v3453 = vpop.f32.mrb[0].mxu0
      %v3454 = vadd.f32 0.0, %v3453
      %v3455 = vpop.f32.mrb[0].mxu0
      %3456 = vmatprep.mubr.bf16.mxu0 0
      %3457 = vmatmul.mubr.bf16.gmra.mrb[0].mxu0 %v3333
      %v3458 = vpop.f32.mrb[0].mxu0
      %v3459 = vadd.f32 0.0, %v3458
      %v3460 = vpop.f32.mrb[0].mxu0
      %v3461 = vpop.f32.mrb[0].mxu0
      %v3462 = vadd.f32 0.0, %v3461
      %v3463 = vpop.f32.mrb[0].mxu0
      %3464 = vmatprep.mubr.bf16.mxu0 0
      %3465 = vmatmul.mubr.bf16.gmra.mrb[0].mxu0 %v3336
      %v3466 = vpop.f32.mrb[0].mxu0
      %v3467 = vadd.f32 0.0, %v3466
      %v3468 = vpop.f32.mrb[0].mxu0
      %v3469 = vpop.f32.mrb[0].mxu0
      %v3470 = vadd.f32 0.0, %v3469
      %v3471 = vpop.f32.mrb[0].mxu0
      %3472 = vmatprep.mubr.bf16.mxu0 0
      %3473 = vmatmul.mubr.bf16.gmra.mrb[0].mxu0 %v3339
      %v3474 = vpop.f32.mrb[0].mxu0
      %v3475 = vadd.f32 0.0, %v3474
      %v3476 = vpop.f32.mrb[0].mxu0
      %v3477 = vpop.f32.mrb[0].mxu0
      %v3478 = vadd.f32 0.0, %v3477
      %v3479 = vpop.f32.mrb[0].mxu0
      %3480 = vmatprep.mubr.bf16.mxu0 0
      %3481 = vmatmul.mubr.bf16.gmra.mrb[0].mxu0 %v3342
      %v3482 = vpop.f32.mrb[0].mxu0
      %v3483 = vadd.f32 0.0, %v3482
      %v3484 = vpop.f32.mrb[0].mxu0
      %v3485 = vpop.f32.mrb[0].mxu0
      %v3486 = vadd.f32 0.0, %v3485
      %v3487 = vpop.f32.mrb[0].mxu0
      %3488 = vmatprep.mubr.bf16.mxu0 0
      %3489 = vmatmul.mubr.bf16.gmra.mrb[0].mxu0 %v3345
      %v3490 = vpop.f32.mrb[0].mxu0
      %v3491 = vadd.f32 0.0, %v3490
      %v3492 = vpop.f32.mrb[0].mxu0
      %v3493 = vpop.f32.mrb[0].mxu0
      %v3494 = vadd.f32 0.0, %v3493
      %v3495 = vpop.f32.mrb[0].mxu0
      %3496 = vmatprep.mubr.bf16.mxu0 0
      %3497 = vmatmul.mubr.bf16.gmra.mrb[0].mxu0 %v3348
      %v3498 = vpop.f32.mrb[0].mxu0
      %v3499 = vadd.f32 0.0, %v3498
      %v3500 = vpop.f32.mrb[0].mxu0
      %v3501 = vpop.f32.mrb[0].mxu0
      %v3502 = vadd.f32 0.0, %v3501
      %v3503 = vpop.f32.mrb[0].mxu0
      %3504 = vmatprep.mubr.bf16.mxu0 0
      %3505 = vmatmul.mubr.bf16.gmra.mrb[0].mxu0 %v3351
      %v3506 = vpop.f32.mrb[0].mxu0
      %v3507 = vadd.f32 0.0, %v3506
      %v3508 = vpop.f32.mrb[0].mxu0
      %v3509 = vpop.f32.mrb[0].mxu0
      %v3510 = vadd.f32 0.0, %v3509
      %v3511 = vpop.f32.mrb[0].mxu0
      %3512 = vmatprep.mubr.bf16.mxu0 0
      %3513 = vmatmul.mubr.bf16.gmra.mrb[0].mxu0 %v3354
      %v3514 = vpop.f32.mrb[0].mxu0
      %v3515 = vadd.f32 0.0, %v3514
      %v3516 = vpop.f32.mrb[0].mxu0
      %v3517 = vpop.f32.mrb[0].mxu0
      %v3518 = vadd.f32 0.0, %v3517
      %v3519 = vpop.f32.mrb[0].mxu0
      %3520 = vmatprep.mubr.bf16.mxu0 0
      %3521 = vmatmul.mubr.bf16.gmra.mrb[0].mxu0 %v3357
      %v3522 = vpop.f32.mrb[0].mxu0
      %v3523 = vadd.f32 0.0, %v3522
      %v3524 = vpop.f32.mrb[0].mxu0
      %v3525 = vpop.f32.mrb[0].mxu0
      %v3526 = vadd.f32 0.0, %v3525
      %v3527 = vpop.f32.mrb[0].mxu0
      %3528 = vmatprep.mubr.bf16.mxu0 0
      %3529 = vmatmul.mubr.bf16.gmra.mrb[0].mxu0 %v3360
      %v3530 = vpop.f32.mrb[0].mxu0
      %v3531 = vadd.f32 0.0, %v3530
      %v3532 = vpop.f32.mrb[0].mxu0
      %v3533 = vpop.f32.mrb[0].mxu0
      %v3534 = vadd.f32 0.0, %v3533
      %v3535 = vpop.f32.mrb[0].mxu0
      %3536 = vmatprep.mubr.bf16.mxu0 0
      %3537 = vmatmul.mubr.bf16.gmra.mrb[0].mxu0 %v3363
      %v3538 = vpop.f32.mrb[0].mxu0
      %v3539 = vadd.f32 0.0, %v3538
      %v3540 = vpop.f32.mrb[0].mxu0
      %v3541 = vpop.f32.mrb[0].mxu0
      %v3542 = vadd.f32 0.0, %v3541
      %v3543 = vpop.f32.mrb[0].mxu0
      %3544 = vmatprep.mubr.bf16.mxu0 0
      %3545 = vmatmul.mubr.bf16.gmra.mrb[0].mxu0 %v3366
      %v3546 = vpop.f32.mrb[0].mxu0
      %v3547 = vadd.f32 0.0, %v3546
      %v3548 = vpop.f32.mrb[0].mxu0
      %v3549 = vpop.f32.mrb[0].mxu0
      %v3550 = vadd.f32 0.0, %v3549
      %v3551 = vpop.f32.mrb[0].mxu0
      %3552 = vdwg.mxu0
      %v3553 = vadd.f32 %v2840, %v3403
      %v3554 = vadd.f32 %v2841, %v3406
      %v3555 = vadd.f32 %v2842, %v3411
      %v3556 = vadd.f32 %v2843, %v3414
      %v3557 = vadd.f32 %v2844, %v3419
      %v3558 = vadd.f32 %v2845, %v3422
      %v3559 = vadd.f32 %v2846, %v3427
      %v3560 = vadd.f32 %v2847, %v3430
      %v3561 = vadd.f32 %v2848, %v3435
      %v3562 = vadd.f32 %v2849, %v3438
      %v3563 = vadd.f32 %v2850, %v3443
      %v3564 = vadd.f32 %v2851, %v3446
      %v3565 = vadd.f32 %v2852, %v3451
      %v3566 = vadd.f32 %v2853, %v3454
      %v3567 = vadd.f32 %v2854, %v3459
      %v3568 = vadd.f32 %v2855, %v3462
      %v3569 = vadd.f32 %v2856, %v3467
      %v3570 = vadd.f32 %v2857, %v3470
      %v3571 = vadd.f32 %v2858, %v3475
      %v3572 = vadd.f32 %v2859, %v3478
      %v3573 = vadd.f32 %v2860, %v3483
      %v3574 = vadd.f32 %v2861, %v3486
      %v3575 = vadd.f32 %v2862, %v3491
      %v3576 = vadd.f32 %v2863, %v3494
      %v3577 = vadd.f32 %v2864, %v3499
      %v3578 = vadd.f32 %v2865, %v3502
      %v3579 = vadd.f32 %v2866, %v3507
      %v3580 = vadd.f32 %v2867, %v3510
      %v3581 = vadd.f32 %v2868, %v3515
      %v3582 = vadd.f32 %v2869, %v3518
      %v3583 = vadd.f32 %v2870, %v3523
      %v3584 = vadd.f32 %v2871, %v3526
      %v3585 = vadd.f32 %v2872, %v3531
      %v3586 = vadd.f32 %v2873, %v3534
      %v3587 = vadd.f32 %v2874, %v3539
      %v3588 = vadd.f32 %v2875, %v3542
      %v3589 = vadd.f32 %v2876, %v3547
      %v3590 = vadd.f32 %v2877, %v3550
      %v3591 = vld [vmem:[%s273 + $0x8] sm:$0xc]
      %v3592 = vld [vmem:[%s273 + $0xc] sm:$0xf]
      %v3593 = vld [vmem:[%s273 + $0x10] sm:$0xf]
      %v3594 = vld [vmem:[%s273 + $0x14] sm:$0xf]
      %v3595 = vld [vmem:[%s273 + $0x18] sm:$0xf]
      %v3596 = vld [vmem:[%s273 + $0x1c] sm:$0xf]
      %v3597 = vld [vmem:[%s273 + $0x20] sm:$0xf]
      %v3598 = vld [vmem:[%s273 + $0x24] sm:$0xf]
      %v3599 = vld [vmem:[%s273 + $0x28] sm:$0xf]
      %v3600 = vld [vmem:[%s273 + $0x2c] sm:$0xf]
      %v3601 = vld [vmem:[%s273 + $0x30] sm:$0xf]
      %v3602 = vld [vmem:[%s273 + $0x34] sm:$0xf]
      %v3603 = vld [vmem:[%s273 + $0x38] sm:$0xf]
      %v3604 = vld [vmem:[%s273 + $0x3c] sm:$0xf]
      %v3605 = vld [vmem:[%s273 + $0x40] sm:$0xf]
      %v3606 = vld [vmem:[%s273 + $0x44] sm:$0xf]
      %v3607 = vld [vmem:[%s273 + $0x48] sm:$0xf]
      %v3608 = vld [vmem:[%s273 + $0x4c] sm:$0xf]
      %v3609 = vld [vmem:[%s273 + $0x50] sm:$0xf]
      %v3610 = vld [vmem:[%s273 + $0x54] sm:$0xf]
      %v3611 = vld [vmem:[%s273 + $0x58] sm:$0xf]
      %v3612 = vld [vmem:[%s273 + $0x5c] sm:$0xf]
      %v3613 = vld [vmem:[%s273 + $0x60] sm:$0xf]
      %v3614 = vld [vmem:[%s273 + $0x64] sm:$0xf]
      %v3615 = vld [vmem:[%s273 + $0x68] sm:$0xf]
      %v3616 = vld [vmem:[%s273 + $0x6c] sm:$0xf]
      %v3617 = vld [vmem:[%s273 + $0x70] sm:$0xf]
      %v3618 = vld [vmem:[%s273 + $0x74] sm:$0xf]
      %v3619 = vld [vmem:[%s273 + $0x78] sm:$0xf]
      %v3620 = vld [vmem:[%s273 + $0x7c] sm:$0xf]
      %v3621 = vld [vmem:[%s273 + $0x80] sm:$0xf]
      %v3622 = vld [vmem:[%s273 + $0x84] sm:$0xf]
      %v3623 = vld [vmem:[%s273 + $0x88] sm:$0xf]
      %v3624 = vld [vmem:[%s273 + $0x8c] sm:$0xf]
      %v3625 = vld [vmem:[%s273 + $0x90] sm:$0xf]
      %v3626 = vld [vmem:[%s273 + $0x94] sm:$0xf]
      %v3627 = vld [vmem:[%s273 + $0x98] sm:$0xf]
      %v3628 = vld [vmem:[%s273 + $0x9c] sm:$0xf]
      %v3629 = vld [vmem:[%s273 + $0xa0] sm:$0x1]
      %s3630 = scalar_lea.vmem %s1, 128
      %v3631 = vld [vmem:[%s3630] sm:$0xf]
      %v3632 = vld [vmem:[%s3630 + $0x4] sm:$0xf]
      %v3633 = vld [vmem:[%s3630 + $0x8] sm:$0xf]
      %v3634 = vld [vmem:[%s3630 + $0xc] sm:$0xf]
      %v3635 = vld [vmem:[%s3630 + $0x10] sm:$0xf]
      %v3636 = vld [vmem:[%s3630 + $0x14] sm:$0xf]
      %v3637 = vld [vmem:[%s3630 + $0x18] sm:$0xf]
      %v3638 = vld [vmem:[%s3630 + $0x1c] sm:$0xf]
      %v3678 = vunpack.c.l.b16 %v3591
      %v3679 = vunpack.c.l.b16 %v3592
      %v3680 = vunpack.c.l.b16 %v3593
      %v3681 = vunpack.c.l.b16 %v3594
      %v3682 = vunpack.c.l.b16 %v3595
      %v3683 = vunpack.c.l.b16 %v3596
      %v3684 = vunpack.c.l.b16 %v3597
      %v3685 = vunpack.c.l.b16 %v3598
      %v3686 = vunpack.c.l.b16 %v3599
      %v3687 = vunpack.c.l.b16 %v3600
      %v3688 = vunpack.c.l.b16 %v3601
      %v3689 = vunpack.c.l.b16 %v3602
      %v3690 = vunpack.c.l.b16 %v3603
      %v3691 = vunpack.c.l.b16 %v3604
      %v3692 = vunpack.c.l.b16 %v3605
      %v3693 = vunpack.c.l.b16 %v3606
      %v3694 = vunpack.c.l.b16 %v3607
      %v3695 = vunpack.c.l.b16 %v3608
      %v3696 = vunpack.c.l.b16 %v3609
      %v3697 = vunpack.c.l.b16 %v3610
      %v3698 = vunpack.c.l.b16 %v3611
      %v3699 = vunpack.c.l.b16 %v3612
      %v3700 = vunpack.c.l.b16 %v3613
      %v3701 = vunpack.c.l.b16 %v3614
      %v3702 = vunpack.c.l.b16 %v3615
      %v3703 = vunpack.c.l.b16 %v3616
      %v3704 = vunpack.c.l.b16 %v3617
      %v3705 = vunpack.c.l.b16 %v3618
      %v3706 = vunpack.c.l.b16 %v3619
      %v3707 = vunpack.c.l.b16 %v3620
      %v3708 = vunpack.c.l.b16 %v3621
      %v3709 = vunpack.c.l.b16 %v3622
      %v3710 = vunpack.c.l.b16 %v3623
      %v3711 = vunpack.c.l.b16 %v3624
      %v3712 = vunpack.c.l.b16 %v3625
      %v3713 = vunpack.c.l.b16 %v3626
      %v3714 = vunpack.c.l.b16 %v3627
      %v3715 = vunpack.c.l.b16 %v3628
      %v3716 = vunpack.c.l.b16 %v3629
      %v3717 = vpack.c.b16 %v3679, %v3678
      %v3718 = vpack.c.b16 %v3681, %v3680
      %v3719 = vpack.c.b16 %v3683, %v3682
      %v3720 = vpack.c.b16 %v3685, %v3684
      %v3721 = vpack.c.b16 %v3687, %v3686
      %v3722 = vpack.c.b16 %v3689, %v3688
      %v3723 = vpack.c.b16 %v3691, %v3690
      %v3724 = vpack.c.b16 %v3693, %v3692
      %v3725 = vpack.c.b16 %v3695, %v3694
      %v3726 = vpack.c.b16 %v3697, %v3696
      %v3727 = vpack.c.b16 %v3699, %v3698
      %v3728 = vpack.c.b16 %v3701, %v3700
      %v3729 = vpack.c.b16 %v3703, %v3702
      %v3730 = vpack.c.b16 %v3705, %v3704
      %v3731 = vpack.c.b16 %v3707, %v3706
      %v3732 = vpack.c.b16 %v3709, %v3708
      %v3733 = vpack.c.b16 %v3711, %v3710
      %v3734 = vpack.c.b16 %v3713, %v3712
      %v3735 = vpack.c.b16 %v3715, %v3714
      %v3736 = vpack.c.b16 %v3716, %v3716
      %vm3737 = vsmask.f32 5376
      %v3739 = vshrl.u32 %v3717, 16
      %v3741 = vrot.slane %v3739, 2
      %v3742 = vshll.u32 %v3717, 16
      %v3744 = vrot.slane %v3742, 3
      %v3745 = vor.u32 %v3741, %v3744
      %v3747 = vshrl.u32 %v3718, 16
      %v3749 = vrot.slane %v3747, 2
      %v3750 = vshll.u32 %v3718, 16
      %v3752 = vrot.slane %v3750, 3
      %v3753 = vor.u32 %v3749, %v3752
      %v3754 = vsel %vm3737, %v3745, %v3753
      %v3756 = vshrl.u32 %v3719, 16
      %v3758 = vrot.slane %v3756, 2
      %v3759 = vshll.u32 %v3719, 16
      %v3761 = vrot.slane %v3759, 3
      %v3762 = vor.u32 %v3758, %v3761
      %v3763 = vsel %vm3737, %v3753, %v3762
      %v3765 = vshrl.u32 %v3720, 16
      %v3767 = vrot.slane %v3765, 2
      %v3768 = vshll.u32 %v3720, 16
      %v3770 = vrot.slane %v3768, 3
      %v3771 = vor.u32 %v3767, %v3770
      %v3772 = vsel %vm3737, %v3762, %v3771
      %v3774 = vshrl.u32 %v3721, 16
      %v3776 = vrot.slane %v3774, 2
      %v3777 = vshll.u32 %v3721, 16
      %v3779 = vrot.slane %v3777, 3
      %v3780 = vor.u32 %v3776, %v3779
      %v3781 = vsel %vm3737, %v3771, %v3780
      %v3783 = vshrl.u32 %v3722, 16
      %v3785 = vrot.slane %v3783, 2
      %v3786 = vshll.u32 %v3722, 16
      %v3788 = vrot.slane %v3786, 3
      %v3789 = vor.u32 %v3785, %v3788
      %v3790 = vsel %vm3737, %v3780, %v3789
      %v3792 = vshrl.u32 %v3723, 16
      %v3794 = vrot.slane %v3792, 2
      %v3795 = vshll.u32 %v3723, 16
      %v3797 = vrot.slane %v3795, 3
      %v3798 = vor.u32 %v3794, %v3797
      %v3799 = vsel %vm3737, %v3789, %v3798
      %v3801 = vshrl.u32 %v3724, 16
      %v3803 = vrot.slane %v3801, 2
      %v3804 = vshll.u32 %v3724, 16
      %v3806 = vrot.slane %v3804, 3
      %v3807 = vor.u32 %v3803, %v3806
      %v3808 = vsel %vm3737, %v3798, %v3807
      %v3810 = vshrl.u32 %v3725, 16
      %v3812 = vrot.slane %v3810, 2
      %v3813 = vshll.u32 %v3725, 16
      %v3815 = vrot.slane %v3813, 3
      %v3816 = vor.u32 %v3812, %v3815
      %v3817 = vsel %vm3737, %v3807, %v3816
      %v3819 = vshrl.u32 %v3726, 16
      %v3821 = vrot.slane %v3819, 2
      %v3822 = vshll.u32 %v3726, 16
      %v3824 = vrot.slane %v3822, 3
      %v3825 = vor.u32 %v3821, %v3824
      %v3826 = vsel %vm3737, %v3816, %v3825
      %v3828 = vshrl.u32 %v3727, 16
      %v3830 = vrot.slane %v3828, 2
      %v3831 = vshll.u32 %v3727, 16
      %v3833 = vrot.slane %v3831, 3
      %v3834 = vor.u32 %v3830, %v3833
      %v3835 = vsel %vm3737, %v3825, %v3834
      %v3837 = vshrl.u32 %v3728, 16
      %v3839 = vrot.slane %v3837, 2
      %v3840 = vshll.u32 %v3728, 16
      %v3842 = vrot.slane %v3840, 3
      %v3843 = vor.u32 %v3839, %v3842
      %v3844 = vsel %vm3737, %v3834, %v3843
      %v3846 = vshrl.u32 %v3729, 16
      %v3848 = vrot.slane %v3846, 2
      %v3849 = vshll.u32 %v3729, 16
      %v3851 = vrot.slane %v3849, 3
      %v3852 = vor.u32 %v3848, %v3851
      %v3853 = vsel %vm3737, %v3843, %v3852
      %v3855 = vshrl.u32 %v3730, 16
      %v3857 = vrot.slane %v3855, 2
      %v3858 = vshll.u32 %v3730, 16
      %v3860 = vrot.slane %v3858, 3
      %v3861 = vor.u32 %v3857, %v3860
      %v3862 = vsel %vm3737, %v3852, %v3861
      %v3864 = vshrl.u32 %v3731, 16
      %v3866 = vrot.slane %v3864, 2
      %v3867 = vshll.u32 %v3731, 16
      %v3869 = vrot.slane %v3867, 3
      %v3870 = vor.u32 %v3866, %v3869
      %v3871 = vsel %vm3737, %v3861, %v3870
      %v3873 = vshrl.u32 %v3732, 16
      %v3875 = vrot.slane %v3873, 2
      %v3876 = vshll.u32 %v3732, 16
      %v3878 = vrot.slane %v3876, 3
      %v3879 = vor.u32 %v3875, %v3878
      %v3880 = vsel %vm3737, %v3870, %v3879
      %v3882 = vshrl.u32 %v3733, 16
      %v3884 = vrot.slane %v3882, 2
      %v3885 = vshll.u32 %v3733, 16
      %v3887 = vrot.slane %v3885, 3
      %v3888 = vor.u32 %v3884, %v3887
      %v3889 = vsel %vm3737, %v3879, %v3888
      %v3891 = vshrl.u32 %v3734, 16
      %v3893 = vrot.slane %v3891, 2
      %v3894 = vshll.u32 %v3734, 16
      %v3896 = vrot.slane %v3894, 3
      %v3897 = vor.u32 %v3893, %v3896
      %v3898 = vsel %vm3737, %v3888, %v3897
      %v3900 = vshrl.u32 %v3735, 16
      %v3902 = vrot.slane %v3900, 2
      %v3903 = vshll.u32 %v3735, 16
      %v3905 = vrot.slane %v3903, 3
      %v3906 = vor.u32 %v3902, %v3905
      %v3907 = vsel %vm3737, %v3897, %v3906
      %v3909 = vshll.u32 %v3736, 16
      %v3911 = vrot.slane %v3909, 3
      %v3912 = vsel %vm3737, %v3906, %v3911
      %v3921 = vunpack.c.l.b16 %v3631
      %v3922 = vunpack.c.l.b16 %v3632
      %v3923 = vunpack.c.l.b16 %v3633
      %v3924 = vunpack.c.l.b16 %v3634
      %v3925 = vunpack.c.l.b16 %v3635
      %v3926 = vunpack.c.l.b16 %v3636
      %v3927 = vunpack.c.l.b16 %v3637
      %v3928 = vunpack.c.l.b16 %v3638
      %v3929 = vpack.c.b16 %v3922, %v3921
      %v3930 = vpack.c.b16 %v3924, %v3923
      %v3931 = vpack.c.b16 %v3926, %v3925
      %v3932 = vpack.c.b16 %v3928, %v3927
      %v3938 = vsel %vm1484, %v3754, 0
      %v3941 = vsel %vm1484, %v3763, 0
      %v3944 = vsel %vm1484, %v3772, 0
      %v3947 = vsel %vm1484, %v3781, 0
      %v3950 = vsel %vm1484, %v3790, 0
      %v3953 = vsel %vm1484, %v3799, 0
      %v3956 = vsel %vm1484, %v3808, 0
      %v3959 = vsel %vm1484, %v3817, 0
      %v3962 = vsel %vm1484, %v3826, 0
      %v3965 = vsel %vm1484, %v3835, 0
      %v3968 = vsel %vm1484, %v3844, 0
      %v3971 = vsel %vm1484, %v3853, 0
      %v3974 = vsel %vm1484, %v3862, 0
      %v3977 = vsel %vm1484, %v3871, 0
      %v3980 = vsel %vm1484, %v3880, 0
      %v3983 = vsel %vm1484, %v3889, 0
      %v3986 = vsel %vm1484, %v3898, 0
      %v3989 = vsel %vm1484, %v3907, 0
      %v3992 = vsel %vm1484, %v3912, 0
      %3994 = vmatprep.subr.bf16.mxu0 0
      %3995 = vmatpush1.bf16.msra.mxu0 %v3929
      %3996 = vmatprep.subr.bf16.mxu0 0
      %3997 = vmatpush1.bf16.msra.mxu0 %v3930
      %3998 = vmatprep.subr.bf16.mxu0 0
      %3999 = vmatpush1.bf16.msra.mxu0 %v3931
      %4000 = vmatprep.subr.bf16.mxu0 0
      %4001 = vmatpush1.bf16.msra.mxu0 %v3932
      %4002 = vmatprep.subr.bf16.mxu0 0
      %4003 = vmatpush1.bf16.msra.mxu0 0
      %4004 = vmatprep.subr.bf16.mxu0 0
      %4005 = vmatpush1.bf16.msra.mxu0 0
      %4006 = vmatprep.subr.bf16.mxu0 0
      %4007 = vmatpush1.bf16.msra.mxu0 0
      %4008 = vmatprep.subr.bf16.mxu0 0
      %4009 = vmatpush1.bf16.msra.mxu0 0
      %4010 = vmatprep.subr.bf16.mxu0 0
      %4011 = vmatpush1.bf16.msra.mxu0 0
      %4012 = vmatprep.subr.bf16.mxu0 0
      %4013 = vmatpush1.bf16.msra.mxu0 0
      %4014 = vmatprep.subr.bf16.mxu0 0
      %4015 = vmatpush1.bf16.msra.mxu0 0
      %4016 = vmatprep.subr.bf16.mxu0 0
      %4017 = vmatpush1.bf16.msra.mxu0 0
      %4018 = vmatprep.subr.bf16.mxu0 0
      %4019 = vmatpush1.bf16.msra.mxu0 0
      %4020 = vmatprep.subr.bf16.mxu0 0
      %4021 = vmatpush1.bf16.msra.mxu0 0
      %4022 = vmatprep.subr.bf16.mxu0 0
      %4023 = vmatpush1.bf16.msra.mxu0 0
      %4024 = vmatprep.subr.bf16.mxu0 0
      %4025 = vmatpush1.bf16.msra.mxu0 0
      %4026 = vmatprep.mubr.bf16.mxu0 0
      %4027 = vmatmul.mubr.bf16.gmra.mrb[0].mxu0 %v3938
      %v4028 = vpop.f32.mrb[0].mxu0
      %v4029 = vadd.f32 0.0, %v4028
      %v4030 = vpop.f32.mrb[0].mxu0
      %v4031 = vpop.f32.mrb[0].mxu0
      %v4032 = vadd.f32 0.0, %v4031
      %v4033 = vpop.f32.mrb[0].mxu0
      %4034 = vmatprep.mubr.bf16.mxu0 0
      %4035 = vmatmul.mubr.bf16.gmra.mrb[0].mxu0 %v3941
      %v4036 = vpop.f32.mrb[0].mxu0
      %v4037 = vadd.f32 0.0, %v4036
      %v4038 = vpop.f32.mrb[0].mxu0
      %v4039 = vpop.f32.mrb[0].mxu0
      %v4040 = vadd.f32 0.0, %v4039
      %v4041 = vpop.f32.mrb[0].mxu0
      %4042 = vmatprep.mubr.bf16.mxu0 0
      %4043 = vmatmul.mubr.bf16.gmra.mrb[0].mxu0 %v3944
      %v4044 = vpop.f32.mrb[0].mxu0
      %v4045 = vadd.f32 0.0, %v4044
      %v4046 = vpop.f32.mrb[0].mxu0
      %v4047 = vpop.f32.mrb[0].mxu0
      %v4048 = vadd.f32 0.0, %v4047
      %v4049 = vpop.f32.mrb[0].mxu0
      %4050 = vmatprep.mubr.bf16.mxu0 0
      %4051 = vmatmul.mubr.bf16.gmra.mrb[0].mxu0 %v3947
      %v4052 = vpop.f32.mrb[0].mxu0
      %v4053 = vadd.f32 0.0, %v4052
      %v4054 = vpop.f32.mrb[0].mxu0
      %v4055 = vpop.f32.mrb[0].mxu0
      %v4056 = vadd.f32 0.0, %v4055
      %v4057 = vpop.f32.mrb[0].mxu0
      %4058 = vmatprep.mubr.bf16.mxu0 0
      %4059 = vmatmul.mubr.bf16.gmra.mrb[0].mxu0 %v3950
      %v4060 = vpop.f32.mrb[0].mxu0
      %v4061 = vadd.f32 0.0, %v4060
      %v4062 = vpop.f32.mrb[0].mxu0
      %v4063 = vpop.f32.mrb[0].mxu0
      %v4064 = vadd.f32 0.0, %v4063
      %v4065 = vpop.f32.mrb[0].mxu0
      %4066 = vmatprep.mubr.bf16.mxu0 0
      %4067 = vmatmul.mubr.bf16.gmra.mrb[0].mxu0 %v3953
      %v4068 = vpop.f32.mrb[0].mxu0
      %v4069 = vadd.f32 0.0, %v4068
      %v4070 = vpop.f32.mrb[0].mxu0
      %v4071 = vpop.f32.mrb[0].mxu0
      %v4072 = vadd.f32 0.0, %v4071
      %v4073 = vpop.f32.mrb[0].mxu0
      %4074 = vmatprep.mubr.bf16.mxu0 0
      %4075 = vmatmul.mubr.bf16.gmra.mrb[0].mxu0 %v3956
      %v4076 = vpop.f32.mrb[0].mxu0
      %v4077 = vadd.f32 0.0, %v4076
      %v4078 = vpop.f32.mrb[0].mxu0
      %v4079 = vpop.f32.mrb[0].mxu0
      %v4080 = vadd.f32 0.0, %v4079
      %v4081 = vpop.f32.mrb[0].mxu0
      %4082 = vmatprep.mubr.bf16.mxu0 0
      %4083 = vmatmul.mubr.bf16.gmra.mrb[0].mxu0 %v3959
      %v4084 = vpop.f32.mrb[0].mxu0
      %v4085 = vadd.f32 0.0, %v4084
      %v4086 = vpop.f32.mrb[0].mxu0
      %v4087 = vpop.f32.mrb[0].mxu0
      %v4088 = vadd.f32 0.0, %v4087
      %v4089 = vpop.f32.mrb[0].mxu0
      %4090 = vmatprep.mubr.bf16.mxu0 0
      %4091 = vmatmul.mubr.bf16.gmra.mrb[0].mxu0 %v3962
      %v4092 = vpop.f32.mrb[0].mxu0
      %v4093 = vadd.f32 0.0, %v4092
      %v4094 = vpop.f32.mrb[0].mxu0
      %v4095 = vpop.f32.mrb[0].mxu0
      %v4096 = vadd.f32 0.0, %v4095
      %v4097 = vpop.f32.mrb[0].mxu0
      %4098 = vmatprep.mubr.bf16.mxu0 0
      %4099 = vmatmul.mubr.bf16.gmra.mrb[0].mxu0 %v3965
      %v4100 = vpop.f32.mrb[0].mxu0
      %v4101 = vadd.f32 0.0, %v4100
      %v4102 = vpop.f32.mrb[0].mxu0
      %v4103 = vpop.f32.mrb[0].mxu0
      %v4104 = vadd.f32 0.0, %v4103
      %v4105 = vpop.f32.mrb[0].mxu0
      %4106 = vmatprep.mubr.bf16.mxu0 0
      %4107 = vmatmul.mubr.bf16.gmra.mrb[0].mxu0 %v3968
      %v4108 = vpop.f32.mrb[0].mxu0
      %v4109 = vadd.f32 0.0, %v4108
      %v4110 = vpop.f32.mrb[0].mxu0
      %v4111 = vpop.f32.mrb[0].mxu0
      %v4112 = vadd.f32 0.0, %v4111
      %v4113 = vpop.f32.mrb[0].mxu0
      %4114 = vmatprep.mubr.bf16.mxu0 0
      %4115 = vmatmul.mubr.bf16.gmra.mrb[0].mxu0 %v3971
      %v4116 = vpop.f32.mrb[0].mxu0
      %v4117 = vadd.f32 0.0, %v4116
      %v4118 = vpop.f32.mrb[0].mxu0
      %v4119 = vpop.f32.mrb[0].mxu0
      %v4120 = vadd.f32 0.0, %v4119
      %v4121 = vpop.f32.mrb[0].mxu0
      %4122 = vmatprep.mubr.bf16.mxu0 0
      %4123 = vmatmul.mubr.bf16.gmra.mrb[0].mxu0 %v3974
      %v4124 = vpop.f32.mrb[0].mxu0
      %v4125 = vadd.f32 0.0, %v4124
      %v4126 = vpop.f32.mrb[0].mxu0
      %v4127 = vpop.f32.mrb[0].mxu0
      %v4128 = vadd.f32 0.0, %v4127
      %v4129 = vpop.f32.mrb[0].mxu0
      %4130 = vmatprep.mubr.bf16.mxu0 0
      %4131 = vmatmul.mubr.bf16.gmra.mrb[0].mxu0 %v3977
      %v4132 = vpop.f32.mrb[0].mxu0
      %v4133 = vadd.f32 0.0, %v4132
      %v4134 = vpop.f32.mrb[0].mxu0
      %v4135 = vpop.f32.mrb[0].mxu0
      %v4136 = vadd.f32 0.0, %v4135
      %v4137 = vpop.f32.mrb[0].mxu0
      %4138 = vmatprep.mubr.bf16.mxu0 0
      %4139 = vmatmul.mubr.bf16.gmra.mrb[0].mxu0 %v3980
      %v4140 = vpop.f32.mrb[0].mxu0
      %v4141 = vadd.f32 0.0, %v4140
      %v4142 = vpop.f32.mrb[0].mxu0
      %v4143 = vpop.f32.mrb[0].mxu0
      %v4144 = vadd.f32 0.0, %v4143
      %v4145 = vpop.f32.mrb[0].mxu0
      %4146 = vmatprep.mubr.bf16.mxu0 0
      %4147 = vmatmul.mubr.bf16.gmra.mrb[0].mxu0 %v3983
      %v4148 = vpop.f32.mrb[0].mxu0
      %v4149 = vadd.f32 0.0, %v4148
      %v4150 = vpop.f32.mrb[0].mxu0
      %v4151 = vpop.f32.mrb[0].mxu0
      %v4152 = vadd.f32 0.0, %v4151
      %v4153 = vpop.f32.mrb[0].mxu0
      %4154 = vmatprep.mubr.bf16.mxu0 0
      %4155 = vmatmul.mubr.bf16.gmra.mrb[0].mxu0 %v3986
      %v4156 = vpop.f32.mrb[0].mxu0
      %v4157 = vadd.f32 0.0, %v4156
      %v4158 = vpop.f32.mrb[0].mxu0
      %v4159 = vpop.f32.mrb[0].mxu0
      %v4160 = vadd.f32 0.0, %v4159
      %v4161 = vpop.f32.mrb[0].mxu0
      %4162 = vmatprep.mubr.bf16.mxu0 0
      %4163 = vmatmul.mubr.bf16.gmra.mrb[0].mxu0 %v3989
      %v4164 = vpop.f32.mrb[0].mxu0
      %v4165 = vadd.f32 0.0, %v4164
      %v4166 = vpop.f32.mrb[0].mxu0
      %v4167 = vpop.f32.mrb[0].mxu0
      %v4168 = vadd.f32 0.0, %v4167
      %v4169 = vpop.f32.mrb[0].mxu0
      %4170 = vmatprep.mubr.bf16.mxu0 0
      %4171 = vmatmul.mubr.bf16.gmra.mrb[0].mxu0 %v3992
      %v4172 = vpop.f32.mrb[0].mxu0
      %v4173 = vadd.f32 0.0, %v4172
      %v4174 = vpop.f32.mrb[0].mxu0
      %v4175 = vpop.f32.mrb[0].mxu0
      %v4176 = vadd.f32 0.0, %v4175
      %v4177 = vpop.f32.mrb[0].mxu0
      %4178 = vdwg.mxu0
      %v4179 = vadd.f32 %v3553, %v4029
      %v4180 = vadd.f32 %v3554, %v4032
      %v4181 = vadd.f32 %v3555, %v4037
      %v4182 = vadd.f32 %v3556, %v4040
      %v4183 = vadd.f32 %v3557, %v4045
      %v4184 = vadd.f32 %v3558, %v4048
      %v4185 = vadd.f32 %v3559, %v4053
      %v4186 = vadd.f32 %v3560, %v4056
      %v4187 = vadd.f32 %v3561, %v4061
      %v4188 = vadd.f32 %v3562, %v4064
      %v4189 = vadd.f32 %v3563, %v4069
      %v4190 = vadd.f32 %v3564, %v4072
      %v4191 = vadd.f32 %v3565, %v4077
      %v4192 = vadd.f32 %v3566, %v4080
      %v4193 = vadd.f32 %v3567, %v4085
      %v4194 = vadd.f32 %v3568, %v4088
      %v4195 = vadd.f32 %v3569, %v4093
      %v4196 = vadd.f32 %v3570, %v4096
      %v4197 = vadd.f32 %v3571, %v4101
      %v4198 = vadd.f32 %v3572, %v4104
      %v4199 = vadd.f32 %v3573, %v4109
      %v4200 = vadd.f32 %v3574, %v4112
      %v4201 = vadd.f32 %v3575, %v4117
      %v4202 = vadd.f32 %v3576, %v4120
      %v4203 = vadd.f32 %v3577, %v4125
      %v4204 = vadd.f32 %v3578, %v4128
      %v4205 = vadd.f32 %v3579, %v4133
      %v4206 = vadd.f32 %v3580, %v4136
      %v4207 = vadd.f32 %v3581, %v4141
      %v4208 = vadd.f32 %v3582, %v4144
      %v4209 = vadd.f32 %v3583, %v4149
      %v4210 = vadd.f32 %v3584, %v4152
      %v4211 = vadd.f32 %v3585, %v4157
      %v4212 = vadd.f32 %v3586, %v4160
      %v4213 = vadd.f32 %v3587, %v4165
      %v4214 = vadd.f32 %v3588, %v4168
      %v4215 = vadd.f32 %v3589, %v4173
      %v4216 = vadd.f32 %v3590, %v4176
      %v4217 = vld [vmem:[%s273 + $0x8] sm:$0x8]
      %vm4218 = vcmask 1042432
      %vm4219 = vcmask 1046532
      %vm4220 = vmor %vm4218, %vm4219
      %v4221 = vrot.slane %v2203, 5
      %v4222 = vrot.slane %v4221, 4
      %v4223 = vrot.slane %v2204, 5
      %v4224 = vsel %vm4220, %v4222, %v4223
      %v4225 = vrot.slane %v4223, 4
      %v4226 = vrot.slane %v2205, 5
      %v4227 = vsel %vm4220, %v4225, %v4226
      %v4228 = vrot.slane %v4226, 4
      %v4229 = vrot.slane %v2206, 5
      %v4230 = vsel %vm4220, %v4228, %v4229
      %v4231 = vrot.slane %v4229, 4
      %v4232 = vrot.slane %v2207, 5
      %v4233 = vsel %vm4220, %v4231, %v4232
      %v4234 = vrot.slane %v4232, 4
      %v4235 = vrot.slane %v2208, 5
      %v4236 = vsel %vm4220, %v4234, %v4235
      %v4237 = vrot.slane %v4235, 4
      %v4238 = vrot.slane %v2209, 5
      %v4239 = vsel %vm4220, %v4237, %v4238
      %v4240 = vrot.slane %v4238, 4
      %v4241 = vrot.slane %v2210, 5
      %v4242 = vsel %vm4220, %v4240, %v4241
      %v4243 = vrot.slane %v4241, 4
      %v4244 = vrot.slane %v2211, 5
      %v4245 = vsel %vm4220, %v4243, %v4244
      %v4246 = vrot.slane %v4244, 4
      %v4247 = vrot.slane %v2212, 5
      %v4248 = vsel %vm4220, %v4246, %v4247
      %v4249 = vrot.slane %v4247, 4
      %v4250 = vrot.slane %v2213, 5
      %v4251 = vsel %vm4220, %v4249, %v4250
      %v4252 = vrot.slane %v4250, 4
      %v4253 = vrot.slane %v2214, 5
      %v4254 = vsel %vm4220, %v4252, %v4253
      %v4255 = vrot.slane %v4253, 4
      %v4256 = vrot.slane %v2215, 5
      %v4257 = vsel %vm4220, %v4255, %v4256
      %v4258 = vrot.slane %v4256, 4
      %v4259 = vrot.slane %v2216, 5
      %v4260 = vsel %vm4220, %v4258, %v4259
      %v4261 = vrot.slane %v4259, 4
      %v4262 = vrot.slane %v2217, 5
      %v4263 = vsel %vm4220, %v4261, %v4262
      %v4264 = vrot.slane %v4262, 4
      %v4265 = vrot.slane %v2218, 5
      %v4266 = vsel %vm4220, %v4264, %v4265
      %v4267 = vrot.slane %v4265, 4
      %v4268 = vrot.slane %v2219, 5
      %v4269 = vsel %vm4220, %v4267, %v4268
      %v4270 = vrot.slane %v4268, 4
      %v4271 = vrot.slane %v2220, 5
      %v4272 = vsel %vm4220, %v4270, %v4271
      %v4273 = vrot.slane %v4271, 4
      %v4274 = vrot.slane %v2221, 5
      %v4275 = vsel %vm4220, %v4273, %v4274
      %v4276 = vrot.slane %v4274, 4
      %v4277 = vrot.slane %v2222, 5
      %v4278 = vsel %vm4220, %v4276, %v4277
      %v4279 = vrot.slane %v4277, 4
      %v4280 = vrot.slane %v2223, 5
      %v4281 = vsel %vm4220, %v4279, %v4280
      %v4282 = vrot.slane %v4280, 4
      %v4283 = vrot.slane %v2224, 5
      %v4284 = vsel %vm4220, %v4282, %v4283
      %v4285 = vrot.slane %v4283, 4
      %v4286 = vrot.slane %v2225, 5
      %v4287 = vsel %vm4220, %v4285, %v4286
      %v4288 = vrot.slane %v4286, 4
      %v4289 = vrot.slane %v2226, 5
      %v4290 = vsel %vm4220, %v4288, %v4289
      %v4291 = vrot.slane %v4289, 4
      %v4292 = vrot.slane %v2227, 5
      %v4293 = vsel %vm4220, %v4291, %v4292
      %v4294 = vrot.slane %v4292, 4
      %v4295 = vrot.slane %v2228, 5
      %v4296 = vsel %vm4220, %v4294, %v4295
      %v4297 = vrot.slane %v4295, 4
      %v4298 = vrot.slane %v2229, 5
      %v4299 = vsel %vm4220, %v4297, %v4298
      %v4300 = vrot.slane %v4298, 4
      %v4301 = vrot.slane %v2230, 5
      %v4302 = vsel %vm4220, %v4300, %v4301
      %v4303 = vrot.slane %v4301, 4
      %v4304 = vrot.slane %v2231, 5
      %v4305 = vsel %vm4220, %v4303, %v4304
      %v4306 = vrot.slane %v4304, 4
      %v4307 = vrot.slane %v2232, 5
      %v4308 = vsel %vm4220, %v4306, %v4307
      %v4309 = vrot.slane %v4307, 4
      %v4310 = vrot.slane %v2233, 5
      %v4311 = vsel %vm4220, %v4309, %v4310
      %v4312 = vrot.slane %v4310, 4
      %v4313 = vrot.slane %v2234, 5
      %v4314 = vsel %vm4220, %v4312, %v4313
      %v4315 = vrot.slane %v4313, 4
      %v4316 = vrot.slane %v2235, 5
      %v4317 = vsel %vm4220, %v4315, %v4316
      %v4318 = vrot.slane %v4316, 4
      %v4319 = vrot.slane %v2236, 5
      %v4320 = vsel %vm4220, %v4318, %v4319
      %v4321 = vrot.slane %v4319, 4
      %v4322 = vrot.slane %v2237, 5
      %v4323 = vsel %vm4220, %v4321, %v4322
      %v4324 = vrot.slane %v4322, 4
      %v4325 = vrot.slane %v2238, 5
      %v4326 = vsel %vm4220, %v4324, %v4325
      %v4327 = vrot.slane %v4325, 4
      %v4328 = vrot.slane %v2239, 5
      %v4329 = vsel %vm4220, %v4327, %v4328
      %v4330 = vrot.slane %v4328, 4
      %v4331 = vrot.slane %v2240, 5
      %v4332 = vsel %vm4220, %v4330, %v4331
      %v4333 = vrot.slane %v4331, 4
      %vm4334 = vcmp.ne.s16.totalorder %v4221, 0
      %vm4335 = vcmp.ne.s16.totalorder %v4224, 0
      %vm4336 = vcmp.ne.s16.totalorder %v4227, 0
      %vm4337 = vcmp.ne.s16.totalorder %v4230, 0
      %vm4338 = vcmp.ne.s16.totalorder %v4233, 0
      %vm4339 = vcmp.ne.s16.totalorder %v4236, 0
      %vm4340 = vcmp.ne.s16.totalorder %v4239, 0
      %vm4341 = vcmp.ne.s16.totalorder %v4242, 0
      %vm4342 = vcmp.ne.s16.totalorder %v4245, 0
      %vm4343 = vcmp.ne.s16.totalorder %v4248, 0
      %vm4344 = vcmp.ne.s16.totalorder %v4251, 0
      %vm4345 = vcmp.ne.s16.totalorder %v4254, 0
      %vm4346 = vcmp.ne.s16.totalorder %v4257, 0
      %vm4347 = vcmp.ne.s16.totalorder %v4260, 0
      %vm4348 = vcmp.ne.s16.totalorder %v4263, 0
      %vm4349 = vcmp.ne.s16.totalorder %v4266, 0
      %vm4350 = vcmp.ne.s16.totalorder %v4269, 0
      %vm4351 = vcmp.ne.s16.totalorder %v4272, 0
      %vm4352 = vcmp.ne.s16.totalorder %v4275, 0
      %vm4353 = vcmp.ne.s16.totalorder %v4278, 0
      %vm4354 = vcmp.ne.s16.totalorder %v4281, 0
      %vm4355 = vcmp.ne.s16.totalorder %v4284, 0
      %vm4356 = vcmp.ne.s16.totalorder %v4287, 0
      %vm4357 = vcmp.ne.s16.totalorder %v4290, 0
      %vm4358 = vcmp.ne.s16.totalorder %v4293, 0
      %vm4359 = vcmp.ne.s16.totalorder %v4296, 0
      %vm4360 = vcmp.ne.s16.totalorder %v4299, 0
      %vm4361 = vcmp.ne.s16.totalorder %v4302, 0
      %vm4362 = vcmp.ne.s16.totalorder %v4305, 0
      %vm4363 = vcmp.ne.s16.totalorder %v4308, 0
      %vm4364 = vcmp.ne.s16.totalorder %v4311, 0
      %vm4365 = vcmp.ne.s16.totalorder %v4314, 0
      %vm4366 = vcmp.ne.s16.totalorder %v4317, 0
      %vm4367 = vcmp.ne.s16.totalorder %v4320, 0
      %vm4368 = vcmp.ne.s16.totalorder %v4323, 0
      %vm4369 = vcmp.ne.s16.totalorder %v4326, 0
      %vm4370 = vcmp.ne.s16.totalorder %v4329, 0
      %vm4371 = vcmp.ne.s16.totalorder %v4332, 0
      %vm4372 = vcmp.ne.s16.totalorder %v4333, 0
      %v4373 = vsel %vm4334, %v4217, 0
      %v4374 = vsel %vm4335, %v3592, 0
      %v4375 = vsel %vm4336, %v3593, 0
      %v4376 = vsel %vm4337, %v3594, 0
      %v4377 = vsel %vm4338, %v3595, 0
      %v4378 = vsel %vm4339, %v3596, 0
      %v4379 = vsel %vm4340, %v3597, 0
      %v4380 = vsel %vm4341, %v3598, 0
      %v4381 = vsel %vm4342, %v3599, 0
      %v4382 = vsel %vm4343, %v3600, 0
      %v4383 = vsel %vm4344, %v3601, 0
      %v4384 = vsel %vm4345, %v3602, 0
      %v4385 = vsel %vm4346, %v3603, 0
      %v4386 = vsel %vm4347, %v3604, 0
      %v4387 = vsel %vm4348, %v3605, 0
      %v4388 = vsel %vm4349, %v3606, 0
      %v4389 = vsel %vm4350, %v3607, 0
      %v4390 = vsel %vm4351, %v3608, 0
      %v4391 = vsel %vm4352, %v3609, 0
      %v4392 = vsel %vm4353, %v3610, 0
      %v4393 = vsel %vm4354, %v3611, 0
      %v4394 = vsel %vm4355, %v3612, 0
      %v4395 = vsel %vm4356, %v3613, 0
      %v4396 = vsel %vm4357, %v3614, 0
      %v4397 = vsel %vm4358, %v3615, 0
      %v4398 = vsel %vm4359, %v3616, 0
      %v4399 = vsel %vm4360, %v3617, 0
      %v4400 = vsel %vm4361, %v3618, 0
      %v4401 = vsel %vm4362, %v3619, 0
      %v4402 = vsel %vm4363, %v3620, 0
      %v4403 = vsel %vm4364, %v3621, 0
      %v4404 = vsel %vm4365, %v3622, 0
      %v4405 = vsel %vm4366, %v3623, 0
      %v4406 = vsel %vm4367, %v3624, 0
      %v4407 = vsel %vm4368, %v3625, 0
      %v4408 = vsel %vm4369, %v3626, 0
      %v4409 = vsel %vm4370, %v3627, 0
      %v4410 = vsel %vm4371, %v3628, 0
      %v4411 = vsel %vm4372, %v3629, 0
      %s4412 = scalar_lea.vmem %s1, 160
      %v4413 = vld [vmem:[%s4412] sm:$0xf]
      %v4414 = vld [vmem:[%s4412 + $0x4] sm:$0xf]
      %v4415 = vld [vmem:[%s4412 + $0x8] sm:$0xf]
      %v4416 = vld [vmem:[%s4412 + $0xc] sm:$0xf]
      %v4417 = vld [vmem:[%s4412 + $0x10] sm:$0xf]
      %v4418 = vld [vmem:[%s4412 + $0x14] sm:$0xf]
      %v4419 = vld [vmem:[%s4412 + $0x18] sm:$0xf]
      %v4420 = vld [vmem:[%s4412 + $0x1c] sm:$0xf]
      %v4460 = vunpack.c.l.b16 %v4373
      %v4461 = vunpack.c.l.b16 %v4374
      %v4462 = vunpack.c.l.b16 %v4375
      %v4463 = vunpack.c.l.b16 %v4376
      %v4464 = vunpack.c.l.b16 %v4377
      %v4465 = vunpack.c.l.b16 %v4378
      %v4466 = vunpack.c.l.b16 %v4379
      %v4467 = vunpack.c.l.b16 %v4380
      %v4468 = vunpack.c.l.b16 %v4381
      %v4469 = vunpack.c.l.b16 %v4382
      %v4470 = vunpack.c.l.b16 %v4383
      %v4471 = vunpack.c.l.b16 %v4384
      %v4472 = vunpack.c.l.b16 %v4385
      %v4473 = vunpack.c.l.b16 %v4386
      %v4474 = vunpack.c.l.b16 %v4387
      %v4475 = vunpack.c.l.b16 %v4388
      %v4476 = vunpack.c.l.b16 %v4389
      %v4477 = vunpack.c.l.b16 %v4390
      %v4478 = vunpack.c.l.b16 %v4391
      %v4479 = vunpack.c.l.b16 %v4392
      %v4480 = vunpack.c.l.b16 %v4393
      %v4481 = vunpack.c.l.b16 %v4394
      %v4482 = vunpack.c.l.b16 %v4395
      %v4483 = vunpack.c.l.b16 %v4396
      %v4484 = vunpack.c.l.b16 %v4397
      %v4485 = vunpack.c.l.b16 %v4398
      %v4486 = vunpack.c.l.b16 %v4399
      %v4487 = vunpack.c.l.b16 %v4400
      %v4488 = vunpack.c.l.b16 %v4401
      %v4489 = vunpack.c.l.b16 %v4402
      %v4490 = vunpack.c.l.b16 %v4403
      %v4491 = vunpack.c.l.b16 %v4404
      %v4492 = vunpack.c.l.b16 %v4405
      %v4493 = vunpack.c.l.b16 %v4406
      %v4494 = vunpack.c.l.b16 %v4407
      %v4495 = vunpack.c.l.b16 %v4408
      %v4496 = vunpack.c.l.b16 %v4409
      %v4497 = vunpack.c.l.b16 %v4410
      %v4498 = vunpack.c.l.b16 %v4411
      %v4499 = vpack.c.b16 %v4461, %v4460
      %v4500 = vpack.c.b16 %v4463, %v4462
      %v4501 = vpack.c.b16 %v4465, %v4464
      %v4502 = vpack.c.b16 %v4467, %v4466
      %v4503 = vpack.c.b16 %v4469, %v4468
      %v4504 = vpack.c.b16 %v4471, %v4470
      %v4505 = vpack.c.b16 %v4473, %v4472
      %v4506 = vpack.c.b16 %v4475, %v4474
      %v4507 = vpack.c.b16 %v4477, %v4476
      %v4508 = vpack.c.b16 %v4479, %v4478
      %v4509 = vpack.c.b16 %v4481, %v4480
      %v4510 = vpack.c.b16 %v4483, %v4482
      %v4511 = vpack.c.b16 %v4485, %v4484
      %v4512 = vpack.c.b16 %v4487, %v4486
      %v4513 = vpack.c.b16 %v4489, %v4488
      %v4514 = vpack.c.b16 %v4491, %v4490
      %v4515 = vpack.c.b16 %v4493, %v4492
      %v4516 = vpack.c.b16 %v4495, %v4494
      %v4517 = vpack.c.b16 %v4497, %v4496
      %v4518 = vpack.c.b16 %v4498, %v4498
      %vm4519 = vcmask 1044480
      %v4520 = vrot.slane %v4499, 3
      %v4521 = vrot.slane %v4500, 3
      %v4522 = vsel %vm4519, %v4520, %v4521
      %v4523 = vrot.slane %v4501, 3
      %v4524 = vsel %vm4519, %v4521, %v4523
      %v4525 = vrot.slane %v4502, 3
      %v4526 = vsel %vm4519, %v4523, %v4525
      %v4527 = vrot.slane %v4503, 3
      %v4528 = vsel %vm4519, %v4525, %v4527
      %v4529 = vrot.slane %v4504, 3
      %v4530 = vsel %vm4519, %v4527, %v4529
      %v4531 = vrot.slane %v4505, 3
      %v4532 = vsel %vm4519, %v4529, %v4531
      %v4533 = vrot.slane %v4506, 3
      %v4534 = vsel %vm4519, %v4531, %v4533
      %v4535 = vrot.slane %v4507, 3
      %v4536 = vsel %vm4519, %v4533, %v4535
      %v4537 = vrot.slane %v4508, 3
      %v4538 = vsel %vm4519, %v4535, %v4537
      %v4539 = vrot.slane %v4509, 3
      %v4540 = vsel %vm4519, %v4537, %v4539
      %v4541 = vrot.slane %v4510, 3
      %v4542 = vsel %vm4519, %v4539, %v4541
      %v4543 = vrot.slane %v4511, 3
      %v4544 = vsel %vm4519, %v4541, %v4543
      %v4545 = vrot.slane %v4512, 3
      %v4546 = vsel %vm4519, %v4543, %v4545
      %v4547 = vrot.slane %v4513, 3
      %v4548 = vsel %vm4519, %v4545, %v4547
      %v4549 = vrot.slane %v4514, 3
      %v4550 = vsel %vm4519, %v4547, %v4549
      %v4551 = vrot.slane %v4515, 3
      %v4552 = vsel %vm4519, %v4549, %v4551
      %v4553 = vrot.slane %v4516, 3
      %v4554 = vsel %vm4519, %v4551, %v4553
      %v4555 = vrot.slane %v4517, 3
      %v4556 = vsel %vm4519, %v4553, %v4555
      %v4557 = vrot.slane %v4518, 3
      %v4558 = vsel %vm4519, %v4555, %v4557
      %v4567 = vunpack.c.l.b16 %v4413
      %v4568 = vunpack.c.l.b16 %v4414
      %v4569 = vunpack.c.l.b16 %v4415
      %v4570 = vunpack.c.l.b16 %v4416
      %v4571 = vunpack.c.l.b16 %v4417
      %v4572 = vunpack.c.l.b16 %v4418
      %v4573 = vunpack.c.l.b16 %v4419
      %v4574 = vunpack.c.l.b16 %v4420
      %v4575 = vpack.c.b16 %v4568, %v4567
      %v4576 = vpack.c.b16 %v4570, %v4569
      %v4577 = vpack.c.b16 %v4572, %v4571
      %v4578 = vpack.c.b16 %v4574, %v4573
      %v4584 = vsel %vm1484, %v4522, 0
      %v4587 = vsel %vm1484, %v4524, 0
      %v4590 = vsel %vm1484, %v4526, 0
      %v4593 = vsel %vm1484, %v4528, 0
      %v4596 = vsel %vm1484, %v4530, 0
      %v4599 = vsel %vm1484, %v4532, 0
      %v4602 = vsel %vm1484, %v4534, 0
      %v4605 = vsel %vm1484, %v4536, 0
      %v4608 = vsel %vm1484, %v4538, 0
      %v4611 = vsel %vm1484, %v4540, 0
      %v4614 = vsel %vm1484, %v4542, 0
      %v4617 = vsel %vm1484, %v4544, 0
      %v4620 = vsel %vm1484, %v4546, 0
      %v4623 = vsel %vm1484, %v4548, 0
      %v4626 = vsel %vm1484, %v4550, 0
      %v4629 = vsel %vm1484, %v4552, 0
      %v4632 = vsel %vm1484, %v4554, 0
      %v4635 = vsel %vm1484, %v4556, 0
      %v4638 = vsel %vm1484, %v4558, 0
      %4640 = vmatprep.subr.bf16.mxu0 0
      %4641 = vmatpush1.bf16.msra.mxu0 %v4575
      %4642 = vmatprep.subr.bf16.mxu0 0
      %4643 = vmatpush1.bf16.msra.mxu0 %v4576
      %4644 = vmatprep.subr.bf16.mxu0 0
      %4645 = vmatpush1.bf16.msra.mxu0 %v4577
      %4646 = vmatprep.subr.bf16.mxu0 0
      %4647 = vmatpush1.bf16.msra.mxu0 %v4578
      %4648 = vmatprep.subr.bf16.mxu0 0
      %4649 = vmatpush1.bf16.msra.mxu0 0
      %4650 = vmatprep.subr.bf16.mxu0 0
      %4651 = vmatpush1.bf16.msra.mxu0 0
      %4652 = vmatprep.subr.bf16.mxu0 0
      %4653 = vmatpush1.bf16.msra.mxu0 0
      %4654 = vmatprep.subr.bf16.mxu0 0
      %4655 = vmatpush1.bf16.msra.mxu0 0
      %4656 = vmatprep.subr.bf16.mxu0 0
      %4657 = vmatpush1.bf16.msra.mxu0 0
      %4658 = vmatprep.subr.bf16.mxu0 0
      %4659 = vmatpush1.bf16.msra.mxu0 0
      %4660 = vmatprep.subr.bf16.mxu0 0
      %4661 = vmatpush1.bf16.msra.mxu0 0
      %4662 = vmatprep.subr.bf16.mxu0 0
      %4663 = vmatpush1.bf16.msra.mxu0 0
      %4664 = vmatprep.subr.bf16.mxu0 0
      %4665 = vmatpush1.bf16.msra.mxu0 0
      %4666 = vmatprep.subr.bf16.mxu0 0
      %4667 = vmatpush1.bf16.msra.mxu0 0
      %4668 = vmatprep.subr.bf16.mxu0 0
      %4669 = vmatpush1.bf16.msra.mxu0 0
      %4670 = vmatprep.subr.bf16.mxu0 0
      %4671 = vmatpush1.bf16.msra.mxu0 0
      %4672 = vmatprep.mubr.bf16.mxu0 0
      %4673 = vmatmul.mubr.bf16.gmra.mrb[0].mxu0 %v4584
      %v4674 = vpop.f32.mrb[0].mxu0
      %v4675 = vadd.f32 0.0, %v4674
      %v4676 = vpop.f32.mrb[0].mxu0
      %v4677 = vpop.f32.mrb[0].mxu0
      %v4678 = vadd.f32 0.0, %v4677
      %v4679 = vpop.f32.mrb[0].mxu0
      %4680 = vmatprep.mubr.bf16.mxu0 0
      %4681 = vmatmul.mubr.bf16.gmra.mrb[0].mxu0 %v4587
      %v4682 = vpop.f32.mrb[0].mxu0
      %v4683 = vadd.f32 0.0, %v4682
      %v4684 = vpop.f32.mrb[0].mxu0
      %v4685 = vpop.f32.mrb[0].mxu0
      %v4686 = vadd.f32 0.0, %v4685
      %v4687 = vpop.f32.mrb[0].mxu0
      %4688 = vmatprep.mubr.bf16.mxu0 0
      %4689 = vmatmul.mubr.bf16.gmra.mrb[0].mxu0 %v4590
      %v4690 = vpop.f32.mrb[0].mxu0
      %v4691 = vadd.f32 0.0, %v4690
      %v4692 = vpop.f32.mrb[0].mxu0
      %v4693 = vpop.f32.mrb[0].mxu0
      %v4694 = vadd.f32 0.0, %v4693
      %v4695 = vpop.f32.mrb[0].mxu0
      %4696 = vmatprep.mubr.bf16.mxu0 0
      %4697 = vmatmul.mubr.bf16.gmra.mrb[0].mxu0 %v4593
      %v4698 = vpop.f32.mrb[0].mxu0
      %v4699 = vadd.f32 0.0, %v4698
      %v4700 = vpop.f32.mrb[0].mxu0
      %v4701 = vpop.f32.mrb[0].mxu0
      %v4702 = vadd.f32 0.0, %v4701
      %v4703 = vpop.f32.mrb[0].mxu0
      %4704 = vmatprep.mubr.bf16.mxu0 0
      %4705 = vmatmul.mubr.bf16.gmra.mrb[0].mxu0 %v4596
      %v4706 = vpop.f32.mrb[0].mxu0
      %v4707 = vadd.f32 0.0, %v4706
      %v4708 = vpop.f32.mrb[0].mxu0
      %v4709 = vpop.f32.mrb[0].mxu0
      %v4710 = vadd.f32 0.0, %v4709
      %v4711 = vpop.f32.mrb[0].mxu0
      %4712 = vmatprep.mubr.bf16.mxu0 0
      %4713 = vmatmul.mubr.bf16.gmra.mrb[0].mxu0 %v4599
      %v4714 = vpop.f32.mrb[0].mxu0
      %v4715 = vadd.f32 0.0, %v4714
      %v4716 = vpop.f32.mrb[0].mxu0
      %v4717 = vpop.f32.mrb[0].mxu0
      %v4718 = vadd.f32 0.0, %v4717
      %v4719 = vpop.f32.mrb[0].mxu0
      %4720 = vmatprep.mubr.bf16.mxu0 0
      %4721 = vmatmul.mubr.bf16.gmra.mrb[0].mxu0 %v4602
      %v4722 = vpop.f32.mrb[0].mxu0
      %v4723 = vadd.f32 0.0, %v4722
      %v4724 = vpop.f32.mrb[0].mxu0
      %v4725 = vpop.f32.mrb[0].mxu0
      %v4726 = vadd.f32 0.0, %v4725
      %v4727 = vpop.f32.mrb[0].mxu0
      %4728 = vmatprep.mubr.bf16.mxu0 0
      %4729 = vmatmul.mubr.bf16.gmra.mrb[0].mxu0 %v4605
      %v4730 = vpop.f32.mrb[0].mxu0
      %v4731 = vadd.f32 0.0, %v4730
      %v4732 = vpop.f32.mrb[0].mxu0
      %v4733 = vpop.f32.mrb[0].mxu0
      %v4734 = vadd.f32 0.0, %v4733
      %v4735 = vpop.f32.mrb[0].mxu0
      %4736 = vmatprep.mubr.bf16.mxu0 0
      %4737 = vmatmul.mubr.bf16.gmra.mrb[0].mxu0 %v4608
      %v4738 = vpop.f32.mrb[0].mxu0
      %v4739 = vadd.f32 0.0, %v4738
      %v4740 = vpop.f32.mrb[0].mxu0
      %v4741 = vpop.f32.mrb[0].mxu0
      %v4742 = vadd.f32 0.0, %v4741
      %v4743 = vpop.f32.mrb[0].mxu0
      %4744 = vmatprep.mubr.bf16.mxu0 0
      %4745 = vmatmul.mubr.bf16.gmra.mrb[0].mxu0 %v4611
      %v4746 = vpop.f32.mrb[0].mxu0
      %v4747 = vadd.f32 0.0, %v4746
      %v4748 = vpop.f32.mrb[0].mxu0
      %v4749 = vpop.f32.mrb[0].mxu0
      %v4750 = vadd.f32 0.0, %v4749
      %v4751 = vpop.f32.mrb[0].mxu0
      %4752 = vmatprep.mubr.bf16.mxu0 0
      %4753 = vmatmul.mubr.bf16.gmra.mrb[0].mxu0 %v4614
      %v4754 = vpop.f32.mrb[0].mxu0
      %v4755 = vadd.f32 0.0, %v4754
      %v4756 = vpop.f32.mrb[0].mxu0
      %v4757 = vpop.f32.mrb[0].mxu0
      %v4758 = vadd.f32 0.0, %v4757
      %v4759 = vpop.f32.mrb[0].mxu0
      %4760 = vmatprep.mubr.bf16.mxu0 0
      %4761 = vmatmul.mubr.bf16.gmra.mrb[0].mxu0 %v4617
      %v4762 = vpop.f32.mrb[0].mxu0
      %v4763 = vadd.f32 0.0, %v4762
      %v4764 = vpop.f32.mrb[0].mxu0
      %v4765 = vpop.f32.mrb[0].mxu0
      %v4766 = vadd.f32 0.0, %v4765
      %v4767 = vpop.f32.mrb[0].mxu0
      %4768 = vmatprep.mubr.bf16.mxu0 0
      %4769 = vmatmul.mubr.bf16.gmra.mrb[0].mxu0 %v4620
      %v4770 = vpop.f32.mrb[0].mxu0
      %v4771 = vadd.f32 0.0, %v4770
      %v4772 = vpop.f32.mrb[0].mxu0
      %v4773 = vpop.f32.mrb[0].mxu0
      %v4774 = vadd.f32 0.0, %v4773
      %v4775 = vpop.f32.mrb[0].mxu0
      %4776 = vmatprep.mubr.bf16.mxu0 0
      %4777 = vmatmul.mubr.bf16.gmra.mrb[0].mxu0 %v4623
      %v4778 = vpop.f32.mrb[0].mxu0
      %v4779 = vadd.f32 0.0, %v4778
      %v4780 = vpop.f32.mrb[0].mxu0
      %v4781 = vpop.f32.mrb[0].mxu0
      %v4782 = vadd.f32 0.0, %v4781
      %v4783 = vpop.f32.mrb[0].mxu0
      %4784 = vmatprep.mubr.bf16.mxu0 0
      %4785 = vmatmul.mubr.bf16.gmra.mrb[0].mxu0 %v4626
      %v4786 = vpop.f32.mrb[0].mxu0
      %v4787 = vadd.f32 0.0, %v4786
      %v4788 = vpop.f32.mrb[0].mxu0
      %v4789 = vpop.f32.mrb[0].mxu0
      %v4790 = vadd.f32 0.0, %v4789
      %v4791 = vpop.f32.mrb[0].mxu0
      %4792 = vmatprep.mubr.bf16.mxu0 0
      %4793 = vmatmul.mubr.bf16.gmra.mrb[0].mxu0 %v4629
      %v4794 = vpop.f32.mrb[0].mxu0
      %v4795 = vadd.f32 0.0, %v4794
      %v4796 = vpop.f32.mrb[0].mxu0
      %v4797 = vpop.f32.mrb[0].mxu0
      %v4798 = vadd.f32 0.0, %v4797
      %v4799 = vpop.f32.mrb[0].mxu0
      %4800 = vmatprep.mubr.bf16.mxu0 0
      %4801 = vmatmul.mubr.bf16.gmra.mrb[0].mxu0 %v4632
      %v4802 = vpop.f32.mrb[0].mxu0
      %v4803 = vadd.f32 0.0, %v4802
      %v4804 = vpop.f32.mrb[0].mxu0
      %v4805 = vpop.f32.mrb[0].mxu0
      %v4806 = vadd.f32 0.0, %v4805
      %v4807 = vpop.f32.mrb[0].mxu0
      %4808 = vmatprep.mubr.bf16.mxu0 0
      %4809 = vmatmul.mubr.bf16.gmra.mrb[0].mxu0 %v4635
      %v4810 = vpop.f32.mrb[0].mxu0
      %v4811 = vadd.f32 0.0, %v4810
      %v4812 = vpop.f32.mrb[0].mxu0
      %v4813 = vpop.f32.mrb[0].mxu0
      %v4814 = vadd.f32 0.0, %v4813
      %v4815 = vpop.f32.mrb[0].mxu0
      %4816 = vmatprep.mubr.bf16.mxu0 0
      %4817 = vmatmul.mubr.bf16.gmra.mrb[0].mxu0 %v4638
      %v4818 = vpop.f32.mrb[0].mxu0
      %v4819 = vadd.f32 0.0, %v4818
      %v4820 = vpop.f32.mrb[0].mxu0
      %v4821 = vpop.f32.mrb[0].mxu0
      %v4822 = vadd.f32 0.0, %v4821
      %v4823 = vpop.f32.mrb[0].mxu0
      %4824 = vdwg.mxu0
      %v4825 = vadd.f32 %v4179, %v4675
      %v4826 = vadd.f32 %v4180, %v4678
      %v4827 = vadd.f32 %v4181, %v4683
      %v4828 = vadd.f32 %v4182, %v4686
      %v4829 = vadd.f32 %v4183, %v4691
      %v4830 = vadd.f32 %v4184, %v4694
      %v4831 = vadd.f32 %v4185, %v4699
      %v4832 = vadd.f32 %v4186, %v4702
      %v4833 = vadd.f32 %v4187, %v4707
      %v4834 = vadd.f32 %v4188, %v4710
      %v4835 = vadd.f32 %v4189, %v4715
      %v4836 = vadd.f32 %v4190, %v4718
      %v4837 = vadd.f32 %v4191, %v4723
      %v4838 = vadd.f32 %v4192, %v4726
      %v4839 = vadd.f32 %v4193, %v4731
      %v4840 = vadd.f32 %v4194, %v4734
      %v4841 = vadd.f32 %v4195, %v4739
      %v4842 = vadd.f32 %v4196, %v4742
      %v4843 = vadd.f32 %v4197, %v4747
      %v4844 = vadd.f32 %v4198, %v4750
      %v4845 = vadd.f32 %v4199, %v4755
      %v4846 = vadd.f32 %v4200, %v4758
      %v4847 = vadd.f32 %v4201, %v4763
      %v4848 = vadd.f32 %v4202, %v4766
      %v4849 = vadd.f32 %v4203, %v4771
      %v4850 = vadd.f32 %v4204, %v4774
      %v4851 = vadd.f32 %v4205, %v4779
      %v4852 = vadd.f32 %v4206, %v4782
      %v4853 = vadd.f32 %v4207, %v4787
      %v4854 = vadd.f32 %v4208, %v4790
      %v4855 = vadd.f32 %v4209, %v4795
      %v4856 = vadd.f32 %v4210, %v4798
      %v4857 = vadd.f32 %v4211, %v4803
      %v4858 = vadd.f32 %v4212, %v4806
      %v4859 = vadd.f32 %v4213, %v4811
      %v4860 = vadd.f32 %v4214, %v4814
      %v4861 = vadd.f32 %v4215, %v4819
      %v4862 = vadd.f32 %v4216, %v4822
      %v4863 = vld [vmem:[%s273 + $0x14] sm:$0xf]
      %v4864 = vld [vmem:[%s273 + $0x18] sm:$0xf]
      %v4865 = vld [vmem:[%s273 + $0x1c] sm:$0xf]
      %v4866 = vld [vmem:[%s273 + $0x20] sm:$0xf]
      %v4867 = vld [vmem:[%s273 + $0x24] sm:$0xf]
      %v4868 = vld [vmem:[%s273 + $0x28] sm:$0xf]
      %v4869 = vld [vmem:[%s273 + $0x2c] sm:$0xf]
      %v4870 = vld [vmem:[%s273 + $0x30] sm:$0xf]
      %v4871 = vld [vmem:[%s273 + $0x34] sm:$0xf]
      %v4872 = vld [vmem:[%s273 + $0x38] sm:$0xf]
      %v4873 = vld [vmem:[%s273 + $0x3c] sm:$0xf]
      %v4874 = vld [vmem:[%s273 + $0x40] sm:$0xf]
      %v4875 = vld [vmem:[%s273 + $0x44] sm:$0xf]
      %v4876 = vld [vmem:[%s273 + $0x48] sm:$0xf]
      %v4877 = vld [vmem:[%s273 + $0x4c] sm:$0xf]
      %v4878 = vld [vmem:[%s273 + $0x50] sm:$0xf]
      %v4879 = vld [vmem:[%s273 + $0x54] sm:$0xf]
      %v4880 = vld [vmem:[%s273 + $0x58] sm:$0xf]
      %v4881 = vld [vmem:[%s273 + $0x5c] sm:$0xf]
      %v4882 = vld [vmem:[%s273 + $0x60] sm:$0xf]
      %v4883 = vld [vmem:[%s273 + $0x64] sm:$0xf]
      %v4884 = vld [vmem:[%s273 + $0x68] sm:$0xf]
      %v4885 = vld [vmem:[%s273 + $0x6c] sm:$0xf]
      %v4886 = vld [vmem:[%s273 + $0x70] sm:$0xf]
      %v4887 = vld [vmem:[%s273 + $0x74] sm:$0xf]
      %v4888 = vld [vmem:[%s273 + $0x78] sm:$0xf]
      %v4889 = vld [vmem:[%s273 + $0x7c] sm:$0xf]
      %v4890 = vld [vmem:[%s273 + $0x80] sm:$0xf]
      %v4891 = vld [vmem:[%s273 + $0x84] sm:$0xf]
      %v4892 = vld [vmem:[%s273 + $0x88] sm:$0xf]
      %v4893 = vld [vmem:[%s273 + $0x8c] sm:$0xf]
      %v4894 = vld [vmem:[%s273 + $0x90] sm:$0xf]
      %v4895 = vld [vmem:[%s273 + $0x94] sm:$0xf]
      %v4896 = vld [vmem:[%s273 + $0x98] sm:$0xf]
      %v4897 = vld [vmem:[%s273 + $0x9c] sm:$0xf]
      %v4898 = vld [vmem:[%s273 + $0xa0] sm:$0xf]
      %v4899 = vld [vmem:[%s273 + $0xa4] sm:$0xf]
      %v4900 = vld [vmem:[%s273 + $0xa8] sm:$0x3]
      %v4901 = vsel %vm1119, %v4863, 0
      %v4902 = vsel %vm1120, %v4864, 0
      %v4903 = vsel %vm1121, %v4865, 0
      %v4904 = vsel %vm1122, %v4866, 0
      %v4905 = vsel %vm1123, %v4867, 0
      %v4906 = vsel %vm1124, %v4868, 0
      %v4907 = vsel %vm1125, %v4869, 0
      %v4908 = vsel %vm1126, %v4870, 0
      %v4909 = vsel %vm1127, %v4871, 0
      %v4910 = vsel %vm1128, %v4872, 0
      %v4911 = vsel %vm1129, %v4873, 0
      %v4912 = vsel %vm1130, %v4874, 0
      %v4913 = vsel %vm1131, %v4875, 0
      %v4914 = vsel %vm1132, %v4876, 0
      %v4915 = vsel %vm1133, %v4877, 0
      %v4916 = vsel %vm1134, %v4878, 0
      %v4917 = vsel %vm1135, %v4879, 0
      %v4918 = vsel %vm1136, %v4880, 0
      %v4919 = vsel %vm1137, %v4881, 0
      %v4920 = vsel %vm1138, %v4882, 0
      %v4921 = vsel %vm1139, %v4883, 0
      %v4922 = vsel %vm1140, %v4884, 0
      %v4923 = vsel %vm1141, %v4885, 0
      %v4924 = vsel %vm1142, %v4886, 0
      %v4925 = vsel %vm1143, %v4887, 0
      %v4926 = vsel %vm1144, %v4888, 0
      %v4927 = vsel %vm1145, %v4889, 0
      %v4928 = vsel %vm1146, %v4890, 0
      %v4929 = vsel %vm1147, %v4891, 0
      %v4930 = vsel %vm1148, %v4892, 0
      %v4931 = vsel %vm1149, %v4893, 0
      %v4932 = vsel %vm1150, %v4894, 0
      %v4933 = vsel %vm1151, %v4895, 0
      %v4934 = vsel %vm1152, %v4896, 0
      %v4935 = vsel %vm1153, %v4897, 0
      %v4936 = vsel %vm1154, %v4898, 0
      %v4937 = vsel %vm1155, %v4899, 0
      %v4938 = vsel %vm1156, %v4900, 0
      %s4939 = scalar_lea.vmem %s1, 192
      %v4940 = vld [vmem:[%s4939] sm:$0xf]
      %v4941 = vld [vmem:[%s4939 + $0x4] sm:$0xf]
      %v4942 = vld [vmem:[%s4939 + $0x8] sm:$0xf]
      %v4943 = vld [vmem:[%s4939 + $0xc] sm:$0xf]
      %v4944 = vld [vmem:[%s4939 + $0x10] sm:$0xf]
      %v4945 = vld [vmem:[%s4939 + $0x14] sm:$0xf]
      %v4946 = vld [vmem:[%s4939 + $0x18] sm:$0xf]
      %v4947 = vld [vmem:[%s4939 + $0x1c] sm:$0xf]
      %v4986 = vunpack.c.l.b16 %v4901
      %v4987 = vunpack.c.l.b16 %v4902
      %v4988 = vunpack.c.l.b16 %v4903
      %v4989 = vunpack.c.l.b16 %v4904
      %v4990 = vunpack.c.l.b16 %v4905
      %v4991 = vunpack.c.l.b16 %v4906
      %v4992 = vunpack.c.l.b16 %v4907
      %v4993 = vunpack.c.l.b16 %v4908
      %v4994 = vunpack.c.l.b16 %v4909
      %v4995 = vunpack.c.l.b16 %v4910
      %v4996 = vunpack.c.l.b16 %v4911
      %v4997 = vunpack.c.l.b16 %v4912
      %v4998 = vunpack.c.l.b16 %v4913
      %v4999 = vunpack.c.l.b16 %v4914
      %v5000 = vunpack.c.l.b16 %v4915
      %v5001 = vunpack.c.l.b16 %v4916
      %v5002 = vunpack.c.l.b16 %v4917
      %v5003 = vunpack.c.l.b16 %v4918
      %v5004 = vunpack.c.l.b16 %v4919
      %v5005 = vunpack.c.l.b16 %v4920
      %v5006 = vunpack.c.l.b16 %v4921
      %v5007 = vunpack.c.l.b16 %v4922
      %v5008 = vunpack.c.l.b16 %v4923
      %v5009 = vunpack.c.l.b16 %v4924
      %v5010 = vunpack.c.l.b16 %v4925
      %v5011 = vunpack.c.l.b16 %v4926
      %v5012 = vunpack.c.l.b16 %v4927
      %v5013 = vunpack.c.l.b16 %v4928
      %v5014 = vunpack.c.l.b16 %v4929
      %v5015 = vunpack.c.l.b16 %v4930
      %v5016 = vunpack.c.l.b16 %v4931
      %v5017 = vunpack.c.l.b16 %v4932
      %v5018 = vunpack.c.l.b16 %v4933
      %v5019 = vunpack.c.l.b16 %v4934
      %v5020 = vunpack.c.l.b16 %v4935
      %v5021 = vunpack.c.l.b16 %v4936
      %v5022 = vunpack.c.l.b16 %v4937
      %v5023 = vunpack.c.l.b16 %v4938
      %v5024 = vpack.c.b16 %v4987, %v4986
      %v5025 = vpack.c.b16 %v4989, %v4988
      %v5026 = vpack.c.b16 %v4991, %v4990
      %v5027 = vpack.c.b16 %v4993, %v4992
      %v5028 = vpack.c.b16 %v4995, %v4994
      %v5029 = vpack.c.b16 %v4997, %v4996
      %v5030 = vpack.c.b16 %v4999, %v4998
      %v5031 = vpack.c.b16 %v5001, %v5000
      %v5032 = vpack.c.b16 %v5003, %v5002
      %v5033 = vpack.c.b16 %v5005, %v5004
      %v5034 = vpack.c.b16 %v5007, %v5006
      %v5035 = vpack.c.b16 %v5009, %v5008
      %v5036 = vpack.c.b16 %v5011, %v5010
      %v5037 = vpack.c.b16 %v5013, %v5012
      %v5038 = vpack.c.b16 %v5015, %v5014
      %v5039 = vpack.c.b16 %v5017, %v5016
      %v5040 = vpack.c.b16 %v5019, %v5018
      %v5041 = vpack.c.b16 %v5021, %v5020
      %v5042 = vpack.c.b16 %v5023, %v5022
      %v5051 = vunpack.c.l.b16 %v4940
      %v5052 = vunpack.c.l.b16 %v4941
      %v5053 = vunpack.c.l.b16 %v4942
      %v5054 = vunpack.c.l.b16 %v4943
      %v5055 = vunpack.c.l.b16 %v4944
      %v5056 = vunpack.c.l.b16 %v4945
      %v5057 = vunpack.c.l.b16 %v4946
      %v5058 = vunpack.c.l.b16 %v4947
      %v5059 = vpack.c.b16 %v5052, %v5051
      %v5060 = vpack.c.b16 %v5054, %v5053
      %v5061 = vpack.c.b16 %v5056, %v5055
      %v5062 = vpack.c.b16 %v5058, %v5057
      %v5068 = vsel %vm1484, %v5024, 0
      %v5071 = vsel %vm1484, %v5025, 0
      %v5074 = vsel %vm1484, %v5026, 0
      %v5077 = vsel %vm1484, %v5027, 0
      %v5080 = vsel %vm1484, %v5028, 0
      %v5083 = vsel %vm1484, %v5029, 0
      %v5086 = vsel %vm1484, %v5030, 0
      %v5089 = vsel %vm1484, %v5031, 0
      %v5092 = vsel %vm1484, %v5032, 0
      %v5095 = vsel %vm1484, %v5033, 0
      %v5098 = vsel %vm1484, %v5034, 0
      %v5101 = vsel %vm1484, %v5035, 0
      %v5104 = vsel %vm1484, %v5036, 0
      %v5107 = vsel %vm1484, %v5037, 0
      %v5110 = vsel %vm1484, %v5038, 0
      %v5113 = vsel %vm1484, %v5039, 0
      %v5116 = vsel %vm1484, %v5040, 0
      %v5119 = vsel %vm1484, %v5041, 0
      %v5122 = vsel %vm1484, %v5042, 0
      %5124 = vmatprep.subr.bf16.mxu0 0
      %5125 = vmatpush1.bf16.msra.mxu0 %v5059
      %5126 = vmatprep.subr.bf16.mxu0 0
      %5127 = vmatpush1.bf16.msra.mxu0 %v5060
      %5128 = vmatprep.subr.bf16.mxu0 0
      %5129 = vmatpush1.bf16.msra.mxu0 %v5061
      %5130 = vmatprep.subr.bf16.mxu0 0
      %5131 = vmatpush1.bf16.msra.mxu0 %v5062
      %5132 = vmatprep.subr.bf16.mxu0 0
      %5133 = vmatpush1.bf16.msra.mxu0 0
      %5134 = vmatprep.subr.bf16.mxu0 0
      %5135 = vmatpush1.bf16.msra.mxu0 0
      %5136 = vmatprep.subr.bf16.mxu0 0
      %5137 = vmatpush1.bf16.msra.mxu0 0
      %5138 = vmatprep.subr.bf16.mxu0 0
      %5139 = vmatpush1.bf16.msra.mxu0 0
      %5140 = vmatprep.subr.bf16.mxu0 0
      %5141 = vmatpush1.bf16.msra.mxu0 0
      %5142 = vmatprep.subr.bf16.mxu0 0
      %5143 = vmatpush1.bf16.msra.mxu0 0
      %5144 = vmatprep.subr.bf16.mxu0 0
      %5145 = vmatpush1.bf16.msra.mxu0 0
      %5146 = vmatprep.subr.bf16.mxu0 0
      %5147 = vmatpush1.bf16.msra.mxu0 0
      %5148 = vmatprep.subr.bf16.mxu0 0
      %5149 = vmatpush1.bf16.msra.mxu0 0
      %5150 = vmatprep.subr.bf16.mxu0 0
      %5151 = vmatpush1.bf16.msra.mxu0 0
      %5152 = vmatprep.subr.bf16.mxu0 0
      %5153 = vmatpush1.bf16.msra.mxu0 0
      %5154 = vmatprep.subr.bf16.mxu0 0
      %5155 = vmatpush1.bf16.msra.mxu0 0
      %5156 = vmatprep.mubr.bf16.mxu0 0
      %5157 = vmatmul.mubr.bf16.gmra.mrb[0].mxu0 %v5068
      %v5158 = vpop.f32.mrb[0].mxu0
      %v5159 = vadd.f32 0.0, %v5158
      %v5160 = vpop.f32.mrb[0].mxu0
      %v5161 = vpop.f32.mrb[0].mxu0
      %v5162 = vadd.f32 0.0, %v5161
      %v5163 = vpop.f32.mrb[0].mxu0
      %5164 = vmatprep.mubr.bf16.mxu0 0
      %5165 = vmatmul.mubr.bf16.gmra.mrb[0].mxu0 %v5071
      %v5166 = vpop.f32.mrb[0].mxu0
      %v5167 = vadd.f32 0.0, %v5166
      %v5168 = vpop.f32.mrb[0].mxu0
      %v5169 = vpop.f32.mrb[0].mxu0
      %v5170 = vadd.f32 0.0, %v5169
      %v5171 = vpop.f32.mrb[0].mxu0
      %5172 = vmatprep.mubr.bf16.mxu0 0
      %5173 = vmatmul.mubr.bf16.gmra.mrb[0].mxu0 %v5074
      %v5174 = vpop.f32.mrb[0].mxu0
      %v5175 = vadd.f32 0.0, %v5174
      %v5176 = vpop.f32.mrb[0].mxu0
      %v5177 = vpop.f32.mrb[0].mxu0
      %v5178 = vadd.f32 0.0, %v5177
      %v5179 = vpop.f32.mrb[0].mxu0
      %5180 = vmatprep.mubr.bf16.mxu0 0
      %5181 = vmatmul.mubr.bf16.gmra.mrb[0].mxu0 %v5077
      %v5182 = vpop.f32.mrb[0].mxu0
      %v5183 = vadd.f32 0.0, %v5182
      %v5184 = vpop.f32.mrb[0].mxu0
      %v5185 = vpop.f32.mrb[0].mxu0
      %v5186 = vadd.f32 0.0, %v5185
      %v5187 = vpop.f32.mrb[0].mxu0
      %5188 = vmatprep.mubr.bf16.mxu0 0
      %5189 = vmatmul.mubr.bf16.gmra.mrb[0].mxu0 %v5080
      %v5190 = vpop.f32.mrb[0].mxu0
      %v5191 = vadd.f32 0.0, %v5190
      %v5192 = vpop.f32.mrb[0].mxu0
      %v5193 = vpop.f32.mrb[0].mxu0
      %v5194 = vadd.f32 0.0, %v5193
      %v5195 = vpop.f32.mrb[0].mxu0
      %5196 = vmatprep.mubr.bf16.mxu0 0
      %5197 = vmatmul.mubr.bf16.gmra.mrb[0].mxu0 %v5083
      %v5198 = vpop.f32.mrb[0].mxu0
      %v5199 = vadd.f32 0.0, %v5198
      %v5200 = vpop.f32.mrb[0].mxu0
      %v5201 = vpop.f32.mrb[0].mxu0
      %v5202 = vadd.f32 0.0, %v5201
      %v5203 = vpop.f32.mrb[0].mxu0
      %5204 = vmatprep.mubr.bf16.mxu0 0
      %5205 = vmatmul.mubr.bf16.gmra.mrb[0].mxu0 %v5086
      %v5206 = vpop.f32.mrb[0].mxu0
      %v5207 = vadd.f32 0.0, %v5206
      %v5208 = vpop.f32.mrb[0].mxu0
      %v5209 = vpop.f32.mrb[0].mxu0
      %v5210 = vadd.f32 0.0, %v5209
      %v5211 = vpop.f32.mrb[0].mxu0
      %5212 = vmatprep.mubr.bf16.mxu0 0
      %5213 = vmatmul.mubr.bf16.gmra.mrb[0].mxu0 %v5089
      %v5214 = vpop.f32.mrb[0].mxu0
      %v5215 = vadd.f32 0.0, %v5214
      %v5216 = vpop.f32.mrb[0].mxu0
      %v5217 = vpop.f32.mrb[0].mxu0
      %v5218 = vadd.f32 0.0, %v5217
      %v5219 = vpop.f32.mrb[0].mxu0
      %5220 = vmatprep.mubr.bf16.mxu0 0
      %5221 = vmatmul.mubr.bf16.gmra.mrb[0].mxu0 %v5092
      %v5222 = vpop.f32.mrb[0].mxu0
      %v5223 = vadd.f32 0.0, %v5222
      %v5224 = vpop.f32.mrb[0].mxu0
      %v5225 = vpop.f32.mrb[0].mxu0
      %v5226 = vadd.f32 0.0, %v5225
      %v5227 = vpop.f32.mrb[0].mxu0
      %5228 = vmatprep.mubr.bf16.mxu0 0
      %5229 = vmatmul.mubr.bf16.gmra.mrb[0].mxu0 %v5095
      %v5230 = vpop.f32.mrb[0].mxu0
      %v5231 = vadd.f32 0.0, %v5230
      %v5232 = vpop.f32.mrb[0].mxu0
      %v5233 = vpop.f32.mrb[0].mxu0
      %v5234 = vadd.f32 0.0, %v5233
      %v5235 = vpop.f32.mrb[0].mxu0
      %5236 = vmatprep.mubr.bf16.mxu0 0
      %5237 = vmatmul.mubr.bf16.gmra.mrb[0].mxu0 %v5098
      %v5238 = vpop.f32.mrb[0].mxu0
      %v5239 = vadd.f32 0.0, %v5238
      %v5240 = vpop.f32.mrb[0].mxu0
      %v5241 = vpop.f32.mrb[0].mxu0
      %v5242 = vadd.f32 0.0, %v5241
      %v5243 = vpop.f32.mrb[0].mxu0
      %5244 = vmatprep.mubr.bf16.mxu0 0
      %5245 = vmatmul.mubr.bf16.gmra.mrb[0].mxu0 %v5101
      %v5246 = vpop.f32.mrb[0].mxu0
      %v5247 = vadd.f32 0.0, %v5246
      %v5248 = vpop.f32.mrb[0].mxu0
      %v5249 = vpop.f32.mrb[0].mxu0
      %v5250 = vadd.f32 0.0, %v5249
      %v5251 = vpop.f32.mrb[0].mxu0
      %5252 = vmatprep.mubr.bf16.mxu0 0
      %5253 = vmatmul.mubr.bf16.gmra.mrb[0].mxu0 %v5104
      %v5254 = vpop.f32.mrb[0].mxu0
      %v5255 = vadd.f32 0.0, %v5254
      %v5256 = vpop.f32.mrb[0].mxu0
      %v5257 = vpop.f32.mrb[0].mxu0
      %v5258 = vadd.f32 0.0, %v5257
      %v5259 = vpop.f32.mrb[0].mxu0
      %5260 = vmatprep.mubr.bf16.mxu0 0
      %5261 = vmatmul.mubr.bf16.gmra.mrb[0].mxu0 %v5107
      %v5262 = vpop.f32.mrb[0].mxu0
      %v5263 = vadd.f32 0.0, %v5262
      %v5264 = vpop.f32.mrb[0].mxu0
      %v5265 = vpop.f32.mrb[0].mxu0
      %v5266 = vadd.f32 0.0, %v5265
      %v5267 = vpop.f32.mrb[0].mxu0
      %5268 = vmatprep.mubr.bf16.mxu0 0
      %5269 = vmatmul.mubr.bf16.gmra.mrb[0].mxu0 %v5110
      %v5270 = vpop.f32.mrb[0].mxu0
      %v5271 = vadd.f32 0.0, %v5270
      %v5272 = vpop.f32.mrb[0].mxu0
      %v5273 = vpop.f32.mrb[0].mxu0
      %v5274 = vadd.f32 0.0, %v5273
      %v5275 = vpop.f32.mrb[0].mxu0
      %5276 = vmatprep.mubr.bf16.mxu0 0
      %5277 = vmatmul.mubr.bf16.gmra.mrb[0].mxu0 %v5113
      %v5278 = vpop.f32.mrb[0].mxu0
      %v5279 = vadd.f32 0.0, %v5278
      %v5280 = vpop.f32.mrb[0].mxu0
      %v5281 = vpop.f32.mrb[0].mxu0
      %v5282 = vadd.f32 0.0, %v5281
      %v5283 = vpop.f32.mrb[0].mxu0
      %5284 = vmatprep.mubr.bf16.mxu0 0
      %5285 = vmatmul.mubr.bf16.gmra.mrb[0].mxu0 %v5116
      %v5286 = vpop.f32.mrb[0].mxu0
      %v5287 = vadd.f32 0.0, %v5286
      %v5288 = vpop.f32.mrb[0].mxu0
      %v5289 = vpop.f32.mrb[0].mxu0
      %v5290 = vadd.f32 0.0, %v5289
      %v5291 = vpop.f32.mrb[0].mxu0
      %5292 = vmatprep.mubr.bf16.mxu0 0
      %5293 = vmatmul.mubr.bf16.gmra.mrb[0].mxu0 %v5119
      %v5294 = vpop.f32.mrb[0].mxu0
      %v5295 = vadd.f32 0.0, %v5294
      %v5296 = vpop.f32.mrb[0].mxu0
      %v5297 = vpop.f32.mrb[0].mxu0
      %v5298 = vadd.f32 0.0, %v5297
      %v5299 = vpop.f32.mrb[0].mxu0
      %5300 = vmatprep.mubr.bf16.mxu0 0
      %5301 = vmatmul.mubr.bf16.gmra.mrb[0].mxu0 %v5122
      %v5302 = vpop.f32.mrb[0].mxu0
      %v5303 = vadd.f32 0.0, %v5302
      %v5304 = vpop.f32.mrb[0].mxu0
      %v5305 = vpop.f32.mrb[0].mxu0
      %v5306 = vadd.f32 0.0, %v5305
      %v5307 = vpop.f32.mrb[0].mxu0
      %5308 = vdwg.mxu0
      %v5309 = vadd.f32 %v4825, %v5159
      %v5310 = vadd.f32 %v4826, %v5162
      %v5311 = vadd.f32 %v4827, %v5167
      %v5312 = vadd.f32 %v4828, %v5170
      %v5313 = vadd.f32 %v4829, %v5175
      %v5314 = vadd.f32 %v4830, %v5178
      %v5315 = vadd.f32 %v4831, %v5183
      %v5316 = vadd.f32 %v4832, %v5186
      %v5317 = vadd.f32 %v4833, %v5191
      %v5318 = vadd.f32 %v4834, %v5194
      %v5319 = vadd.f32 %v4835, %v5199
      %v5320 = vadd.f32 %v4836, %v5202
      %v5321 = vadd.f32 %v4837, %v5207
      %v5322 = vadd.f32 %v4838, %v5210
      %v5323 = vadd.f32 %v4839, %v5215
      %v5324 = vadd.f32 %v4840, %v5218
      %v5325 = vadd.f32 %v4841, %v5223
      %v5326 = vadd.f32 %v4842, %v5226
      %v5327 = vadd.f32 %v4843, %v5231
      %v5328 = vadd.f32 %v4844, %v5234
      %v5329 = vadd.f32 %v4845, %v5239
      %v5330 = vadd.f32 %v4846, %v5242
      %v5331 = vadd.f32 %v4847, %v5247
      %v5332 = vadd.f32 %v4848, %v5250
      %v5333 = vadd.f32 %v4849, %v5255
      %v5334 = vadd.f32 %v4850, %v5258
      %v5335 = vadd.f32 %v4851, %v5263
      %v5336 = vadd.f32 %v4852, %v5266
      %v5337 = vadd.f32 %v4853, %v5271
      %v5338 = vadd.f32 %v4854, %v5274
      %v5339 = vadd.f32 %v4855, %v5279
      %v5340 = vadd.f32 %v4856, %v5282
      %v5341 = vadd.f32 %v4857, %v5287
      %v5342 = vadd.f32 %v4858, %v5290
      %v5343 = vadd.f32 %v4859, %v5295
      %v5344 = vadd.f32 %v4860, %v5298
      %v5345 = vadd.f32 %v4861, %v5303
      %v5346 = vadd.f32 %v4862, %v5306
      %v5347 = vld [vmem:[%s273 + $0xa8] sm:$0x7]
      %s5348 = scalar_lea.vmem %s1, 224
      %v5349 = vld [vmem:[%s5348] sm:$0xf]
      %v5350 = vld [vmem:[%s5348 + $0x4] sm:$0xf]
      %v5351 = vld [vmem:[%s5348 + $0x8] sm:$0xf]
      %v5352 = vld [vmem:[%s5348 + $0xc] sm:$0xf]
      %v5353 = vld [vmem:[%s5348 + $0x10] sm:$0xf]
      %v5354 = vld [vmem:[%s5348 + $0x14] sm:$0xf]
      %v5355 = vld [vmem:[%s5348 + $0x18] sm:$0xf]
      %v5356 = vld [vmem:[%s5348 + $0x1c] sm:$0xf]
      %v5395 = vunpack.c.l.b16 %v4863
      %v5396 = vunpack.c.l.b16 %v4864
      %v5397 = vunpack.c.l.b16 %v4865
      %v5398 = vunpack.c.l.b16 %v4866
      %v5399 = vunpack.c.l.b16 %v4867
      %v5400 = vunpack.c.l.b16 %v4868
      %v5401 = vunpack.c.l.b16 %v4869
      %v5402 = vunpack.c.l.b16 %v4870
      %v5403 = vunpack.c.l.b16 %v4871
      %v5404 = vunpack.c.l.b16 %v4872
      %v5405 = vunpack.c.l.b16 %v4873
      %v5406 = vunpack.c.l.b16 %v4874
      %v5407 = vunpack.c.l.b16 %v4875
      %v5408 = vunpack.c.l.b16 %v4876
      %v5409 = vunpack.c.l.b16 %v4877
      %v5410 = vunpack.c.l.b16 %v4878
      %v5411 = vunpack.c.l.b16 %v4879
      %v5412 = vunpack.c.l.b16 %v4880
      %v5413 = vunpack.c.l.b16 %v4881
      %v5414 = vunpack.c.l.b16 %v4882
      %v5415 = vunpack.c.l.b16 %v4883
      %v5416 = vunpack.c.l.b16 %v4884
      %v5417 = vunpack.c.l.b16 %v4885
      %v5418 = vunpack.c.l.b16 %v4886
      %v5419 = vunpack.c.l.b16 %v4887
      %v5420 = vunpack.c.l.b16 %v4888
      %v5421 = vunpack.c.l.b16 %v4889
      %v5422 = vunpack.c.l.b16 %v4890
      %v5423 = vunpack.c.l.b16 %v4891
      %v5424 = vunpack.c.l.b16 %v4892
      %v5425 = vunpack.c.l.b16 %v4893
      %v5426 = vunpack.c.l.b16 %v4894
      %v5427 = vunpack.c.l.b16 %v4895
      %v5428 = vunpack.c.l.b16 %v4896
      %v5429 = vunpack.c.l.b16 %v4897
      %v5430 = vunpack.c.l.b16 %v4898
      %v5431 = vunpack.c.l.b16 %v4899
      %v5432 = vunpack.c.l.b16 %v5347
      %v5433 = vpack.c.b16 %v5396, %v5395
      %v5434 = vpack.c.b16 %v5398, %v5397
      %v5435 = vpack.c.b16 %v5400, %v5399
      %v5436 = vpack.c.b16 %v5402, %v5401
      %v5437 = vpack.c.b16 %v5404, %v5403
      %v5438 = vpack.c.b16 %v5406, %v5405
      %v5439 = vpack.c.b16 %v5408, %v5407
      %v5440 = vpack.c.b16 %v5410, %v5409
      %v5441 = vpack.c.b16 %v5412, %v5411
      %v5442 = vpack.c.b16 %v5414, %v5413
      %v5443 = vpack.c.b16 %v5416, %v5415
      %v5444 = vpack.c.b16 %v5418, %v5417
      %v5445 = vpack.c.b16 %v5420, %v5419
      %v5446 = vpack.c.b16 %v5422, %v5421
      %v5447 = vpack.c.b16 %v5424, %v5423
      %v5448 = vpack.c.b16 %v5426, %v5425
      %v5449 = vpack.c.b16 %v5428, %v5427
      %v5450 = vpack.c.b16 %v5430, %v5429
      %v5451 = vpack.c.b16 %v5432, %v5431
      %v5453 = vshrl.u32 %v5433, 16
      %v5455 = vshll.u32 %v5433, 16
      %v5457 = vrot.slane %v5455, 1
      %v5458 = vor.u32 %v5453, %v5457
      %v5460 = vshll.u32 %v5434, 16
      %v5462 = vrot.slane %v5460, 1
      %v5463 = vsel %vm1308, %v5458, %v5462
      %v5464 = vshrl.u32 %v5434, 16
      %v5466 = vor.u32 %v5464, %v5462
      %v5468 = vshll.u32 %v5435, 16
      %v5470 = vrot.slane %v5468, 1
      %v5471 = vsel %vm1308, %v5466, %v5470
      %v5472 = vshrl.u32 %v5435, 16
      %v5474 = vor.u32 %v5472, %v5470
      %v5476 = vshll.u32 %v5436, 16
      %v5478 = vrot.slane %v5476, 1
      %v5479 = vsel %vm1308, %v5474, %v5478
      %v5480 = vshrl.u32 %v5436, 16
      %v5482 = vor.u32 %v5480, %v5478
      %v5484 = vshll.u32 %v5437, 16
      %v5486 = vrot.slane %v5484, 1
      %v5487 = vsel %vm1308, %v5482, %v5486
      %v5488 = vshrl.u32 %v5437, 16
      %v5490 = vor.u32 %v5488, %v5486
      %v5492 = vshll.u32 %v5438, 16
      %v5494 = vrot.slane %v5492, 1
      %v5495 = vsel %vm1308, %v5490, %v5494
      %v5496 = vshrl.u32 %v5438, 16
      %v5498 = vor.u32 %v5496, %v5494
      %v5500 = vshll.u32 %v5439, 16
      %v5502 = vrot.slane %v5500, 1
      %v5503 = vsel %vm1308, %v5498, %v5502
      %v5504 = vshrl.u32 %v5439, 16
      %v5506 = vor.u32 %v5504, %v5502
      %v5508 = vshll.u32 %v5440, 16
      %v5510 = vrot.slane %v5508, 1
      %v5511 = vsel %vm1308, %v5506, %v5510
      %v5512 = vshrl.u32 %v5440, 16
      %v5514 = vor.u32 %v5512, %v5510
      %v5516 = vshll.u32 %v5441, 16
      %v5518 = vrot.slane %v5516, 1
      %v5519 = vsel %vm1308, %v5514, %v5518
      %v5520 = vshrl.u32 %v5441, 16
      %v5522 = vor.u32 %v5520, %v5518
      %v5524 = vshll.u32 %v5442, 16
      %v5526 = vrot.slane %v5524, 1
      %v5527 = vsel %vm1308, %v5522, %v5526
      %v5528 = vshrl.u32 %v5442, 16
      %v5530 = vor.u32 %v5528, %v5526
      %v5532 = vshll.u32 %v5443, 16
      %v5534 = vrot.slane %v5532, 1
      %v5535 = vsel %vm1308, %v5530, %v5534
      %v5536 = vshrl.u32 %v5443, 16
      %v5538 = vor.u32 %v5536, %v5534
      %v5540 = vshll.u32 %v5444, 16
      %v5542 = vrot.slane %v5540, 1
      %v5543 = vsel %vm1308, %v5538, %v5542
      %v5544 = vshrl.u32 %v5444, 16
      %v5546 = vor.u32 %v5544, %v5542
      %v5548 = vshll.u32 %v5445, 16
      %v5550 = vrot.slane %v5548, 1
      %v5551 = vsel %vm1308, %v5546, %v5550
      %v5552 = vshrl.u32 %v5445, 16
      %v5554 = vor.u32 %v5552, %v5550
      %v5556 = vshll.u32 %v5446, 16
      %v5558 = vrot.slane %v5556, 1
      %v5559 = vsel %vm1308, %v5554, %v5558
      %v5560 = vshrl.u32 %v5446, 16
      %v5562 = vor.u32 %v5560, %v5558
      %v5564 = vshll.u32 %v5447, 16
      %v5566 = vrot.slane %v5564, 1
      %v5567 = vsel %vm1308, %v5562, %v5566
      %v5568 = vshrl.u32 %v5447, 16
      %v5570 = vor.u32 %v5568, %v5566
      %v5572 = vshll.u32 %v5448, 16
      %v5574 = vrot.slane %v5572, 1
      %v5575 = vsel %vm1308, %v5570, %v5574
      %v5576 = vshrl.u32 %v5448, 16
      %v5578 = vor.u32 %v5576, %v5574
      %v5580 = vshll.u32 %v5449, 16
      %v5582 = vrot.slane %v5580, 1
      %v5583 = vsel %vm1308, %v5578, %v5582
      %v5584 = vshrl.u32 %v5449, 16
      %v5586 = vor.u32 %v5584, %v5582
      %v5588 = vshll.u32 %v5450, 16
      %v5590 = vrot.slane %v5588, 1
      %v5591 = vsel %vm1308, %v5586, %v5590
      %v5592 = vshrl.u32 %v5450, 16
      %v5594 = vor.u32 %v5592, %v5590
      %v5596 = vshll.u32 %v5451, 16
      %v5598 = vrot.slane %v5596, 1
      %v5599 = vsel %vm1308, %v5594, %v5598
      %v5600 = vshrl.u32 %v5451, 16
      %v5602 = vor.u32 %v5600, %v5598
      %v5611 = vunpack.c.l.b16 %v5349
      %v5612 = vunpack.c.l.b16 %v5350
      %v5613 = vunpack.c.l.b16 %v5351
      %v5614 = vunpack.c.l.b16 %v5352
      %v5615 = vunpack.c.l.b16 %v5353
      %v5616 = vunpack.c.l.b16 %v5354
      %v5617 = vunpack.c.l.b16 %v5355
      %v5618 = vunpack.c.l.b16 %v5356
      %v5619 = vpack.c.b16 %v5612, %v5611
      %v5620 = vpack.c.b16 %v5614, %v5613
      %v5621 = vpack.c.b16 %v5616, %v5615
      %v5622 = vpack.c.b16 %v5618, %v5617
      %v5628 = vsel %vm1484, %v5463, 0
      %v5631 = vsel %vm1484, %v5471, 0
      %v5634 = vsel %vm1484, %v5479, 0
      %v5637 = vsel %vm1484, %v5487, 0
      %v5640 = vsel %vm1484, %v5495, 0
      %v5643 = vsel %vm1484, %v5503, 0
      %v5646 = vsel %vm1484, %v5511, 0
      %v5649 = vsel %vm1484, %v5519, 0
      %v5652 = vsel %vm1484, %v5527, 0
      %v5655 = vsel %vm1484, %v5535, 0
      %v5658 = vsel %vm1484, %v5543, 0
      %v5661 = vsel %vm1484, %v5551, 0
      %v5664 = vsel %vm1484, %v5559, 0
      %v5667 = vsel %vm1484, %v5567, 0
      %v5670 = vsel %vm1484, %v5575, 0
      %v5673 = vsel %vm1484, %v5583, 0
      %v5676 = vsel %vm1484, %v5591, 0
      %v5679 = vsel %vm1484, %v5599, 0
      %v5682 = vsel %vm1484, %v5602, 0
      %5684 = vmatprep.subr.bf16.mxu0 0
      %5685 = vmatpush1.bf16.msra.mxu0 %v5619
      %5686 = vmatprep.subr.bf16.mxu0 0
      %5687 = vmatpush1.bf16.msra.mxu0 %v5620
      %5688 = vmatprep.subr.bf16.mxu0 0
      %5689 = vmatpush1.bf16.msra.mxu0 %v5621
      %5690 = vmatprep.subr.bf16.mxu0 0
      %5691 = vmatpush1.bf16.msra.mxu0 %v5622
      %5692 = vmatprep.subr.bf16.mxu0 0
      %5693 = vmatpush1.bf16.msra.mxu0 0
      %5694 = vmatprep.subr.bf16.mxu0 0
      %5695 = vmatpush1.bf16.msra.mxu0 0
      %5696 = vmatprep.subr.bf16.mxu0 0
      %5697 = vmatpush1.bf16.msra.mxu0 0
      %5698 = vmatprep.subr.bf16.mxu0 0
      %5699 = vmatpush1.bf16.msra.mxu0 0
      %5700 = vmatprep.subr.bf16.mxu0 0
      %5701 = vmatpush1.bf16.msra.mxu0 0
      %5702 = vmatprep.subr.bf16.mxu0 0
      %5703 = vmatpush1.bf16.msra.mxu0 0
      %5704 = vmatprep.subr.bf16.mxu0 0
      %5705 = vmatpush1.bf16.msra.mxu0 0
      %5706 = vmatprep.subr.bf16.mxu0 0
      %5707 = vmatpush1.bf16.msra.mxu0 0
      %5708 = vmatprep.subr.bf16.mxu0 0
      %5709 = vmatpush1.bf16.msra.mxu0 0
      %5710 = vmatprep.subr.bf16.mxu0 0
      %5711 = vmatpush1.bf16.msra.mxu0 0
      %5712 = vmatprep.subr.bf16.mxu0 0
      %5713 = vmatpush1.bf16.msra.mxu0 0
      %5714 = vmatprep.subr.bf16.mxu0 0
      %5715 = vmatpush1.bf16.msra.mxu0 0
      %5716 = vmatprep.mubr.bf16.mxu0 0
      %5717 = vmatmul.mubr.bf16.gmra.mrb[0].mxu0 %v5628
      %v5718 = vpop.f32.mrb[0].mxu0
      %v5719 = vadd.f32 0.0, %v5718
      %v5720 = vpop.f32.mrb[0].mxu0
      %v5721 = vpop.f32.mrb[0].mxu0
      %v5722 = vadd.f32 0.0, %v5721
      %v5723 = vpop.f32.mrb[0].mxu0
      %5724 = vmatprep.mubr.bf16.mxu0 0
      %5725 = vmatmul.mubr.bf16.gmra.mrb[0].mxu0 %v5631
      %v5726 = vpop.f32.mrb[0].mxu0
      %v5727 = vadd.f32 0.0, %v5726
      %v5728 = vpop.f32.mrb[0].mxu0
      %v5729 = vpop.f32.mrb[0].mxu0
      %v5730 = vadd.f32 0.0, %v5729
      %v5731 = vpop.f32.mrb[0].mxu0
      %5732 = vmatprep.mubr.bf16.mxu0 0
      %5733 = vmatmul.mubr.bf16.gmra.mrb[0].mxu0 %v5634
      %v5734 = vpop.f32.mrb[0].mxu0
      %v5735 = vadd.f32 0.0, %v5734
      %v5736 = vpop.f32.mrb[0].mxu0
      %v5737 = vpop.f32.mrb[0].mxu0
      %v5738 = vadd.f32 0.0, %v5737
      %v5739 = vpop.f32.mrb[0].mxu0
      %5740 = vmatprep.mubr.bf16.mxu0 0
      %5741 = vmatmul.mubr.bf16.gmra.mrb[0].mxu0 %v5637
      %v5742 = vpop.f32.mrb[0].mxu0
      %v5743 = vadd.f32 0.0, %v5742
      %v5744 = vpop.f32.mrb[0].mxu0
      %v5745 = vpop.f32.mrb[0].mxu0
      %v5746 = vadd.f32 0.0, %v5745
      %v5747 = vpop.f32.mrb[0].mxu0
      %5748 = vmatprep.mubr.bf16.mxu0 0
      %5749 = vmatmul.mubr.bf16.gmra.mrb[0].mxu0 %v5640
      %v5750 = vpop.f32.mrb[0].mxu0
      %v5751 = vadd.f32 0.0, %v5750
      %v5752 = vpop.f32.mrb[0].mxu0
      %v5753 = vpop.f32.mrb[0].mxu0
      %v5754 = vadd.f32 0.0, %v5753
      %v5755 = vpop.f32.mrb[0].mxu0
      %5756 = vmatprep.mubr.bf16.mxu0 0
      %5757 = vmatmul.mubr.bf16.gmra.mrb[0].mxu0 %v5643
      %v5758 = vpop.f32.mrb[0].mxu0
      %v5759 = vadd.f32 0.0, %v5758
      %v5760 = vpop.f32.mrb[0].mxu0
      %v5761 = vpop.f32.mrb[0].mxu0
      %v5762 = vadd.f32 0.0, %v5761
      %v5763 = vpop.f32.mrb[0].mxu0
      %5764 = vmatprep.mubr.bf16.mxu0 0
      %5765 = vmatmul.mubr.bf16.gmra.mrb[0].mxu0 %v5646
      %v5766 = vpop.f32.mrb[0].mxu0
      %v5767 = vadd.f32 0.0, %v5766
      %v5768 = vpop.f32.mrb[0].mxu0
      %v5769 = vpop.f32.mrb[0].mxu0
      %v5770 = vadd.f32 0.0, %v5769
      %v5771 = vpop.f32.mrb[0].mxu0
      %5772 = vmatprep.mubr.bf16.mxu0 0
      %5773 = vmatmul.mubr.bf16.gmra.mrb[0].mxu0 %v5649
      %v5774 = vpop.f32.mrb[0].mxu0
      %v5775 = vadd.f32 0.0, %v5774
      %v5776 = vpop.f32.mrb[0].mxu0
      %v5777 = vpop.f32.mrb[0].mxu0
      %v5778 = vadd.f32 0.0, %v5777
      %v5779 = vpop.f32.mrb[0].mxu0
      %5780 = vmatprep.mubr.bf16.mxu0 0
      %5781 = vmatmul.mubr.bf16.gmra.mrb[0].mxu0 %v5652
      %v5782 = vpop.f32.mrb[0].mxu0
      %v5783 = vadd.f32 0.0, %v5782
      %v5784 = vpop.f32.mrb[0].mxu0
      %v5785 = vpop.f32.mrb[0].mxu0
      %v5786 = vadd.f32 0.0, %v5785
      %v5787 = vpop.f32.mrb[0].mxu0
      %5788 = vmatprep.mubr.bf16.mxu0 0
      %5789 = vmatmul.mubr.bf16.gmra.mrb[0].mxu0 %v5655
      %v5790 = vpop.f32.mrb[0].mxu0
      %v5791 = vadd.f32 0.0, %v5790
      %v5792 = vpop.f32.mrb[0].mxu0
      %v5793 = vpop.f32.mrb[0].mxu0
      %v5794 = vadd.f32 0.0, %v5793
      %v5795 = vpop.f32.mrb[0].mxu0
      %5796 = vmatprep.mubr.bf16.mxu0 0
      %5797 = vmatmul.mubr.bf16.gmra.mrb[0].mxu0 %v5658
      %v5798 = vpop.f32.mrb[0].mxu0
      %v5799 = vadd.f32 0.0, %v5798
      %v5800 = vpop.f32.mrb[0].mxu0
      %v5801 = vpop.f32.mrb[0].mxu0
      %v5802 = vadd.f32 0.0, %v5801
      %v5803 = vpop.f32.mrb[0].mxu0
      %5804 = vmatprep.mubr.bf16.mxu0 0
      %5805 = vmatmul.mubr.bf16.gmra.mrb[0].mxu0 %v5661
      %v5806 = vpop.f32.mrb[0].mxu0
      %v5807 = vadd.f32 0.0, %v5806
      %v5808 = vpop.f32.mrb[0].mxu0
      %v5809 = vpop.f32.mrb[0].mxu0
      %v5810 = vadd.f32 0.0, %v5809
      %v5811 = vpop.f32.mrb[0].mxu0
      %5812 = vmatprep.mubr.bf16.mxu0 0
      %5813 = vmatmul.mubr.bf16.gmra.mrb[0].mxu0 %v5664
      %v5814 = vpop.f32.mrb[0].mxu0
      %v5815 = vadd.f32 0.0, %v5814
      %v5816 = vpop.f32.mrb[0].mxu0
      %v5817 = vpop.f32.mrb[0].mxu0
      %v5818 = vadd.f32 0.0, %v5817
      %v5819 = vpop.f32.mrb[0].mxu0
      %5820 = vmatprep.mubr.bf16.mxu0 0
      %5821 = vmatmul.mubr.bf16.gmra.mrb[0].mxu0 %v5667
      %v5822 = vpop.f32.mrb[0].mxu0
      %v5823 = vadd.f32 0.0, %v5822
      %v5824 = vpop.f32.mrb[0].mxu0
      %v5825 = vpop.f32.mrb[0].mxu0
      %v5826 = vadd.f32 0.0, %v5825
      %v5827 = vpop.f32.mrb[0].mxu0
      %5828 = vmatprep.mubr.bf16.mxu0 0
      %5829 = vmatmul.mubr.bf16.gmra.mrb[0].mxu0 %v5670
      %v5830 = vpop.f32.mrb[0].mxu0
      %v5831 = vadd.f32 0.0, %v5830
      %v5832 = vpop.f32.mrb[0].mxu0
      %v5833 = vpop.f32.mrb[0].mxu0
      %v5834 = vadd.f32 0.0, %v5833
      %v5835 = vpop.f32.mrb[0].mxu0
      %5836 = vmatprep.mubr.bf16.mxu0 0
      %5837 = vmatmul.mubr.bf16.gmra.mrb[0].mxu0 %v5673
      %v5838 = vpop.f32.mrb[0].mxu0
      %v5839 = vadd.f32 0.0, %v5838
      %v5840 = vpop.f32.mrb[0].mxu0
      %v5841 = vpop.f32.mrb[0].mxu0
      %v5842 = vadd.f32 0.0, %v5841
      %v5843 = vpop.f32.mrb[0].mxu0
      %5844 = vmatprep.mubr.bf16.mxu0 0
      %5845 = vmatmul.mubr.bf16.gmra.mrb[0].mxu0 %v5676
      %v5846 = vpop.f32.mrb[0].mxu0
      %v5847 = vadd.f32 0.0, %v5846
      %v5848 = vpop.f32.mrb[0].mxu0
      %v5849 = vpop.f32.mrb[0].mxu0
      %v5850 = vadd.f32 0.0, %v5849
      %v5851 = vpop.f32.mrb[0].mxu0
      %5852 = vmatprep.mubr.bf16.mxu0 0
      %5853 = vmatmul.mubr.bf16.gmra.mrb[0].mxu0 %v5679
      %v5854 = vpop.f32.mrb[0].mxu0
      %v5855 = vadd.f32 0.0, %v5854
      %v5856 = vpop.f32.mrb[0].mxu0
      %v5857 = vpop.f32.mrb[0].mxu0
      %v5858 = vadd.f32 0.0, %v5857
      %v5859 = vpop.f32.mrb[0].mxu0
      %5860 = vmatprep.mubr.bf16.mxu0 0
      %5861 = vmatmul.mubr.bf16.gmra.mrb[0].mxu0 %v5682
      %v5862 = vpop.f32.mrb[0].mxu0
      %v5863 = vadd.f32 0.0, %v5862
      %v5864 = vpop.f32.mrb[0].mxu0
      %v5865 = vpop.f32.mrb[0].mxu0
      %v5866 = vadd.f32 0.0, %v5865
      %v5867 = vpop.f32.mrb[0].mxu0
      %5868 = vdwg.mxu0
      %v5869 = vadd.f32 %v5309, %v5719
      %v5870 = vadd.f32 %v5310, %v5722
      %v5871 = vadd.f32 %v5311, %v5727
      %v5872 = vadd.f32 %v5312, %v5730
      %v5873 = vadd.f32 %v5313, %v5735
      %v5874 = vadd.f32 %v5314, %v5738
      %v5875 = vadd.f32 %v5315, %v5743
      %v5876 = vadd.f32 %v5316, %v5746
      %v5877 = vadd.f32 %v5317, %v5751
      %v5878 = vadd.f32 %v5318, %v5754
      %v5879 = vadd.f32 %v5319, %v5759
      %v5880 = vadd.f32 %v5320, %v5762
      %v5881 = vadd.f32 %v5321, %v5767
      %v5882 = vadd.f32 %v5322, %v5770
      %v5883 = vadd.f32 %v5323, %v5775
      %v5884 = vadd.f32 %v5324, %v5778
      %v5885 = vadd.f32 %v5325, %v5783
      %v5886 = vadd.f32 %v5326, %v5786
      %v5887 = vadd.f32 %v5327, %v5791
      %v5888 = vadd.f32 %v5328, %v5794
      %v5889 = vadd.f32 %v5329, %v5799
      %v5890 = vadd.f32 %v5330, %v5802
      %v5891 = vadd.f32 %v5331, %v5807
      %v5892 = vadd.f32 %v5332, %v5810
      %v5893 = vadd.f32 %v5333, %v5815
      %v5894 = vadd.f32 %v5334, %v5818
      %v5895 = vadd.f32 %v5335, %v5823
      %v5896 = vadd.f32 %v5336, %v5826
      %v5897 = vadd.f32 %v5337, %v5831
      %v5898 = vadd.f32 %v5338, %v5834
      %v5899 = vadd.f32 %v5339, %v5839
      %v5900 = vadd.f32 %v5340, %v5842
      %v5901 = vadd.f32 %v5341, %v5847
      %v5902 = vadd.f32 %v5342, %v5850
      %v5903 = vadd.f32 %v5343, %v5855
      %v5904 = vadd.f32 %v5344, %v5858
      %v5905 = vadd.f32 %v5345, %v5863
      %v5906 = vadd.f32 %v5346, %v5866
      %v5907 = vld [vmem:[%s273 + $0x14] sm:$0xe]
      %v5908 = vsel %vm2356, %v5907, 0
      %v5909 = vsel %vm2357, %v4864, 0
      %v5910 = vsel %vm2358, %v4865, 0
      %v5911 = vsel %vm2359, %v4866, 0
      %v5912 = vsel %vm2360, %v4867, 0
      %v5913 = vsel %vm2361, %v4868, 0
      %v5914 = vsel %vm2362, %v4869, 0
      %v5915 = vsel %vm2363, %v4870, 0
      %v5916 = vsel %vm2364, %v4871, 0
      %v5917 = vsel %vm2365, %v4872, 0
      %v5918 = vsel %vm2366, %v4873, 0
      %v5919 = vsel %vm2367, %v4874, 0
      %v5920 = vsel %vm2368, %v4875, 0
      %v5921 = vsel %vm2369, %v4876, 0
      %v5922 = vsel %vm2370, %v4877, 0
      %v5923 = vsel %vm2371, %v4878, 0
      %v5924 = vsel %vm2372, %v4879, 0
      %v5925 = vsel %vm2373, %v4880, 0
      %v5926 = vsel %vm2374, %v4881, 0
      %v5927 = vsel %vm2375, %v4882, 0
      %v5928 = vsel %vm2376, %v4883, 0
      %v5929 = vsel %vm2377, %v4884, 0
      %v5930 = vsel %vm2378, %v4885, 0
      %v5931 = vsel %vm2379, %v4886, 0
      %v5932 = vsel %vm2380, %v4887, 0
      %v5933 = vsel %vm2381, %v4888, 0
      %v5934 = vsel %vm2382, %v4889, 0
      %v5935 = vsel %vm2383, %v4890, 0
      %v5936 = vsel %vm2384, %v4891, 0
      %v5937 = vsel %vm2385, %v4892, 0
      %v5938 = vsel %vm2386, %v4893, 0
      %v5939 = vsel %vm2387, %v4894, 0
      %v5940 = vsel %vm2388, %v4895, 0
      %v5941 = vsel %vm2389, %v4896, 0
      %v5942 = vsel %vm2390, %v4897, 0
      %v5943 = vsel %vm2391, %v4898, 0
      %v5944 = vsel %vm2392, %v4899, 0
      %v5945 = vsel %vm2393, %v5347, 0
      %s5946 = scalar_lea.vmem %s1, 256
      %v5947 = vld [vmem:[%s5946] sm:$0xf]
      %v5948 = vld [vmem:[%s5946 + $0x4] sm:$0xf]
      %v5949 = vld [vmem:[%s5946 + $0x8] sm:$0xf]
      %v5950 = vld [vmem:[%s5946 + $0xc] sm:$0xf]
      %v5951 = vld [vmem:[%s5946 + $0x10] sm:$0xf]
      %v5952 = vld [vmem:[%s5946 + $0x14] sm:$0xf]
      %v5953 = vld [vmem:[%s5946 + $0x18] sm:$0xf]
      %v5954 = vld [vmem:[%s5946 + $0x1c] sm:$0xf]
      %v5993 = vunpack.c.l.b16 %v5908
      %v5994 = vunpack.c.l.b16 %v5909
      %v5995 = vunpack.c.l.b16 %v5910
      %v5996 = vunpack.c.l.b16 %v5911
      %v5997 = vunpack.c.l.b16 %v5912
      %v5998 = vunpack.c.l.b16 %v5913
      %v5999 = vunpack.c.l.b16 %v5914
      %v6000 = vunpack.c.l.b16 %v5915
      %v6001 = vunpack.c.l.b16 %v5916
      %v6002 = vunpack.c.l.b16 %v5917
      %v6003 = vunpack.c.l.b16 %v5918
      %v6004 = vunpack.c.l.b16 %v5919
      %v6005 = vunpack.c.l.b16 %v5920
      %v6006 = vunpack.c.l.b16 %v5921
      %v6007 = vunpack.c.l.b16 %v5922
      %v6008 = vunpack.c.l.b16 %v5923
      %v6009 = vunpack.c.l.b16 %v5924
      %v6010 = vunpack.c.l.b16 %v5925
      %v6011 = vunpack.c.l.b16 %v5926
      %v6012 = vunpack.c.l.b16 %v5927
      %v6013 = vunpack.c.l.b16 %v5928
      %v6014 = vunpack.c.l.b16 %v5929
      %v6015 = vunpack.c.l.b16 %v5930
      %v6016 = vunpack.c.l.b16 %v5931
      %v6017 = vunpack.c.l.b16 %v5932
      %v6018 = vunpack.c.l.b16 %v5933
      %v6019 = vunpack.c.l.b16 %v5934
      %v6020 = vunpack.c.l.b16 %v5935
      %v6021 = vunpack.c.l.b16 %v5936
      %v6022 = vunpack.c.l.b16 %v5937
      %v6023 = vunpack.c.l.b16 %v5938
      %v6024 = vunpack.c.l.b16 %v5939
      %v6025 = vunpack.c.l.b16 %v5940
      %v6026 = vunpack.c.l.b16 %v5941
      %v6027 = vunpack.c.l.b16 %v5942
      %v6028 = vunpack.c.l.b16 %v5943
      %v6029 = vunpack.c.l.b16 %v5944
      %v6030 = vunpack.c.l.b16 %v5945
      %v6031 = vpack.c.b16 %v5994, %v5993
      %v6032 = vpack.c.b16 %v5996, %v5995
      %v6033 = vpack.c.b16 %v5998, %v5997
      %v6034 = vpack.c.b16 %v6000, %v5999
      %v6035 = vpack.c.b16 %v6002, %v6001
      %v6036 = vpack.c.b16 %v6004, %v6003
      %v6037 = vpack.c.b16 %v6006, %v6005
      %v6038 = vpack.c.b16 %v6008, %v6007
      %v6039 = vpack.c.b16 %v6010, %v6009
      %v6040 = vpack.c.b16 %v6012, %v6011
      %v6041 = vpack.c.b16 %v6014, %v6013
      %v6042 = vpack.c.b16 %v6016, %v6015
      %v6043 = vpack.c.b16 %v6018, %v6017
      %v6044 = vpack.c.b16 %v6020, %v6019
      %v6045 = vpack.c.b16 %v6022, %v6021
      %v6046 = vpack.c.b16 %v6024, %v6023
      %v6047 = vpack.c.b16 %v6026, %v6025
      %v6048 = vpack.c.b16 %v6028, %v6027
      %v6049 = vpack.c.b16 %v6030, %v6029
      %v6050 = vrot.slane %v6031, 1
      %v6051 = vrot.slane %v6032, 1
      %v6052 = vsel %vm2536, %v6050, %v6051
      %v6053 = vrot.slane %v6033, 1
      %v6054 = vsel %vm2536, %v6051, %v6053
      %v6055 = vrot.slane %v6034, 1
      %v6056 = vsel %vm2536, %v6053, %v6055
      %v6057 = vrot.slane %v6035, 1
      %v6058 = vsel %vm2536, %v6055, %v6057
      %v6059 = vrot.slane %v6036, 1
      %v6060 = vsel %vm2536, %v6057, %v6059
      %v6061 = vrot.slane %v6037, 1
      %v6062 = vsel %vm2536, %v6059, %v6061
      %v6063 = vrot.slane %v6038, 1
      %v6064 = vsel %vm2536, %v6061, %v6063
      %v6065 = vrot.slane %v6039, 1
      %v6066 = vsel %vm2536, %v6063, %v6065
      %v6067 = vrot.slane %v6040, 1
      %v6068 = vsel %vm2536, %v6065, %v6067
      %v6069 = vrot.slane %v6041, 1
      %v6070 = vsel %vm2536, %v6067, %v6069
      %v6071 = vrot.slane %v6042, 1
      %v6072 = vsel %vm2536, %v6069, %v6071
      %v6073 = vrot.slane %v6043, 1
      %v6074 = vsel %vm2536, %v6071, %v6073
      %v6075 = vrot.slane %v6044, 1
      %v6076 = vsel %vm2536, %v6073, %v6075
      %v6077 = vrot.slane %v6045, 1
      %v6078 = vsel %vm2536, %v6075, %v6077
      %v6079 = vrot.slane %v6046, 1
      %v6080 = vsel %vm2536, %v6077, %v6079
      %v6081 = vrot.slane %v6047, 1
      %v6082 = vsel %vm2536, %v6079, %v6081
      %v6083 = vrot.slane %v6048, 1
      %v6084 = vsel %vm2536, %v6081, %v6083
      %v6085 = vrot.slane %v6049, 1
      %v6086 = vsel %vm2536, %v6083, %v6085
      %v6095 = vunpack.c.l.b16 %v5947
      %v6096 = vunpack.c.l.b16 %v5948
      %v6097 = vunpack.c.l.b16 %v5949
      %v6098 = vunpack.c.l.b16 %v5950
      %v6099 = vunpack.c.l.b16 %v5951
      %v6100 = vunpack.c.l.b16 %v5952
      %v6101 = vunpack.c.l.b16 %v5953
      %v6102 = vunpack.c.l.b16 %v5954
      %v6103 = vpack.c.b16 %v6096, %v6095
      %v6104 = vpack.c.b16 %v6098, %v6097
      %v6105 = vpack.c.b16 %v6100, %v6099
      %v6106 = vpack.c.b16 %v6102, %v6101
      %v6112 = vsel %vm1484, %v6052, 0
      %v6115 = vsel %vm1484, %v6054, 0
      %v6118 = vsel %vm1484, %v6056, 0
      %v6121 = vsel %vm1484, %v6058, 0
      %v6124 = vsel %vm1484, %v6060, 0
      %v6127 = vsel %vm1484, %v6062, 0
      %v6130 = vsel %vm1484, %v6064, 0
      %v6133 = vsel %vm1484, %v6066, 0
      %v6136 = vsel %vm1484, %v6068, 0
      %v6139 = vsel %vm1484, %v6070, 0
      %v6142 = vsel %vm1484, %v6072, 0
      %v6145 = vsel %vm1484, %v6074, 0
      %v6148 = vsel %vm1484, %v6076, 0
      %v6151 = vsel %vm1484, %v6078, 0
      %v6154 = vsel %vm1484, %v6080, 0
      %v6157 = vsel %vm1484, %v6082, 0
      %v6160 = vsel %vm1484, %v6084, 0
      %v6163 = vsel %vm1484, %v6086, 0
      %v6166 = vsel %vm1484, %v6085, 0
      %6168 = vmatprep.subr.bf16.mxu0 0
      %6169 = vmatpush1.bf16.msra.mxu0 %v6103
      %6170 = vmatprep.subr.bf16.mxu0 0
      %6171 = vmatpush1.bf16.msra.mxu0 %v6104
      %6172 = vmatprep.subr.bf16.mxu0 0
      %6173 = vmatpush1.bf16.msra.mxu0 %v6105
      %6174 = vmatprep.subr.bf16.mxu0 0
      %6175 = vmatpush1.bf16.msra.mxu0 %v6106
      %6176 = vmatprep.subr.bf16.mxu0 0
      %6177 = vmatpush1.bf16.msra.mxu0 0
      %6178 = vmatprep.subr.bf16.mxu0 0
      %6179 = vmatpush1.bf16.msra.mxu0 0
      %6180 = vmatprep.subr.bf16.mxu0 0
      %6181 = vmatpush1.bf16.msra.mxu0 0
      %6182 = vmatprep.subr.bf16.mxu0 0
      %6183 = vmatpush1.bf16.msra.mxu0 0
      %6184 = vmatprep.subr.bf16.mxu0 0
      %6185 = vmatpush1.bf16.msra.mxu0 0
      %6186 = vmatprep.subr.bf16.mxu0 0
      %6187 = vmatpush1.bf16.msra.mxu0 0
      %6188 = vmatprep.subr.bf16.mxu0 0
      %6189 = vmatpush1.bf16.msra.mxu0 0
      %6190 = vmatprep.subr.bf16.mxu0 0
      %6191 = vmatpush1.bf16.msra.mxu0 0
      %6192 = vmatprep.subr.bf16.mxu0 0
      %6193 = vmatpush1.bf16.msra.mxu0 0
      %6194 = vmatprep.subr.bf16.mxu0 0
      %6195 = vmatpush1.bf16.msra.mxu0 0
      %6196 = vmatprep.subr.bf16.mxu0 0
      %6197 = vmatpush1.bf16.msra.mxu0 0
      %6198 = vmatprep.subr.bf16.mxu0 0
      %6199 = vmatpush1.bf16.msra.mxu0 0
      %6200 = vmatprep.mubr.bf16.mxu0 0
      %6201 = vmatmul.mubr.bf16.gmra.mrb[0].mxu0 %v6112
      %v6202 = vpop.f32.mrb[0].mxu0
      %v6203 = vadd.f32 0.0, %v6202
      %v6204 = vpop.f32.mrb[0].mxu0
      %v6205 = vpop.f32.mrb[0].mxu0
      %v6206 = vadd.f32 0.0, %v6205
      %v6207 = vpop.f32.mrb[0].mxu0
      %6208 = vmatprep.mubr.bf16.mxu0 0
      %6209 = vmatmul.mubr.bf16.gmra.mrb[0].mxu0 %v6115
      %v6210 = vpop.f32.mrb[0].mxu0
      %v6211 = vadd.f32 0.0, %v6210
      %v6212 = vpop.f32.mrb[0].mxu0
      %v6213 = vpop.f32.mrb[0].mxu0
      %v6214 = vadd.f32 0.0, %v6213
      %v6215 = vpop.f32.mrb[0].mxu0
      %6216 = vmatprep.mubr.bf16.mxu0 0
      %6217 = vmatmul.mubr.bf16.gmra.mrb[0].mxu0 %v6118
      %v6218 = vpop.f32.mrb[0].mxu0
      %v6219 = vadd.f32 0.0, %v6218
      %v6220 = vpop.f32.mrb[0].mxu0
      %v6221 = vpop.f32.mrb[0].mxu0
      %v6222 = vadd.f32 0.0, %v6221
      %v6223 = vpop.f32.mrb[0].mxu0
      %6224 = vmatprep.mubr.bf16.mxu0 0
      %6225 = vmatmul.mubr.bf16.gmra.mrb[0].mxu0 %v6121
      %v6226 = vpop.f32.mrb[0].mxu0
      %v6227 = vadd.f32 0.0, %v6226
      %v6228 = vpop.f32.mrb[0].mxu0
      %v6229 = vpop.f32.mrb[0].mxu0
      %v6230 = vadd.f32 0.0, %v6229
      %v6231 = vpop.f32.mrb[0].mxu0
      %6232 = vmatprep.mubr.bf16.mxu0 0
      %6233 = vmatmul.mubr.bf16.gmra.mrb[0].mxu0 %v6124
      %v6234 = vpop.f32.mrb[0].mxu0
      %v6235 = vadd.f32 0.0, %v6234
      %v6236 = vpop.f32.mrb[0].mxu0
      %v6237 = vpop.f32.mrb[0].mxu0
      %v6238 = vadd.f32 0.0, %v6237
      %v6239 = vpop.f32.mrb[0].mxu0
      %6240 = vmatprep.mubr.bf16.mxu0 0
      %6241 = vmatmul.mubr.bf16.gmra.mrb[0].mxu0 %v6127
      %v6242 = vpop.f32.mrb[0].mxu0
      %v6243 = vadd.f32 0.0, %v6242
      %v6244 = vpop.f32.mrb[0].mxu0
      %v6245 = vpop.f32.mrb[0].mxu0
      %v6246 = vadd.f32 0.0, %v6245
      %v6247 = vpop.f32.mrb[0].mxu0
      %6248 = vmatprep.mubr.bf16.mxu0 0
      %6249 = vmatmul.mubr.bf16.gmra.mrb[0].mxu0 %v6130
      %v6250 = vpop.f32.mrb[0].mxu0
      %v6251 = vadd.f32 0.0, %v6250
      %v6252 = vpop.f32.mrb[0].mxu0
      %v6253 = vpop.f32.mrb[0].mxu0
      %v6254 = vadd.f32 0.0, %v6253
      %v6255 = vpop.f32.mrb[0].mxu0
      %6256 = vmatprep.mubr.bf16.mxu0 0
      %6257 = vmatmul.mubr.bf16.gmra.mrb[0].mxu0 %v6133
      %v6258 = vpop.f32.mrb[0].mxu0
      %v6259 = vadd.f32 0.0, %v6258
      %v6260 = vpop.f32.mrb[0].mxu0
      %v6261 = vpop.f32.mrb[0].mxu0
      %v6262 = vadd.f32 0.0, %v6261
      %v6263 = vpop.f32.mrb[0].mxu0
      %6264 = vmatprep.mubr.bf16.mxu0 0
      %6265 = vmatmul.mubr.bf16.gmra.mrb[0].mxu0 %v6136
      %v6266 = vpop.f32.mrb[0].mxu0
      %v6267 = vadd.f32 0.0, %v6266
      %v6268 = vpop.f32.mrb[0].mxu0
      %v6269 = vpop.f32.mrb[0].mxu0
      %v6270 = vadd.f32 0.0, %v6269
      %v6271 = vpop.f32.mrb[0].mxu0
      %6272 = vmatprep.mubr.bf16.mxu0 0
      %6273 = vmatmul.mubr.bf16.gmra.mrb[0].mxu0 %v6139
      %v6274 = vpop.f32.mrb[0].mxu0
      %v6275 = vadd.f32 0.0, %v6274
      %v6276 = vpop.f32.mrb[0].mxu0
      %v6277 = vpop.f32.mrb[0].mxu0
      %v6278 = vadd.f32 0.0, %v6277
      %v6279 = vpop.f32.mrb[0].mxu0
      %6280 = vmatprep.mubr.bf16.mxu0 0
      %6281 = vmatmul.mubr.bf16.gmra.mrb[0].mxu0 %v6142
      %v6282 = vpop.f32.mrb[0].mxu0
      %v6283 = vadd.f32 0.0, %v6282
      %v6284 = vpop.f32.mrb[0].mxu0
      %v6285 = vpop.f32.mrb[0].mxu0
      %v6286 = vadd.f32 0.0, %v6285
      %v6287 = vpop.f32.mrb[0].mxu0
      %6288 = vmatprep.mubr.bf16.mxu0 0
      %6289 = vmatmul.mubr.bf16.gmra.mrb[0].mxu0 %v6145
      %v6290 = vpop.f32.mrb[0].mxu0
      %v6291 = vadd.f32 0.0, %v6290
      %v6292 = vpop.f32.mrb[0].mxu0
      %v6293 = vpop.f32.mrb[0].mxu0
      %v6294 = vadd.f32 0.0, %v6293
      %v6295 = vpop.f32.mrb[0].mxu0
      %6296 = vmatprep.mubr.bf16.mxu0 0
      %6297 = vmatmul.mubr.bf16.gmra.mrb[0].mxu0 %v6148
      %v6298 = vpop.f32.mrb[0].mxu0
      %v6299 = vadd.f32 0.0, %v6298
      %v6300 = vpop.f32.mrb[0].mxu0
      %v6301 = vpop.f32.mrb[0].mxu0
      %v6302 = vadd.f32 0.0, %v6301
      %v6303 = vpop.f32.mrb[0].mxu0
      %6304 = vmatprep.mubr.bf16.mxu0 0
      %6305 = vmatmul.mubr.bf16.gmra.mrb[0].mxu0 %v6151
      %v6306 = vpop.f32.mrb[0].mxu0
      %v6307 = vadd.f32 0.0, %v6306
      %v6308 = vpop.f32.mrb[0].mxu0
      %v6309 = vpop.f32.mrb[0].mxu0
      %v6310 = vadd.f32 0.0, %v6309
      %v6311 = vpop.f32.mrb[0].mxu0
      %6312 = vmatprep.mubr.bf16.mxu0 0
      %6313 = vmatmul.mubr.bf16.gmra.mrb[0].mxu0 %v6154
      %v6314 = vpop.f32.mrb[0].mxu0
      %v6315 = vadd.f32 0.0, %v6314
      %v6316 = vpop.f32.mrb[0].mxu0
      %v6317 = vpop.f32.mrb[0].mxu0
      %v6318 = vadd.f32 0.0, %v6317
      %v6319 = vpop.f32.mrb[0].mxu0
      %6320 = vmatprep.mubr.bf16.mxu0 0
      %6321 = vmatmul.mubr.bf16.gmra.mrb[0].mxu0 %v6157
      %v6322 = vpop.f32.mrb[0].mxu0
      %v6323 = vadd.f32 0.0, %v6322
      %v6324 = vpop.f32.mrb[0].mxu0
      %v6325 = vpop.f32.mrb[0].mxu0
      %v6326 = vadd.f32 0.0, %v6325
      %v6327 = vpop.f32.mrb[0].mxu0
      %6328 = vmatprep.mubr.bf16.mxu0 0
      %6329 = vmatmul.mubr.bf16.gmra.mrb[0].mxu0 %v6160
      %v6330 = vpop.f32.mrb[0].mxu0
      %v6331 = vadd.f32 0.0, %v6330
      %v6332 = vpop.f32.mrb[0].mxu0
      %v6333 = vpop.f32.mrb[0].mxu0
      %v6334 = vadd.f32 0.0, %v6333
      %v6335 = vpop.f32.mrb[0].mxu0
      %6336 = vmatprep.mubr.bf16.mxu0 0
      %6337 = vmatmul.mubr.bf16.gmra.mrb[0].mxu0 %v6163
      %v6338 = vpop.f32.mrb[0].mxu0
      %v6339 = vadd.f32 0.0, %v6338
      %v6340 = vpop.f32.mrb[0].mxu0
      %v6341 = vpop.f32.mrb[0].mxu0
      %v6342 = vadd.f32 0.0, %v6341
      %v6343 = vpop.f32.mrb[0].mxu0
      %6344 = vmatprep.mubr.bf16.mxu0 0
      %6345 = vmatmul.mubr.bf16.gmra.mrb[0].mxu0 %v6166
      %v6346 = vpop.f32.mrb[0].mxu0
      %v6347 = vadd.f32 0.0, %v6346
      %v6348 = vpop.f32.mrb[0].mxu0
      %v6349 = vpop.f32.mrb[0].mxu0
      %v6350 = vadd.f32 0.0, %v6349
      %v6351 = vpop.f32.mrb[0].mxu0
      %6352 = vdwg.mxu0
      %v6353 = vadd.f32 %v5869, %v6203
      %v6354 = vadd.f32 %v5870, %v6206
      %v6355 = vadd.f32 %v5871, %v6211
      %v6356 = vadd.f32 %v5872, %v6214
      %v6357 = vadd.f32 %v5873, %v6219
      %v6358 = vadd.f32 %v5874, %v6222
      %v6359 = vadd.f32 %v5875, %v6227
      %v6360 = vadd.f32 %v5876, %v6230
      %v6361 = vadd.f32 %v5877, %v6235
      %v6362 = vadd.f32 %v5878, %v6238
      %v6363 = vadd.f32 %v5879, %v6243
      %v6364 = vadd.f32 %v5880, %v6246
      %v6365 = vadd.f32 %v5881, %v6251
      %v6366 = vadd.f32 %v5882, %v6254
      %v6367 = vadd.f32 %v5883, %v6259
      %v6368 = vadd.f32 %v5884, %v6262
      %v6369 = vadd.f32 %v5885, %v6267
      %v6370 = vadd.f32 %v5886, %v6270
      %v6371 = vadd.f32 %v5887, %v6275
      %v6372 = vadd.f32 %v5888, %v6278
      %v6373 = vadd.f32 %v5889, %v6283
      %v6374 = vadd.f32 %v5890, %v6286
      %v6375 = vadd.f32 %v5891, %v6291
      %v6376 = vadd.f32 %v5892, %v6294
      %v6377 = vadd.f32 %v5893, %v6299
      %v6378 = vadd.f32 %v5894, %v6302
      %v6379 = vadd.f32 %v5895, %v6307
      %v6380 = vadd.f32 %v5896, %v6310
      %v6381 = vadd.f32 %v5897, %v6315
      %v6382 = vadd.f32 %v5898, %v6318
      %v6383 = vadd.f32 %v5899, %v6323
      %v6384 = vadd.f32 %v5900, %v6326
      %v6385 = vadd.f32 %v5901, %v6331
      %v6386 = vadd.f32 %v5902, %v6334
      %v6387 = vadd.f32 %v5903, %v6339
      %v6388 = vadd.f32 %v5904, %v6342
      %v6389 = vadd.f32 %v5905, %v6347
      %v6390 = vadd.f32 %v5906, %v6350
      %v6391 = vld [vmem:[%s2] sm:$0x1]
      %v6393 = vlaneseq
      %v6394 = vshrl.u32 %v6393, 7
      %v6395 = vsub.s32 0, %v6394
      %v6396 = vrot.slane %v6391, %v6395
      %v6398 = vmul.f32 %v6353, %v6396
      %v6399 = vmul.f32 %v6354, %v6396
      %v6400 = vmul.f32 %v6355, %v6396
      %v6401 = vmul.f32 %v6356, %v6396
      %v6402 = vmul.f32 %v6357, %v6396
      %v6403 = vmul.f32 %v6358, %v6396
      %v6404 = vmul.f32 %v6359, %v6396
      %v6405 = vmul.f32 %v6360, %v6396
      %v6406 = vmul.f32 %v6361, %v6396
      %v6407 = vmul.f32 %v6362, %v6396
      %v6408 = vmul.f32 %v6363, %v6396
      %v6409 = vmul.f32 %v6364, %v6396
      %v6410 = vmul.f32 %v6365, %v6396
      %v6411 = vmul.f32 %v6366, %v6396
      %v6412 = vmul.f32 %v6367, %v6396
      %v6413 = vmul.f32 %v6368, %v6396
      %v6414 = vmul.f32 %v6369, %v6396
      %v6415 = vmul.f32 %v6370, %v6396
      %v6416 = vmul.f32 %v6371, %v6396
      %v6417 = vmul.f32 %v6372, %v6396
      %v6418 = vmul.f32 %v6373, %v6396
      %v6419 = vmul.f32 %v6374, %v6396
      %v6420 = vmul.f32 %v6375, %v6396
      %v6421 = vmul.f32 %v6376, %v6396
      %v6422 = vmul.f32 %v6377, %v6396
      %v6423 = vmul.f32 %v6378, %v6396
      %v6424 = vmul.f32 %v6379, %v6396
      %v6425 = vmul.f32 %v6380, %v6396
      %v6426 = vmul.f32 %v6381, %v6396
      %v6427 = vmul.f32 %v6382, %v6396
      %v6428 = vmul.f32 %v6383, %v6396
      %v6429 = vmul.f32 %v6384, %v6396
      %v6430 = vmul.f32 %v6385, %v6396
      %v6431 = vmul.f32 %v6386, %v6396
      %v6432 = vmul.f32 %v6387, %v6396
      %v6433 = vmul.f32 %v6388, %v6396
      %v6434 = vmul.f32 %v6389, %v6396
      %v6435 = vmul.f32 %v6390, %v6396
      %v6436 = vld [vmem:[%s3] sm:$0x1]
      %v6438 = vlaneseq
      %v6439 = vshrl.u32 %v6438, 7
      %v6440 = vsub.s32 0, %v6439
      %v6441 = vrot.slane %v6436, %v6440
      %v6443 = vadd.f32 %v6398, %v6441
      %v6444 = vadd.f32 %v6399, %v6441
      %v6445 = vadd.f32 %v6400, %v6441
      %v6446 = vadd.f32 %v6401, %v6441
      %v6447 = vadd.f32 %v6402, %v6441
      %v6448 = vadd.f32 %v6403, %v6441
      %v6449 = vadd.f32 %v6404, %v6441
      %v6450 = vadd.f32 %v6405, %v6441
      %v6451 = vadd.f32 %v6406, %v6441
      %v6452 = vadd.f32 %v6407, %v6441
      %v6453 = vadd.f32 %v6408, %v6441
      %v6454 = vadd.f32 %v6409, %v6441
      %v6455 = vadd.f32 %v6410, %v6441
      %v6456 = vadd.f32 %v6411, %v6441
      %v6457 = vadd.f32 %v6412, %v6441
      %v6458 = vadd.f32 %v6413, %v6441
      %v6459 = vadd.f32 %v6414, %v6441
      %v6460 = vadd.f32 %v6415, %v6441
      %v6461 = vadd.f32 %v6416, %v6441
      %v6462 = vadd.f32 %v6417, %v6441
      %v6463 = vadd.f32 %v6418, %v6441
      %v6464 = vadd.f32 %v6419, %v6441
      %v6465 = vadd.f32 %v6420, %v6441
      %v6466 = vadd.f32 %v6421, %v6441
      %v6467 = vadd.f32 %v6422, %v6441
      %v6468 = vadd.f32 %v6423, %v6441
      %v6469 = vadd.f32 %v6424, %v6441
      %v6470 = vadd.f32 %v6425, %v6441
      %v6471 = vadd.f32 %v6426, %v6441
      %v6472 = vadd.f32 %v6427, %v6441
      %v6473 = vadd.f32 %v6428, %v6441
      %v6474 = vadd.f32 %v6429, %v6441
      %v6475 = vadd.f32 %v6430, %v6441
      %v6476 = vadd.f32 %v6431, %v6441
      %v6477 = vadd.f32 %v6432, %v6441
      %v6478 = vadd.f32 %v6433, %v6441
      %v6479 = vadd.f32 %v6434, %v6441
      %v6480 = vadd.f32 %v6435, %v6441
      %v6481 = vmax.f32 %v6443, 0.0
      %v6482 = vmax.f32 %v6444, 0.0
      %v6483 = vmax.f32 %v6445, 0.0
      %v6484 = vmax.f32 %v6446, 0.0
      %v6485 = vmax.f32 %v6447, 0.0
      %v6486 = vmax.f32 %v6448, 0.0
      %v6487 = vmax.f32 %v6449, 0.0
      %v6488 = vmax.f32 %v6450, 0.0
      %v6489 = vmax.f32 %v6451, 0.0
      %v6490 = vmax.f32 %v6452, 0.0
      %v6491 = vmax.f32 %v6453, 0.0
      %v6492 = vmax.f32 %v6454, 0.0
      %v6493 = vmax.f32 %v6455, 0.0
      %v6494 = vmax.f32 %v6456, 0.0
      %v6495 = vmax.f32 %v6457, 0.0
      %v6496 = vmax.f32 %v6458, 0.0
      %v6497 = vmax.f32 %v6459, 0.0
      %v6498 = vmax.f32 %v6460, 0.0
      %v6499 = vmax.f32 %v6461, 0.0
      %v6500 = vmax.f32 %v6462, 0.0
      %v6501 = vmax.f32 %v6463, 0.0
      %v6502 = vmax.f32 %v6464, 0.0
      %v6503 = vmax.f32 %v6465, 0.0
      %v6504 = vmax.f32 %v6466, 0.0
      %v6505 = vmax.f32 %v6467, 0.0
      %v6506 = vmax.f32 %v6468, 0.0
      %v6507 = vmax.f32 %v6469, 0.0
      %v6508 = vmax.f32 %v6470, 0.0
      %v6509 = vmax.f32 %v6471, 0.0
      %v6510 = vmax.f32 %v6472, 0.0
      %v6511 = vmax.f32 %v6473, 0.0
      %v6512 = vmax.f32 %v6474, 0.0
      %v6513 = vmax.f32 %v6475, 0.0
      %v6514 = vmax.f32 %v6476, 0.0
      %v6515 = vmax.f32 %v6477, 0.0
      %v6516 = vmax.f32 %v6478, 0.0
      %v6517 = vmax.f32 %v6479, 0.0
      %v6518 = vmax.f32 %v6480, 0.0
      %v6519 = vpack.c.bf16 %v6482, %v6481
      %v6520 = vpack.c.bf16 %v6484, %v6483
      %v6521 = vpack.c.bf16 %v6486, %v6485
      %v6522 = vpack.c.bf16 %v6488, %v6487
      %v6523 = vpack.c.bf16 %v6490, %v6489
      %v6524 = vpack.c.bf16 %v6492, %v6491
      %v6525 = vpack.c.bf16 %v6494, %v6493
      %v6526 = vpack.c.bf16 %v6496, %v6495
      %v6527 = vpack.c.bf16 %v6498, %v6497
      %v6528 = vpack.c.bf16 %v6500, %v6499
      %v6529 = vpack.c.bf16 %v6502, %v6501
      %v6530 = vpack.c.bf16 %v6504, %v6503
      %v6531 = vpack.c.bf16 %v6506, %v6505
      %v6532 = vpack.c.bf16 %v6508, %v6507
      %v6533 = vpack.c.bf16 %v6510, %v6509
      %v6534 = vpack.c.bf16 %v6512, %v6511
      %v6535 = vpack.c.bf16 %v6514, %v6513
      %v6536 = vpack.c.bf16 %v6516, %v6515
      %v6537 = vpack.c.bf16 %v6518, %v6517
      %v6538 = vld [vmem:[%s4] sm:$0xff]
      %v6539 = vld [vmem:[%s4 + $0x8] sm:$0xf]
      %v6540 = vld [vmem:[%s4 + $0xc] sm:$0xff]
      %v6541 = vld [vmem:[%s4 + $0x14] sm:$0xf]
      %v6542 = vld [vmem:[%s4 + $0x18] sm:$0xff]
      %v6543 = vld [vmem:[%s4 + $0x20] sm:$0xf]
      %v6544 = vld [vmem:[%s4 + $0x24] sm:$0xff]
      %v6545 = vld [vmem:[%s4 + $0x2c] sm:$0xf]
      %v6546 = vld [vmem:[%s4 + $0x30] sm:$0xff]
      %v6547 = vld [vmem:[%s4 + $0x38] sm:$0xf]
      %v6548 = vld [vmem:[%s4 + $0x3c] sm:$0xff]
      %v6549 = vld [vmem:[%s4 + $0x44] sm:$0xf]
      %v6550 = vld [vmem:[%s4 + $0x48] sm:$0xff]
      %v6551 = vld [vmem:[%s4 + $0x50] sm:$0xf]
      %v6552 = vld [vmem:[%s4 + $0x54] sm:$0xff]
      %v6553 = vld [vmem:[%s4 + $0x5c] sm:$0xf]
      %v6570 = vunpack.c.l.b16 %v6538
      %v6571 = vunpack.c.h.b16 %v6538
      %v6572 = vunpack.c.l.b16 %v6539
      %v6573 = vunpack.c.l.b16 %v6540
      %v6574 = vunpack.c.h.b16 %v6540
      %v6575 = vunpack.c.l.b16 %v6541
      %v6576 = vunpack.c.l.b16 %v6542
      %v6577 = vunpack.c.h.b16 %v6542
      %v6578 = vunpack.c.l.b16 %v6543
      %v6579 = vunpack.c.l.b16 %v6544
      %v6580 = vunpack.c.h.b16 %v6544
      %v6581 = vunpack.c.l.b16 %v6545
      %v6582 = vunpack.c.l.b16 %v6546
      %v6583 = vunpack.c.h.b16 %v6546
      %v6584 = vunpack.c.l.b16 %v6547
      %v6585 = vunpack.c.l.b16 %v6548
      %v6586 = vunpack.c.h.b16 %v6548
      %v6587 = vunpack.c.l.b16 %v6549
      %v6588 = vunpack.c.l.b16 %v6550
      %v6589 = vunpack.c.h.b16 %v6550
      %v6590 = vunpack.c.l.b16 %v6551
      %v6591 = vunpack.c.l.b16 %v6552
      %v6592 = vunpack.c.h.b16 %v6552
      %v6593 = vunpack.c.l.b16 %v6553
      %v6594 = vpack.c.b16 %v6573, %v6570
      %v6595 = vpack.c.b16 %v6574, %v6571
      %v6596 = vpack.c.b16 %v6575, %v6572
      %v6597 = vpack.c.b16 %v6579, %v6576
      %v6598 = vpack.c.b16 %v6580, %v6577
      %v6599 = vpack.c.b16 %v6581, %v6578
      %v6600 = vpack.c.b16 %v6585, %v6582
      %v6601 = vpack.c.b16 %v6586, %v6583
      %v6602 = vpack.c.b16 %v6587, %v6584
      %v6603 = vpack.c.b16 %v6591, %v6588
      %v6604 = vpack.c.b16 %v6592, %v6589
      %v6605 = vpack.c.b16 %v6593, %v6590
      %v6619 = vsel %vm1484, %v6519, 0
      %v6622 = vsel %vm1484, %v6520, 0
      %v6625 = vsel %vm1484, %v6521, 0
      %v6628 = vsel %vm1484, %v6522, 0
      %v6631 = vsel %vm1484, %v6523, 0
      %v6634 = vsel %vm1484, %v6524, 0
      %v6637 = vsel %vm1484, %v6525, 0
      %v6640 = vsel %vm1484, %v6526, 0
      %v6643 = vsel %vm1484, %v6527, 0
      %v6646 = vsel %vm1484, %v6528, 0
      %v6649 = vsel %vm1484, %v6529, 0
      %v6652 = vsel %vm1484, %v6530, 0
      %v6655 = vsel %vm1484, %v6531, 0
      %v6658 = vsel %vm1484, %v6532, 0
      %v6661 = vsel %vm1484, %v6533, 0
      %v6664 = vsel %vm1484, %v6534, 0
      %v6667 = vsel %vm1484, %v6535, 0
      %v6670 = vsel %vm1484, %v6536, 0
      %v6673 = vsel %vm1484, %v6537, 0
      %6675 = vmatprep.subr.bf16.mxu0 %v6595
      %6676 = vmatpush1.bf16.msra.mxu0 %v6594
      %6677 = vmatprep.subr.bf16.mxu0 %v6598
      %6678 = vmatpush1.bf16.msra.mxu0 %v6597
      %6679 = vmatprep.subr.bf16.mxu0 %v6601
      %6680 = vmatpush1.bf16.msra.mxu0 %v6600
      %6681 = vmatprep.subr.bf16.mxu0 %v6604
      %6682 = vmatpush1.bf16.msra.mxu0 %v6603
      %6683 = vmatprep.subr.bf16.mxu0 0
      %6684 = vmatpush1.bf16.msra.mxu0 0
      %6685 = vmatprep.subr.bf16.mxu0 0
      %6686 = vmatpush1.bf16.msra.mxu0 0
      %6687 = vmatprep.subr.bf16.mxu0 0
      %6688 = vmatpush1.bf16.msra.mxu0 0
      %6689 = vmatprep.subr.bf16.mxu0 0
      %6690 = vmatpush1.bf16.msra.mxu0 0
      %6691 = vmatprep.subr.bf16.mxu0 0
      %6692 = vmatpush1.bf16.msra.mxu0 0
      %6693 = vmatprep.subr.bf16.mxu0 0
      %6694 = vmatpush1.bf16.msra.mxu0 0
      %6695 = vmatprep.subr.bf16.mxu0 0
      %6696 = vmatpush1.bf16.msra.mxu0 0
      %6697 = vmatprep.subr.bf16.mxu0 0
      %6698 = vmatpush1.bf16.msra.mxu0 0
      %6699 = vmatprep.subr.bf16.mxu0 0
      %6700 = vmatpush1.bf16.msra.mxu0 0
      %6701 = vmatprep.subr.bf16.mxu0 0
      %6702 = vmatpush1.bf16.msra.mxu0 0
      %6703 = vmatprep.subr.bf16.mxu0 0
      %6704 = vmatpush1.bf16.msra.mxu0 0
      %6705 = vmatprep.subr.bf16.mxu0 0
      %6706 = vmatpush1.bf16.msra.mxu0 0
      %6707 = vmatprep.mubr.bf16.mxu0 0
      %6708 = vmatmul.mubr.bf16.gmra.mrb[0].mxu0 %v6619
      %v6709 = vpop.f32.mrb[0].mxu0
      %v6710 = vadd.f32 0.0, %v6709
      %v6711 = vpop.f32.mrb[0].mxu0
      %v6712 = vadd.f32 0.0, %v6711
      %v6713 = vpop.f32.mrb[0].mxu0
      %v6714 = vadd.f32 0.0, %v6713
      %v6715 = vpop.f32.mrb[0].mxu0
      %v6716 = vadd.f32 0.0, %v6715
      %6717 = vmatprep.mubr.bf16.mxu0 0
      %6718 = vmatmul.mubr.bf16.gmra.mrb[0].mxu0 %v6622
      %v6719 = vpop.f32.mrb[0].mxu0
      %v6720 = vadd.f32 0.0, %v6719
      %v6721 = vpop.f32.mrb[0].mxu0
      %v6722 = vadd.f32 0.0, %v6721
      %v6723 = vpop.f32.mrb[0].mxu0
      %v6724 = vadd.f32 0.0, %v6723
      %v6725 = vpop.f32.mrb[0].mxu0
      %v6726 = vadd.f32 0.0, %v6725
      %6727 = vmatprep.mubr.bf16.mxu0 0
      %6728 = vmatmul.mubr.bf16.gmra.mrb[0].mxu0 %v6625
      %v6729 = vpop.f32.mrb[0].mxu0
      %v6730 = vadd.f32 0.0, %v6729
      %v6731 = vpop.f32.mrb[0].mxu0
      %v6732 = vadd.f32 0.0, %v6731
      %v6733 = vpop.f32.mrb[0].mxu0
      %v6734 = vadd.f32 0.0, %v6733
      %v6735 = vpop.f32.mrb[0].mxu0
      %v6736 = vadd.f32 0.0, %v6735
      %6737 = vmatprep.mubr.bf16.mxu0 0
      %6738 = vmatmul.mubr.bf16.gmra.mrb[0].mxu0 %v6628
      %v6739 = vpop.f32.mrb[0].mxu0
      %v6740 = vadd.f32 0.0, %v6739
      %v6741 = vpop.f32.mrb[0].mxu0
      %v6742 = vadd.f32 0.0, %v6741
      %v6743 = vpop.f32.mrb[0].mxu0
      %v6744 = vadd.f32 0.0, %v6743
      %v6745 = vpop.f32.mrb[0].mxu0
      %v6746 = vadd.f32 0.0, %v6745
      %6747 = vmatprep.mubr.bf16.mxu0 0
      %6748 = vmatmul.mubr.bf16.gmra.mrb[0].mxu0 %v6631
      %v6749 = vpop.f32.mrb[0].mxu0
      %v6750 = vadd.f32 0.0, %v6749
      %v6751 = vpop.f32.mrb[0].mxu0
      %v6752 = vadd.f32 0.0, %v6751
      %v6753 = vpop.f32.mrb[0].mxu0
      %v6754 = vadd.f32 0.0, %v6753
      %v6755 = vpop.f32.mrb[0].mxu0
      %v6756 = vadd.f32 0.0, %v6755
      %6757 = vmatprep.mubr.bf16.mxu0 0
      %6758 = vmatmul.mubr.bf16.gmra.mrb[0].mxu0 %v6634
      %v6759 = vpop.f32.mrb[0].mxu0
      %v6760 = vadd.f32 0.0, %v6759
      %v6761 = vpop.f32.mrb[0].mxu0
      %v6762 = vadd.f32 0.0, %v6761
      %v6763 = vpop.f32.mrb[0].mxu0
      %v6764 = vadd.f32 0.0, %v6763
      %v6765 = vpop.f32.mrb[0].mxu0
      %v6766 = vadd.f32 0.0, %v6765
      %6767 = vmatprep.mubr.bf16.mxu0 0
      %6768 = vmatmul.mubr.bf16.gmra.mrb[0].mxu0 %v6637
      %v6769 = vpop.f32.mrb[0].mxu0
      %v6770 = vadd.f32 0.0, %v6769
      %v6771 = vpop.f32.mrb[0].mxu0
      %v6772 = vadd.f32 0.0, %v6771
      %v6773 = vpop.f32.mrb[0].mxu0
      %v6774 = vadd.f32 0.0, %v6773
      %v6775 = vpop.f32.mrb[0].mxu0
      %v6776 = vadd.f32 0.0, %v6775
      %6777 = vmatprep.mubr.bf16.mxu0 0
      %6778 = vmatmul.mubr.bf16.gmra.mrb[0].mxu0 %v6640
      %v6779 = vpop.f32.mrb[0].mxu0
      %v6780 = vadd.f32 0.0, %v6779
      %v6781 = vpop.f32.mrb[0].mxu0
      %v6782 = vadd.f32 0.0, %v6781
      %v6783 = vpop.f32.mrb[0].mxu0
      %v6784 = vadd.f32 0.0, %v6783
      %v6785 = vpop.f32.mrb[0].mxu0
      %v6786 = vadd.f32 0.0, %v6785
      %6787 = vmatprep.mubr.bf16.mxu0 0
      %6788 = vmatmul.mubr.bf16.gmra.mrb[0].mxu0 %v6643
      %v6789 = vpop.f32.mrb[0].mxu0
      %v6790 = vadd.f32 0.0, %v6789
      %v6791 = vpop.f32.mrb[0].mxu0
      %v6792 = vadd.f32 0.0, %v6791
      %v6793 = vpop.f32.mrb[0].mxu0
      %v6794 = vadd.f32 0.0, %v6793
      %v6795 = vpop.f32.mrb[0].mxu0
      %v6796 = vadd.f32 0.0, %v6795
      %6797 = vmatprep.mubr.bf16.mxu0 0
      %6798 = vmatmul.mubr.bf16.gmra.mrb[0].mxu0 %v6646
      %v6799 = vpop.f32.mrb[0].mxu0
      %v6800 = vadd.f32 0.0, %v6799
      %v6801 = vpop.f32.mrb[0].mxu0
      %v6802 = vadd.f32 0.0, %v6801
      %v6803 = vpop.f32.mrb[0].mxu0
      %v6804 = vadd.f32 0.0, %v6803
      %v6805 = vpop.f32.mrb[0].mxu0
      %v6806 = vadd.f32 0.0, %v6805
      %6807 = vmatprep.mubr.bf16.mxu0 0
      %6808 = vmatmul.mubr.bf16.gmra.mrb[0].mxu0 %v6649
      %v6809 = vpop.f32.mrb[0].mxu0
      %v6810 = vadd.f32 0.0, %v6809
      %v6811 = vpop.f32.mrb[0].mxu0
      %v6812 = vadd.f32 0.0, %v6811
      %v6813 = vpop.f32.mrb[0].mxu0
      %v6814 = vadd.f32 0.0, %v6813
      %v6815 = vpop.f32.mrb[0].mxu0
      %v6816 = vadd.f32 0.0, %v6815
      %6817 = vmatprep.mubr.bf16.mxu0 0
      %6818 = vmatmul.mubr.bf16.gmra.mrb[0].mxu0 %v6652
      %v6819 = vpop.f32.mrb[0].mxu0
      %v6820 = vadd.f32 0.0, %v6819
      %v6821 = vpop.f32.mrb[0].mxu0
      %v6822 = vadd.f32 0.0, %v6821
      %v6823 = vpop.f32.mrb[0].mxu0
      %v6824 = vadd.f32 0.0, %v6823
      %v6825 = vpop.f32.mrb[0].mxu0
      %v6826 = vadd.f32 0.0, %v6825
      %6827 = vmatprep.mubr.bf16.mxu0 0
      %6828 = vmatmul.mubr.bf16.gmra.mrb[0].mxu0 %v6655
      %v6829 = vpop.f32.mrb[0].mxu0
      %v6830 = vadd.f32 0.0, %v6829
      %v6831 = vpop.f32.mrb[0].mxu0
      %v6832 = vadd.f32 0.0, %v6831
      %v6833 = vpop.f32.mrb[0].mxu0
      %v6834 = vadd.f32 0.0, %v6833
      %v6835 = vpop.f32.mrb[0].mxu0
      %v6836 = vadd.f32 0.0, %v6835
      %6837 = vmatprep.mubr.bf16.mxu0 0
      %6838 = vmatmul.mubr.bf16.gmra.mrb[0].mxu0 %v6658
      %v6839 = vpop.f32.mrb[0].mxu0
      %v6840 = vadd.f32 0.0, %v6839
      %v6841 = vpop.f32.mrb[0].mxu0
      %v6842 = vadd.f32 0.0, %v6841
      %v6843 = vpop.f32.mrb[0].mxu0
      %v6844 = vadd.f32 0.0, %v6843
      %v6845 = vpop.f32.mrb[0].mxu0
      %v6846 = vadd.f32 0.0, %v6845
      %6847 = vmatprep.mubr.bf16.mxu0 0
      %6848 = vmatmul.mubr.bf16.gmra.mrb[0].mxu0 %v6661
      %v6849 = vpop.f32.mrb[0].mxu0
      %v6850 = vadd.f32 0.0, %v6849
      %v6851 = vpop.f32.mrb[0].mxu0
      %v6852 = vadd.f32 0.0, %v6851
      %v6853 = vpop.f32.mrb[0].mxu0
      %v6854 = vadd.f32 0.0, %v6853
      %v6855 = vpop.f32.mrb[0].mxu0
      %v6856 = vadd.f32 0.0, %v6855
      %6857 = vmatprep.mubr.bf16.mxu0 0
      %6858 = vmatmul.mubr.bf16.gmra.mrb[0].mxu0 %v6664
      %v6859 = vpop.f32.mrb[0].mxu0
      %v6860 = vadd.f32 0.0, %v6859
      %v6861 = vpop.f32.mrb[0].mxu0
      %v6862 = vadd.f32 0.0, %v6861
      %v6863 = vpop.f32.mrb[0].mxu0
      %v6864 = vadd.f32 0.0, %v6863
      %v6865 = vpop.f32.mrb[0].mxu0
      %v6866 = vadd.f32 0.0, %v6865
      %6867 = vmatprep.mubr.bf16.mxu0 0
      %6868 = vmatmul.mubr.bf16.gmra.mrb[0].mxu0 %v6667
      %v6869 = vpop.f32.mrb[0].mxu0
      %v6870 = vadd.f32 0.0, %v6869
      %v6871 = vpop.f32.mrb[0].mxu0
      %v6872 = vadd.f32 0.0, %v6871
      %v6873 = vpop.f32.mrb[0].mxu0
      %v6874 = vadd.f32 0.0, %v6873
      %v6875 = vpop.f32.mrb[0].mxu0
      %v6876 = vadd.f32 0.0, %v6875
      %6877 = vmatprep.mubr.bf16.mxu0 0
      %6878 = vmatmul.mubr.bf16.gmra.mrb[0].mxu0 %v6670
      %v6879 = vpop.f32.mrb[0].mxu0
      %v6880 = vadd.f32 0.0, %v6879
      %v6881 = vpop.f32.mrb[0].mxu0
      %v6882 = vadd.f32 0.0, %v6881
      %v6883 = vpop.f32.mrb[0].mxu0
      %v6884 = vadd.f32 0.0, %v6883
      %v6885 = vpop.f32.mrb[0].mxu0
      %v6886 = vadd.f32 0.0, %v6885
      %6887 = vmatprep.mubr.bf16.mxu0 0
      %6888 = vmatmul.mubr.bf16.gmra.mrb[0].mxu0 %v6673
      %v6889 = vpop.f32.mrb[0].mxu0
      %v6890 = vadd.f32 0.0, %v6889
      %v6891 = vpop.f32.mrb[0].mxu0
      %v6892 = vadd.f32 0.0, %v6891
      %v6893 = vpop.f32.mrb[0].mxu0
      %v6894 = vadd.f32 0.0, %v6893
      %v6895 = vpop.f32.mrb[0].mxu0
      %v6896 = vadd.f32 0.0, %v6895
      %6897 = vdwg.mxu0
      %6898 = vmatprep.subr.bf16.mxu0 0
      %6899 = vmatpush1.bf16.msra.mxu0 %v6596
      %6900 = vmatprep.subr.bf16.mxu0 0
      %6901 = vmatpush1.bf16.msra.mxu0 %v6599
      %6902 = vmatprep.subr.bf16.mxu0 0
      %6903 = vmatpush1.bf16.msra.mxu0 %v6602
      %6904 = vmatprep.subr.bf16.mxu0 0
      %6905 = vmatpush1.bf16.msra.mxu0 %v6605
      %6906 = vmatprep.subr.bf16.mxu0 0
      %6907 = vmatpush1.bf16.msra.mxu0 0
      %6908 = vmatprep.subr.bf16.mxu0 0
      %6909 = vmatpush1.bf16.msra.mxu0 0
      %6910 = vmatprep.subr.bf16.mxu0 0
      %6911 = vmatpush1.bf16.msra.mxu0 0
      %6912 = vmatprep.subr.bf16.mxu0 0
      %6913 = vmatpush1.bf16.msra.mxu0 0
      %6914 = vmatprep.subr.bf16.mxu0 0
      %6915 = vmatpush1.bf16.msra.mxu0 0
      %6916 = vmatprep.subr.bf16.mxu0 0
      %6917 = vmatpush1.bf16.msra.mxu0 0
      %6918 = vmatprep.subr.bf16.mxu0 0
      %6919 = vmatpush1.bf16.msra.mxu0 0
      %6920 = vmatprep.subr.bf16.mxu0 0
      %6921 = vmatpush1.bf16.msra.mxu0 0
      %6922 = vmatprep.subr.bf16.mxu0 0
      %6923 = vmatpush1.bf16.msra.mxu0 0
      %6924 = vmatprep.subr.bf16.mxu0 0
      %6925 = vmatpush1.bf16.msra.mxu0 0
      %6926 = vmatprep.subr.bf16.mxu0 0
      %6927 = vmatpush1.bf16.msra.mxu0 0
      %6928 = vmatprep.subr.bf16.mxu0 0
      %6929 = vmatpush1.bf16.msra.mxu0 0
      %6930 = vmatprep.mubr.bf16.mxu0 0
      %6931 = vmatmul.mubr.bf16.gmra.mrb[0].mxu0 %v6619
      %v6932 = vpop.f32.mrb[0].mxu0
      %v6933 = vadd.f32 0.0, %v6932
      %v6934 = vpop.f32.mrb[0].mxu0
      %v6935 = vpop.f32.mrb[0].mxu0
      %v6936 = vadd.f32 0.0, %v6935
      %v6937 = vpop.f32.mrb[0].mxu0
      %6938 = vmatprep.mubr.bf16.mxu0 0
      %6939 = vmatmul.mubr.bf16.gmra.mrb[0].mxu0 %v6622
      %v6940 = vpop.f32.mrb[0].mxu0
      %v6941 = vadd.f32 0.0, %v6940
      %v6942 = vpop.f32.mrb[0].mxu0
      %v6943 = vpop.f32.mrb[0].mxu0
      %v6944 = vadd.f32 0.0, %v6943
      %v6945 = vpop.f32.mrb[0].mxu0
      %6946 = vmatprep.mubr.bf16.mxu0 0
      %6947 = vmatmul.mubr.bf16.gmra.mrb[0].mxu0 %v6625
      %v6948 = vpop.f32.mrb[0].mxu0
      %v6949 = vadd.f32 0.0, %v6948
      %v6950 = vpop.f32.mrb[0].mxu0
      %v6951 = vpop.f32.mrb[0].mxu0
      %v6952 = vadd.f32 0.0, %v6951
      %v6953 = vpop.f32.mrb[0].mxu0
      %6954 = vmatprep.mubr.bf16.mxu0 0
      %6955 = vmatmul.mubr.bf16.gmra.mrb[0].mxu0 %v6628
      %v6956 = vpop.f32.mrb[0].mxu0
      %v6957 = vadd.f32 0.0, %v6956
      %v6958 = vpop.f32.mrb[0].mxu0
      %v6959 = vpop.f32.mrb[0].mxu0
      %v6960 = vadd.f32 0.0, %v6959
      %v6961 = vpop.f32.mrb[0].mxu0
      %6962 = vmatprep.mubr.bf16.mxu0 0
      %6963 = vmatmul.mubr.bf16.gmra.mrb[0].mxu0 %v6631
      %v6964 = vpop.f32.mrb[0].mxu0
      %v6965 = vadd.f32 0.0, %v6964
      %v6966 = vpop.f32.mrb[0].mxu0
      %v6967 = vpop.f32.mrb[0].mxu0
      %v6968 = vadd.f32 0.0, %v6967
      %v6969 = vpop.f32.mrb[0].mxu0
      %6970 = vmatprep.mubr.bf16.mxu0 0
      %6971 = vmatmul.mubr.bf16.gmra.mrb[0].mxu0 %v6634
      %v6972 = vpop.f32.mrb[0].mxu0
      %v6973 = vadd.f32 0.0, %v6972
      %v6974 = vpop.f32.mrb[0].mxu0
      %v6975 = vpop.f32.mrb[0].mxu0
      %v6976 = vadd.f32 0.0, %v6975
      %v6977 = vpop.f32.mrb[0].mxu0
      %6978 = vmatprep.mubr.bf16.mxu0 0
      %6979 = vmatmul.mubr.bf16.gmra.mrb[0].mxu0 %v6637
      %v6980 = vpop.f32.mrb[0].mxu0
      %v6981 = vadd.f32 0.0, %v6980
      %v6982 = vpop.f32.mrb[0].mxu0
      %v6983 = vpop.f32.mrb[0].mxu0
      %v6984 = vadd.f32 0.0, %v6983
      %v6985 = vpop.f32.mrb[0].mxu0
      %6986 = vmatprep.mubr.bf16.mxu0 0
      %6987 = vmatmul.mubr.bf16.gmra.mrb[0].mxu0 %v6640
      %v6988 = vpop.f32.mrb[0].mxu0
      %v6989 = vadd.f32 0.0, %v6988
      %v6990 = vpop.f32.mrb[0].mxu0
      %v6991 = vpop.f32.mrb[0].mxu0
      %v6992 = vadd.f32 0.0, %v6991
      %v6993 = vpop.f32.mrb[0].mxu0
      %6994 = vmatprep.mubr.bf16.mxu0 0
      %6995 = vmatmul.mubr.bf16.gmra.mrb[0].mxu0 %v6643
      %v6996 = vpop.f32.mrb[0].mxu0
      %v6997 = vadd.f32 0.0, %v6996
      %v6998 = vpop.f32.mrb[0].mxu0
      %v6999 = vpop.f32.mrb[0].mxu0
      %v7000 = vadd.f32 0.0, %v6999
      %v7001 = vpop.f32.mrb[0].mxu0
      %7002 = vmatprep.mubr.bf16.mxu0 0
      %7003 = vmatmul.mubr.bf16.gmra.mrb[0].mxu0 %v6646
      %v7004 = vpop.f32.mrb[0].mxu0
      %v7005 = vadd.f32 0.0, %v7004
      %v7006 = vpop.f32.mrb[0].mxu0
      %v7007 = vpop.f32.mrb[0].mxu0
      %v7008 = vadd.f32 0.0, %v7007
      %v7009 = vpop.f32.mrb[0].mxu0
      %7010 = vmatprep.mubr.bf16.mxu0 0
      %7011 = vmatmul.mubr.bf16.gmra.mrb[0].mxu0 %v6649
      %v7012 = vpop.f32.mrb[0].mxu0
      %v7013 = vadd.f32 0.0, %v7012
      %v7014 = vpop.f32.mrb[0].mxu0
      %v7015 = vpop.f32.mrb[0].mxu0
      %v7016 = vadd.f32 0.0, %v7015
      %v7017 = vpop.f32.mrb[0].mxu0
      %7018 = vmatprep.mubr.bf16.mxu0 0
      %7019 = vmatmul.mubr.bf16.gmra.mrb[0].mxu0 %v6652
      %v7020 = vpop.f32.mrb[0].mxu0
      %v7021 = vadd.f32 0.0, %v7020
      %v7022 = vpop.f32.mrb[0].mxu0
      %v7023 = vpop.f32.mrb[0].mxu0
      %v7024 = vadd.f32 0.0, %v7023
      %v7025 = vpop.f32.mrb[0].mxu0
      %7026 = vmatprep.mubr.bf16.mxu0 0
      %7027 = vmatmul.mubr.bf16.gmra.mrb[0].mxu0 %v6655
      %v7028 = vpop.f32.mrb[0].mxu0
      %v7029 = vadd.f32 0.0, %v7028
      %v7030 = vpop.f32.mrb[0].mxu0
      %v7031 = vpop.f32.mrb[0].mxu0
      %v7032 = vadd.f32 0.0, %v7031
      %v7033 = vpop.f32.mrb[0].mxu0
      %7034 = vmatprep.mubr.bf16.mxu0 0
      %7035 = vmatmul.mubr.bf16.gmra.mrb[0].mxu0 %v6658
      %v7036 = vpop.f32.mrb[0].mxu0
      %v7037 = vadd.f32 0.0, %v7036
      %v7038 = vpop.f32.mrb[0].mxu0
      %v7039 = vpop.f32.mrb[0].mxu0
      %v7040 = vadd.f32 0.0, %v7039
      %v7041 = vpop.f32.mrb[0].mxu0
      %7042 = vmatprep.mubr.bf16.mxu0 0
      %7043 = vmatmul.mubr.bf16.gmra.mrb[0].mxu0 %v6661
      %v7044 = vpop.f32.mrb[0].mxu0
      %v7045 = vadd.f32 0.0, %v7044
      %v7046 = vpop.f32.mrb[0].mxu0
      %v7047 = vpop.f32.mrb[0].mxu0
      %v7048 = vadd.f32 0.0, %v7047
      %v7049 = vpop.f32.mrb[0].mxu0
      %7050 = vmatprep.mubr.bf16.mxu0 0
      %7051 = vmatmul.mubr.bf16.gmra.mrb[0].mxu0 %v6664
      %v7052 = vpop.f32.mrb[0].mxu0
      %v7053 = vadd.f32 0.0, %v7052
      %v7054 = vpop.f32.mrb[0].mxu0
      %v7055 = vpop.f32.mrb[0].mxu0
      %v7056 = vadd.f32 0.0, %v7055
      %v7057 = vpop.f32.mrb[0].mxu0
      %7058 = vmatprep.mubr.bf16.mxu0 0
      %7059 = vmatmul.mubr.bf16.gmra.mrb[0].mxu0 %v6667
      %v7060 = vpop.f32.mrb[0].mxu0
      %v7061 = vadd.f32 0.0, %v7060
      %v7062 = vpop.f32.mrb[0].mxu0
      %v7063 = vpop.f32.mrb[0].mxu0
      %v7064 = vadd.f32 0.0, %v7063
      %v7065 = vpop.f32.mrb[0].mxu0
      %7066 = vmatprep.mubr.bf16.mxu0 0
      %7067 = vmatmul.mubr.bf16.gmra.mrb[0].mxu0 %v6670
      %v7068 = vpop.f32.mrb[0].mxu0
      %v7069 = vadd.f32 0.0, %v7068
      %v7070 = vpop.f32.mrb[0].mxu0
      %v7071 = vpop.f32.mrb[0].mxu0
      %v7072 = vadd.f32 0.0, %v7071
      %v7073 = vpop.f32.mrb[0].mxu0
      %7074 = vmatprep.mubr.bf16.mxu0 0
      %7075 = vmatmul.mubr.bf16.gmra.mrb[0].mxu0 %v6673
      %v7076 = vpop.f32.mrb[0].mxu0
      %v7077 = vadd.f32 0.0, %v7076
      %v7078 = vpop.f32.mrb[0].mxu0
      %v7079 = vpop.f32.mrb[0].mxu0
      %v7080 = vadd.f32 0.0, %v7079
      %v7081 = vpop.f32.mrb[0].mxu0
      %7082 = vdwg.mxu0
      %v7083 = vld [vmem:[%s5] sm:$0x7]
      %v7085 = vlaneseq
      %v7086 = vshrl.u32 %v7085, 7
      %v7087 = vsub.s32 0, %v7086
      %v7088 = vrot.slane %v7083, %v7087
      %v7089 = vlaneseq
      %v7090 = vshrl.u32 %v7089, 7
      %v7091 = vsub.s32 1, %v7090
      %v7092 = vrot.slane %v7083, %v7091
      %v7093 = vlaneseq
      %v7094 = vshrl.u32 %v7093, 7
      %v7095 = vsub.s32 2, %v7094
      %v7096 = vrot.slane %v7083, %v7095
      %v7100 = vmul.f32 %v6710, %v7088
      %v7101 = vmul.f32 %v6712, %v7092
      %v7102 = vmul.f32 %v6933, %v7096
      %v7103 = vmul.f32 %v6714, %v7088
      %v7104 = vmul.f32 %v6716, %v7092
      %v7105 = vmul.f32 %v6936, %v7096
      %v7106 = vmul.f32 %v6720, %v7088
      %v7107 = vmul.f32 %v6722, %v7092
      %v7108 = vmul.f32 %v6941, %v7096
      %v7109 = vmul.f32 %v6724, %v7088
      %v7110 = vmul.f32 %v6726, %v7092
      %v7111 = vmul.f32 %v6944, %v7096
      %v7112 = vmul.f32 %v6730, %v7088
      %v7113 = vmul.f32 %v6732, %v7092
      %v7114 = vmul.f32 %v6949, %v7096
      %v7115 = vmul.f32 %v6734, %v7088
      %v7116 = vmul.f32 %v6736, %v7092
      %v7117 = vmul.f32 %v6952, %v7096
      %v7118 = vmul.f32 %v6740, %v7088
      %v7119 = vmul.f32 %v6742, %v7092
      %v7120 = vmul.f32 %v6957, %v7096
      %v7121 = vmul.f32 %v6744, %v7088
      %v7122 = vmul.f32 %v6746, %v7092
      %v7123 = vmul.f32 %v6960, %v7096
      %v7124 = vmul.f32 %v6750, %v7088
      %v7125 = vmul.f32 %v6752, %v7092
      %v7126 = vmul.f32 %v6965, %v7096
      %v7127 = vmul.f32 %v6754, %v7088
      %v7128 = vmul.f32 %v6756, %v7092
      %v7129 = vmul.f32 %v6968, %v7096
      %v7130 = vmul.f32 %v6760, %v7088
      %v7131 = vmul.f32 %v6762, %v7092
      %v7132 = vmul.f32 %v6973, %v7096
      %v7133 = vmul.f32 %v6764, %v7088
      %v7134 = vmul.f32 %v6766, %v7092
      %v7135 = vmul.f32 %v6976, %v7096
      %v7136 = vmul.f32 %v6770, %v7088
      %v7137 = vmul.f32 %v6772, %v7092
      %v7138 = vmul.f32 %v6981, %v7096
      %v7139 = vmul.f32 %v6774, %v7088
      %v7140 = vmul.f32 %v6776, %v7092
      %v7141 = vmul.f32 %v6984, %v7096
      %v7142 = vmul.f32 %v6780, %v7088
      %v7143 = vmul.f32 %v6782, %v7092
      %v7144 = vmul.f32 %v6989, %v7096
      %v7145 = vmul.f32 %v6784, %v7088
      %v7146 = vmul.f32 %v6786, %v7092
      %v7147 = vmul.f32 %v6992, %v7096
      %v7148 = vmul.f32 %v6790, %v7088
      %v7149 = vmul.f32 %v6792, %v7092
      %v7150 = vmul.f32 %v6997, %v7096
      %v7151 = vmul.f32 %v6794, %v7088
      %v7152 = vmul.f32 %v6796, %v7092
      %v7153 = vmul.f32 %v7000, %v7096
      %v7154 = vmul.f32 %v6800, %v7088
      %v7155 = vmul.f32 %v6802, %v7092
      %v7156 = vmul.f32 %v7005, %v7096
      %v7157 = vmul.f32 %v6804, %v7088
      %v7158 = vmul.f32 %v6806, %v7092
      %v7159 = vmul.f32 %v7008, %v7096
      %v7160 = vmul.f32 %v6810, %v7088
      %v7161 = vmul.f32 %v6812, %v7092
      %v7162 = vmul.f32 %v7013, %v7096
      %v7163 = vmul.f32 %v6814, %v7088
      %v7164 = vmul.f32 %v6816, %v7092
      %v7165 = vmul.f32 %v7016, %v7096
      %v7166 = vmul.f32 %v6820, %v7088
      %v7167 = vmul.f32 %v6822, %v7092
      %v7168 = vmul.f32 %v7021, %v7096
      %v7169 = vmul.f32 %v6824, %v7088
      %v7170 = vmul.f32 %v6826, %v7092
      %v7171 = vmul.f32 %v7024, %v7096
      %v7172 = vmul.f32 %v6830, %v7088
      %v7173 = vmul.f32 %v6832, %v7092
      %v7174 = vmul.f32 %v7029, %v7096
      %v7175 = vmul.f32 %v6834, %v7088
      %v7176 = vmul.f32 %v6836, %v7092
      %v7177 = vmul.f32 %v7032, %v7096
      %v7178 = vmul.f32 %v6840, %v7088
      %v7179 = vmul.f32 %v6842, %v7092
      %v7180 = vmul.f32 %v7037, %v7096
      %v7181 = vmul.f32 %v6844, %v7088
      %v7182 = vmul.f32 %v6846, %v7092
      %v7183 = vmul.f32 %v7040, %v7096
      %v7184 = vmul.f32 %v6850, %v7088
      %v7185 = vmul.f32 %v6852, %v7092
      %v7186 = vmul.f32 %v7045, %v7096
      %v7187 = vmul.f32 %v6854, %v7088
      %v7188 = vmul.f32 %v6856, %v7092
      %v7189 = vmul.f32 %v7048, %v7096
      %v7190 = vmul.f32 %v6860, %v7088
      %v7191 = vmul.f32 %v6862, %v7092
      %v7192 = vmul.f32 %v7053, %v7096
      %v7193 = vmul.f32 %v6864, %v7088
      %v7194 = vmul.f32 %v6866, %v7092
      %v7195 = vmul.f32 %v7056, %v7096
      %v7196 = vmul.f32 %v6870, %v7088
      %v7197 = vmul.f32 %v6872, %v7092
      %v7198 = vmul.f32 %v7061, %v7096
      %v7199 = vmul.f32 %v6874, %v7088
      %v7200 = vmul.f32 %v6876, %v7092
      %v7201 = vmul.f32 %v7064, %v7096
      %v7202 = vmul.f32 %v6880, %v7088
      %v7203 = vmul.f32 %v6882, %v7092
      %v7204 = vmul.f32 %v7069, %v7096
      %v7205 = vmul.f32 %v6884, %v7088
      %v7206 = vmul.f32 %v6886, %v7092
      %v7207 = vmul.f32 %v7072, %v7096
      %v7208 = vmul.f32 %v6890, %v7088
      %v7209 = vmul.f32 %v6892, %v7092
      %v7210 = vmul.f32 %v7077, %v7096
      %v7211 = vmul.f32 %v6894, %v7088
      %v7212 = vmul.f32 %v6896, %v7092
      %v7213 = vmul.f32 %v7080, %v7096
      %v7214 = vld [vmem:[%s6] sm:$0x7]
      %v7216 = vlaneseq
      %v7217 = vshrl.u32 %v7216, 7
      %v7218 = vsub.s32 0, %v7217
      %v7219 = vrot.slane %v7214, %v7218
      %v7220 = vlaneseq
      %v7221 = vshrl.u32 %v7220, 7
      %v7222 = vsub.s32 1, %v7221
      %v7223 = vrot.slane %v7214, %v7222
      %v7224 = vlaneseq
      %v7225 = vshrl.u32 %v7224, 7
      %v7226 = vsub.s32 2, %v7225
      %v7227 = vrot.slane %v7214, %v7226
      %v7231 = vadd.f32 %v7100, %v7219
      %v7232 = vadd.f32 %v7101, %v7223
      %v7233 = vadd.f32 %v7102, %v7227
      %v7234 = vadd.f32 %v7103, %v7219
      %v7235 = vadd.f32 %v7104, %v7223
      %v7236 = vadd.f32 %v7105, %v7227
      %v7237 = vadd.f32 %v7106, %v7219
      %v7238 = vadd.f32 %v7107, %v7223
      %v7239 = vadd.f32 %v7108, %v7227
      %v7240 = vadd.f32 %v7109, %v7219
      %v7241 = vadd.f32 %v7110, %v7223
      %v7242 = vadd.f32 %v7111, %v7227
      %v7243 = vadd.f32 %v7112, %v7219
      %v7244 = vadd.f32 %v7113, %v7223
      %v7245 = vadd.f32 %v7114, %v7227
      %v7246 = vadd.f32 %v7115, %v7219
      %v7247 = vadd.f32 %v7116, %v7223
      %v7248 = vadd.f32 %v7117, %v7227
      %v7249 = vadd.f32 %v7118, %v7219
      %v7250 = vadd.f32 %v7119, %v7223
      %v7251 = vadd.f32 %v7120, %v7227
      %v7252 = vadd.f32 %v7121, %v7219
      %v7253 = vadd.f32 %v7122, %v7223
      %v7254 = vadd.f32 %v7123, %v7227
      %v7255 = vadd.f32 %v7124, %v7219
      %v7256 = vadd.f32 %v7125, %v7223
      %v7257 = vadd.f32 %v7126, %v7227
      %v7258 = vadd.f32 %v7127, %v7219
      %v7259 = vadd.f32 %v7128, %v7223
      %v7260 = vadd.f32 %v7129, %v7227
      %v7261 = vadd.f32 %v7130, %v7219
      %v7262 = vadd.f32 %v7131, %v7223
      %v7263 = vadd.f32 %v7132, %v7227
      %v7264 = vadd.f32 %v7133, %v7219
      %v7265 = vadd.f32 %v7134, %v7223
      %v7266 = vadd.f32 %v7135, %v7227
      %v7267 = vadd.f32 %v7136, %v7219
      %v7268 = vadd.f32 %v7137, %v7223
      %v7269 = vadd.f32 %v7138, %v7227
      %v7270 = vadd.f32 %v7139, %v7219
      %v7271 = vadd.f32 %v7140, %v7223
      %v7272 = vadd.f32 %v7141, %v7227
      %v7273 = vadd.f32 %v7142, %v7219
      %v7274 = vadd.f32 %v7143, %v7223
      %v7275 = vadd.f32 %v7144, %v7227
      %v7276 = vadd.f32 %v7145, %v7219
      %v7277 = vadd.f32 %v7146, %v7223
      %v7278 = vadd.f32 %v7147, %v7227
      %v7279 = vadd.f32 %v7148, %v7219
      %v7280 = vadd.f32 %v7149, %v7223
      %v7281 = vadd.f32 %v7150, %v7227
      %v7282 = vadd.f32 %v7151, %v7219
      %v7283 = vadd.f32 %v7152, %v7223
      %v7284 = vadd.f32 %v7153, %v7227
      %v7285 = vadd.f32 %v7154, %v7219
      %v7286 = vadd.f32 %v7155, %v7223
      %v7287 = vadd.f32 %v7156, %v7227
      %v7288 = vadd.f32 %v7157, %v7219
      %v7289 = vadd.f32 %v7158, %v7223
      %v7290 = vadd.f32 %v7159, %v7227
      %v7291 = vadd.f32 %v7160, %v7219
      %v7292 = vadd.f32 %v7161, %v7223
      %v7293 = vadd.f32 %v7162, %v7227
      %v7294 = vadd.f32 %v7163, %v7219
      %v7295 = vadd.f32 %v7164, %v7223
      %v7296 = vadd.f32 %v7165, %v7227
      %v7297 = vadd.f32 %v7166, %v7219
      %v7298 = vadd.f32 %v7167, %v7223
      %v7299 = vadd.f32 %v7168, %v7227
      %v7300 = vadd.f32 %v7169, %v7219
      %v7301 = vadd.f32 %v7170, %v7223
      %v7302 = vadd.f32 %v7171, %v7227
      %v7303 = vadd.f32 %v7172, %v7219
      %v7304 = vadd.f32 %v7173, %v7223
      %v7305 = vadd.f32 %v7174, %v7227
      %v7306 = vadd.f32 %v7175, %v7219
      %v7307 = vadd.f32 %v7176, %v7223
      %v7308 = vadd.f32 %v7177, %v7227
      %v7309 = vadd.f32 %v7178, %v7219
      %v7310 = vadd.f32 %v7179, %v7223
      %v7311 = vadd.f32 %v7180, %v7227
      %v7312 = vadd.f32 %v7181, %v7219
      %v7313 = vadd.f32 %v7182, %v7223
      %v7314 = vadd.f32 %v7183, %v7227
      %v7315 = vadd.f32 %v7184, %v7219
      %v7316 = vadd.f32 %v7185, %v7223
      %v7317 = vadd.f32 %v7186, %v7227
      %v7318 = vadd.f32 %v7187, %v7219
      %v7319 = vadd.f32 %v7188, %v7223
      %v7320 = vadd.f32 %v7189, %v7227
      %v7321 = vadd.f32 %v7190, %v7219
      %v7322 = vadd.f32 %v7191, %v7223
      %v7323 = vadd.f32 %v7192, %v7227
      %v7324 = vadd.f32 %v7193, %v7219
      %v7325 = vadd.f32 %v7194, %v7223
      %v7326 = vadd.f32 %v7195, %v7227
      %v7327 = vadd.f32 %v7196, %v7219
      %v7328 = vadd.f32 %v7197, %v7223
      %v7329 = vadd.f32 %v7198, %v7227
      %v7330 = vadd.f32 %v7199, %v7219
      %v7331 = vadd.f32 %v7200, %v7223
      %v7332 = vadd.f32 %v7201, %v7227
      %v7333 = vadd.f32 %v7202, %v7219
      %v7334 = vadd.f32 %v7203, %v7223
      %v7335 = vadd.f32 %v7204, %v7227
      %v7336 = vadd.f32 %v7205, %v7219
      %v7337 = vadd.f32 %v7206, %v7223
      %v7338 = vadd.f32 %v7207, %v7227
      %v7339 = vadd.f32 %v7208, %v7219
      %v7340 = vadd.f32 %v7209, %v7223
      %v7341 = vadd.f32 %v7210, %v7227
      %v7342 = vadd.f32 %v7211, %v7219
      %v7343 = vadd.f32 %v7212, %v7223
      %v7344 = vadd.f32 %v7213, %v7227
      %7345 = vst [vmem:[%s278] sm:$0xff] %v7231
      %7346 = vst [vmem:[%s278 + $0x8] sm:$0xff] %v7232
      %7347 = vst [vmem:[%s278 + $0x10] sm:$0xff] %v7233
      %7348 = vst [vmem:[%s278 + $0x18] sm:$0xff] %v7234
      %7349 = vst [vmem:[%s278 + $0x20] sm:$0xff] %v7235
      %7350 = vst [vmem:[%s278 + $0x28] sm:$0xff] %v7236
      %7351 = vst [vmem:[%s278 + $0x30] sm:$0xff] %v7237
      %7352 = vst [vmem:[%s278 + $0x38] sm:$0xff] %v7238
      %7353 = vst [vmem:[%s278 + $0x40] sm:$0xff] %v7239
      %7354 = vst [vmem:[%s278 + $0x48] sm:$0xff] %v7240
      %7355 = vst [vmem:[%s278 + $0x50] sm:$0xff] %v7241
      %7356 = vst [vmem:[%s278 + $0x58] sm:$0xff] %v7242
      %7357 = vst [vmem:[%s278 + $0x60] sm:$0xff] %v7243
      %7358 = vst [vmem:[%s278 + $0x68] sm:$0xff] %v7244
      %7359 = vst [vmem:[%s278 + $0x70] sm:$0xff] %v7245
      %7360 = vst [vmem:[%s278 + $0x78] sm:$0xff] %v7246
      %7361 = vst [vmem:[%s278 + $0x80] sm:$0xff] %v7247
      %7362 = vst [vmem:[%s278 + $0x88] sm:$0xff] %v7248
      %7363 = vst [vmem:[%s278 + $0x90] sm:$0xff] %v7249
      %7364 = vst [vmem:[%s278 + $0x98] sm:$0xff] %v7250
      %7365 = vst [vmem:[%s278 + $0xa0] sm:$0xff] %v7251
      %7366 = vst [vmem:[%s278 + $0xa8] sm:$0xff] %v7252
      %7367 = vst [vmem:[%s278 + $0xb0] sm:$0xff] %v7253
      %7368 = vst [vmem:[%s278 + $0xb8] sm:$0xff] %v7254
      %7369 = vst [vmem:[%s278 + $0xc0] sm:$0xff] %v7255
      %7370 = vst [vmem:[%s278 + $0xc8] sm:$0xff] %v7256
      %7371 = vst [vmem:[%s278 + $0xd0] sm:$0xff] %v7257
      %7372 = vst [vmem:[%s278 + $0xd8] sm:$0xff] %v7258
      %7373 = vst [vmem:[%s278 + $0xe0] sm:$0xff] %v7259
      %7374 = vst [vmem:[%s278 + $0xe8] sm:$0xff] %v7260
      %7375 = vst [vmem:[%s278 + $0xf0] sm:$0xff] %v7261
      %7376 = vst [vmem:[%s278 + $0xf8] sm:$0xff] %v7262
      %7377 = vst [vmem:[%s278 + $0x100] sm:$0xff] %v7263
      %7378 = vst [vmem:[%s278 + $0x108] sm:$0xff] %v7264
      %7379 = vst [vmem:[%s278 + $0x110] sm:$0xff] %v7265
      %7380 = vst [vmem:[%s278 + $0x118] sm:$0xff] %v7266
      %7381 = vst [vmem:[%s278 + $0x120] sm:$0xff] %v7267
      %7382 = vst [vmem:[%s278 + $0x128] sm:$0xff] %v7268
      %7383 = vst [vmem:[%s278 + $0x130] sm:$0xff] %v7269
      %7384 = vst [vmem:[%s278 + $0x138] sm:$0xff] %v7270
      %7385 = vst [vmem:[%s278 + $0x140] sm:$0xff] %v7271
      %7386 = vst [vmem:[%s278 + $0x148] sm:$0xff] %v7272
      %7387 = vst [vmem:[%s278 + $0x150] sm:$0xff] %v7273
      %7388 = vst [vmem:[%s278 + $0x158] sm:$0xff] %v7274
      %7389 = vst [vmem:[%s278 + $0x160] sm:$0xff] %v7275
      %7390 = vst [vmem:[%s278 + $0x168] sm:$0xff] %v7276
      %7391 = vst [vmem:[%s278 + $0x170] sm:$0xff] %v7277
      %7392 = vst [vmem:[%s278 + $0x178] sm:$0xff] %v7278
      %7393 = vst [vmem:[%s278 + $0x180] sm:$0xff] %v7279
      %7394 = vst [vmem:[%s278 + $0x188] sm:$0xff] %v7280
      %7395 = vst [vmem:[%s278 + $0x190] sm:$0xff] %v7281
      %7396 = vst [vmem:[%s278 + $0x198] sm:$0xff] %v7282
      %7397 = vst [vmem:[%s278 + $0x1a0] sm:$0xff] %v7283
      %7398 = vst [vmem:[%s278 + $0x1a8] sm:$0xff] %v7284
      %7399 = vst [vmem:[%s278 + $0x1b0] sm:$0xff] %v7285
      %7400 = vst [vmem:[%s278 + $0x1b8] sm:$0xff] %v7286
      %7401 = vst [vmem:[%s278 + $0x1c0] sm:$0xff] %v7287
      %7402 = vst [vmem:[%s278 + $0x1c8] sm:$0xff] %v7288
      %7403 = vst [vmem:[%s278 + $0x1d0] sm:$0xff] %v7289
      %7404 = vst [vmem:[%s278 + $0x1d8] sm:$0xff] %v7290
      %7405 = vst [vmem:[%s278 + $0x1e0] sm:$0xff] %v7291
      %7406 = vst [vmem:[%s278 + $0x1e8] sm:$0xff] %v7292
      %7407 = vst [vmem:[%s278 + $0x1f0] sm:$0xff] %v7293
      %7408 = vst [vmem:[%s278 + $0x1f8] sm:$0xff] %v7294
      %7409 = vst [vmem:[%s278 + $0x200] sm:$0xff] %v7295
      %7410 = vst [vmem:[%s278 + $0x208] sm:$0xff] %v7296
      %7411 = vst [vmem:[%s278 + $0x210] sm:$0xff] %v7297
      %7412 = vst [vmem:[%s278 + $0x218] sm:$0xff] %v7298
      %7413 = vst [vmem:[%s278 + $0x220] sm:$0xff] %v7299
      %7414 = vst [vmem:[%s278 + $0x228] sm:$0xff] %v7300
      %7415 = vst [vmem:[%s278 + $0x230] sm:$0xff] %v7301
      %7416 = vst [vmem:[%s278 + $0x238] sm:$0xff] %v7302
      %7417 = vst [vmem:[%s278 + $0x240] sm:$0xff] %v7303
      %7418 = vst [vmem:[%s278 + $0x248] sm:$0xff] %v7304
      %7419 = vst [vmem:[%s278 + $0x250] sm:$0xff] %v7305
      %7420 = vst [vmem:[%s278 + $0x258] sm:$0xff] %v7306
      %7421 = vst [vmem:[%s278 + $0x260] sm:$0xff] %v7307
      %7422 = vst [vmem:[%s278 + $0x268] sm:$0xff] %v7308
      %7423 = vst [vmem:[%s278 + $0x270] sm:$0xff] %v7309
      %7424 = vst [vmem:[%s278 + $0x278] sm:$0xff] %v7310
      %7425 = vst [vmem:[%s278 + $0x280] sm:$0xff] %v7311
      %7426 = vst [vmem:[%s278 + $0x288] sm:$0xff] %v7312
      %7427 = vst [vmem:[%s278 + $0x290] sm:$0xff] %v7313
      %7428 = vst [vmem:[%s278 + $0x298] sm:$0xff] %v7314
      %7429 = vst [vmem:[%s278 + $0x2a0] sm:$0xff] %v7315
      %7430 = vst [vmem:[%s278 + $0x2a8] sm:$0xff] %v7316
      %7431 = vst [vmem:[%s278 + $0x2b0] sm:$0xff] %v7317
      %7432 = vst [vmem:[%s278 + $0x2b8] sm:$0xff] %v7318
      %7433 = vst [vmem:[%s278 + $0x2c0] sm:$0xff] %v7319
      %7434 = vst [vmem:[%s278 + $0x2c8] sm:$0xff] %v7320
      %7435 = vst [vmem:[%s278 + $0x2d0] sm:$0xff] %v7321
      %7436 = vst [vmem:[%s278 + $0x2d8] sm:$0xff] %v7322
      %7437 = vst [vmem:[%s278 + $0x2e0] sm:$0xff] %v7323
      %7438 = vst [vmem:[%s278 + $0x2e8] sm:$0xff] %v7324
      %7439 = vst [vmem:[%s278 + $0x2f0] sm:$0xff] %v7325
      %7440 = vst [vmem:[%s278 + $0x2f8] sm:$0xff] %v7326
      %7441 = vst [vmem:[%s278 + $0x300] sm:$0xff] %v7327
      %7442 = vst [vmem:[%s278 + $0x308] sm:$0xff] %v7328
      %7443 = vst [vmem:[%s278 + $0x310] sm:$0xff] %v7329
      %7444 = vst [vmem:[%s278 + $0x318] sm:$0xff] %v7330
      %7445 = vst [vmem:[%s278 + $0x320] sm:$0xff] %v7331
      %7446 = vst [vmem:[%s278 + $0x328] sm:$0xff] %v7332
      %7447 = vst [vmem:[%s278 + $0x330] sm:$0xff] %v7333
      %7448 = vst [vmem:[%s278 + $0x338] sm:$0xff] %v7334
      %7449 = vst [vmem:[%s278 + $0x340] sm:$0xff] %v7335
      %7450 = vst [vmem:[%s278 + $0x348] sm:$0xff] %v7336
      %7451 = vst [vmem:[%s278 + $0x350] sm:$0xff] %v7337
      %7452 = vst [vmem:[%s278 + $0x358] sm:$0xff] %v7338
      %7453 = vst [vmem:[%s278 + $0x360] sm:$0xff] %v7339
      %7454 = vst [vmem:[%s278 + $0x368] sm:$0xff] %v7340
      %7455 = vst [vmem:[%s278 + $0x370] sm:$0xff] %v7341
      %7456 = vst [vmem:[%s278 + $0x378] sm:$0xf] %v7342
      %7457 = vst [vmem:[%s278 + $0x380] sm:$0xf] %v7343
      %7458 = vst [vmem:[%s278 + $0x388] sm:$0xf] %v7344
      %7497 = vrot.lane.b32.xlu0 %v7231, 116
      %v7498 = vpop.permute.xlu0 %7497
      %7499 = vrot.lane.b32.xlu0 %v7234, 116
      %v7500 = vpop.permute.xlu0 %7499
      %7501 = vrot.lane.b32.xlu0 %v7237, 116
      %v7502 = vpop.permute.xlu0 %7501
      %7503 = vrot.lane.b32.xlu0 %v7240, 116
      %v7504 = vpop.permute.xlu0 %7503
      %7505 = vrot.lane.b32.xlu0 %v7243, 116
      %v7506 = vpop.permute.xlu0 %7505
      %7507 = vrot.lane.b32.xlu0 %v7246, 116
      %v7508 = vpop.permute.xlu0 %7507
      %7509 = vrot.lane.b32.xlu0 %v7249, 116
      %v7510 = vpop.permute.xlu0 %7509
      %7511 = vrot.lane.b32.xlu0 %v7252, 116
      %v7512 = vpop.permute.xlu0 %7511
      %7513 = vrot.lane.b32.xlu0 %v7255, 116
      %v7514 = vpop.permute.xlu0 %7513
      %7515 = vrot.lane.b32.xlu0 %v7258, 116
      %v7516 = vpop.permute.xlu0 %7515
      %7517 = vrot.lane.b32.xlu0 %v7261, 116
      %v7518 = vpop.permute.xlu0 %7517
      %7519 = vrot.lane.b32.xlu0 %v7264, 116
      %v7520 = vpop.permute.xlu0 %7519
      %7521 = vrot.lane.b32.xlu0 %v7267, 116
      %v7522 = vpop.permute.xlu0 %7521
      %7523 = vrot.lane.b32.xlu0 %v7270, 116
      %v7524 = vpop.permute.xlu0 %7523
      %7525 = vrot.lane.b32.xlu0 %v7273, 116
      %v7526 = vpop.permute.xlu0 %7525
      %7527 = vrot.lane.b32.xlu0 %v7276, 116
      %v7528 = vpop.permute.xlu0 %7527
      %7529 = vrot.lane.b32.xlu0 %v7279, 116
      %v7530 = vpop.permute.xlu0 %7529
      %7531 = vrot.lane.b32.xlu0 %v7282, 116
      %v7532 = vpop.permute.xlu0 %7531
      %7533 = vrot.lane.b32.xlu0 %v7285, 116
      %v7534 = vpop.permute.xlu0 %7533
      %7535 = vrot.lane.b32.xlu0 %v7288, 116
      %v7536 = vpop.permute.xlu0 %7535
      %7537 = vrot.lane.b32.xlu0 %v7291, 116
      %v7538 = vpop.permute.xlu0 %7537
      %7539 = vrot.lane.b32.xlu0 %v7294, 116
      %v7540 = vpop.permute.xlu0 %7539
      %7541 = vrot.lane.b32.xlu0 %v7297, 116
      %v7542 = vpop.permute.xlu0 %7541
      %7543 = vrot.lane.b32.xlu0 %v7300, 116
      %v7544 = vpop.permute.xlu0 %7543
      %7545 = vrot.lane.b32.xlu0 %v7303, 116
      %v7546 = vpop.permute.xlu0 %7545
      %7547 = vrot.lane.b32.xlu0 %v7306, 116
      %v7548 = vpop.permute.xlu0 %7547
      %7549 = vrot.lane.b32.xlu0 %v7309, 116
      %v7550 = vpop.permute.xlu0 %7549
      %7551 = vrot.lane.b32.xlu0 %v7312, 116
      %v7552 = vpop.permute.xlu0 %7551
      %7553 = vrot.lane.b32.xlu0 %v7315, 116
      %v7554 = vpop.permute.xlu0 %7553
      %7555 = vrot.lane.b32.xlu0 %v7318, 116
      %v7556 = vpop.permute.xlu0 %7555
      %7557 = vrot.lane.b32.xlu0 %v7321, 116
      %v7558 = vpop.permute.xlu0 %7557
      %7559 = vrot.lane.b32.xlu0 %v7324, 116
      %v7560 = vpop.permute.xlu0 %7559
      %7561 = vrot.lane.b32.xlu0 %v7327, 116
      %v7562 = vpop.permute.xlu0 %7561
      %7563 = vrot.lane.b32.xlu0 %v7330, 116
      %v7564 = vpop.permute.xlu0 %7563
      %7565 = vrot.lane.b32.xlu0 %v7333, 116
      %v7566 = vpop.permute.xlu0 %7565
      %7567 = vrot.lane.b32.xlu0 %v7336, 116
      %v7568 = vpop.permute.xlu0 %7567
      %7569 = vrot.lane.b32.xlu0 %v7339, 116
      %v7570 = vpop.permute.xlu0 %7569
      %7571 = vrot.lane.b32.xlu0 %v7342, 116
      %v7572 = vpop.permute.xlu0 %7571
      %v7611 = vmax.f32 %v7231, %v7498
      %v7612 = vmax.f32 %v7234, %v7500
      %v7613 = vmax.f32 %v7237, %v7502
      %v7614 = vmax.f32 %v7240, %v7504
      %v7615 = vmax.f32 %v7243, %v7506
      %v7616 = vmax.f32 %v7246, %v7508
      %v7617 = vmax.f32 %v7249, %v7510
      %v7618 = vmax.f32 %v7252, %v7512
      %v7619 = vmax.f32 %v7255, %v7514
      %v7620 = vmax.f32 %v7258, %v7516
      %v7621 = vmax.f32 %v7261, %v7518
      %v7622 = vmax.f32 %v7264, %v7520
      %v7623 = vmax.f32 %v7267, %v7522
      %v7624 = vmax.f32 %v7270, %v7524
      %v7625 = vmax.f32 %v7273, %v7526
      %v7626 = vmax.f32 %v7276, %v7528
      %v7627 = vmax.f32 %v7279, %v7530
      %v7628 = vmax.f32 %v7282, %v7532
      %v7629 = vmax.f32 %v7285, %v7534
      %v7630 = vmax.f32 %v7288, %v7536
      %v7631 = vmax.f32 %v7291, %v7538
      %v7632 = vmax.f32 %v7294, %v7540
      %v7633 = vmax.f32 %v7297, %v7542
      %v7634 = vmax.f32 %v7300, %v7544
      %v7635 = vmax.f32 %v7303, %v7546
      %v7636 = vmax.f32 %v7306, %v7548
      %v7637 = vmax.f32 %v7309, %v7550
      %v7638 = vmax.f32 %v7312, %v7552
      %v7639 = vmax.f32 %v7315, %v7554
      %v7640 = vmax.f32 %v7318, %v7556
      %v7641 = vmax.f32 %v7321, %v7558
      %v7642 = vmax.f32 %v7324, %v7560
      %v7643 = vmax.f32 %v7327, %v7562
      %v7644 = vmax.f32 %v7330, %v7564
      %v7645 = vmax.f32 %v7333, %v7566
      %v7646 = vmax.f32 %v7336, %v7568
      %v7647 = vmax.f32 %v7339, %v7570
      %v7648 = vmax.f32 %v7342, %v7572
      %v7649 = vsub.f32 %v7231, %v7611
      %v7650 = vsub.f32 %v7234, %v7612
      %v7651 = vsub.f32 %v7237, %v7613
      %v7652 = vsub.f32 %v7240, %v7614
      %v7653 = vsub.f32 %v7243, %v7615
      %v7654 = vsub.f32 %v7246, %v7616
      %v7655 = vsub.f32 %v7249, %v7617
      %v7656 = vsub.f32 %v7252, %v7618
      %v7657 = vsub.f32 %v7255, %v7619
      %v7658 = vsub.f32 %v7258, %v7620
      %v7659 = vsub.f32 %v7261, %v7621
      %v7660 = vsub.f32 %v7264, %v7622
      %v7661 = vsub.f32 %v7267, %v7623
      %v7662 = vsub.f32 %v7270, %v7624
      %v7663 = vsub.f32 %v7273, %v7625
      %v7664 = vsub.f32 %v7276, %v7626
      %v7665 = vsub.f32 %v7279, %v7627
      %v7666 = vsub.f32 %v7282, %v7628
      %v7667 = vsub.f32 %v7285, %v7629
      %v7668 = vsub.f32 %v7288, %v7630
      %v7669 = vsub.f32 %v7291, %v7631
      %v7670 = vsub.f32 %v7294, %v7632
      %v7671 = vsub.f32 %v7297, %v7633
      %v7672 = vsub.f32 %v7300, %v7634
      %v7673 = vsub.f32 %v7303, %v7635
      %v7674 = vsub.f32 %v7306, %v7636
      %v7675 = vsub.f32 %v7309, %v7637
      %v7676 = vsub.f32 %v7312, %v7638
      %v7677 = vsub.f32 %v7315, %v7639
      %v7678 = vsub.f32 %v7318, %v7640
      %v7679 = vsub.f32 %v7321, %v7641
      %v7680 = vsub.f32 %v7324, %v7642
      %v7681 = vsub.f32 %v7327, %v7643
      %v7682 = vsub.f32 %v7330, %v7644
      %v7683 = vsub.f32 %v7333, %v7645
      %v7684 = vsub.f32 %v7336, %v7646
      %v7685 = vsub.f32 %v7339, %v7647
      %v7686 = vsub.f32 %v7342, %v7648
      %v7687 = vmul.f32 %v7649, 1.442695
      %v7688 = vpow.pop %v7687
      %v7689 = vmul.f32 %v7650, 1.442695
      %v7690 = vpow.pop %v7689
      %v7691 = vmul.f32 %v7651, 1.442695
      %v7692 = vpow.pop %v7691
      %v7693 = vmul.f32 %v7652, 1.442695
      %v7694 = vpow.pop %v7693
      %v7695 = vmul.f32 %v7653, 1.442695
      %v7696 = vpow.pop %v7695
      %v7697 = vmul.f32 %v7654, 1.442695
      %v7698 = vpow.pop %v7697
      %v7699 = vmul.f32 %v7655, 1.442695
      %v7700 = vpow.pop %v7699
      %v7701 = vmul.f32 %v7656, 1.442695
      %v7702 = vpow.pop %v7701
      %v7703 = vmul.f32 %v7657, 1.442695
      %v7704 = vpow.pop %v7703
      %v7705 = vmul.f32 %v7658, 1.442695
      %v7706 = vpow.pop %v7705
      %v7707 = vmul.f32 %v7659, 1.442695
      %v7708 = vpow.pop %v7707
      %v7709 = vmul.f32 %v7660, 1.442695
      %v7710 = vpow.pop %v7709
      %v7711 = vmul.f32 %v7661, 1.442695
      %v7712 = vpow.pop %v7711
      %v7713 = vmul.f32 %v7662, 1.442695
      %v7714 = vpow.pop %v7713
      %v7715 = vmul.f32 %v7663, 1.442695
      %v7716 = vpow.pop %v7715
      %v7717 = vmul.f32 %v7664, 1.442695
      %v7718 = vpow.pop %v7717
      %v7719 = vmul.f32 %v7665, 1.442695
      %v7720 = vpow.pop %v7719
      %v7721 = vmul.f32 %v7666, 1.442695
      %v7722 = vpow.pop %v7721
      %v7723 = vmul.f32 %v7667, 1.442695
      %v7724 = vpow.pop %v7723
      %v7725 = vmul.f32 %v7668, 1.442695
      %v7726 = vpow.pop %v7725
      %v7727 = vmul.f32 %v7669, 1.442695
      %v7728 = vpow.pop %v7727
      %v7729 = vmul.f32 %v7670, 1.442695
      %v7730 = vpow.pop %v7729
      %v7731 = vmul.f32 %v7671, 1.442695
      %v7732 = vpow.pop %v7731
      %v7733 = vmul.f32 %v7672, 1.442695
      %v7734 = vpow.pop %v7733
      %v7735 = vmul.f32 %v7673, 1.442695
      %v7736 = vpow.pop %v7735
      %v7737 = vmul.f32 %v7674, 1.442695
      %v7738 = vpow.pop %v7737
      %v7739 = vmul.f32 %v7675, 1.442695
      %v7740 = vpow.pop %v7739
      %v7741 = vmul.f32 %v7676, 1.442695
      %v7742 = vpow.pop %v7741
      %v7743 = vmul.f32 %v7677, 1.442695
      %v7744 = vpow.pop %v7743
      %v7745 = vmul.f32 %v7678, 1.442695
      %v7746 = vpow.pop %v7745
      %v7747 = vmul.f32 %v7679, 1.442695
      %v7748 = vpow.pop %v7747
      %v7749 = vmul.f32 %v7680, 1.442695
      %v7750 = vpow.pop %v7749
      %v7751 = vmul.f32 %v7681, 1.442695
      %v7752 = vpow.pop %v7751
      %v7753 = vmul.f32 %v7682, 1.442695
      %v7754 = vpow.pop %v7753
      %v7755 = vmul.f32 %v7683, 1.442695
      %v7756 = vpow.pop %v7755
      %v7757 = vmul.f32 %v7684, 1.442695
      %v7758 = vpow.pop %v7757
      %v7759 = vmul.f32 %v7685, 1.442695
      %v7760 = vpow.pop %v7759
      %v7761 = vmul.f32 %v7686, 1.442695
      %v7762 = vpow.pop %v7761
      %7801 = vrot.lane.b32.xlu0 %v7611, 12
      %v7802 = vpop.permute.xlu0 %7801
      %7803 = vrot.lane.b32.xlu0 %v7612, 12
      %v7804 = vpop.permute.xlu0 %7803
      %7805 = vrot.lane.b32.xlu0 %v7613, 12
      %v7806 = vpop.permute.xlu0 %7805
      %7807 = vrot.lane.b32.xlu0 %v7614, 12
      %v7808 = vpop.permute.xlu0 %7807
      %7809 = vrot.lane.b32.xlu0 %v7615, 12
      %v7810 = vpop.permute.xlu0 %7809
      %7811 = vrot.lane.b32.xlu0 %v7616, 12
      %v7812 = vpop.permute.xlu0 %7811
      %7813 = vrot.lane.b32.xlu0 %v7617, 12
      %v7814 = vpop.permute.xlu0 %7813
      %7815 = vrot.lane.b32.xlu0 %v7618, 12
      %v7816 = vpop.permute.xlu0 %7815
      %7817 = vrot.lane.b32.xlu0 %v7619, 12
      %v7818 = vpop.permute.xlu0 %7817
      %7819 = vrot.lane.b32.xlu0 %v7620, 12
      %v7820 = vpop.permute.xlu0 %7819
      %7821 = vrot.lane.b32.xlu0 %v7621, 12
      %v7822 = vpop.permute.xlu0 %7821
      %7823 = vrot.lane.b32.xlu0 %v7622, 12
      %v7824 = vpop.permute.xlu0 %7823
      %7825 = vrot.lane.b32.xlu0 %v7623, 12
      %v7826 = vpop.permute.xlu0 %7825
      %7827 = vrot.lane.b32.xlu0 %v7624, 12
      %v7828 = vpop.permute.xlu0 %7827
      %7829 = vrot.lane.b32.xlu0 %v7625, 12
      %v7830 = vpop.permute.xlu0 %7829
      %7831 = vrot.lane.b32.xlu0 %v7626, 12
      %v7832 = vpop.permute.xlu0 %7831
      %7833 = vrot.lane.b32.xlu0 %v7627, 12
      %v7834 = vpop.permute.xlu0 %7833
      %7835 = vrot.lane.b32.xlu0 %v7628, 12
      %v7836 = vpop.permute.xlu0 %7835
      %7837 = vrot.lane.b32.xlu0 %v7629, 12
      %v7838 = vpop.permute.xlu0 %7837
      %7839 = vrot.lane.b32.xlu0 %v7630, 12
      %v7840 = vpop.permute.xlu0 %7839
      %7841 = vrot.lane.b32.xlu0 %v7631, 12
      %v7842 = vpop.permute.xlu0 %7841
      %7843 = vrot.lane.b32.xlu0 %v7632, 12
      %v7844 = vpop.permute.xlu0 %7843
      %7845 = vrot.lane.b32.xlu0 %v7633, 12
      %v7846 = vpop.permute.xlu0 %7845
      %7847 = vrot.lane.b32.xlu0 %v7634, 12
      %v7848 = vpop.permute.xlu0 %7847
      %7849 = vrot.lane.b32.xlu0 %v7635, 12
      %v7850 = vpop.permute.xlu0 %7849
      %7851 = vrot.lane.b32.xlu0 %v7636, 12
      %v7852 = vpop.permute.xlu0 %7851
      %7853 = vrot.lane.b32.xlu0 %v7637, 12
      %v7854 = vpop.permute.xlu0 %7853
      %7855 = vrot.lane.b32.xlu0 %v7638, 12
      %v7856 = vpop.permute.xlu0 %7855
      %7857 = vrot.lane.b32.xlu0 %v7639, 12
      %v7858 = vpop.permute.xlu0 %7857
      %7859 = vrot.lane.b32.xlu0 %v7640, 12
      %v7860 = vpop.permute.xlu0 %7859
      %7861 = vrot.lane.b32.xlu0 %v7641, 12
      %v7862 = vpop.permute.xlu0 %7861
      %7863 = vrot.lane.b32.xlu0 %v7642, 12
      %v7864 = vpop.permute.xlu0 %7863
      %7865 = vrot.lane.b32.xlu0 %v7643, 12
      %v7866 = vpop.permute.xlu0 %7865
      %7867 = vrot.lane.b32.xlu0 %v7644, 12
      %v7868 = vpop.permute.xlu0 %7867
      %7869 = vrot.lane.b32.xlu0 %v7645, 12
      %v7870 = vpop.permute.xlu0 %7869
      %7871 = vrot.lane.b32.xlu0 %v7646, 12
      %v7872 = vpop.permute.xlu0 %7871
      %7873 = vrot.lane.b32.xlu0 %v7647, 12
      %v7874 = vpop.permute.xlu0 %7873
      %7875 = vrot.lane.b32.xlu0 %v7648, 12
      %v7876 = vpop.permute.xlu0 %7875
      %v7915 = vsub.f32 %v7231, %v7802
      %v7916 = vsub.f32 %v7234, %v7804
      %v7917 = vsub.f32 %v7237, %v7806
      %v7918 = vsub.f32 %v7240, %v7808
      %v7919 = vsub.f32 %v7243, %v7810
      %v7920 = vsub.f32 %v7246, %v7812
      %v7921 = vsub.f32 %v7249, %v7814
      %v7922 = vsub.f32 %v7252, %v7816
      %v7923 = vsub.f32 %v7255, %v7818
      %v7924 = vsub.f32 %v7258, %v7820
      %v7925 = vsub.f32 %v7261, %v7822
      %v7926 = vsub.f32 %v7264, %v7824
      %v7927 = vsub.f32 %v7267, %v7826
      %v7928 = vsub.f32 %v7270, %v7828
      %v7929 = vsub.f32 %v7273, %v7830
      %v7930 = vsub.f32 %v7276, %v7832
      %v7931 = vsub.f32 %v7279, %v7834
      %v7932 = vsub.f32 %v7282, %v7836
      %v7933 = vsub.f32 %v7285, %v7838
      %v7934 = vsub.f32 %v7288, %v7840
      %v7935 = vsub.f32 %v7291, %v7842
      %v7936 = vsub.f32 %v7294, %v7844
      %v7937 = vsub.f32 %v7297, %v7846
      %v7938 = vsub.f32 %v7300, %v7848
      %v7939 = vsub.f32 %v7303, %v7850
      %v7940 = vsub.f32 %v7306, %v7852
      %v7941 = vsub.f32 %v7309, %v7854
      %v7942 = vsub.f32 %v7312, %v7856
      %v7943 = vsub.f32 %v7315, %v7858
      %v7944 = vsub.f32 %v7318, %v7860
      %v7945 = vsub.f32 %v7321, %v7862
      %v7946 = vsub.f32 %v7324, %v7864
      %v7947 = vsub.f32 %v7327, %v7866
      %v7948 = vsub.f32 %v7330, %v7868
      %v7949 = vsub.f32 %v7333, %v7870
      %v7950 = vsub.f32 %v7336, %v7872
      %v7951 = vsub.f32 %v7339, %v7874
      %v7952 = vsub.f32 %v7342, %v7876
      %v7953 = vmul.f32 %v7915, 1.442695
      %v7954 = vpow.pop %v7953
      %v7955 = vmul.f32 %v7916, 1.442695
      %v7956 = vpow.pop %v7955
      %v7957 = vmul.f32 %v7917, 1.442695
      %v7958 = vpow.pop %v7957
      %v7959 = vmul.f32 %v7918, 1.442695
      %v7960 = vpow.pop %v7959
      %v7961 = vmul.f32 %v7919, 1.442695
      %v7962 = vpow.pop %v7961
      %v7963 = vmul.f32 %v7920, 1.442695
      %v7964 = vpow.pop %v7963
      %v7965 = vmul.f32 %v7921, 1.442695
      %v7966 = vpow.pop %v7965
      %v7967 = vmul.f32 %v7922, 1.442695
      %v7968 = vpow.pop %v7967
      %v7969 = vmul.f32 %v7923, 1.442695
      %v7970 = vpow.pop %v7969
      %v7971 = vmul.f32 %v7924, 1.442695
      %v7972 = vpow.pop %v7971
      %v7973 = vmul.f32 %v7925, 1.442695
      %v7974 = vpow.pop %v7973
      %v7975 = vmul.f32 %v7926, 1.442695
      %v7976 = vpow.pop %v7975
      %v7977 = vmul.f32 %v7927, 1.442695
      %v7978 = vpow.pop %v7977
      %v7979 = vmul.f32 %v7928, 1.442695
      %v7980 = vpow.pop %v7979
      %v7981 = vmul.f32 %v7929, 1.442695
      %v7982 = vpow.pop %v7981
      %v7983 = vmul.f32 %v7930, 1.442695
      %v7984 = vpow.pop %v7983
      %v7985 = vmul.f32 %v7931, 1.442695
      %v7986 = vpow.pop %v7985
      %v7987 = vmul.f32 %v7932, 1.442695
      %v7988 = vpow.pop %v7987
      %v7989 = vmul.f32 %v7933, 1.442695
      %v7990 = vpow.pop %v7989
      %v7991 = vmul.f32 %v7934, 1.442695
      %v7992 = vpow.pop %v7991
      %v7993 = vmul.f32 %v7935, 1.442695
      %v7994 = vpow.pop %v7993
      %v7995 = vmul.f32 %v7936, 1.442695
      %v7996 = vpow.pop %v7995
      %v7997 = vmul.f32 %v7937, 1.442695
      %v7998 = vpow.pop %v7997
      %v7999 = vmul.f32 %v7938, 1.442695
      %v8000 = vpow.pop %v7999
      %v8001 = vmul.f32 %v7939, 1.442695
      %v8002 = vpow.pop %v8001
      %v8003 = vmul.f32 %v7940, 1.442695
      %v8004 = vpow.pop %v8003
      %v8005 = vmul.f32 %v7941, 1.442695
      %v8006 = vpow.pop %v8005
      %v8007 = vmul.f32 %v7942, 1.442695
      %v8008 = vpow.pop %v8007
      %v8009 = vmul.f32 %v7943, 1.442695
      %v8010 = vpow.pop %v8009
      %v8011 = vmul.f32 %v7944, 1.442695
      %v8012 = vpow.pop %v8011
      %v8013 = vmul.f32 %v7945, 1.442695
      %v8014 = vpow.pop %v8013
      %v8015 = vmul.f32 %v7946, 1.442695
      %v8016 = vpow.pop %v8015
      %v8017 = vmul.f32 %v7947, 1.442695
      %v8018 = vpow.pop %v8017
      %v8019 = vmul.f32 %v7948, 1.442695
      %v8020 = vpow.pop %v8019
      %v8021 = vmul.f32 %v7949, 1.442695
      %v8022 = vpow.pop %v8021
      %v8023 = vmul.f32 %v7950, 1.442695
      %v8024 = vpow.pop %v8023
      %v8025 = vmul.f32 %v7951, 1.442695
      %v8026 = vpow.pop %v8025
      %v8027 = vmul.f32 %v7952, 1.442695
      %v8028 = vpow.pop %v8027
      %8067 = vrot.lane.b32.xlu0 %v7954, 116
      %v8068 = vpop.permute.xlu0 %8067
      %8069 = vrot.lane.b32.xlu0 %v7956, 116
      %v8070 = vpop.permute.xlu0 %8069
      %8071 = vrot.lane.b32.xlu0 %v7958, 116
      %v8072 = vpop.permute.xlu0 %8071
      %8073 = vrot.lane.b32.xlu0 %v7960, 116
      %v8074 = vpop.permute.xlu0 %8073
      %8075 = vrot.lane.b32.xlu0 %v7962, 116
      %v8076 = vpop.permute.xlu0 %8075
      %8077 = vrot.lane.b32.xlu0 %v7964, 116
      %v8078 = vpop.permute.xlu0 %8077
      %8079 = vrot.lane.b32.xlu0 %v7966, 116
      %v8080 = vpop.permute.xlu0 %8079
      %8081 = vrot.lane.b32.xlu0 %v7968, 116
      %v8082 = vpop.permute.xlu0 %8081
      %8083 = vrot.lane.b32.xlu0 %v7970, 116
      %v8084 = vpop.permute.xlu0 %8083
      %8085 = vrot.lane.b32.xlu0 %v7972, 116
      %v8086 = vpop.permute.xlu0 %8085
      %8087 = vrot.lane.b32.xlu0 %v7974, 116
      %v8088 = vpop.permute.xlu0 %8087
      %8089 = vrot.lane.b32.xlu0 %v7976, 116
      %v8090 = vpop.permute.xlu0 %8089
      %8091 = vrot.lane.b32.xlu0 %v7978, 116
      %v8092 = vpop.permute.xlu0 %8091
      %8093 = vrot.lane.b32.xlu0 %v7980, 116
      %v8094 = vpop.permute.xlu0 %8093
      %8095 = vrot.lane.b32.xlu0 %v7982, 116
      %v8096 = vpop.permute.xlu0 %8095
      %8097 = vrot.lane.b32.xlu0 %v7984, 116
      %v8098 = vpop.permute.xlu0 %8097
      %8099 = vrot.lane.b32.xlu0 %v7986, 116
      %v8100 = vpop.permute.xlu0 %8099
      %8101 = vrot.lane.b32.xlu0 %v7988, 116
      %v8102 = vpop.permute.xlu0 %8101
      %8103 = vrot.lane.b32.xlu0 %v7990, 116
      %v8104 = vpop.permute.xlu0 %8103
      %8105 = vrot.lane.b32.xlu0 %v7992, 116
      %v8106 = vpop.permute.xlu0 %8105
      %8107 = vrot.lane.b32.xlu0 %v7994, 116
      %v8108 = vpop.permute.xlu0 %8107
      %8109 = vrot.lane.b32.xlu0 %v7996, 116
      %v8110 = vpop.permute.xlu0 %8109
      %8111 = vrot.lane.b32.xlu0 %v7998, 116
      %v8112 = vpop.permute.xlu0 %8111
      %8113 = vrot.lane.b32.xlu0 %v8000, 116
      %v8114 = vpop.permute.xlu0 %8113
      %8115 = vrot.lane.b32.xlu0 %v8002, 116
      %v8116 = vpop.permute.xlu0 %8115
      %8117 = vrot.lane.b32.xlu0 %v8004, 116
      %v8118 = vpop.permute.xlu0 %8117
      %8119 = vrot.lane.b32.xlu0 %v8006, 116
      %v8120 = vpop.permute.xlu0 %8119
      %8121 = vrot.lane.b32.xlu0 %v8008, 116
      %v8122 = vpop.permute.xlu0 %8121
      %8123 = vrot.lane.b32.xlu0 %v8010, 116
      %v8124 = vpop.permute.xlu0 %8123
      %8125 = vrot.lane.b32.xlu0 %v8012, 116
      %v8126 = vpop.permute.xlu0 %8125
      %8127 = vrot.lane.b32.xlu0 %v8014, 116
      %v8128 = vpop.permute.xlu0 %8127
      %8129 = vrot.lane.b32.xlu0 %v8016, 116
      %v8130 = vpop.permute.xlu0 %8129
      %8131 = vrot.lane.b32.xlu0 %v8018, 116
      %v8132 = vpop.permute.xlu0 %8131
      %8133 = vrot.lane.b32.xlu0 %v8020, 116
      %v8134 = vpop.permute.xlu0 %8133
      %8135 = vrot.lane.b32.xlu0 %v8022, 116
      %v8136 = vpop.permute.xlu0 %8135
      %8137 = vrot.lane.b32.xlu0 %v8024, 116
      %v8138 = vpop.permute.xlu0 %8137
      %8139 = vrot.lane.b32.xlu0 %v8026, 116
      %v8140 = vpop.permute.xlu0 %8139
      %8141 = vrot.lane.b32.xlu0 %v8028, 116
      %v8142 = vpop.permute.xlu0 %8141
      %v8181 = vadd.f32 %v7688, %v8068
      %v8182 = vadd.f32 %v7690, %v8070
      %v8183 = vadd.f32 %v7692, %v8072
      %v8184 = vadd.f32 %v7694, %v8074
      %v8185 = vadd.f32 %v7696, %v8076
      %v8186 = vadd.f32 %v7698, %v8078
      %v8187 = vadd.f32 %v7700, %v8080
      %v8188 = vadd.f32 %v7702, %v8082
      %v8189 = vadd.f32 %v7704, %v8084
      %v8190 = vadd.f32 %v7706, %v8086
      %v8191 = vadd.f32 %v7708, %v8088
      %v8192 = vadd.f32 %v7710, %v8090
      %v8193 = vadd.f32 %v7712, %v8092
      %v8194 = vadd.f32 %v7714, %v8094
      %v8195 = vadd.f32 %v7716, %v8096
      %v8196 = vadd.f32 %v7718, %v8098
      %v8197 = vadd.f32 %v7720, %v8100
      %v8198 = vadd.f32 %v7722, %v8102
      %v8199 = vadd.f32 %v7724, %v8104
      %v8200 = vadd.f32 %v7726, %v8106
      %v8201 = vadd.f32 %v7728, %v8108
      %v8202 = vadd.f32 %v7730, %v8110
      %v8203 = vadd.f32 %v7732, %v8112
      %v8204 = vadd.f32 %v7734, %v8114
      %v8205 = vadd.f32 %v7736, %v8116
      %v8206 = vadd.f32 %v7738, %v8118
      %v8207 = vadd.f32 %v7740, %v8120
      %v8208 = vadd.f32 %v7742, %v8122
      %v8209 = vadd.f32 %v7744, %v8124
      %v8210 = vadd.f32 %v7746, %v8126
      %v8211 = vadd.f32 %v7748, %v8128
      %v8212 = vadd.f32 %v7750, %v8130
      %v8213 = vadd.f32 %v7752, %v8132
      %v8214 = vadd.f32 %v7754, %v8134
      %v8215 = vadd.f32 %v7756, %v8136
      %v8216 = vadd.f32 %v7758, %v8138
      %v8217 = vadd.f32 %v7760, %v8140
      %v8218 = vadd.f32 %v7762, %v8142
      %v8219 = vrcp.pop %v8181
      %v8220 = vrcp.pop %v8182
      %v8221 = vrcp.pop %v8183
      %v8222 = vrcp.pop %v8184
      %v8223 = vrcp.pop %v8185
      %v8224 = vrcp.pop %v8186
      %v8225 = vrcp.pop %v8187
      %v8226 = vrcp.pop %v8188
      %v8227 = vrcp.pop %v8189
      %v8228 = vrcp.pop %v8190
      %v8229 = vrcp.pop %v8191
      %v8230 = vrcp.pop %v8192
      %v8231 = vrcp.pop %v8193
      %v8232 = vrcp.pop %v8194
      %v8233 = vrcp.pop %v8195
      %v8234 = vrcp.pop %v8196
      %v8235 = vrcp.pop %v8197
      %v8236 = vrcp.pop %v8198
      %v8237 = vrcp.pop %v8199
      %v8238 = vrcp.pop %v8200
      %v8239 = vrcp.pop %v8201
      %v8240 = vrcp.pop %v8202
      %v8241 = vrcp.pop %v8203
      %v8242 = vrcp.pop %v8204
      %v8243 = vrcp.pop %v8205
      %v8244 = vrcp.pop %v8206
      %v8245 = vrcp.pop %v8207
      %v8246 = vrcp.pop %v8208
      %v8247 = vrcp.pop %v8209
      %v8248 = vrcp.pop %v8210
      %v8249 = vrcp.pop %v8211
      %v8250 = vrcp.pop %v8212
      %v8251 = vrcp.pop %v8213
      %v8252 = vrcp.pop %v8214
      %v8253 = vrcp.pop %v8215
      %v8254 = vrcp.pop %v8216
      %v8255 = vrcp.pop %v8217
      %v8256 = vrcp.pop %v8218
      %v8257 = vmul.f32 %v7688, %v8219
      %v8258 = vmul.f32 %v7690, %v8220
      %v8259 = vmul.f32 %v7692, %v8221
      %v8260 = vmul.f32 %v7694, %v8222
      %v8261 = vmul.f32 %v7696, %v8223
      %v8262 = vmul.f32 %v7698, %v8224
      %v8263 = vmul.f32 %v7700, %v8225
      %v8264 = vmul.f32 %v7702, %v8226
      %v8265 = vmul.f32 %v7704, %v8227
      %v8266 = vmul.f32 %v7706, %v8228
      %v8267 = vmul.f32 %v7708, %v8229
      %v8268 = vmul.f32 %v7710, %v8230
      %v8269 = vmul.f32 %v7712, %v8231
      %v8270 = vmul.f32 %v7714, %v8232
      %v8271 = vmul.f32 %v7716, %v8233
      %v8272 = vmul.f32 %v7718, %v8234
      %v8273 = vmul.f32 %v7720, %v8235
      %v8274 = vmul.f32 %v7722, %v8236
      %v8275 = vmul.f32 %v7724, %v8237
      %v8276 = vmul.f32 %v7726, %v8238
      %v8277 = vmul.f32 %v7728, %v8239
      %v8278 = vmul.f32 %v7730, %v8240
      %v8279 = vmul.f32 %v7732, %v8241
      %v8280 = vmul.f32 %v7734, %v8242
      %v8281 = vmul.f32 %v7736, %v8243
      %v8282 = vmul.f32 %v7738, %v8244
      %v8283 = vmul.f32 %v7740, %v8245
      %v8284 = vmul.f32 %v7742, %v8246
      %v8285 = vmul.f32 %v7744, %v8247
      %v8286 = vmul.f32 %v7746, %v8248
      %v8287 = vmul.f32 %v7748, %v8249
      %v8288 = vmul.f32 %v7750, %v8250
      %v8289 = vmul.f32 %v7752, %v8251
      %v8290 = vmul.f32 %v7754, %v8252
      %v8291 = vmul.f32 %v7756, %v8253
      %v8292 = vmul.f32 %v7758, %v8254
      %v8293 = vmul.f32 %v7760, %v8255
      %v8294 = vmul.f32 %v7762, %v8256
      %vm8295 = vcmask 97280
      %8296 = vst.msk [vmem:[%s278] sm:$0xff] %vm8295, %v8257
      %8297 = vst.msk [vmem:[%s278 + $0x18] sm:$0xff] %vm8295, %v8258
      %8298 = vst.msk [vmem:[%s278 + $0x30] sm:$0xff] %vm8295, %v8259
      %8299 = vst.msk [vmem:[%s278 + $0x48] sm:$0xff] %vm8295, %v8260
      %8300 = vst.msk [vmem:[%s278 + $0x60] sm:$0xff] %vm8295, %v8261
      %8301 = vst.msk [vmem:[%s278 + $0x78] sm:$0xff] %vm8295, %v8262
      %8302 = vst.msk [vmem:[%s278 + $0x90] sm:$0xff] %vm8295, %v8263
      %8303 = vst.msk [vmem:[%s278 + $0xa8] sm:$0xff] %vm8295, %v8264
      %8304 = vst.msk [vmem:[%s278 + $0xc0] sm:$0xff] %vm8295, %v8265
      %8305 = vst.msk [vmem:[%s278 + $0xd8] sm:$0xff] %vm8295, %v8266
      %8306 = vst.msk [vmem:[%s278 + $0xf0] sm:$0xff] %vm8295, %v8267
      %8307 = vst.msk [vmem:[%s278 + $0x108] sm:$0xff] %vm8295, %v8268
      %8308 = vst.msk [vmem:[%s278 + $0x120] sm:$0xff] %vm8295, %v8269
      %8309 = vst.msk [vmem:[%s278 + $0x138] sm:$0xff] %vm8295, %v8270
      %8310 = vst.msk [vmem:[%s278 + $0x150] sm:$0xff] %vm8295, %v8271
      %8311 = vst.msk [vmem:[%s278 + $0x168] sm:$0xff] %vm8295, %v8272
      %8312 = vst.msk [vmem:[%s278 + $0x180] sm:$0xff] %vm8295, %v8273
      %8313 = vst.msk [vmem:[%s278 + $0x198] sm:$0xff] %vm8295, %v8274
      %8314 = vst.msk [vmem:[%s278 + $0x1b0] sm:$0xff] %vm8295, %v8275
      %8315 = vst.msk [vmem:[%s278 + $0x1c8] sm:$0xff] %vm8295, %v8276
      %8316 = vst.msk [vmem:[%s278 + $0x1e0] sm:$0xff] %vm8295, %v8277
      %8317 = vst.msk [vmem:[%s278 + $0x1f8] sm:$0xff] %vm8295, %v8278
      %8318 = vst.msk [vmem:[%s278 + $0x210] sm:$0xff] %vm8295, %v8279
      %8319 = vst.msk [vmem:[%s278 + $0x228] sm:$0xff] %vm8295, %v8280
      %8320 = vst.msk [vmem:[%s278 + $0x240] sm:$0xff] %vm8295, %v8281
      %8321 = vst.msk [vmem:[%s278 + $0x258] sm:$0xff] %vm8295, %v8282
      %8322 = vst.msk [vmem:[%s278 + $0x270] sm:$0xff] %vm8295, %v8283
      %8323 = vst.msk [vmem:[%s278 + $0x288] sm:$0xff] %vm8295, %v8284
      %8324 = vst.msk [vmem:[%s278 + $0x2a0] sm:$0xff] %vm8295, %v8285
      %8325 = vst.msk [vmem:[%s278 + $0x2b8] sm:$0xff] %vm8295, %v8286
      %8326 = vst.msk [vmem:[%s278 + $0x2d0] sm:$0xff] %vm8295, %v8287
      %8327 = vst.msk [vmem:[%s278 + $0x2e8] sm:$0xff] %vm8295, %v8288
      %8328 = vst.msk [vmem:[%s278 + $0x300] sm:$0xff] %vm8295, %v8289
      %8329 = vst.msk [vmem:[%s278 + $0x318] sm:$0xff] %vm8295, %v8290
      %8330 = vst.msk [vmem:[%s278 + $0x330] sm:$0xff] %vm8295, %v8291
      %8331 = vst.msk [vmem:[%s278 + $0x348] sm:$0xff] %vm8295, %v8292
      %8332 = vst.msk [vmem:[%s278 + $0x360] sm:$0xff] %vm8295, %v8293
      %vm8333 = vcmask 93184
      %8334 = vst.msk [vmem:[%s278 + $0x378] sm:$0xf] %vm8333, %v8294
      %8373 = vrot.lane.b32.xlu0 %v8219, 12
      %v8374 = vpop.permute.xlu0 %8373
      %8375 = vrot.lane.b32.xlu0 %v8220, 12
      %v8376 = vpop.permute.xlu0 %8375
      %8377 = vrot.lane.b32.xlu0 %v8221, 12
      %v8378 = vpop.permute.xlu0 %8377
      %8379 = vrot.lane.b32.xlu0 %v8222, 12
      %v8380 = vpop.permute.xlu0 %8379
      %8381 = vrot.lane.b32.xlu0 %v8223, 12
      %v8382 = vpop.permute.xlu0 %8381
      %8383 = vrot.lane.b32.xlu0 %v8224, 12
      %v8384 = vpop.permute.xlu0 %8383
      %8385 = vrot.lane.b32.xlu0 %v8225, 12
      %v8386 = vpop.permute.xlu0 %8385
      %8387 = vrot.lane.b32.xlu0 %v8226, 12
      %v8388 = vpop.permute.xlu0 %8387
      %8389 = vrot.lane.b32.xlu0 %v8227, 12
      %v8390 = vpop.permute.xlu0 %8389
      %8391 = vrot.lane.b32.xlu0 %v8228, 12
      %v8392 = vpop.permute.xlu0 %8391
      %8393 = vrot.lane.b32.xlu0 %v8229, 12
      %v8394 = vpop.permute.xlu0 %8393
      %8395 = vrot.lane.b32.xlu0 %v8230, 12
      %v8396 = vpop.permute.xlu0 %8395
      %8397 = vrot.lane.b32.xlu0 %v8231, 12
      %v8398 = vpop.permute.xlu0 %8397
      %8399 = vrot.lane.b32.xlu0 %v8232, 12
      %v8400 = vpop.permute.xlu0 %8399
      %8401 = vrot.lane.b32.xlu0 %v8233, 12
      %v8402 = vpop.permute.xlu0 %8401
      %8403 = vrot.lane.b32.xlu0 %v8234, 12
      %v8404 = vpop.permute.xlu0 %8403
      %8405 = vrot.lane.b32.xlu0 %v8235, 12
      %v8406 = vpop.permute.xlu0 %8405
      %8407 = vrot.lane.b32.xlu0 %v8236, 12
      %v8408 = vpop.permute.xlu0 %8407
      %8409 = vrot.lane.b32.xlu0 %v8237, 12
      %v8410 = vpop.permute.xlu0 %8409
      %8411 = vrot.lane.b32.xlu0 %v8238, 12
      %v8412 = vpop.permute.xlu0 %8411
      %8413 = vrot.lane.b32.xlu0 %v8239, 12
      %v8414 = vpop.permute.xlu0 %8413
      %8415 = vrot.lane.b32.xlu0 %v8240, 12
      %v8416 = vpop.permute.xlu0 %8415
      %8417 = vrot.lane.b32.xlu0 %v8241, 12
      %v8418 = vpop.permute.xlu0 %8417
      %8419 = vrot.lane.b32.xlu0 %v8242, 12
      %v8420 = vpop.permute.xlu0 %8419
      %8421 = vrot.lane.b32.xlu0 %v8243, 12
      %v8422 = vpop.permute.xlu0 %8421
      %8423 = vrot.lane.b32.xlu0 %v8244, 12
      %v8424 = vpop.permute.xlu0 %8423
      %8425 = vrot.lane.b32.xlu0 %v8245, 12
      %v8426 = vpop.permute.xlu0 %8425
      %8427 = vrot.lane.b32.xlu0 %v8246, 12
      %v8428 = vpop.permute.xlu0 %8427
      %8429 = vrot.lane.b32.xlu0 %v8247, 12
      %v8430 = vpop.permute.xlu0 %8429
      %8431 = vrot.lane.b32.xlu0 %v8248, 12
      %v8432 = vpop.permute.xlu0 %8431
      %8433 = vrot.lane.b32.xlu0 %v8249, 12
      %v8434 = vpop.permute.xlu0 %8433
      %8435 = vrot.lane.b32.xlu0 %v8250, 12
      %v8436 = vpop.permute.xlu0 %8435
      %8437 = vrot.lane.b32.xlu0 %v8251, 12
      %v8438 = vpop.permute.xlu0 %8437
      %8439 = vrot.lane.b32.xlu0 %v8252, 12
      %v8440 = vpop.permute.xlu0 %8439
      %8441 = vrot.lane.b32.xlu0 %v8253, 12
      %v8442 = vpop.permute.xlu0 %8441
      %8443 = vrot.lane.b32.xlu0 %v8254, 12
      %v8444 = vpop.permute.xlu0 %8443
      %8445 = vrot.lane.b32.xlu0 %v8255, 12
      %v8446 = vpop.permute.xlu0 %8445
      %8447 = vrot.lane.b32.xlu0 %v8256, 12
      %v8448 = vpop.permute.xlu0 %8447
      %v8487 = vmul.f32 %v7954, %v8374
      %v8488 = vmul.f32 %v7956, %v8376
      %v8489 = vmul.f32 %v7958, %v8378
      %v8490 = vmul.f32 %v7960, %v8380
      %v8491 = vmul.f32 %v7962, %v8382
      %v8492 = vmul.f32 %v7964, %v8384
      %v8493 = vmul.f32 %v7966, %v8386
      %v8494 = vmul.f32 %v7968, %v8388
      %v8495 = vmul.f32 %v7970, %v8390
      %v8496 = vmul.f32 %v7972, %v8392
      %v8497 = vmul.f32 %v7974, %v8394
      %v8498 = vmul.f32 %v7976, %v8396
      %v8499 = vmul.f32 %v7978, %v8398
      %v8500 = vmul.f32 %v7980, %v8400
      %v8501 = vmul.f32 %v7982, %v8402
      %v8502 = vmul.f32 %v7984, %v8404
      %v8503 = vmul.f32 %v7986, %v8406
      %v8504 = vmul.f32 %v7988, %v8408
      %v8505 = vmul.f32 %v7990, %v8410
      %v8506 = vmul.f32 %v7992, %v8412
      %v8507 = vmul.f32 %v7994, %v8414
      %v8508 = vmul.f32 %v7996, %v8416
      %v8509 = vmul.f32 %v7998, %v8418
      %v8510 = vmul.f32 %v8000, %v8420
      %v8511 = vmul.f32 %v8002, %v8422
      %v8512 = vmul.f32 %v8004, %v8424
      %v8513 = vmul.f32 %v8006, %v8426
      %v8514 = vmul.f32 %v8008, %v8428
      %v8515 = vmul.f32 %v8010, %v8430
      %v8516 = vmul.f32 %v8012, %v8432
      %v8517 = vmul.f32 %v8014, %v8434
      %v8518 = vmul.f32 %v8016, %v8436
      %v8519 = vmul.f32 %v8018, %v8438
      %v8520 = vmul.f32 %v8020, %v8440
      %v8521 = vmul.f32 %v8022, %v8442
      %v8522 = vmul.f32 %v8024, %v8444
      %v8523 = vmul.f32 %v8026, %v8446
      %v8524 = vmul.f32 %v8028, %v8448
      %vm8525 = vcmask 195680
      %8526 = vst.msk [vmem:[%s278] sm:$0xff] %vm8525, %v8487
      %8527 = vst.msk [vmem:[%s278 + $0x18] sm:$0xff] %vm8525, %v8488
      %8528 = vst.msk [vmem:[%s278 + $0x30] sm:$0xff] %vm8525, %v8489
      %8529 = vst.msk [vmem:[%s278 + $0x48] sm:$0xff] %vm8525, %v8490
      %8530 = vst.msk [vmem:[%s278 + $0x60] sm:$0xff] %vm8525, %v8491
      %8531 = vst.msk [vmem:[%s278 + $0x78] sm:$0xff] %vm8525, %v8492
      %8532 = vst.msk [vmem:[%s278 + $0x90] sm:$0xff] %vm8525, %v8493
      %8533 = vst.msk [vmem:[%s278 + $0xa8] sm:$0xff] %vm8525, %v8494
      %8534 = vst.msk [vmem:[%s278 + $0xc0] sm:$0xff] %vm8525, %v8495
      %8535 = vst.msk [vmem:[%s278 + $0xd8] sm:$0xff] %vm8525, %v8496
      %8536 = vst.msk [vmem:[%s278 + $0xf0] sm:$0xff] %vm8525, %v8497
      %8537 = vst.msk [vmem:[%s278 + $0x108] sm:$0xff] %vm8525, %v8498
      %8538 = vst.msk [vmem:[%s278 + $0x120] sm:$0xff] %vm8525, %v8499
      %8539 = vst.msk [vmem:[%s278 + $0x138] sm:$0xff] %vm8525, %v8500
      %8540 = vst.msk [vmem:[%s278 + $0x150] sm:$0xff] %vm8525, %v8501
      %8541 = vst.msk [vmem:[%s278 + $0x168] sm:$0xff] %vm8525, %v8502
      %8542 = vst.msk [vmem:[%s278 + $0x180] sm:$0xff] %vm8525, %v8503
      %8543 = vst.msk [vmem:[%s278 + $0x198] sm:$0xff] %vm8525, %v8504
      %8544 = vst.msk [vmem:[%s278 + $0x1b0] sm:$0xff] %vm8525, %v8505
      %8545 = vst.msk [vmem:[%s278 + $0x1c8] sm:$0xff] %vm8525, %v8506
      %8546 = vst.msk [vmem:[%s278 + $0x1e0] sm:$0xff] %vm8525, %v8507
      %8547 = vst.msk [vmem:[%s278 + $0x1f8] sm:$0xff] %vm8525, %v8508
      %8548 = vst.msk [vmem:[%s278 + $0x210] sm:$0xff] %vm8525, %v8509
      %8549 = vst.msk [vmem:[%s278 + $0x228] sm:$0xff] %vm8525, %v8510
      %8550 = vst.msk [vmem:[%s278 + $0x240] sm:$0xff] %vm8525, %v8511
      %8551 = vst.msk [vmem:[%s278 + $0x258] sm:$0xff] %vm8525, %v8512
      %8552 = vst.msk [vmem:[%s278 + $0x270] sm:$0xff] %vm8525, %v8513
      %8553 = vst.msk [vmem:[%s278 + $0x288] sm:$0xff] %vm8525, %v8514
      %8554 = vst.msk [vmem:[%s278 + $0x2a0] sm:$0xff] %vm8525, %v8515
      %8555 = vst.msk [vmem:[%s278 + $0x2b8] sm:$0xff] %vm8525, %v8516
      %8556 = vst.msk [vmem:[%s278 + $0x2d0] sm:$0xff] %vm8525, %v8517
      %8557 = vst.msk [vmem:[%s278 + $0x2e8] sm:$0xff] %vm8525, %v8518
      %8558 = vst.msk [vmem:[%s278 + $0x300] sm:$0xff] %vm8525, %v8519
      %8559 = vst.msk [vmem:[%s278 + $0x318] sm:$0xff] %vm8525, %v8520
      %8560 = vst.msk [vmem:[%s278 + $0x330] sm:$0xff] %vm8525, %v8521
      %8561 = vst.msk [vmem:[%s278 + $0x348] sm:$0xff] %vm8525, %v8522
      %8562 = vst.msk [vmem:[%s278 + $0x360] sm:$0xff] %vm8525, %v8523
      %vm8563 = vcmask 191584
      %8564 = vst.msk [vmem:[%s278 + $0x378] sm:$0xf] %vm8563, %v8524
      %p8565 = scmp.lt.s32.totalorder %s18, 1
      %s8566 = scalar_select %p8565, %s18, 1
      %s8567 = smul.addr %s8566, 114
      %s8568 = smul.addr %s8567, 8
      %s8569 = scalar_lea.vmem %s7, %s8568
      // Predicated region
      $region49: #{cpn_forward.1} parent=47 // pred_check
        %p8570 = pneg %p188
      $region50: #{cpn_forward.1} parent=47 // pred_check_branch
        %8572 = sbr.rel (%p8570) target = $region52
      $region51: #{cpn_forward.1} parent=47 // pred_region
        _
      $region52: #{cpn_forward.1} parent=47 // pred_fallthru
        _
    $region48: #{cpn_forward.1} parent=5 // pred_fallthru
      _
    %p8573 = scmp.le.s32.totalorder 2, %s13
    // Predicated region
    $region53: #{cpn_forward.1} parent=5 // pred_check
      %p8574 = pneg %p8573
    $region54: #{cpn_forward.1} parent=5 // pred_check_branch
      %8576 = sbr.rel (%p8574) target = $region56
    $region55: #{cpn_forward.1} parent=5 // pred_region
      %s8577 = ssub.s32 %s13, 2
      // Predicated region
      $region57: #{cpn_forward.1} parent=55 // pred_check
        %p8578 = pneg %p194
      $region58: #{cpn_forward.1} parent=55 // pred_check_branch
        %8580 = sbr.rel (%p8578) target = $region60
      $region59: #{cpn_forward.1} parent=55 // pred_region
        %p8581 = scmp.lt.s32.totalorder %s19, 1
        %s8582 = scalar_select %p8581, %s19, 1
        %s8583 = smul.addr %s8582, 114
        %s8584 = smul.addr %s8583, 8
        %s8585 = scalar_lea.vmem %s7, %s8584
      $region60: #{cpn_forward.1} parent=55 // pred_fallthru
        _
    $region56: #{cpn_forward.1} parent=5 // pred_fallthru
      _
  $region6: #{cpn_forward.1} parent=0 // loop_footer
    %s17 = sadd.s32 1, %s13
  $region7: #{cpn_forward.1} parent=0 // loop_footer_branch
    %12 = sbr.rel target = $region3
  $region8: #{cpn_forward.1} parent=0 // loop_exit
    _

</llo_original>
